<compile_context>
chip_gen: v5e
topology: v5e:2x2
jax: 0.10.0
libtpu: 0.0.40
codegen_flags: <defaults>
</compile_context>

<pallas_src>
import functools

import numpy as np

import jax
import jax.numpy as jnp
from jax.experimental import pallas as pl
from jax.experimental.pallas import tpu as pltpu


# ----------------------------- in-kernel helpers ---------------------------- #

def _shifted_views(x, wp):
    """x: (C, L) flattened zero-padded grid with row stride `wp`.

    Returns the 9 arrays s_k with s_k[:, p] = x[:, p + (dh-1)*wp + (dw-1)]
    (zero-filled where that index is out of range; only interior grid
    positions p are ever consumed downstream, and those never read the fill).
    """
    c, l = x.shape
    pad = 128  # >= wp + 1 for every layer; lane-tile aligned
    z = jnp.zeros((c, pad), dtype=x.dtype)
    xb = jnp.concatenate([z, x, z], axis=1)          # (C, L + 256)
    views = []
    for dh in range(3):
        for dw in range(3):
            off = (dh - 1) * wp + (dw - 1)
            views.append(xb[:, pad + off: pad + off + l])
    return views


def _conv3x3(x, w9, b, wp):
    """3x3 'same' conv on the flattened padded grid.

    x  : (Cin, L)  activation with its zero border already in place
    w9 : (9, Cout, Cin)  weights, k = dh*3 + dw
    b  : (Cout, 1)
    Returns (Cout, L).  Only interior positions are valid (border columns are
    garbage and are never consumed).
    """
    cin = x.shape[0]
    views = _shifted_views(x, wp)
    acc = None
    for k in range(9):
        wk = w9[k]                                                  # (Cout, Cin)
        if cin == 1:
            contrib = wk * views[k]                # outer product on the VPU
        else:
            contrib = jnp.dot(wk, views[k],
                              preferred_element_type=jnp.float32)   # MXU
        acc = contrib if acc is None else acc + contrib
    return acc + b


def _pool_bn_relu(y, wp, sel, gamma, beta, mask, count, eps=1e-5):
    """2x2/2 max-pool + downsample/re-pad (constant selection matmul) +
    train-mode BatchNorm + ReLU (+ border re-zeroing).

    y    : (C, L) conv output on a grid with row stride `wp`
    sel  : (L - wp - 1, L_next) constant 0/1 selection matrix
    mask : (1, L_next) border mask (or None)
    """
    c, l = y.shape
    lm = l - wp - 1
    m = jnp.maximum(jnp.maximum(y[:, 0:lm], y[:, 1:1 + lm]),
                    jnp.maximum(y[:, wp:wp + lm], y[:, wp + 1:wp + 1 + lm]))
    x = jnp.dot(m, sel, preferred_element_type=jnp.float32)   # (C, L_next)
    # border columns of x are exactly zero, so plain row sums give the stats
    # over the `count` valid positions.
    inv_n = 1.0 / count
    mean = jnp.sum(x, axis=1, keepdims=True) * inv_n
    ex2 = jnp.sum(x * x, axis=1, keepdims=True) * inv_n
    var = jnp.maximum(ex2 - mean * mean, 0.0)
    inv = jax.lax.rsqrt(var + eps)
    out = jnp.maximum((x - mean) * inv * gamma + beta, 0.0)
    if mask is not None:
        out = out * mask        # restore the exact-zero padding border
    return out


# --------------------------------- kernel ----------------------------------- #

def _net_kernel(x1_ref,
                w1_ref, b1_ref, g1_ref, be1_ref, s1_ref, m2_ref,
                w2_ref, b2_ref, g2_ref, be2_ref, s2_ref, m3_ref,
                w3_ref, b3_ref, g3_ref, be3_ref, s3_ref,
                wfc_ref, bfc_ref, csel_ref,
                out_ref, *, n):
    # block 1 : 30x30 padded grid -> 16x16 padded grid
    y1 = _conv3x3(x1_ref[...], w1_ref[...], b1_ref[...], wp=30)       # (4, n*900)
    x2 = _pool_bn_relu(y1, 30, s1_ref[...], g1_ref[...], be1_ref[...],
                       m2_ref[...], count=n * 14 * 14)                # (4, n*256)
    # block 2 : 16x16 -> 9x9
    y2 = _conv3x3(x2, w2_ref[...], b2_ref[...], wp=16)                # (8, n*256)
    x3 = _pool_bn_relu(y2, 16, s2_ref[...], g2_ref[...], be2_ref[...],
                       m3_ref[...], count=n * 7 * 7)                  # (8, n*81)
    # block 3 : 9x9 -> 5x5
    y3 = _conv3x3(x3, w3_ref[...], b3_ref[...], wp=9)                 # (16, n*81)
    x4 = _pool_bn_relu(y3, 9, s3_ref[...], g3_ref[...], be3_ref[...],
                       None, count=n * 3 * 3)                         # (16, n*25)
    # fc : 3x3 VALID conv over the final 3x3 map + center-column selection
    y4 = _conv3x3(x4, wfc_ref[...], bfc_ref[...], wp=5)               # (10, n*25)
    out_ref[...] = jnp.dot(y4, csel_ref[...],
                           preferred_element_type=jnp.float32)        # (10, n)


# -------------------------- compile-time constants -------------------------- #

def _pool_select_matrix(n, hp_in, wp_in, h_out, w_out, hp_out, wp_out):
    """0/1 matrix mapping pool-window top-left positions on the input grid to
    interior positions of the next (zero-padded) grid."""
    rows = n * hp_in * wp_in - wp_in - 1
    cols = n * hp_out * wp_out
    s = np.zeros((rows, cols), dtype=np.float32)
    for b in range(n):
        for i in range(h_out):
            for j in range(w_out):
                p = b * hp_in * wp_in + (2 * i + 1) * wp_in + (2 * j + 1)
                q = b * hp_out * wp_out + (i + 1) * wp_out + (j + 1)
                s[p, q] = 1.0
    return s


def _border_mask(n, h, w, hp, wp):
    m = np.zeros((n, hp, wp), dtype=np.float32)
    m[:, 1:h + 1, 1:w + 1] = 1.0
    return m.reshape(1, n * hp * wp)


def _center_select_matrix(n, hp, wp):
    s = np.zeros((n * hp * wp, n), dtype=np.float32)
    for b in range(n):
        s[b * hp * wp + 2 * wp + 2, b] = 1.0
    return s


def _stack_conv_w(w):        # torch layout (Cout, Cin, 3, 3) -> (9, Cout, Cin)
    cout, cin = w.shape[0], w.shape[1]
    return jnp.transpose(w, (2, 3, 0, 1)).reshape(9, cout, cin)


def _stack_fc_w(wfc):        # torch layout (10, 16*3*3), columns ordered (c,h,w)
    w = wfc.reshape(10, 16, 3, 3)
    return jnp.transpose(w, (2, 3, 0, 1)).reshape(9, 10, 16)


def _col(v):
    return v.reshape(-1, 1).astype(jnp.float32)


# --------------------------------- forward ---------------------------------- #

@jax.jit
def net_forward(x_nchw, params):
    n = x_nchw.shape[0]

    # input -> (1, n*30*30) flattened zero-padded grid (this IS conv1's padding)
    xp = jnp.pad(x_nchw.astype(jnp.float32), ((0, 0), (0, 0), (1, 1), (1, 1)))
    x1 = jnp.transpose(xp, (1, 0, 2, 3)).reshape(1, n * 30 * 30)

    # constants (folded at trace time)
    s1 = jnp.asarray(_pool_select_matrix(n, 30, 30, 14, 14, 16, 16))
    s2 = jnp.asarray(_pool_select_matrix(n, 16, 16, 7, 7, 9, 9))
    s3 = jnp.asarray(_pool_select_matrix(n, 9, 9, 3, 3, 5, 5))
    m2 = jnp.asarray(_border_mask(n, 14, 14, 16, 16))
    m3 = jnp.asarray(_border_mask(n, 7, 7, 9, 9))
    csel = jnp.asarray(_center_select_matrix(n, 5, 5))

    args = (
        x1,
        _stack_conv_w(params["w1"]), _col(params["b1"]),
        _col(params["g1"]), _col(params["be1"]), s1, m2,
        _stack_conv_w(params["w2"]), _col(params["b2"]),
        _col(params["g2"]), _col(params["be2"]), s2, m3,
        _stack_conv_w(params["w3"]), _col(params["b3"]),
        _col(params["g3"]), _col(params["be3"]), s3,
        _stack_fc_w(params["wfc"]), _col(params["bfc"]), csel,
    )

    logits_t = pl.pallas_call(
        functools.partial(_net_kernel, n=n),
        out_shape=jax.ShapeDtypeStruct((10, n), jnp.float32),
        compiler_params=pltpu.CompilerParams(
            vmem_limit_bytes=32 * 1024 * 1024),
    )(*args)
    return logits_t.T          # (n, 10), matching the PyTorch module


# ---------------------------------- params ----------------------------------- #

def init_params(key):
    ks = jax.random.split(key, 5)

    def conv_init(k, cin, cout):
        bound = 1.0 / (cin * 9) ** 0.5                 # kaiming-uniform-like
        kw, kb = jax.random.split(k)
        w = jax.random.uniform(kw, (cout, cin, 3, 3), jnp.float32, -bound, bound)
        b = jax.random.uniform(kb, (cout,), jnp.float32, -bound, bound)
        return w, b

    w1, b1 = conv_init(ks[0], 1, 4)
    w2, b2 = conv_init(ks[1], 4, 8)
    w3, b3 = conv_init(ks[2], 8, 16)

    fin = 16 * 3 * 3
    bound = 1.0 / fin ** 0.5
    wfc = jax.random.uniform(ks[3], (10, fin), jnp.float32, -bound, bound)
    bfc = jax.random.uniform(ks[4], (10,), jnp.float32, -bound, bound)

    return dict(
        w1=w1, b1=b1, g1=jnp.ones((4,), jnp.float32), be1=jnp.zeros((4,), jnp.float32),
        w2=w2, b2=b2, g2=jnp.ones((8,), jnp.float32), be2=jnp.zeros((8,), jnp.float32),
        w3=w3, b3=b3, g3=jnp.ones((16,), jnp.float32), be3=jnp.zeros((16,), jnp.float32),
        wfc=wfc, bfc=bfc,
    )


if __name__ == "__main__":
    key = jax.random.PRNGKey(0)
    pkey, xkey = jax.random.split(key)
    params = init_params(pkey)

    # 28x28 single-channel input implied by fc = Linear(16*3*3, 10)
    x = jax.random.normal(xkey, (2, 1, 28, 28), jnp.float32)

    out = net_forward(x, params)
    out = jax.block_until_ready(out)
    assert out.shape == (2, 10), out.shape
    assert bool(jnp.all(jnp.isfinite(out)))
    print("KERNEL_OK")
</pallas_src>

<mosaic_0001>
module attributes {stable_mosaic.version = 11 : i64} {
  func.func @_net_kernel(%arg0: memref<1x1800xf32, #tpu.memory_space<vmem>>, %arg1: memref<9x4x1xf32, #tpu.memory_space<vmem>>, %arg2: memref<4x1xf32, #tpu.memory_space<vmem>>, %arg3: memref<4x1xf32, #tpu.memory_space<vmem>>, %arg4: memref<4x1xf32, #tpu.memory_space<vmem>>, %arg5: memref<1769x512xf32, #tpu.memory_space<vmem>>, %arg6: memref<1x512xf32, #tpu.memory_space<vmem>>, %arg7: memref<9x8x4xf32, #tpu.memory_space<vmem>>, %arg8: memref<8x1xf32, #tpu.memory_space<vmem>>, %arg9: memref<8x1xf32, #tpu.memory_space<vmem>>, %arg10: memref<8x1xf32, #tpu.memory_space<vmem>>, %arg11: memref<495x162xf32, #tpu.memory_space<vmem>>, %arg12: memref<1x162xf32, #tpu.memory_space<vmem>>, %arg13: memref<9x16x8xf32, #tpu.memory_space<vmem>>, %arg14: memref<16x1xf32, #tpu.memory_space<vmem>>, %arg15: memref<16x1xf32, #tpu.memory_space<vmem>>, %arg16: memref<16x1xf32, #tpu.memory_space<vmem>>, %arg17: memref<152x50xf32, #tpu.memory_space<vmem>>, %arg18: memref<9x10x16xf32, #tpu.memory_space<vmem>>, %arg19: memref<10x1xf32, #tpu.memory_space<vmem>>, %arg20: memref<50x2xf32, #tpu.memory_space<vmem>>, %arg21: memref<10x2xf32, #tpu.memory_space<vmem>>) attributes {dimension_semantics = [], scalar_prefetch = 0 : i64, scratch_operands = 0 : i64, tpu.core_type = #tpu.core_type<tc>} {
    %c0 = arith.constant 0 : index
    %c0_0 = arith.constant 0 : index
    %0 = vector.load %arg0[%c0, %c0_0] : memref<1x1800xf32, #tpu.memory_space<vmem>>, vector<1x1800xf32>
    %c0_1 = arith.constant 0 : index
    %c0_2 = arith.constant 0 : index
    %c0_3 = arith.constant 0 : index
    %1 = vector.load %arg1[%c0_1, %c0_2, %c0_3] : memref<9x4x1xf32, #tpu.memory_space<vmem>>, vector<9x4x1xf32>
    %c0_4 = arith.constant 0 : index
    %c0_5 = arith.constant 0 : index
    %2 = vector.load %arg2[%c0_4, %c0_5] : memref<4x1xf32, #tpu.memory_space<vmem>>, vector<4x1xf32>
    %cst = arith.constant 0.000000e+00 : f32
    %3 = vector.broadcast %cst : f32 to vector<1x128xf32>
    %4 = tpu.concatenate %3, %0, %3 in 1 : vector<1x128xf32>, vector<1x1800xf32>, vector<1x128xf32> -> vector<1x2056xf32>
    %5 = vector.extract_strided_slice %4 {offsets = [0, 97], sizes = [1, 1800], strides = [1, 1]} : vector<1x2056xf32> to vector<1x1800xf32>
    %6 = vector.extract_strided_slice %4 {offsets = [0, 98], sizes = [1, 1800], strides = [1, 1]} : vector<1x2056xf32> to vector<1x1800xf32>
    %7 = vector.extract_strided_slice %4 {offsets = [0, 99], sizes = [1, 1800], strides = [1, 1]} : vector<1x2056xf32> to vector<1x1800xf32>
    %8 = vector.extract_strided_slice %4 {offsets = [0, 127], sizes = [1, 1800], strides = [1, 1]} : vector<1x2056xf32> to vector<1x1800xf32>
    %9 = vector.extract_strided_slice %4 {offsets = [0, 128], sizes = [1, 1800], strides = [1, 1]} : vector<1x2056xf32> to vector<1x1800xf32>
    %10 = vector.extract_strided_slice %4 {offsets = [0, 129], sizes = [1, 1800], strides = [1, 1]} : vector<1x2056xf32> to vector<1x1800xf32>
    %11 = vector.extract_strided_slice %4 {offsets = [0, 157], sizes = [1, 1800], strides = [1, 1]} : vector<1x2056xf32> to vector<1x1800xf32>
    %12 = vector.extract_strided_slice %4 {offsets = [0, 158], sizes = [1, 1800], strides = [1, 1]} : vector<1x2056xf32> to vector<1x1800xf32>
    %13 = vector.extract_strided_slice %4 {offsets = [0, 159], sizes = [1, 1800], strides = [1, 1]} : vector<1x2056xf32> to vector<1x1800xf32>
    %14 = vector.extract_strided_slice %1 {offsets = [0, 0, 0], sizes = [1, 4, 1], strides = [1, 1, 1]} : vector<9x4x1xf32> to vector<1x4x1xf32>
    %15 = vector.shape_cast %14 : vector<1x4x1xf32> to vector<4x1xf32>
    %16 = vector.broadcast %15 : vector<4x1xf32> to vector<4x1800xf32>
    %17 = vector.broadcast %5 : vector<1x1800xf32> to vector<4x1800xf32>
    %18 = arith.mulf %16, %17 : vector<4x1800xf32>
    %19 = vector.extract_strided_slice %1 {offsets = [1, 0, 0], sizes = [1, 4, 1], strides = [1, 1, 1]} : vector<9x4x1xf32> to vector<1x4x1xf32>
    %20 = vector.shape_cast %19 : vector<1x4x1xf32> to vector<4x1xf32>
    %21 = vector.broadcast %20 : vector<4x1xf32> to vector<4x1800xf32>
    %22 = vector.broadcast %6 : vector<1x1800xf32> to vector<4x1800xf32>
    %23 = arith.mulf %21, %22 : vector<4x1800xf32>
    %24 = arith.addf %18, %23 : vector<4x1800xf32>
    %25 = vector.extract_strided_slice %1 {offsets = [2, 0, 0], sizes = [1, 4, 1], strides = [1, 1, 1]} : vector<9x4x1xf32> to vector<1x4x1xf32>
    %26 = vector.shape_cast %25 : vector<1x4x1xf32> to vector<4x1xf32>
    %27 = vector.broadcast %26 : vector<4x1xf32> to vector<4x1800xf32>
    %28 = vector.broadcast %7 : vector<1x1800xf32> to vector<4x1800xf32>
    %29 = arith.mulf %27, %28 : vector<4x1800xf32>
    %30 = arith.addf %24, %29 : vector<4x1800xf32>
    %31 = vector.extract_strided_slice %1 {offsets = [3, 0, 0], sizes = [1, 4, 1], strides = [1, 1, 1]} : vector<9x4x1xf32> to vector<1x4x1xf32>
    %32 = vector.shape_cast %31 : vector<1x4x1xf32> to vector<4x1xf32>
    %33 = vector.broadcast %32 : vector<4x1xf32> to vector<4x1800xf32>
    %34 = vector.broadcast %8 : vector<1x1800xf32> to vector<4x1800xf32>
    %35 = arith.mulf %33, %34 : vector<4x1800xf32>
    %36 = arith.addf %30, %35 : vector<4x1800xf32>
    %37 = vector.extract_strided_slice %1 {offsets = [4, 0, 0], sizes = [1, 4, 1], strides = [1, 1, 1]} : vector<9x4x1xf32> to vector<1x4x1xf32>
    %38 = vector.shape_cast %37 : vector<1x4x1xf32> to vector<4x1xf32>
    %39 = vector.broadcast %38 : vector<4x1xf32> to vector<4x1800xf32>
    %40 = vector.broadcast %9 : vector<1x1800xf32> to vector<4x1800xf32>
    %41 = arith.mulf %39, %40 : vector<4x1800xf32>
    %42 = arith.addf %36, %41 : vector<4x1800xf32>
    %43 = vector.extract_strided_slice %1 {offsets = [5, 0, 0], sizes = [1, 4, 1], strides = [1, 1, 1]} : vector<9x4x1xf32> to vector<1x4x1xf32>
    %44 = vector.shape_cast %43 : vector<1x4x1xf32> to vector<4x1xf32>
    %45 = vector.broadcast %44 : vector<4x1xf32> to vector<4x1800xf32>
    %46 = vector.broadcast %10 : vector<1x1800xf32> to vector<4x1800xf32>
    %47 = arith.mulf %45, %46 : vector<4x1800xf32>
    %48 = arith.addf %42, %47 : vector<4x1800xf32>
    %49 = vector.extract_strided_slice %1 {offsets = [6, 0, 0], sizes = [1, 4, 1], strides = [1, 1, 1]} : vector<9x4x1xf32> to vector<1x4x1xf32>
    %50 = vector.shape_cast %49 : vector<1x4x1xf32> to vector<4x1xf32>
    %51 = vector.broadcast %50 : vector<4x1xf32> to vector<4x1800xf32>
    %52 = vector.broadcast %11 : vector<1x1800xf32> to vector<4x1800xf32>
    %53 = arith.mulf %51, %52 : vector<4x1800xf32>
    %54 = arith.addf %48, %53 : vector<4x1800xf32>
    %55 = vector.extract_strided_slice %1 {offsets = [7, 0, 0], sizes = [1, 4, 1], strides = [1, 1, 1]} : vector<9x4x1xf32> to vector<1x4x1xf32>
    %56 = vector.shape_cast %55 : vector<1x4x1xf32> to vector<4x1xf32>
    %57 = vector.broadcast %56 : vector<4x1xf32> to vector<4x1800xf32>
    %58 = vector.broadcast %12 : vector<1x1800xf32> to vector<4x1800xf32>
    %59 = arith.mulf %57, %58 : vector<4x1800xf32>
    %60 = arith.addf %54, %59 : vector<4x1800xf32>
    %61 = vector.extract_strided_slice %1 {offsets = [8, 0, 0], sizes = [1, 4, 1], strides = [1, 1, 1]} : vector<9x4x1xf32> to vector<1x4x1xf32>
    %62 = vector.shape_cast %61 : vector<1x4x1xf32> to vector<4x1xf32>
    %63 = vector.broadcast %62 : vector<4x1xf32> to vector<4x1800xf32>
    %64 = vector.broadcast %13 : vector<1x1800xf32> to vector<4x1800xf32>
    %65 = arith.mulf %63, %64 : vector<4x1800xf32>
    %66 = arith.addf %60, %65 : vector<4x1800xf32>
    %67 = vector.broadcast %2 : vector<4x1xf32> to vector<4x1800xf32>
    %68 = arith.addf %66, %67 : vector<4x1800xf32>
    %c0_6 = arith.constant 0 : index
    %c0_7 = arith.constant 0 : index
    %69 = vector.load %arg5[%c0_6, %c0_7] : memref<1769x512xf32, #tpu.memory_space<vmem>>, vector<1769x512xf32>
    %c0_8 = arith.constant 0 : index
    %c0_9 = arith.constant 0 : index
    %70 = vector.load %arg3[%c0_8, %c0_9] : memref<4x1xf32, #tpu.memory_space<vmem>>, vector<4x1xf32>
    %c0_10 = arith.constant 0 : index
    %c0_11 = arith.constant 0 : index
    %71 = vector.load %arg4[%c0_10, %c0_11] : memref<4x1xf32, #tpu.memory_space<vmem>>, vector<4x1xf32>
    %c0_12 = arith.constant 0 : index
    %c0_13 = arith.constant 0 : index
    %72 = vector.load %arg6[%c0_12, %c0_13] : memref<1x512xf32, #tpu.memory_space<vmem>>, vector<1x512xf32>
    %73 = vector.extract_strided_slice %68 {offsets = [0, 0], sizes = [4, 1769], strides = [1, 1]} : vector<4x1800xf32> to vector<4x1769xf32>
    %74 = vector.extract_strided_slice %68 {offsets = [0, 1], sizes = [4, 1769], strides = [1, 1]} : vector<4x1800xf32> to vector<4x1769xf32>
    %75 = arith.maximumf %73, %74 : vector<4x1769xf32>
    %76 = vector.extract_strided_slice %68 {offsets = [0, 30], sizes = [4, 1769], strides = [1, 1]} : vector<4x1800xf32> to vector<4x1769xf32>
    %77 = vector.extract_strided_slice %68 {offsets = [0, 31], sizes = [4, 1769], strides = [1, 1]} : vector<4x1800xf32> to vector<4x1769xf32>
    %78 = arith.maximumf %76, %77 : vector<4x1769xf32>
    %79 = arith.maximumf %75, %78 : vector<4x1769xf32>
    %cst_14 = arith.constant dense<0.000000e+00> : vector<4x512xf32>
    %80 = tpu.matmul %79, %69, %cst_14 {dimension_numbers = #tpu.dot_dimension_numbers<[1], [0], [0], [1], [0, 0, 1, 1], [], []>} : vector<4x1769xf32>, vector<1769x512xf32>, vector<4x512xf32> -> vector<4x512xf32>
    %cst_15 = arith.constant dense<0.000000e+00> : vector<4xf32>
    %81 = vector.multi_reduction <add>, %80, %cst_15 [1] : vector<4x512xf32> to vector<4xf32>
    %82 = vector.shape_cast %81 : vector<4xf32> to vector<4x1xf32>
    %cst_16 = arith.constant 0.00255102036 : f32
    %83 = vector.broadcast %cst_16 : f32 to vector<4x1xf32>
    %84 = arith.mulf %82, %83 : vector<4x1xf32>
    %85 = arith.mulf %80, %80 : vector<4x512xf32>
    %cst_17 = arith.constant dense<0.000000e+00> : vector<4xf32>
    %86 = vector.multi_reduction <add>, %85, %cst_17 [1] : vector<4x512xf32> to vector<4xf32>
    %87 = vector.shape_cast %86 : vector<4xf32> to vector<4x1xf32>
    %cst_18 = arith.constant 0.00255102036 : f32
    %88 = vector.broadcast %cst_18 : f32 to vector<4x1xf32>
    %89 = arith.mulf %87, %88 : vector<4x1xf32>
    %90 = arith.mulf %84, %84 : vector<4x1xf32>
    %91 = arith.subf %89, %90 : vector<4x1xf32>
    %cst_19 = arith.constant 0.000000e+00 : f32
    %92 = vector.broadcast %cst_19 : f32 to vector<4x1xf32>
    %93 = arith.maximumf %91, %92 : vector<4x1xf32>
    %cst_20 = arith.constant 9.99999974E-6 : f32
    %94 = vector.broadcast %cst_20 : f32 to vector<4x1xf32>
    %95 = arith.addf %93, %94 : vector<4x1xf32>
    %96 = math.rsqrt %95 : vector<4x1xf32>
    %97 = vector.broadcast %84 : vector<4x1xf32> to vector<4x512xf32>
    %98 = arith.subf %80, %97 : vector<4x512xf32>
    %99 = vector.broadcast %96 : vector<4x1xf32> to vector<4x512xf32>
    %100 = arith.mulf %98, %99 : vector<4x512xf32>
    %101 = vector.broadcast %70 : vector<4x1xf32> to vector<4x512xf32>
    %102 = arith.mulf %100, %101 : vector<4x512xf32>
    %103 = vector.broadcast %71 : vector<4x1xf32> to vector<4x512xf32>
    %104 = arith.addf %102, %103 : vector<4x512xf32>
    %cst_21 = arith.constant 0.000000e+00 : f32
    %105 = vector.broadcast %cst_21 : f32 to vector<4x512xf32>
    %106 = arith.maximumf %104, %105 : vector<4x512xf32>
    %107 = vector.broadcast %72 : vector<1x512xf32> to vector<4x512xf32>
    %108 = arith.mulf %106, %107 : vector<4x512xf32>
    %c0_22 = arith.constant 0 : index
    %c0_23 = arith.constant 0 : index
    %c0_24 = arith.constant 0 : index
    %109 = vector.load %arg7[%c0_22, %c0_23, %c0_24] : memref<9x8x4xf32, #tpu.memory_space<vmem>>, vector<9x8x4xf32>
    %c0_25 = arith.constant 0 : index
    %c0_26 = arith.constant 0 : index
    %110 = vector.load %arg8[%c0_25, %c0_26] : memref<8x1xf32, #tpu.memory_space<vmem>>, vector<8x1xf32>
    %cst_27 = arith.constant 0.000000e+00 : f32
    %111 = vector.broadcast %cst_27 : f32 to vector<4x128xf32>
    %112 = tpu.concatenate %111, %108, %111 in 1 : vector<4x128xf32>, vector<4x512xf32>, vector<4x128xf32> -> vector<4x768xf32>
    %113 = vector.extract_strided_slice %112 {offsets = [0, 111], sizes = [4, 512], strides = [1, 1]} : vector<4x768xf32> to vector<4x512xf32>
    %114 = vector.extract_strided_slice %112 {offsets = [0, 112], sizes = [4, 512], strides = [1, 1]} : vector<4x768xf32> to vector<4x512xf32>
    %115 = vector.extract_strided_slice %112 {offsets = [0, 113], sizes = [4, 512], strides = [1, 1]} : vector<4x768xf32> to vector<4x512xf32>
    %116 = vector.extract_strided_slice %112 {offsets = [0, 127], sizes = [4, 512], strides = [1, 1]} : vector<4x768xf32> to vector<4x512xf32>
    %117 = vector.extract_strided_slice %112 {offsets = [0, 128], sizes = [4, 512], strides = [1, 1]} : vector<4x768xf32> to vector<4x512xf32>
    %118 = vector.extract_strided_slice %112 {offsets = [0, 129], sizes = [4, 512], strides = [1, 1]} : vector<4x768xf32> to vector<4x512xf32>
    %119 = vector.extract_strided_slice %112 {offsets = [0, 143], sizes = [4, 512], strides = [1, 1]} : vector<4x768xf32> to vector<4x512xf32>
    %120 = vector.extract_strided_slice %112 {offsets = [0, 144], sizes = [4, 512], strides = [1, 1]} : vector<4x768xf32> to vector<4x512xf32>
    %121 = vector.extract_strided_slice %112 {offsets = [0, 145], sizes = [4, 512], strides = [1, 1]} : vector<4x768xf32> to vector<4x512xf32>
    %122 = vector.extract_strided_slice %109 {offsets = [0, 0, 0], sizes = [1, 8, 4], strides = [1, 1, 1]} : vector<9x8x4xf32> to vector<1x8x4xf32>
    %123 = vector.shape_cast %122 : vector<1x8x4xf32> to vector<8x4xf32>
    %cst_28 = arith.constant dense<0.000000e+00> : vector<8x512xf32>
    %124 = tpu.matmul %123, %113, %cst_28 {dimension_numbers = #tpu.dot_dimension_numbers<[1], [0], [0], [1], [0, 0, 1, 1], [], []>} : vector<8x4xf32>, vector<4x512xf32>, vector<8x512xf32> -> vector<8x512xf32>
    %125 = vector.extract_strided_slice %109 {offsets = [1, 0, 0], sizes = [1, 8, 4], strides = [1, 1, 1]} : vector<9x8x4xf32> to vector<1x8x4xf32>
    %126 = vector.shape_cast %125 : vector<1x8x4xf32> to vector<8x4xf32>
    %cst_29 = arith.constant dense<0.000000e+00> : vector<8x512xf32>
    %127 = tpu.matmul %126, %114, %cst_29 {dimension_numbers = #tpu.dot_dimension_numbers<[1], [0], [0], [1], [0, 0, 1, 1], [], []>} : vector<8x4xf32>, vector<4x512xf32>, vector<8x512xf32> -> vector<8x512xf32>
    %128 = arith.addf %124, %127 : vector<8x512xf32>
    %129 = vector.extract_strided_slice %109 {offsets = [2, 0, 0], sizes = [1, 8, 4], strides = [1, 1, 1]} : vector<9x8x4xf32> to vector<1x8x4xf32>
    %130 = vector.shape_cast %129 : vector<1x8x4xf32> to vector<8x4xf32>
    %cst_30 = arith.constant dense<0.000000e+00> : vector<8x512xf32>
    %131 = tpu.matmul %130, %115, %cst_30 {dimension_numbers = #tpu.dot_dimension_numbers<[1], [0], [0], [1], [0, 0, 1, 1], [], []>} : vector<8x4xf32>, vector<4x512xf32>, vector<8x512xf32> -> vector<8x512xf32>
    %132 = arith.addf %128, %131 : vector<8x512xf32>
    %133 = vector.extract_strided_slice %109 {offsets = [3, 0, 0], sizes = [1, 8, 4], strides = [1, 1, 1]} : vector<9x8x4xf32> to vector<1x8x4xf32>
    %134 = vector.shape_cast %133 : vector<1x8x4xf32> to vector<8x4xf32>
    %cst_31 = arith.constant dense<0.000000e+00> : vector<8x512xf32>
    %135 = tpu.matmul %134, %116, %cst_31 {dimension_numbers = #tpu.dot_dimension_numbers<[1], [0], [0], [1], [0, 0, 1, 1], [], []>} : vector<8x4xf32>, vector<4x512xf32>, vector<8x512xf32> -> vector<8x512xf32>
    %136 = arith.addf %132, %135 : vector<8x512xf32>
    %137 = vector.extract_strided_slice %109 {offsets = [4, 0, 0], sizes = [1, 8, 4], strides = [1, 1, 1]} : vector<9x8x4xf32> to vector<1x8x4xf32>
    %138 = vector.shape_cast %137 : vector<1x8x4xf32> to vector<8x4xf32>
    %cst_32 = arith.constant dense<0.000000e+00> : vector<8x512xf32>
    %139 = tpu.matmul %138, %117, %cst_32 {dimension_numbers = #tpu.dot_dimension_numbers<[1], [0], [0], [1], [0, 0, 1, 1], [], []>} : vector<8x4xf32>, vector<4x512xf32>, vector<8x512xf32> -> vector<8x512xf32>
    %140 = arith.addf %136, %139 : vector<8x512xf32>
    %141 = vector.extract_strided_slice %109 {offsets = [5, 0, 0], sizes = [1, 8, 4], strides = [1, 1, 1]} : vector<9x8x4xf32> to vector<1x8x4xf32>
    %142 = vector.shape_cast %141 : vector<1x8x4xf32> to vector<8x4xf32>
    %cst_33 = arith.constant dense<0.000000e+00> : vector<8x512xf32>
    %143 = tpu.matmul %142, %118, %cst_33 {dimension_numbers = #tpu.dot_dimension_numbers<[1], [0], [0], [1], [0, 0, 1, 1], [], []>} : vector<8x4xf32>, vector<4x512xf32>, vector<8x512xf32> -> vector<8x512xf32>
    %144 = arith.addf %140, %143 : vector<8x512xf32>
    %145 = vector.extract_strided_slice %109 {offsets = [6, 0, 0], sizes = [1, 8, 4], strides = [1, 1, 1]} : vector<9x8x4xf32> to vector<1x8x4xf32>
    %146 = vector.shape_cast %145 : vector<1x8x4xf32> to vector<8x4xf32>
    %cst_34 = arith.constant dense<0.000000e+00> : vector<8x512xf32>
    %147 = tpu.matmul %146, %119, %cst_34 {dimension_numbers = #tpu.dot_dimension_numbers<[1], [0], [0], [1], [0, 0, 1, 1], [], []>} : vector<8x4xf32>, vector<4x512xf32>, vector<8x512xf32> -> vector<8x512xf32>
    %148 = arith.addf %144, %147 : vector<8x512xf32>
    %149 = vector.extract_strided_slice %109 {offsets = [7, 0, 0], sizes = [1, 8, 4], strides = [1, 1, 1]} : vector<9x8x4xf32> to vector<1x8x4xf32>
    %150 = vector.shape_cast %149 : vector<1x8x4xf32> to vector<8x4xf32>
    %cst_35 = arith.constant dense<0.000000e+00> : vector<8x512xf32>
    %151 = tpu.matmul %150, %120, %cst_35 {dimension_numbers = #tpu.dot_dimension_numbers<[1], [0], [0], [1], [0, 0, 1, 1], [], []>} : vector<8x4xf32>, vector<4x512xf32>, vector<8x512xf32> -> vector<8x512xf32>
    %152 = arith.addf %148, %151 : vector<8x512xf32>
    %153 = vector.extract_strided_slice %109 {offsets = [8, 0, 0], sizes = [1, 8, 4], strides = [1, 1, 1]} : vector<9x8x4xf32> to vector<1x8x4xf32>
    %154 = vector.shape_cast %153 : vector<1x8x4xf32> to vector<8x4xf32>
    %cst_36 = arith.constant dense<0.000000e+00> : vector<8x512xf32>
    %155 = tpu.matmul %154, %121, %cst_36 {dimension_numbers = #tpu.dot_dimension_numbers<[1], [0], [0], [1], [0, 0, 1, 1], [], []>} : vector<8x4xf32>, vector<4x512xf32>, vector<8x512xf32> -> vector<8x512xf32>
    %156 = arith.addf %152, %155 : vector<8x512xf32>
    %157 = vector.broadcast %110 : vector<8x1xf32> to vector<8x512xf32>
    %158 = arith.addf %156, %157 : vector<8x512xf32>
    %c0_37 = arith.constant 0 : index
    %c0_38 = arith.constant 0 : index
    %159 = vector.load %arg11[%c0_37, %c0_38] : memref<495x162xf32, #tpu.memory_space<vmem>>, vector<495x162xf32>
    %c0_39 = arith.constant 0 : index
    %c0_40 = arith.constant 0 : index
    %160 = vector.load %arg9[%c0_39, %c0_40] : memref<8x1xf32, #tpu.memory_space<vmem>>, vector<8x1xf32>
    %c0_41 = arith.constant 0 : index
    %c0_42 = arith.constant 0 : index
    %161 = vector.load %arg10[%c0_41, %c0_42] : memref<8x1xf32, #tpu.memory_space<vmem>>, vector<8x1xf32>
    %c0_43 = arith.constant 0 : index
    %c0_44 = arith.constant 0 : index
    %162 = vector.load %arg12[%c0_43, %c0_44] : memref<1x162xf32, #tpu.memory_space<vmem>>, vector<1x162xf32>
    %163 = vector.extract_strided_slice %158 {offsets = [0, 0], sizes = [8, 495], strides = [1, 1]} : vector<8x512xf32> to vector<8x495xf32>
    %164 = vector.extract_strided_slice %158 {offsets = [0, 1], sizes = [8, 495], strides = [1, 1]} : vector<8x512xf32> to vector<8x495xf32>
    %165 = arith.maximumf %163, %164 : vector<8x495xf32>
    %166 = vector.extract_strided_slice %158 {offsets = [0, 16], sizes = [8, 495], strides = [1, 1]} : vector<8x512xf32> to vector<8x495xf32>
    %167 = vector.extract_strided_slice %158 {offsets = [0, 17], sizes = [8, 495], strides = [1, 1]} : vector<8x512xf32> to vector<8x495xf32>
    %168 = arith.maximumf %166, %167 : vector<8x495xf32>
    %169 = arith.maximumf %165, %168 : vector<8x495xf32>
    %cst_45 = arith.constant dense<0.000000e+00> : vector<8x162xf32>
    %170 = tpu.matmul %169, %159, %cst_45 {dimension_numbers = #tpu.dot_dimension_numbers<[1], [0], [0], [1], [0, 0, 1, 1], [], []>} : vector<8x495xf32>, vector<495x162xf32>, vector<8x162xf32> -> vector<8x162xf32>
    %cst_46 = arith.constant dense<0.000000e+00> : vector<8xf32>
    %171 = vector.multi_reduction <add>, %170, %cst_46 [1] : vector<8x162xf32> to vector<8xf32>
    %172 = vector.shape_cast %171 : vector<8xf32> to vector<8x1xf32>
    %cst_47 = arith.constant 0.0102040814 : f32
    %173 = vector.broadcast %cst_47 : f32 to vector<8x1xf32>
    %174 = arith.mulf %172, %173 : vector<8x1xf32>
    %175 = arith.mulf %170, %170 : vector<8x162xf32>
    %cst_48 = arith.constant dense<0.000000e+00> : vector<8xf32>
    %176 = vector.multi_reduction <add>, %175, %cst_48 [1] : vector<8x162xf32> to vector<8xf32>
    %177 = vector.shape_cast %176 : vector<8xf32> to vector<8x1xf32>
    %cst_49 = arith.constant 0.0102040814 : f32
    %178 = vector.broadcast %cst_49 : f32 to vector<8x1xf32>
    %179 = arith.mulf %177, %178 : vector<8x1xf32>
    %180 = arith.mulf %174, %174 : vector<8x1xf32>
    %181 = arith.subf %179, %180 : vector<8x1xf32>
    %cst_50 = arith.constant 0.000000e+00 : f32
    %182 = vector.broadcast %cst_50 : f32 to vector<8x1xf32>
    %183 = arith.maximumf %181, %182 : vector<8x1xf32>
    %cst_51 = arith.constant 9.99999974E-6 : f32
    %184 = vector.broadcast %cst_51 : f32 to vector<8x1xf32>
    %185 = arith.addf %183, %184 : vector<8x1xf32>
    %186 = math.rsqrt %185 : vector<8x1xf32>
    %187 = vector.broadcast %174 : vector<8x1xf32> to vector<8x162xf32>
    %188 = arith.subf %170, %187 : vector<8x162xf32>
    %189 = vector.broadcast %186 : vector<8x1xf32> to vector<8x162xf32>
    %190 = arith.mulf %188, %189 : vector<8x162xf32>
    %191 = vector.broadcast %160 : vector<8x1xf32> to vector<8x162xf32>
    %192 = arith.mulf %190, %191 : vector<8x162xf32>
    %193 = vector.broadcast %161 : vector<8x1xf32> to vector<8x162xf32>
    %194 = arith.addf %192, %193 : vector<8x162xf32>
    %cst_52 = arith.constant 0.000000e+00 : f32
    %195 = vector.broadcast %cst_52 : f32 to vector<8x162xf32>
    %196 = arith.maximumf %194, %195 : vector<8x162xf32>
    %197 = vector.broadcast %162 : vector<1x162xf32> to vector<8x162xf32>
    %198 = arith.mulf %196, %197 : vector<8x162xf32>
    %c0_53 = arith.constant 0 : index
    %c0_54 = arith.constant 0 : index
    %c0_55 = arith.constant 0 : index
    %199 = vector.load %arg13[%c0_53, %c0_54, %c0_55] : memref<9x16x8xf32, #tpu.memory_space<vmem>>, vector<9x16x8xf32>
    %c0_56 = arith.constant 0 : index
    %c0_57 = arith.constant 0 : index
    %200 = vector.load %arg14[%c0_56, %c0_57] : memref<16x1xf32, #tpu.memory_space<vmem>>, vector<16x1xf32>
    %cst_58 = arith.constant 0.000000e+00 : f32
    %201 = vector.broadcast %cst_58 : f32 to vector<8x128xf32>
    %202 = tpu.concatenate %201, %198, %201 in 1 : vector<8x128xf32>, vector<8x162xf32>, vector<8x128xf32> -> vector<8x418xf32>
    %203 = vector.extract_strided_slice %202 {offsets = [0, 118], sizes = [8, 162], strides = [1, 1]} : vector<8x418xf32> to vector<8x162xf32>
    %204 = vector.extract_strided_slice %202 {offsets = [0, 119], sizes = [8, 162], strides = [1, 1]} : vector<8x418xf32> to vector<8x162xf32>
    %205 = vector.extract_strided_slice %202 {offsets = [0, 120], sizes = [8, 162], strides = [1, 1]} : vector<8x418xf32> to vector<8x162xf32>
    %206 = vector.extract_strided_slice %202 {offsets = [0, 127], sizes = [8, 162], strides = [1, 1]} : vector<8x418xf32> to vector<8x162xf32>
    %207 = vector.extract_strided_slice %202 {offsets = [0, 128], sizes = [8, 162], strides = [1, 1]} : vector<8x418xf32> to vector<8x162xf32>
    %208 = vector.extract_strided_slice %202 {offsets = [0, 129], sizes = [8, 162], strides = [1, 1]} : vector<8x418xf32> to vector<8x162xf32>
    %209 = vector.extract_strided_slice %202 {offsets = [0, 136], sizes = [8, 162], strides = [1, 1]} : vector<8x418xf32> to vector<8x162xf32>
    %210 = vector.extract_strided_slice %202 {offsets = [0, 137], sizes = [8, 162], strides = [1, 1]} : vector<8x418xf32> to vector<8x162xf32>
    %211 = vector.extract_strided_slice %202 {offsets = [0, 138], sizes = [8, 162], strides = [1, 1]} : vector<8x418xf32> to vector<8x162xf32>
    %212 = vector.extract_strided_slice %199 {offsets = [0, 0, 0], sizes = [1, 16, 8], strides = [1, 1, 1]} : vector<9x16x8xf32> to vector<1x16x8xf32>
    %213 = vector.shape_cast %212 : vector<1x16x8xf32> to vector<16x8xf32>
    %cst_59 = arith.constant dense<0.000000e+00> : vector<16x162xf32>
    %214 = tpu.matmul %213, %203, %cst_59 {dimension_numbers = #tpu.dot_dimension_numbers<[1], [0], [0], [1], [0, 0, 1, 1], [], []>} : vector<16x8xf32>, vector<8x162xf32>, vector<16x162xf32> -> vector<16x162xf32>
    %215 = vector.extract_strided_slice %199 {offsets = [1, 0, 0], sizes = [1, 16, 8], strides = [1, 1, 1]} : vector<9x16x8xf32> to vector<1x16x8xf32>
    %216 = vector.shape_cast %215 : vector<1x16x8xf32> to vector<16x8xf32>
    %cst_60 = arith.constant dense<0.000000e+00> : vector<16x162xf32>
    %217 = tpu.matmul %216, %204, %cst_60 {dimension_numbers = #tpu.dot_dimension_numbers<[1], [0], [0], [1], [0, 0, 1, 1], [], []>} : vector<16x8xf32>, vector<8x162xf32>, vector<16x162xf32> -> vector<16x162xf32>
    %218 = arith.addf %214, %217 : vector<16x162xf32>
    %219 = vector.extract_strided_slice %199 {offsets = [2, 0, 0], sizes = [1, 16, 8], strides = [1, 1, 1]} : vector<9x16x8xf32> to vector<1x16x8xf32>
    %220 = vector.shape_cast %219 : vector<1x16x8xf32> to vector<16x8xf32>
    %cst_61 = arith.constant dense<0.000000e+00> : vector<16x162xf32>
    %221 = tpu.matmul %220, %205, %cst_61 {dimension_numbers = #tpu.dot_dimension_numbers<[1], [0], [0], [1], [0, 0, 1, 1], [], []>} : vector<16x8xf32>, vector<8x162xf32>, vector<16x162xf32> -> vector<16x162xf32>
    %222 = arith.addf %218, %221 : vector<16x162xf32>
    %223 = vector.extract_strided_slice %199 {offsets = [3, 0, 0], sizes = [1, 16, 8], strides = [1, 1, 1]} : vector<9x16x8xf32> to vector<1x16x8xf32>
    %224 = vector.shape_cast %223 : vector<1x16x8xf32> to vector<16x8xf32>
    %cst_62 = arith.constant dense<0.000000e+00> : vector<16x162xf32>
    %225 = tpu.matmul %224, %206, %cst_62 {dimension_numbers = #tpu.dot_dimension_numbers<[1], [0], [0], [1], [0, 0, 1, 1], [], []>} : vector<16x8xf32>, vector<8x162xf32>, vector<16x162xf32> -> vector<16x162xf32>
    %226 = arith.addf %222, %225 : vector<16x162xf32>
    %227 = vector.extract_strided_slice %199 {offsets = [4, 0, 0], sizes = [1, 16, 8], strides = [1, 1, 1]} : vector<9x16x8xf32> to vector<1x16x8xf32>
    %228 = vector.shape_cast %227 : vector<1x16x8xf32> to vector<16x8xf32>
    %cst_63 = arith.constant dense<0.000000e+00> : vector<16x162xf32>
    %229 = tpu.matmul %228, %207, %cst_63 {dimension_numbers = #tpu.dot_dimension_numbers<[1], [0], [0], [1], [0, 0, 1, 1], [], []>} : vector<16x8xf32>, vector<8x162xf32>, vector<16x162xf32> -> vector<16x162xf32>
    %230 = arith.addf %226, %229 : vector<16x162xf32>
    %231 = vector.extract_strided_slice %199 {offsets = [5, 0, 0], sizes = [1, 16, 8], strides = [1, 1, 1]} : vector<9x16x8xf32> to vector<1x16x8xf32>
    %232 = vector.shape_cast %231 : vector<1x16x8xf32> to vector<16x8xf32>
    %cst_64 = arith.constant dense<0.000000e+00> : vector<16x162xf32>
    %233 = tpu.matmul %232, %208, %cst_64 {dimension_numbers = #tpu.dot_dimension_numbers<[1], [0], [0], [1], [0, 0, 1, 1], [], []>} : vector<16x8xf32>, vector<8x162xf32>, vector<16x162xf32> -> vector<16x162xf32>
    %234 = arith.addf %230, %233 : vector<16x162xf32>
    %235 = vector.extract_strided_slice %199 {offsets = [6, 0, 0], sizes = [1, 16, 8], strides = [1, 1, 1]} : vector<9x16x8xf32> to vector<1x16x8xf32>
    %236 = vector.shape_cast %235 : vector<1x16x8xf32> to vector<16x8xf32>
    %cst_65 = arith.constant dense<0.000000e+00> : vector<16x162xf32>
    %237 = tpu.matmul %236, %209, %cst_65 {dimension_numbers = #tpu.dot_dimension_numbers<[1], [0], [0], [1], [0, 0, 1, 1], [], []>} : vector<16x8xf32>, vector<8x162xf32>, vector<16x162xf32> -> vector<16x162xf32>
    %238 = arith.addf %234, %237 : vector<16x162xf32>
    %239 = vector.extract_strided_slice %199 {offsets = [7, 0, 0], sizes = [1, 16, 8], strides = [1, 1, 1]} : vector<9x16x8xf32> to vector<1x16x8xf32>
    %240 = vector.shape_cast %239 : vector<1x16x8xf32> to vector<16x8xf32>
    %cst_66 = arith.constant dense<0.000000e+00> : vector<16x162xf32>
    %241 = tpu.matmul %240, %210, %cst_66 {dimension_numbers = #tpu.dot_dimension_numbers<[1], [0], [0], [1], [0, 0, 1, 1], [], []>} : vector<16x8xf32>, vector<8x162xf32>, vector<16x162xf32> -> vector<16x162xf32>
    %242 = arith.addf %238, %241 : vector<16x162xf32>
    %243 = vector.extract_strided_slice %199 {offsets = [8, 0, 0], sizes = [1, 16, 8], strides = [1, 1, 1]} : vector<9x16x8xf32> to vector<1x16x8xf32>
    %244 = vector.shape_cast %243 : vector<1x16x8xf32> to vector<16x8xf32>
    %cst_67 = arith.constant dense<0.000000e+00> : vector<16x162xf32>
    %245 = tpu.matmul %244, %211, %cst_67 {dimension_numbers = #tpu.dot_dimension_numbers<[1], [0], [0], [1], [0, 0, 1, 1], [], []>} : vector<16x8xf32>, vector<8x162xf32>, vector<16x162xf32> -> vector<16x162xf32>
    %246 = arith.addf %242, %245 : vector<16x162xf32>
    %247 = vector.broadcast %200 : vector<16x1xf32> to vector<16x162xf32>
    %248 = arith.addf %246, %247 : vector<16x162xf32>
    %c0_68 = arith.constant 0 : index
    %c0_69 = arith.constant 0 : index
    %249 = vector.load %arg17[%c0_68, %c0_69] : memref<152x50xf32, #tpu.memory_space<vmem>>, vector<152x50xf32>
    %c0_70 = arith.constant 0 : index
    %c0_71 = arith.constant 0 : index
    %250 = vector.load %arg15[%c0_70, %c0_71] : memref<16x1xf32, #tpu.memory_space<vmem>>, vector<16x1xf32>
    %c0_72 = arith.constant 0 : index
    %c0_73 = arith.constant 0 : index
    %251 = vector.load %arg16[%c0_72, %c0_73] : memref<16x1xf32, #tpu.memory_space<vmem>>, vector<16x1xf32>
    %252 = vector.extract_strided_slice %248 {offsets = [0, 0], sizes = [16, 152], strides = [1, 1]} : vector<16x162xf32> to vector<16x152xf32>
    %253 = vector.extract_strided_slice %248 {offsets = [0, 1], sizes = [16, 152], strides = [1, 1]} : vector<16x162xf32> to vector<16x152xf32>
    %254 = arith.maximumf %252, %253 : vector<16x152xf32>
    %255 = vector.extract_strided_slice %248 {offsets = [0, 9], sizes = [16, 152], strides = [1, 1]} : vector<16x162xf32> to vector<16x152xf32>
    %256 = vector.extract_strided_slice %248 {offsets = [0, 10], sizes = [16, 152], strides = [1, 1]} : vector<16x162xf32> to vector<16x152xf32>
    %257 = arith.maximumf %255, %256 : vector<16x152xf32>
    %258 = arith.maximumf %254, %257 : vector<16x152xf32>
    %cst_74 = arith.constant dense<0.000000e+00> : vector<16x50xf32>
    %259 = tpu.matmul %258, %249, %cst_74 {dimension_numbers = #tpu.dot_dimension_numbers<[1], [0], [0], [1], [0, 0, 1, 1], [], []>} : vector<16x152xf32>, vector<152x50xf32>, vector<16x50xf32> -> vector<16x50xf32>
    %cst_75 = arith.constant dense<0.000000e+00> : vector<16xf32>
    %260 = vector.multi_reduction <add>, %259, %cst_75 [1] : vector<16x50xf32> to vector<16xf32>
    %261 = vector.shape_cast %260 : vector<16xf32> to vector<16x1xf32>
    %cst_76 = arith.constant 0.055555556 : f32
    %262 = vector.broadcast %cst_76 : f32 to vector<16x1xf32>
    %263 = arith.mulf %261, %262 : vector<16x1xf32>
    %264 = arith.mulf %259, %259 : vector<16x50xf32>
    %cst_77 = arith.constant dense<0.000000e+00> : vector<16xf32>
    %265 = vector.multi_reduction <add>, %264, %cst_77 [1] : vector<16x50xf32> to vector<16xf32>
    %266 = vector.shape_cast %265 : vector<16xf32> to vector<16x1xf32>
    %cst_78 = arith.constant 0.055555556 : f32
    %267 = vector.broadcast %cst_78 : f32 to vector<16x1xf32>
    %268 = arith.mulf %266, %267 : vector<16x1xf32>
    %269 = arith.mulf %263, %263 : vector<16x1xf32>
    %270 = arith.subf %268, %269 : vector<16x1xf32>
    %cst_79 = arith.constant 0.000000e+00 : f32
    %271 = vector.broadcast %cst_79 : f32 to vector<16x1xf32>
    %272 = arith.maximumf %270, %271 : vector<16x1xf32>
    %cst_80 = arith.constant 9.99999974E-6 : f32
    %273 = vector.broadcast %cst_80 : f32 to vector<16x1xf32>
    %274 = arith.addf %272, %273 : vector<16x1xf32>
    %275 = math.rsqrt %274 : vector<16x1xf32>
    %276 = vector.broadcast %263 : vector<16x1xf32> to vector<16x50xf32>
    %277 = arith.subf %259, %276 : vector<16x50xf32>
    %278 = vector.broadcast %275 : vector<16x1xf32> to vector<16x50xf32>
    %279 = arith.mulf %277, %278 : vector<16x50xf32>
    %280 = vector.broadcast %250 : vector<16x1xf32> to vector<16x50xf32>
    %281 = arith.mulf %279, %280 : vector<16x50xf32>
    %282 = vector.broadcast %251 : vector<16x1xf32> to vector<16x50xf32>
    %283 = arith.addf %281, %282 : vector<16x50xf32>
    %cst_81 = arith.constant 0.000000e+00 : f32
    %284 = vector.broadcast %cst_81 : f32 to vector<16x50xf32>
    %285 = arith.maximumf %283, %284 : vector<16x50xf32>
    %c0_82 = arith.constant 0 : index
    %c0_83 = arith.constant 0 : index
    %c0_84 = arith.constant 0 : index
    %286 = vector.load %arg18[%c0_82, %c0_83, %c0_84] : memref<9x10x16xf32, #tpu.memory_space<vmem>>, vector<9x10x16xf32>
    %c0_85 = arith.constant 0 : index
    %c0_86 = arith.constant 0 : index
    %287 = vector.load %arg19[%c0_85, %c0_86] : memref<10x1xf32, #tpu.memory_space<vmem>>, vector<10x1xf32>
    %cst_87 = arith.constant 0.000000e+00 : f32
    %288 = vector.broadcast %cst_87 : f32 to vector<16x128xf32>
    %289 = tpu.concatenate %288, %285, %288 in 1 : vector<16x128xf32>, vector<16x50xf32>, vector<16x128xf32> -> vector<16x306xf32>
    %290 = vector.extract_strided_slice %289 {offsets = [0, 122], sizes = [16, 50], strides = [1, 1]} : vector<16x306xf32> to vector<16x50xf32>
    %291 = vector.extract_strided_slice %289 {offsets = [0, 123], sizes = [16, 50], strides = [1, 1]} : vector<16x306xf32> to vector<16x50xf32>
    %292 = vector.extract_strided_slice %289 {offsets = [0, 124], sizes = [16, 50], strides = [1, 1]} : vector<16x306xf32> to vector<16x50xf32>
    %293 = vector.extract_strided_slice %289 {offsets = [0, 127], sizes = [16, 50], strides = [1, 1]} : vector<16x306xf32> to vector<16x50xf32>
    %294 = vector.extract_strided_slice %289 {offsets = [0, 128], sizes = [16, 50], strides = [1, 1]} : vector<16x306xf32> to vector<16x50xf32>
    %295 = vector.extract_strided_slice %289 {offsets = [0, 129], sizes = [16, 50], strides = [1, 1]} : vector<16x306xf32> to vector<16x50xf32>
    %296 = vector.extract_strided_slice %289 {offsets = [0, 132], sizes = [16, 50], strides = [1, 1]} : vector<16x306xf32> to vector<16x50xf32>
    %297 = vector.extract_strided_slice %289 {offsets = [0, 133], sizes = [16, 50], strides = [1, 1]} : vector<16x306xf32> to vector<16x50xf32>
    %298 = vector.extract_strided_slice %289 {offsets = [0, 134], sizes = [16, 50], strides = [1, 1]} : vector<16x306xf32> to vector<16x50xf32>
    %299 = vector.extract_strided_slice %286 {offsets = [0, 0, 0], sizes = [1, 10, 16], strides = [1, 1, 1]} : vector<9x10x16xf32> to vector<1x10x16xf32>
    %300 = vector.shape_cast %299 : vector<1x10x16xf32> to vector<10x16xf32>
    %cst_88 = arith.constant dense<0.000000e+00> : vector<10x50xf32>
    %301 = tpu.matmul %300, %290, %cst_88 {dimension_numbers = #tpu.dot_dimension_numbers<[1], [0], [0], [1], [0, 0, 1, 1], [], []>} : vector<10x16xf32>, vector<16x50xf32>, vector<10x50xf32> -> vector<10x50xf32>
    %302 = vector.extract_strided_slice %286 {offsets = [1, 0, 0], sizes = [1, 10, 16], strides = [1, 1, 1]} : vector<9x10x16xf32> to vector<1x10x16xf32>
    %303 = vector.shape_cast %302 : vector<1x10x16xf32> to vector<10x16xf32>
    %cst_89 = arith.constant dense<0.000000e+00> : vector<10x50xf32>
    %304 = tpu.matmul %303, %291, %cst_89 {dimension_numbers = #tpu.dot_dimension_numbers<[1], [0], [0], [1], [0, 0, 1, 1], [], []>} : vector<10x16xf32>, vector<16x50xf32>, vector<10x50xf32> -> vector<10x50xf32>
    %305 = arith.addf %301, %304 : vector<10x50xf32>
    %306 = vector.extract_strided_slice %286 {offsets = [2, 0, 0], sizes = [1, 10, 16], strides = [1, 1, 1]} : vector<9x10x16xf32> to vector<1x10x16xf32>
    %307 = vector.shape_cast %306 : vector<1x10x16xf32> to vector<10x16xf32>
    %cst_90 = arith.constant dense<0.000000e+00> : vector<10x50xf32>
    %308 = tpu.matmul %307, %292, %cst_90 {dimension_numbers = #tpu.dot_dimension_numbers<[1], [0], [0], [1], [0, 0, 1, 1], [], []>} : vector<10x16xf32>, vector<16x50xf32>, vector<10x50xf32> -> vector<10x50xf32>
    %309 = arith.addf %305, %308 : vector<10x50xf32>
    %310 = vector.extract_strided_slice %286 {offsets = [3, 0, 0], sizes = [1, 10, 16], strides = [1, 1, 1]} : vector<9x10x16xf32> to vector<1x10x16xf32>
    %311 = vector.shape_cast %310 : vector<1x10x16xf32> to vector<10x16xf32>
    %cst_91 = arith.constant dense<0.000000e+00> : vector<10x50xf32>
    %312 = tpu.matmul %311, %293, %cst_91 {dimension_numbers = #tpu.dot_dimension_numbers<[1], [0], [0], [1], [0, 0, 1, 1], [], []>} : vector<10x16xf32>, vector<16x50xf32>, vector<10x50xf32> -> vector<10x50xf32>
    %313 = arith.addf %309, %312 : vector<10x50xf32>
    %314 = vector.extract_strided_slice %286 {offsets = [4, 0, 0], sizes = [1, 10, 16], strides = [1, 1, 1]} : vector<9x10x16xf32> to vector<1x10x16xf32>
    %315 = vector.shape_cast %314 : vector<1x10x16xf32> to vector<10x16xf32>
    %cst_92 = arith.constant dense<0.000000e+00> : vector<10x50xf32>
    %316 = tpu.matmul %315, %294, %cst_92 {dimension_numbers = #tpu.dot_dimension_numbers<[1], [0], [0], [1], [0, 0, 1, 1], [], []>} : vector<10x16xf32>, vector<16x50xf32>, vector<10x50xf32> -> vector<10x50xf32>
    %317 = arith.addf %313, %316 : vector<10x50xf32>
    %318 = vector.extract_strided_slice %286 {offsets = [5, 0, 0], sizes = [1, 10, 16], strides = [1, 1, 1]} : vector<9x10x16xf32> to vector<1x10x16xf32>
    %319 = vector.shape_cast %318 : vector<1x10x16xf32> to vector<10x16xf32>
    %cst_93 = arith.constant dense<0.000000e+00> : vector<10x50xf32>
    %320 = tpu.matmul %319, %295, %cst_93 {dimension_numbers = #tpu.dot_dimension_numbers<[1], [0], [0], [1], [0, 0, 1, 1], [], []>} : vector<10x16xf32>, vector<16x50xf32>, vector<10x50xf32> -> vector<10x50xf32>
    %321 = arith.addf %317, %320 : vector<10x50xf32>
    %322 = vector.extract_strided_slice %286 {offsets = [6, 0, 0], sizes = [1, 10, 16], strides = [1, 1, 1]} : vector<9x10x16xf32> to vector<1x10x16xf32>
    %323 = vector.shape_cast %322 : vector<1x10x16xf32> to vector<10x16xf32>
    %cst_94 = arith.constant dense<0.000000e+00> : vector<10x50xf32>
    %324 = tpu.matmul %323, %296, %cst_94 {dimension_numbers = #tpu.dot_dimension_numbers<[1], [0], [0], [1], [0, 0, 1, 1], [], []>} : vector<10x16xf32>, vector<16x50xf32>, vector<10x50xf32> -> vector<10x50xf32>
    %325 = arith.addf %321, %324 : vector<10x50xf32>
    %326 = vector.extract_strided_slice %286 {offsets = [7, 0, 0], sizes = [1, 10, 16], strides = [1, 1, 1]} : vector<9x10x16xf32> to vector<1x10x16xf32>
    %327 = vector.shape_cast %326 : vector<1x10x16xf32> to vector<10x16xf32>
    %cst_95 = arith.constant dense<0.000000e+00> : vector<10x50xf32>
    %328 = tpu.matmul %327, %297, %cst_95 {dimension_numbers = #tpu.dot_dimension_numbers<[1], [0], [0], [1], [0, 0, 1, 1], [], []>} : vector<10x16xf32>, vector<16x50xf32>, vector<10x50xf32> -> vector<10x50xf32>
    %329 = arith.addf %325, %328 : vector<10x50xf32>
    %330 = vector.extract_strided_slice %286 {offsets = [8, 0, 0], sizes = [1, 10, 16], strides = [1, 1, 1]} : vector<9x10x16xf32> to vector<1x10x16xf32>
    %331 = vector.shape_cast %330 : vector<1x10x16xf32> to vector<10x16xf32>
    %cst_96 = arith.constant dense<0.000000e+00> : vector<10x50xf32>
    %332 = tpu.matmul %331, %298, %cst_96 {dimension_numbers = #tpu.dot_dimension_numbers<[1], [0], [0], [1], [0, 0, 1, 1], [], []>} : vector<10x16xf32>, vector<16x50xf32>, vector<10x50xf32> -> vector<10x50xf32>
    %333 = arith.addf %329, %332 : vector<10x50xf32>
    %334 = vector.broadcast %287 : vector<10x1xf32> to vector<10x50xf32>
    %335 = arith.addf %333, %334 : vector<10x50xf32>
    %c0_97 = arith.constant 0 : index
    %c0_98 = arith.constant 0 : index
    %336 = vector.load %arg20[%c0_97, %c0_98] : memref<50x2xf32, #tpu.memory_space<vmem>>, vector<50x2xf32>
    %cst_99 = arith.constant dense<0.000000e+00> : vector<10x2xf32>
    %337 = tpu.matmul %335, %336, %cst_99 {dimension_numbers = #tpu.dot_dimension_numbers<[1], [0], [0], [1], [0, 0, 1, 1], [], []>} : vector<10x50xf32>, vector<50x2xf32>, vector<10x2xf32> -> vector<10x2xf32>
    %c0_100 = arith.constant 0 : index
    %c0_101 = arith.constant 0 : index
    %338 = vector.load %arg21[%c0_100, %c0_101] : memref<10x2xf32, #tpu.memory_space<vmem>>, vector<10x2xf32>
    tpu.vector_store %arg21[%c0_100, %c0_101], %337 {strides = array<i32>} : memref<10x2xf32, #tpu.memory_space<vmem>>, vector<10x2xf32>,
    return
  }
}

</mosaic_0001>

<llo_original>
// kernel: net_forward.1
$region0: #{net_forward.1}
  #allocation0 [shape = 'u32[]', space=smem, size = 0x4, offset = 0x4, fixed_abs, tag = 'smem constant byte address 0x4 - core index']
  #allocation1 [shape = 'u32[72,128]{1,0:T(1,128)}', space=vmem, size = 0x9000, scoped, tag = 'internal scratch']
  %s0 = inlined_call_operand.vmem [shape: f32[1,1800], index: 0, kind: input, shape index: {}]
  %s1 = inlined_call_operand.vmem [shape: f32[9,4,1], index: 1, kind: input, shape index: {}]
  %s2 = inlined_call_operand.vmem [shape: f32[4,1], index: 2, kind: input, shape index: {}]
  %s3 = inlined_call_operand.vmem [shape: f32[4,1], index: 3, kind: input, shape index: {}]
  %s4 = inlined_call_operand.vmem [shape: f32[4,1], index: 4, kind: input, shape index: {}]
  %s5 = inlined_call_operand.hbm [shape: f32[1769,512], index: 5, kind: input, shape index: {}]
  %s6 = inlined_call_operand.hbm [shape: f32[1,512], index: 6, kind: input, shape index: {}]
  %s7 = inlined_call_operand.vmem [shape: f32[9,8,4], index: 7, kind: input, shape index: {}]
  %s8 = inlined_call_operand.vmem [shape: f32[8,1], index: 8, kind: input, shape index: {}]
  %s9 = inlined_call_operand.vmem [shape: f32[8,1], index: 9, kind: input, shape index: {}]
  %s10 = inlined_call_operand.vmem [shape: f32[8,1], index: 10, kind: input, shape index: {}]
  %s11 = inlined_call_operand.hbm [shape: f32[495,162], index: 11, kind: input, shape index: {}]
  %s12 = inlined_call_operand.hbm [shape: f32[1,162], index: 12, kind: input, shape index: {}]
  %s13 = inlined_call_operand.vmem [shape: f32[9,16,8], index: 13, kind: input, shape index: {}]
  %s14 = inlined_call_operand.vmem [shape: f32[16,1], index: 14, kind: input, shape index: {}]
  %s15 = inlined_call_operand.vmem [shape: f32[16,1], index: 15, kind: input, shape index: {}]
  %s16 = inlined_call_operand.vmem [shape: f32[16,1], index: 16, kind: input, shape index: {}]
  %s17 = inlined_call_operand.hbm [shape: f32[152,50], index: 17, kind: input, shape index: {}]
  %s18 = inlined_call_operand.vmem [shape: f32[9,10,16], index: 18, kind: input, shape index: {}]
  %s19 = inlined_call_operand.vmem [shape: f32[10,1], index: 19, kind: input, shape index: {}]
  %s20 = inlined_call_operand.hbm [shape: f32[50,2], index: 20, kind: input, shape index: {}]
  %s21 = inlined_call_operand.vmem [shape: f32[10,2], index: 21, kind: output, shape index: {}]
  %s22 = sld [smem:[#allocation0]]
  $region118: #{net_forward.1} parent=0
    _
  %s24 = ssub.s32 1, %s22
  %s25 = scalar_select 0, %s24, %s22
  $region1: #{net_forward.1} parent=0
    #allocation2 [shape = 'u8[3637248]{0}', space=vmem, size = 0x378000, scoped, tag = 'input window, operand 5, single buffered']
    #allocation3 [shape = 's32[1]{0}', space=sflag, size = 0x4, scoped, tag = 'scoped memory for net_forward.1']
    #allocation4 [shape = 'u8[2048]{0}', space=vmem, size = 0x800, scoped, tag = 'input window, operand 6, single buffered']
    #allocation5 [shape = 's32[1]{0}', space=sflag, size = 0x4, scoped, tag = 'scoped memory for net_forward.1']
    #allocation6 [shape = 'u8[507904]{0}', space=vmem, size = 0x7c000, scoped, tag = 'input window, operand 11, single buffered']
    #allocation7 [shape = 'u8[1024]{0}', space=vmem, size = 0x400, scoped, tag = 'input window, operand 12, single buffered']
    #allocation8 [shape = 's32[1]{0}', space=sflag, size = 0x4, scoped, tag = 'scoped memory for net_forward.1']
    #allocation9 [shape = 'u8[77824]{0}', space=vmem, size = 0x13000, scoped, tag = 'input window, operand 17, single buffered']
    #allocation10 [shape = 'u8[28672]{0}', space=vmem, size = 0x7000, scoped, tag = 'input window, operand 20, single buffered']
    #allocation11 [shape = 's32[1]{0}', space=sflag, size = 0x4, scoped, tag = 'scoped memory for net_forward.1']
    %26 = vsyncpa [#allocation3], 0
    %27 = vsyncpa [#allocation5], 0
    %28 = vsyncpa [#allocation8], 0
    %29 = vsyncpa [#allocation11], 0
    // Predicated region
    $region2: #{net_forward.1} parent=1 // pred_check
      _
    $region3: #{net_forward.1} parent=1 // pred_check_branch
      %31 = sbr.rel (0) target = $region5
    $region4: #{net_forward.1} parent=1 // pred_region
      _
    $region5: #{net_forward.1} parent=1 // pred_fallthru
      _
    // Predicated region
    $region6: #{net_forward.1} parent=1 // pred_check
      _
    $region7: #{net_forward.1} parent=1 // pred_check_branch
      %33 = sbr.rel (0) target = $region9
    $region8: #{net_forward.1} parent=1 // pred_region
      _
    $region9: #{net_forward.1} parent=1 // pred_fallthru
      _
    // Predicated region
    $region10: #{net_forward.1} parent=1 // pred_check
      _
    $region11: #{net_forward.1} parent=1 // pred_check_branch
      %35 = sbr.rel (0) target = $region13
    $region12: #{net_forward.1} parent=1 // pred_region
      _
    $region13: #{net_forward.1} parent=1 // pred_fallthru
      _
    // Predicated region
    $region14: #{net_forward.1} parent=1 // pred_check
      _
    $region15: #{net_forward.1} parent=1 // pred_check_branch
      %37 = sbr.rel (0) target = $region17
    $region16: #{net_forward.1} parent=1 // pred_region
      _
    $region17: #{net_forward.1} parent=1 // pred_fallthru
      _
    // Predicated region
    $region18: #{net_forward.1} parent=1 // pred_check
      _
    $region19: #{net_forward.1} parent=1 // pred_check_branch
      %39 = sbr.rel (0) target = $region21
    $region20: #{net_forward.1} parent=1 // pred_region
      _
    $region21: #{net_forward.1} parent=1 // pred_fallthru
      _
    // Predicated region
    $region22: #{net_forward.1} parent=1 // pred_check
      _
    $region23: #{net_forward.1} parent=1 // pred_check_branch
      %41 = sbr.rel (0) target = $region25
    $region24: #{net_forward.1} parent=1 // pred_region
      %43 = vsyncadd [#allocation3], 0
      %s44 = sshll.u32 %s5, 4
      %s45 = int_to_ptr.hbm [resolvable:$true] %s44
      %s46 = sshll.u32 [#allocation2], 4
      %s47 = int_to_ptr.vmem [resolvable:$true] %s46
      %52 = dma.hbm_to_vmem [thread:$0]  %s45, 113664, %s47, [#allocation3], 512, 512, 32
    $region25: #{net_forward.1} parent=1 // pred_fallthru
      _
    // Predicated region
    $region26: #{net_forward.1} parent=1 // pred_check
      _
    $region27: #{net_forward.1} parent=1 // pred_check_branch
      %54 = sbr.rel (0) target = $region29
    $region28: #{net_forward.1} parent=1 // pred_region
      %56 = vsyncadd [#allocation5], 0
      %s58 = sshll.u32 %s6, 4
      %s59 = int_to_ptr.hbm [resolvable:$true] %s58
      %s60 = sshll.u32 [#allocation4], 4
      %s61 = int_to_ptr.vmem [resolvable:$true] %s60
      %63 = dma.hbm_to_vmem [thread:$0]  %s59, 64, %s61, [#allocation5]
    $region29: #{net_forward.1} parent=1 // pred_fallthru
      _
    // Predicated region
    $region30: #{net_forward.1} parent=1 // pred_check
      _
    $region31: #{net_forward.1} parent=1 // pred_check_branch
      %65 = sbr.rel (0) target = $region33
    $region32: #{net_forward.1} parent=1 // pred_region
      _
    $region33: #{net_forward.1} parent=1 // pred_fallthru
      _
    // Predicated region
    $region34: #{net_forward.1} parent=1 // pred_check
      _
    $region35: #{net_forward.1} parent=1 // pred_check_branch
      %67 = sbr.rel (0) target = $region37
    $region36: #{net_forward.1} parent=1 // pred_region
      _
    $region37: #{net_forward.1} parent=1 // pred_fallthru
      _
    // Predicated region
    $region38: #{net_forward.1} parent=1 // pred_check
      _
    $region39: #{net_forward.1} parent=1 // pred_check_branch
      %69 = sbr.rel (0) target = $region41
    $region40: #{net_forward.1} parent=1 // pred_region
      _
    $region41: #{net_forward.1} parent=1 // pred_fallthru
      _
    // Predicated region
    $region42: #{net_forward.1} parent=1 // pred_check
      _
    $region43: #{net_forward.1} parent=1 // pred_check_branch
      %71 = sbr.rel (0) target = $region45
    $region44: #{net_forward.1} parent=1 // pred_region
      _
    $region45: #{net_forward.1} parent=1 // pred_fallthru
      _
    // Predicated region
    $region46: #{net_forward.1} parent=1 // pred_check
      _
    $region47: #{net_forward.1} parent=1 // pred_check_branch
      %73 = sbr.rel (0) target = $region49
    $region48: #{net_forward.1} parent=1 // pred_region
      %75 = vsyncadd [#allocation5], 0
      %s76 = sshll.u32 %s11, 4
      %s77 = int_to_ptr.hbm [resolvable:$true] %s76
      %s78 = sshll.u32 [#allocation6], 4
      %s79 = int_to_ptr.vmem [resolvable:$true] %s78
      %84 = dma.hbm_to_vmem [thread:$0]  %s77, 15872, %s79, [#allocation5], 256, 256, 16
    $region49: #{net_forward.1} parent=1 // pred_fallthru
      _
    // Predicated region
    $region50: #{net_forward.1} parent=1 // pred_check
      _
    $region51: #{net_forward.1} parent=1 // pred_check_branch
      %86 = sbr.rel (0) target = $region53
    $region52: #{net_forward.1} parent=1 // pred_region
      %88 = vsyncadd [#allocation8], 0
      %s90 = sshll.u32 %s12, 4
      %s91 = int_to_ptr.hbm [resolvable:$true] %s90
      %s92 = sshll.u32 [#allocation7], 4
      %s93 = int_to_ptr.vmem [resolvable:$true] %s92
      %95 = dma.hbm_to_vmem [thread:$0]  %s91, 32, %s93, [#allocation8]
    $region53: #{net_forward.1} parent=1 // pred_fallthru
      _
    // Predicated region
    $region54: #{net_forward.1} parent=1 // pred_check
      _
    $region55: #{net_forward.1} parent=1 // pred_check_branch
      %97 = sbr.rel (0) target = $region57
    $region56: #{net_forward.1} parent=1 // pred_region
      _
    $region57: #{net_forward.1} parent=1 // pred_fallthru
      _
    // Predicated region
    $region58: #{net_forward.1} parent=1 // pred_check
      _
    $region59: #{net_forward.1} parent=1 // pred_check_branch
      %99 = sbr.rel (0) target = $region61
    $region60: #{net_forward.1} parent=1 // pred_region
      _
    $region61: #{net_forward.1} parent=1 // pred_fallthru
      _
    // Predicated region
    $region62: #{net_forward.1} parent=1 // pred_check
      _
    $region63: #{net_forward.1} parent=1 // pred_check_branch
      %101 = sbr.rel (0) target = $region65
    $region64: #{net_forward.1} parent=1 // pred_region
      _
    $region65: #{net_forward.1} parent=1 // pred_fallthru
      _
    // Predicated region
    $region66: #{net_forward.1} parent=1 // pred_check
      _
    $region67: #{net_forward.1} parent=1 // pred_check_branch
      %103 = sbr.rel (0) target = $region69
    $region68: #{net_forward.1} parent=1 // pred_region
      _
    $region69: #{net_forward.1} parent=1 // pred_fallthru
      _
    // Predicated region
    $region70: #{net_forward.1} parent=1 // pred_check
      _
    $region71: #{net_forward.1} parent=1 // pred_check_branch
      %105 = sbr.rel (0) target = $region73
    $region72: #{net_forward.1} parent=1 // pred_region
      %107 = vsyncadd [#allocation8], 0
      %s108 = sshll.u32 %s17, 4
      %s109 = int_to_ptr.hbm [resolvable:$true] %s108
      %s110 = sshll.u32 [#allocation9], 4
      %s111 = int_to_ptr.vmem [resolvable:$true] %s110
      %116 = dma.hbm_to_vmem [thread:$0]  %s109, 2432, %s111, [#allocation8], 128, 128, 8
    $region73: #{net_forward.1} parent=1 // pred_fallthru
      _
    // Predicated region
    $region74: #{net_forward.1} parent=1 // pred_check
      _
    $region75: #{net_forward.1} parent=1 // pred_check_branch
      %118 = sbr.rel (0) target = $region77
    $region76: #{net_forward.1} parent=1 // pred_region
      _
    $region77: #{net_forward.1} parent=1 // pred_fallthru
      _
    // Predicated region
    $region78: #{net_forward.1} parent=1 // pred_check
      _
    $region79: #{net_forward.1} parent=1 // pred_check_branch
      %120 = sbr.rel (0) target = $region81
    $region80: #{net_forward.1} parent=1 // pred_region
      _
    $region81: #{net_forward.1} parent=1 // pred_fallthru
      _
    // Predicated region
    $region82: #{net_forward.1} parent=1 // pred_check
      _
    $region83: #{net_forward.1} parent=1 // pred_check_branch
      %122 = sbr.rel (0) target = $region85
    $region84: #{net_forward.1} parent=1 // pred_region
      %124 = vsyncadd [#allocation11], 0
      %s125 = sshll.u32 %s20, 4
      %s126 = int_to_ptr.hbm [resolvable:$true] %s125
      %s127 = sshll.u32 [#allocation10], 4
      %s128 = int_to_ptr.vmem [resolvable:$true] %s127
      %133 = dma.hbm_to_vmem [thread:$0]  %s126, 896, %s128, [#allocation11], 128, 128, 8
    $region85: #{net_forward.1} parent=1 // pred_fallthru
      _
    // Predicated region
    $region86: #{net_forward.1} parent=1 // pred_check
      _
    $region87: #{net_forward.1} parent=1 // pred_check_branch
      %135 = sbr.rel (0) target = $region89
    $region88: #{net_forward.1} parent=1 // pred_region
      %137 = dma.done [#allocation3], 113664
    $region89: #{net_forward.1} parent=1 // pred_fallthru
      _
    // Predicated region
    $region90: #{net_forward.1} parent=1 // pred_check
      _
    $region91: #{net_forward.1} parent=1 // pred_check_branch
      %139 = sbr.rel (0) target = $region93
    $region92: #{net_forward.1} parent=1 // pred_region
      %141 = dma.done [#allocation5], 64
    $region93: #{net_forward.1} parent=1 // pred_fallthru
      _
    // Predicated region
    $region94: #{net_forward.1} parent=1 // pred_check
      _
    $region95: #{net_forward.1} parent=1 // pred_check_branch
      %143 = sbr.rel (0) target = $region97
    $region96: #{net_forward.1} parent=1 // pred_region
      %145 = dma.done [#allocation5], 15872
    $region97: #{net_forward.1} parent=1 // pred_fallthru
      _
    // Predicated region
    $region98: #{net_forward.1} parent=1 // pred_check
      _
    $region99: #{net_forward.1} parent=1 // pred_check_branch
      %147 = sbr.rel (0) target = $region101
    $region100: #{net_forward.1} parent=1 // pred_region
      %149 = dma.done [#allocation8], 32
    $region101: #{net_forward.1} parent=1 // pred_fallthru
      _
    // Predicated region
    $region102: #{net_forward.1} parent=1 // pred_check
      _
    $region103: #{net_forward.1} parent=1 // pred_check_branch
      %151 = sbr.rel (0) target = $region105
    $region104: #{net_forward.1} parent=1 // pred_region
      %153 = dma.done [#allocation8], 2432
    $region105: #{net_forward.1} parent=1 // pred_fallthru
      _
    // Predicated region
    $region106: #{net_forward.1} parent=1 // pred_check
      _
    $region107: #{net_forward.1} parent=1 // pred_check_branch
      %155 = sbr.rel (0) target = $region109
    $region108: #{net_forward.1} parent=1 // pred_region
      %157 = dma.done [#allocation11], 896
    $region109: #{net_forward.1} parent=1 // pred_fallthru
      _
    %v158 = vld [vmem:[%s0] sm:$0xff]
    %v159 = vld [vmem:[%s0 + $0x8] sm:$0x7f]
    %v160 = vld [vmem:[%s1] sm:$0xf]
    %v161 = vld [vmem:[%s1 + $0x4] sm:$0xf]
    %v162 = vld [vmem:[%s1 + $0x8] sm:$0xf]
    %v163 = vld [vmem:[%s1 + $0xc] sm:$0xf]
    %v164 = vld [vmem:[%s1 + $0x10] sm:$0xf]
    %v165 = vld [vmem:[%s1 + $0x14] sm:$0xf]
    %v166 = vld [vmem:[%s1 + $0x18] sm:$0xf]
    %v167 = vld [vmem:[%s1 + $0x1c] sm:$0xf]
    %v168 = vld [vmem:[%s1 + $0x20] sm:$0xf]
    %v169 = vld [vmem:[%s2] sm:$0xf]
    %v172 = vperm.slane %v158, 0
    %v173 = vperm.slane %v158, 1
    %v174 = vperm.slane %v158, 2
    %v175 = vperm.slane %v158, 3
    %v176 = vperm.slane %v158, 4
    %v177 = vperm.slane %v158, 5
    %v178 = vperm.slane %v158, 6
    %v179 = vperm.slane %v158, 7
    %v180 = vperm.slane %v159, 0
    %v181 = vperm.slane %v159, 1
    %v182 = vperm.slane %v159, 2
    %v183 = vperm.slane %v159, 3
    %v184 = vperm.slane %v159, 4
    %v185 = vperm.slane %v159, 5
    %v186 = vperm.slane %v159, 6
    %vm202 = vcmask 64512
    %v203 = vsel %vm202, %v186, 0.0
    %205 = vset.pattern.permute.xlu0 0
    %206 = vperm.xlu0 %205, %v160
    %v207 = vpop.permute.xlu0 %206
    %v209 = vperm.slane 0.0, 0
    %v210 = vperm.slane %v172, 0
    %v211 = vperm.slane %v173, 0
    %v212 = vperm.slane %v174, 0
    %v213 = vperm.slane %v175, 0
    %v214 = vperm.slane %v176, 0
    %v215 = vperm.slane %v177, 0
    %v216 = vperm.slane %v178, 0
    %v217 = vperm.slane %v179, 0
    %v218 = vperm.slane %v180, 0
    %v219 = vperm.slane %v181, 0
    %v220 = vperm.slane %v182, 0
    %v221 = vperm.slane %v183, 0
    %v222 = vperm.slane %v184, 0
    %v223 = vperm.slane %v185, 0
    %v224 = vmul.f32 %v207, %v209
    %v225 = vmul.f32 %v207, %v210
    %v226 = vmul.f32 %v207, %v211
    %v227 = vmul.f32 %v207, %v212
    %v228 = vmul.f32 %v207, %v213
    %v229 = vmul.f32 %v207, %v214
    %v230 = vmul.f32 %v207, %v215
    %v231 = vmul.f32 %v207, %v216
    %v232 = vmul.f32 %v207, %v217
    %v233 = vmul.f32 %v207, %v218
    %v234 = vmul.f32 %v207, %v219
    %v235 = vmul.f32 %v207, %v220
    %v236 = vmul.f32 %v207, %v221
    %v237 = vmul.f32 %v207, %v222
    %v238 = vmul.f32 %v207, %v223
    %240 = vset.pattern.permute.xlu0 0
    %241 = vperm.xlu0 %240, %v161
    %v242 = vpop.permute.xlu0 %241
    %v244 = vmul.f32 %v242, %v209
    %v245 = vmul.f32 %v242, %v210
    %v246 = vmul.f32 %v242, %v211
    %v247 = vmul.f32 %v242, %v212
    %v248 = vmul.f32 %v242, %v213
    %v249 = vmul.f32 %v242, %v214
    %v250 = vmul.f32 %v242, %v215
    %v251 = vmul.f32 %v242, %v216
    %v252 = vmul.f32 %v242, %v217
    %v253 = vmul.f32 %v242, %v218
    %v254 = vmul.f32 %v242, %v219
    %v255 = vmul.f32 %v242, %v220
    %v256 = vmul.f32 %v242, %v221
    %v257 = vmul.f32 %v242, %v222
    %v258 = vmul.f32 %v242, %v223
    %274 = vrot.lane.b32.xlu0 %v244, 127
    %v275 = vpop.permute.xlu0 %274
    %276 = vrot.lane.b32.xlu0 %v245, 127
    %v277 = vpop.permute.xlu0 %276
    %278 = vrot.lane.b32.xlu0 %v246, 127
    %v279 = vpop.permute.xlu0 %278
    %280 = vrot.lane.b32.xlu0 %v247, 127
    %v281 = vpop.permute.xlu0 %280
    %282 = vrot.lane.b32.xlu0 %v248, 127
    %v283 = vpop.permute.xlu0 %282
    %284 = vrot.lane.b32.xlu0 %v249, 127
    %v285 = vpop.permute.xlu0 %284
    %286 = vrot.lane.b32.xlu0 %v250, 127
    %v287 = vpop.permute.xlu0 %286
    %288 = vrot.lane.b32.xlu0 %v251, 127
    %v289 = vpop.permute.xlu0 %288
    %290 = vrot.lane.b32.xlu0 %v252, 127
    %v291 = vpop.permute.xlu0 %290
    %292 = vrot.lane.b32.xlu0 %v253, 127
    %v293 = vpop.permute.xlu0 %292
    %294 = vrot.lane.b32.xlu0 %v254, 127
    %v295 = vpop.permute.xlu0 %294
    %296 = vrot.lane.b32.xlu0 %v255, 127
    %v297 = vpop.permute.xlu0 %296
    %298 = vrot.lane.b32.xlu0 %v256, 127
    %v299 = vpop.permute.xlu0 %298
    %300 = vrot.lane.b32.xlu0 %v257, 127
    %v301 = vpop.permute.xlu0 %300
    %302 = vrot.lane.b32.xlu0 %v258, 127
    %v303 = vpop.permute.xlu0 %302
    %vm304 = vcmask 1039360
    %v305 = vsel %vm304, %v275, %v277
    %v306 = vsel %vm304, %v277, %v279
    %v307 = vsel %vm304, %v279, %v281
    %v308 = vsel %vm304, %v281, %v283
    %v309 = vsel %vm304, %v283, %v285
    %v310 = vsel %vm304, %v285, %v287
    %v311 = vsel %vm304, %v287, %v289
    %v312 = vsel %vm304, %v289, %v291
    %v313 = vsel %vm304, %v291, %v293
    %v314 = vsel %vm304, %v293, %v295
    %v315 = vsel %vm304, %v295, %v297
    %v316 = vsel %vm304, %v297, %v299
    %v317 = vsel %vm304, %v299, %v301
    %v318 = vsel %vm304, %v301, %v303
    %v334 = vadd.f32 %v224, %v305
    %v335 = vadd.f32 %v225, %v306
    %v336 = vadd.f32 %v226, %v307
    %v337 = vadd.f32 %v227, %v308
    %v338 = vadd.f32 %v228, %v309
    %v339 = vadd.f32 %v229, %v310
    %v340 = vadd.f32 %v230, %v311
    %v341 = vadd.f32 %v231, %v312
    %v342 = vadd.f32 %v232, %v313
    %v343 = vadd.f32 %v233, %v314
    %v344 = vadd.f32 %v234, %v315
    %v345 = vadd.f32 %v235, %v316
    %v346 = vadd.f32 %v236, %v317
    %v347 = vadd.f32 %v237, %v318
    %v348 = vadd.f32 %v238, %v303
    %350 = vset.pattern.permute.xlu0 0
    %351 = vperm.xlu0 %350, %v162
    %v352 = vpop.permute.xlu0 %351
    %v354 = vmul.f32 %v352, %v209
    %v355 = vmul.f32 %v352, %v210
    %v356 = vmul.f32 %v352, %v211
    %v357 = vmul.f32 %v352, %v212
    %v358 = vmul.f32 %v352, %v213
    %v359 = vmul.f32 %v352, %v214
    %v360 = vmul.f32 %v352, %v215
    %v361 = vmul.f32 %v352, %v216
    %v362 = vmul.f32 %v352, %v217
    %v363 = vmul.f32 %v352, %v218
    %v364 = vmul.f32 %v352, %v219
    %v365 = vmul.f32 %v352, %v220
    %v366 = vmul.f32 %v352, %v221
    %v367 = vmul.f32 %v352, %v222
    %v368 = vmul.f32 %v352, %v223
    %384 = vrot.lane.b32.xlu0 %v354, 126
    %v385 = vpop.permute.xlu0 %384
    %386 = vrot.lane.b32.xlu0 %v355, 126
    %v387 = vpop.permute.xlu0 %386
    %388 = vrot.lane.b32.xlu0 %v356, 126
    %v389 = vpop.permute.xlu0 %388
    %390 = vrot.lane.b32.xlu0 %v357, 126
    %v391 = vpop.permute.xlu0 %390
    %392 = vrot.lane.b32.xlu0 %v358, 126
    %v393 = vpop.permute.xlu0 %392
    %394 = vrot.lane.b32.xlu0 %v359, 126
    %v395 = vpop.permute.xlu0 %394
    %396 = vrot.lane.b32.xlu0 %v360, 126
    %v397 = vpop.permute.xlu0 %396
    %398 = vrot.lane.b32.xlu0 %v361, 126
    %v399 = vpop.permute.xlu0 %398
    %400 = vrot.lane.b32.xlu0 %v362, 126
    %v401 = vpop.permute.xlu0 %400
    %402 = vrot.lane.b32.xlu0 %v363, 126
    %v403 = vpop.permute.xlu0 %402
    %404 = vrot.lane.b32.xlu0 %v364, 126
    %v405 = vpop.permute.xlu0 %404
    %406 = vrot.lane.b32.xlu0 %v365, 126
    %v407 = vpop.permute.xlu0 %406
    %408 = vrot.lane.b32.xlu0 %v366, 126
    %v409 = vpop.permute.xlu0 %408
    %410 = vrot.lane.b32.xlu0 %v367, 126
    %v411 = vpop.permute.xlu0 %410
    %412 = vrot.lane.b32.xlu0 %v368, 126
    %v413 = vpop.permute.xlu0 %412
    %vm414 = vcmask 1031168
    %v415 = vsel %vm414, %v385, %v387
    %v416 = vsel %vm414, %v387, %v389
    %v417 = vsel %vm414, %v389, %v391
    %v418 = vsel %vm414, %v391, %v393
    %v419 = vsel %vm414, %v393, %v395
    %v420 = vsel %vm414, %v395, %v397
    %v421 = vsel %vm414, %v397, %v399
    %v422 = vsel %vm414, %v399, %v401
    %v423 = vsel %vm414, %v401, %v403
    %v424 = vsel %vm414, %v403, %v405
    %v425 = vsel %vm414, %v405, %v407
    %v426 = vsel %vm414, %v407, %v409
    %v427 = vsel %vm414, %v409, %v411
    %v428 = vsel %vm414, %v411, %v413
    %v444 = vadd.f32 %v334, %v415
    %v445 = vadd.f32 %v335, %v416
    %v446 = vadd.f32 %v336, %v417
    %v447 = vadd.f32 %v337, %v418
    %v448 = vadd.f32 %v338, %v419
    %v449 = vadd.f32 %v339, %v420
    %v450 = vadd.f32 %v340, %v421
    %v451 = vadd.f32 %v341, %v422
    %v452 = vadd.f32 %v342, %v423
    %v453 = vadd.f32 %v343, %v424
    %v454 = vadd.f32 %v344, %v425
    %v455 = vadd.f32 %v345, %v426
    %v456 = vadd.f32 %v346, %v427
    %v457 = vadd.f32 %v347, %v428
    %v458 = vadd.f32 %v348, %v413
    %460 = vset.pattern.permute.xlu0 0
    %461 = vperm.xlu0 %460, %v163
    %v462 = vpop.permute.xlu0 %461
    %v464 = vperm.slane %v203, 0
    %v465 = vmul.f32 %v462, %v209
    %v466 = vmul.f32 %v462, %v210
    %v467 = vmul.f32 %v462, %v211
    %v468 = vmul.f32 %v462, %v212
    %v469 = vmul.f32 %v462, %v213
    %v470 = vmul.f32 %v462, %v214
    %v471 = vmul.f32 %v462, %v215
    %v472 = vmul.f32 %v462, %v216
    %v473 = vmul.f32 %v462, %v217
    %v474 = vmul.f32 %v462, %v218
    %v475 = vmul.f32 %v462, %v219
    %v476 = vmul.f32 %v462, %v220
    %v477 = vmul.f32 %v462, %v221
    %v478 = vmul.f32 %v462, %v222
    %v479 = vmul.f32 %v462, %v223
    %v480 = vmul.f32 %v462, %v464
    %497 = vrot.lane.b32.xlu0 %v465, 98
    %v498 = vpop.permute.xlu0 %497
    %499 = vrot.lane.b32.xlu0 %v466, 98
    %v500 = vpop.permute.xlu0 %499
    %501 = vrot.lane.b32.xlu0 %v467, 98
    %v502 = vpop.permute.xlu0 %501
    %503 = vrot.lane.b32.xlu0 %v468, 98
    %v504 = vpop.permute.xlu0 %503
    %505 = vrot.lane.b32.xlu0 %v469, 98
    %v506 = vpop.permute.xlu0 %505
    %507 = vrot.lane.b32.xlu0 %v470, 98
    %v508 = vpop.permute.xlu0 %507
    %509 = vrot.lane.b32.xlu0 %v471, 98
    %v510 = vpop.permute.xlu0 %509
    %511 = vrot.lane.b32.xlu0 %v472, 98
    %v512 = vpop.permute.xlu0 %511
    %513 = vrot.lane.b32.xlu0 %v473, 98
    %v514 = vpop.permute.xlu0 %513
    %515 = vrot.lane.b32.xlu0 %v474, 98
    %v516 = vpop.permute.xlu0 %515
    %517 = vrot.lane.b32.xlu0 %v475, 98
    %v518 = vpop.permute.xlu0 %517
    %519 = vrot.lane.b32.xlu0 %v476, 98
    %v520 = vpop.permute.xlu0 %519
    %521 = vrot.lane.b32.xlu0 %v477, 98
    %v522 = vpop.permute.xlu0 %521
    %523 = vrot.lane.b32.xlu0 %v478, 98
    %v524 = vpop.permute.xlu0 %523
    %525 = vrot.lane.b32.xlu0 %v479, 98
    %v526 = vpop.permute.xlu0 %525
    %527 = vrot.lane.b32.xlu0 %v480, 98
    %v528 = vpop.permute.xlu0 %527
    %vm529 = vcmask 801792
    %v530 = vsel %vm529, %v498, %v500
    %v531 = vsel %vm529, %v500, %v502
    %v532 = vsel %vm529, %v502, %v504
    %v533 = vsel %vm529, %v504, %v506
    %v534 = vsel %vm529, %v506, %v508
    %v535 = vsel %vm529, %v508, %v510
    %v536 = vsel %vm529, %v510, %v512
    %v537 = vsel %vm529, %v512, %v514
    %v538 = vsel %vm529, %v514, %v516
    %v539 = vsel %vm529, %v516, %v518
    %v540 = vsel %vm529, %v518, %v520
    %v541 = vsel %vm529, %v520, %v522
    %v542 = vsel %vm529, %v522, %v524
    %v543 = vsel %vm529, %v524, %v526
    %v544 = vsel %vm529, %v526, %v528
    %v560 = vadd.f32 %v444, %v530
    %v561 = vadd.f32 %v445, %v531
    %v562 = vadd.f32 %v446, %v532
    %v563 = vadd.f32 %v447, %v533
    %v564 = vadd.f32 %v448, %v534
    %v565 = vadd.f32 %v449, %v535
    %v566 = vadd.f32 %v450, %v536
    %v567 = vadd.f32 %v451, %v537
    %v568 = vadd.f32 %v452, %v538
    %v569 = vadd.f32 %v453, %v539
    %v570 = vadd.f32 %v454, %v540
    %v571 = vadd.f32 %v455, %v541
    %v572 = vadd.f32 %v456, %v542
    %v573 = vadd.f32 %v457, %v543
    %v574 = vadd.f32 %v458, %v544
    %576 = vset.pattern.permute.xlu0 0
    %577 = vperm.xlu0 %576, %v164
    %v578 = vpop.permute.xlu0 %577
    %v580 = vmul.f32 %v578, %v210
    %v581 = vmul.f32 %v578, %v211
    %v582 = vmul.f32 %v578, %v212
    %v583 = vmul.f32 %v578, %v213
    %v584 = vmul.f32 %v578, %v214
    %v585 = vmul.f32 %v578, %v215
    %v586 = vmul.f32 %v578, %v216
    %v587 = vmul.f32 %v578, %v217
    %v588 = vmul.f32 %v578, %v218
    %v589 = vmul.f32 %v578, %v219
    %v590 = vmul.f32 %v578, %v220
    %v591 = vmul.f32 %v578, %v221
    %v592 = vmul.f32 %v578, %v222
    %v593 = vmul.f32 %v578, %v223
    %v594 = vmul.f32 %v578, %v464
    %610 = vrot.lane.b32.xlu0 %v580, 97
    %v611 = vpop.permute.xlu0 %610
    %612 = vrot.lane.b32.xlu0 %v581, 97
    %v613 = vpop.permute.xlu0 %612
    %614 = vrot.lane.b32.xlu0 %v582, 97
    %v615 = vpop.permute.xlu0 %614
    %616 = vrot.lane.b32.xlu0 %v583, 97
    %v617 = vpop.permute.xlu0 %616
    %618 = vrot.lane.b32.xlu0 %v584, 97
    %v619 = vpop.permute.xlu0 %618
    %620 = vrot.lane.b32.xlu0 %v585, 97
    %v621 = vpop.permute.xlu0 %620
    %622 = vrot.lane.b32.xlu0 %v586, 97
    %v623 = vpop.permute.xlu0 %622
    %624 = vrot.lane.b32.xlu0 %v587, 97
    %v625 = vpop.permute.xlu0 %624
    %626 = vrot.lane.b32.xlu0 %v588, 97
    %v627 = vpop.permute.xlu0 %626
    %628 = vrot.lane.b32.xlu0 %v589, 97
    %v629 = vpop.permute.xlu0 %628
    %630 = vrot.lane.b32.xlu0 %v590, 97
    %v631 = vpop.permute.xlu0 %630
    %632 = vrot.lane.b32.xlu0 %v591, 97
    %v633 = vpop.permute.xlu0 %632
    %634 = vrot.lane.b32.xlu0 %v592, 97
    %v635 = vpop.permute.xlu0 %634
    %636 = vrot.lane.b32.xlu0 %v593, 97
    %v637 = vpop.permute.xlu0 %636
    %638 = vrot.lane.b32.xlu0 %v594, 97
    %v639 = vpop.permute.xlu0 %638
    %vm640 = vcmask 793600
    %v641 = vsel %vm640, %v611, %v613
    %v642 = vsel %vm640, %v613, %v615
    %v643 = vsel %vm640, %v615, %v617
    %v644 = vsel %vm640, %v617, %v619
    %v645 = vsel %vm640, %v619, %v621
    %v646 = vsel %vm640, %v621, %v623
    %v647 = vsel %vm640, %v623, %v625
    %v648 = vsel %vm640, %v625, %v627
    %v649 = vsel %vm640, %v627, %v629
    %v650 = vsel %vm640, %v629, %v631
    %v651 = vsel %vm640, %v631, %v633
    %v652 = vsel %vm640, %v633, %v635
    %v653 = vsel %vm640, %v635, %v637
    %v654 = vsel %vm640, %v637, %v639
    %v670 = vadd.f32 %v560, %v611
    %v671 = vadd.f32 %v561, %v641
    %v672 = vadd.f32 %v562, %v642
    %v673 = vadd.f32 %v563, %v643
    %v674 = vadd.f32 %v564, %v644
    %v675 = vadd.f32 %v565, %v645
    %v676 = vadd.f32 %v566, %v646
    %v677 = vadd.f32 %v567, %v647
    %v678 = vadd.f32 %v568, %v648
    %v679 = vadd.f32 %v569, %v649
    %v680 = vadd.f32 %v570, %v650
    %v681 = vadd.f32 %v571, %v651
    %v682 = vadd.f32 %v572, %v652
    %v683 = vadd.f32 %v573, %v653
    %v684 = vadd.f32 %v574, %v654
    %686 = vset.pattern.permute.xlu0 0
    %687 = vperm.xlu0 %686, %v165
    %v688 = vpop.permute.xlu0 %687
    %v690 = vmul.f32 %v688, %v210
    %v691 = vmul.f32 %v688, %v211
    %v692 = vmul.f32 %v688, %v212
    %v693 = vmul.f32 %v688, %v213
    %v694 = vmul.f32 %v688, %v214
    %v695 = vmul.f32 %v688, %v215
    %v696 = vmul.f32 %v688, %v216
    %v697 = vmul.f32 %v688, %v217
    %v698 = vmul.f32 %v688, %v218
    %v699 = vmul.f32 %v688, %v219
    %v700 = vmul.f32 %v688, %v220
    %v701 = vmul.f32 %v688, %v221
    %v702 = vmul.f32 %v688, %v222
    %v703 = vmul.f32 %v688, %v223
    %v704 = vmul.f32 %v688, %v464
    %720 = vrot.lane.b32.xlu0 %v690, 96
    %v721 = vpop.permute.xlu0 %720
    %722 = vrot.lane.b32.xlu0 %v691, 96
    %v723 = vpop.permute.xlu0 %722
    %724 = vrot.lane.b32.xlu0 %v692, 96
    %v725 = vpop.permute.xlu0 %724
    %726 = vrot.lane.b32.xlu0 %v693, 96
    %v727 = vpop.permute.xlu0 %726
    %728 = vrot.lane.b32.xlu0 %v694, 96
    %v729 = vpop.permute.xlu0 %728
    %730 = vrot.lane.b32.xlu0 %v695, 96
    %v731 = vpop.permute.xlu0 %730
    %732 = vrot.lane.b32.xlu0 %v696, 96
    %v733 = vpop.permute.xlu0 %732
    %734 = vrot.lane.b32.xlu0 %v697, 96
    %v735 = vpop.permute.xlu0 %734
    %736 = vrot.lane.b32.xlu0 %v698, 96
    %v737 = vpop.permute.xlu0 %736
    %738 = vrot.lane.b32.xlu0 %v699, 96
    %v739 = vpop.permute.xlu0 %738
    %740 = vrot.lane.b32.xlu0 %v700, 96
    %v741 = vpop.permute.xlu0 %740
    %742 = vrot.lane.b32.xlu0 %v701, 96
    %v743 = vpop.permute.xlu0 %742
    %744 = vrot.lane.b32.xlu0 %v702, 96
    %v745 = vpop.permute.xlu0 %744
    %746 = vrot.lane.b32.xlu0 %v703, 96
    %v747 = vpop.permute.xlu0 %746
    %748 = vrot.lane.b32.xlu0 %v704, 96
    %v749 = vpop.permute.xlu0 %748
    %vm750 = vcmask 785408
    %v751 = vsel %vm750, %v721, %v723
    %v752 = vsel %vm750, %v723, %v725
    %v753 = vsel %vm750, %v725, %v727
    %v754 = vsel %vm750, %v727, %v729
    %v755 = vsel %vm750, %v729, %v731
    %v756 = vsel %vm750, %v731, %v733
    %v757 = vsel %vm750, %v733, %v735
    %v758 = vsel %vm750, %v735, %v737
    %v759 = vsel %vm750, %v737, %v739
    %v760 = vsel %vm750, %v739, %v741
    %v761 = vsel %vm750, %v741, %v743
    %v762 = vsel %vm750, %v743, %v745
    %v763 = vsel %vm750, %v745, %v747
    %v764 = vsel %vm750, %v747, %v749
    %v780 = vadd.f32 %v670, %v721
    %v781 = vadd.f32 %v671, %v751
    %v782 = vadd.f32 %v672, %v752
    %v783 = vadd.f32 %v673, %v753
    %v784 = vadd.f32 %v674, %v754
    %v785 = vadd.f32 %v675, %v755
    %v786 = vadd.f32 %v676, %v756
    %v787 = vadd.f32 %v677, %v757
    %v788 = vadd.f32 %v678, %v758
    %v789 = vadd.f32 %v679, %v759
    %v790 = vadd.f32 %v680, %v760
    %v791 = vadd.f32 %v681, %v761
    %v792 = vadd.f32 %v682, %v762
    %v793 = vadd.f32 %v683, %v763
    %v794 = vadd.f32 %v684, %v764
    %796 = vset.pattern.permute.xlu0 0
    %797 = vperm.xlu0 %796, %v166
    %v798 = vpop.permute.xlu0 %797
    %v800 = vmul.f32 %v798, %v210
    %v801 = vmul.f32 %v798, %v211
    %v802 = vmul.f32 %v798, %v212
    %v803 = vmul.f32 %v798, %v213
    %v804 = vmul.f32 %v798, %v214
    %v805 = vmul.f32 %v798, %v215
    %v806 = vmul.f32 %v798, %v216
    %v807 = vmul.f32 %v798, %v217
    %v808 = vmul.f32 %v798, %v218
    %v809 = vmul.f32 %v798, %v219
    %v810 = vmul.f32 %v798, %v220
    %v811 = vmul.f32 %v798, %v221
    %v812 = vmul.f32 %v798, %v222
    %v813 = vmul.f32 %v798, %v223
    %v814 = vmul.f32 %v798, %v464
    %830 = vrot.lane.b32.xlu0 %v800, 68
    %v831 = vpop.permute.xlu0 %830
    %832 = vrot.lane.b32.xlu0 %v801, 68
    %v833 = vpop.permute.xlu0 %832
    %834 = vrot.lane.b32.xlu0 %v802, 68
    %v835 = vpop.permute.xlu0 %834
    %836 = vrot.lane.b32.xlu0 %v803, 68
    %v837 = vpop.permute.xlu0 %836
    %838 = vrot.lane.b32.xlu0 %v804, 68
    %v839 = vpop.permute.xlu0 %838
    %840 = vrot.lane.b32.xlu0 %v805, 68
    %v841 = vpop.permute.xlu0 %840
    %842 = vrot.lane.b32.xlu0 %v806, 68
    %v843 = vpop.permute.xlu0 %842
    %844 = vrot.lane.b32.xlu0 %v807, 68
    %v845 = vpop.permute.xlu0 %844
    %846 = vrot.lane.b32.xlu0 %v808, 68
    %v847 = vpop.permute.xlu0 %846
    %848 = vrot.lane.b32.xlu0 %v809, 68
    %v849 = vpop.permute.xlu0 %848
    %850 = vrot.lane.b32.xlu0 %v810, 68
    %v851 = vpop.permute.xlu0 %850
    %852 = vrot.lane.b32.xlu0 %v811, 68
    %v853 = vpop.permute.xlu0 %852
    %854 = vrot.lane.b32.xlu0 %v812, 68
    %v855 = vpop.permute.xlu0 %854
    %856 = vrot.lane.b32.xlu0 %v813, 68
    %v857 = vpop.permute.xlu0 %856
    %858 = vrot.lane.b32.xlu0 %v814, 68
    %v859 = vpop.permute.xlu0 %858
    %vm860 = vcmask 556032
    %v861 = vsel %vm860, %v831, %v833
    %v862 = vsel %vm860, %v833, %v835
    %v863 = vsel %vm860, %v835, %v837
    %v864 = vsel %vm860, %v837, %v839
    %v865 = vsel %vm860, %v839, %v841
    %v866 = vsel %vm860, %v841, %v843
    %v867 = vsel %vm860, %v843, %v845
    %v868 = vsel %vm860, %v845, %v847
    %v869 = vsel %vm860, %v847, %v849
    %v870 = vsel %vm860, %v849, %v851
    %v871 = vsel %vm860, %v851, %v853
    %v872 = vsel %vm860, %v853, %v855
    %v873 = vsel %vm860, %v855, %v857
    %v874 = vsel %vm860, %v857, %v859
    %v890 = vadd.f32 %v780, %v831
    %v891 = vadd.f32 %v781, %v861
    %v892 = vadd.f32 %v782, %v862
    %v893 = vadd.f32 %v783, %v863
    %v894 = vadd.f32 %v784, %v864
    %v895 = vadd.f32 %v785, %v865
    %v896 = vadd.f32 %v786, %v866
    %v897 = vadd.f32 %v787, %v867
    %v898 = vadd.f32 %v788, %v868
    %v899 = vadd.f32 %v789, %v869
    %v900 = vadd.f32 %v790, %v870
    %v901 = vadd.f32 %v791, %v871
    %v902 = vadd.f32 %v792, %v872
    %v903 = vadd.f32 %v793, %v873
    %v904 = vadd.f32 %v794, %v874
    %906 = vset.pattern.permute.xlu0 0
    %907 = vperm.xlu0 %906, %v167
    %v908 = vpop.permute.xlu0 %907
    %v910 = vmul.f32 %v908, %v210
    %v911 = vmul.f32 %v908, %v211
    %v912 = vmul.f32 %v908, %v212
    %v913 = vmul.f32 %v908, %v213
    %v914 = vmul.f32 %v908, %v214
    %v915 = vmul.f32 %v908, %v215
    %v916 = vmul.f32 %v908, %v216
    %v917 = vmul.f32 %v908, %v217
    %v918 = vmul.f32 %v908, %v218
    %v919 = vmul.f32 %v908, %v219
    %v920 = vmul.f32 %v908, %v220
    %v921 = vmul.f32 %v908, %v221
    %v922 = vmul.f32 %v908, %v222
    %v923 = vmul.f32 %v908, %v223
    %v924 = vmul.f32 %v908, %v464
    %940 = vrot.lane.b32.xlu0 %v910, 67
    %v941 = vpop.permute.xlu0 %940
    %942 = vrot.lane.b32.xlu0 %v911, 67
    %v943 = vpop.permute.xlu0 %942
    %944 = vrot.lane.b32.xlu0 %v912, 67
    %v945 = vpop.permute.xlu0 %944
    %946 = vrot.lane.b32.xlu0 %v913, 67
    %v947 = vpop.permute.xlu0 %946
    %948 = vrot.lane.b32.xlu0 %v914, 67
    %v949 = vpop.permute.xlu0 %948
    %950 = vrot.lane.b32.xlu0 %v915, 67
    %v951 = vpop.permute.xlu0 %950
    %952 = vrot.lane.b32.xlu0 %v916, 67
    %v953 = vpop.permute.xlu0 %952
    %954 = vrot.lane.b32.xlu0 %v917, 67
    %v955 = vpop.permute.xlu0 %954
    %956 = vrot.lane.b32.xlu0 %v918, 67
    %v957 = vpop.permute.xlu0 %956
    %958 = vrot.lane.b32.xlu0 %v919, 67
    %v959 = vpop.permute.xlu0 %958
    %960 = vrot.lane.b32.xlu0 %v920, 67
    %v961 = vpop.permute.xlu0 %960
    %962 = vrot.lane.b32.xlu0 %v921, 67
    %v963 = vpop.permute.xlu0 %962
    %964 = vrot.lane.b32.xlu0 %v922, 67
    %v965 = vpop.permute.xlu0 %964
    %966 = vrot.lane.b32.xlu0 %v923, 67
    %v967 = vpop.permute.xlu0 %966
    %968 = vrot.lane.b32.xlu0 %v924, 67
    %v969 = vpop.permute.xlu0 %968
    %vm970 = vcmask 547840
    %v971 = vsel %vm970, %v941, %v943
    %v972 = vsel %vm970, %v943, %v945
    %v973 = vsel %vm970, %v945, %v947
    %v974 = vsel %vm970, %v947, %v949
    %v975 = vsel %vm970, %v949, %v951
    %v976 = vsel %vm970, %v951, %v953
    %v977 = vsel %vm970, %v953, %v955
    %v978 = vsel %vm970, %v955, %v957
    %v979 = vsel %vm970, %v957, %v959
    %v980 = vsel %vm970, %v959, %v961
    %v981 = vsel %vm970, %v961, %v963
    %v982 = vsel %vm970, %v963, %v965
    %v983 = vsel %vm970, %v965, %v967
    %v984 = vsel %vm970, %v967, %v969
    %v1000 = vadd.f32 %v890, %v941
    %v1001 = vadd.f32 %v891, %v971
    %v1002 = vadd.f32 %v892, %v972
    %v1003 = vadd.f32 %v893, %v973
    %v1004 = vadd.f32 %v894, %v974
    %v1005 = vadd.f32 %v895, %v975
    %v1006 = vadd.f32 %v896, %v976
    %v1007 = vadd.f32 %v897, %v977
    %v1008 = vadd.f32 %v898, %v978
    %v1009 = vadd.f32 %v899, %v979
    %v1010 = vadd.f32 %v900, %v980
    %v1011 = vadd.f32 %v901, %v981
    %v1012 = vadd.f32 %v902, %v982
    %v1013 = vadd.f32 %v903, %v983
    %v1014 = vadd.f32 %v904, %v984
    %1016 = vset.pattern.permute.xlu0 0
    %1017 = vperm.xlu0 %1016, %v168
    %v1018 = vpop.permute.xlu0 %1017
    %v1020 = vmul.f32 %v1018, %v210
    %v1021 = vmul.f32 %v1018, %v211
    %v1022 = vmul.f32 %v1018, %v212
    %v1023 = vmul.f32 %v1018, %v213
    %v1024 = vmul.f32 %v1018, %v214
    %v1025 = vmul.f32 %v1018, %v215
    %v1026 = vmul.f32 %v1018, %v216
    %v1027 = vmul.f32 %v1018, %v217
    %v1028 = vmul.f32 %v1018, %v218
    %v1029 = vmul.f32 %v1018, %v219
    %v1030 = vmul.f32 %v1018, %v220
    %v1031 = vmul.f32 %v1018, %v221
    %v1032 = vmul.f32 %v1018, %v222
    %v1033 = vmul.f32 %v1018, %v223
    %v1034 = vmul.f32 %v1018, %v464
    %1050 = vrot.lane.b32.xlu0 %v1020, 66
    %v1051 = vpop.permute.xlu0 %1050
    %1052 = vrot.lane.b32.xlu0 %v1021, 66
    %v1053 = vpop.permute.xlu0 %1052
    %1054 = vrot.lane.b32.xlu0 %v1022, 66
    %v1055 = vpop.permute.xlu0 %1054
    %1056 = vrot.lane.b32.xlu0 %v1023, 66
    %v1057 = vpop.permute.xlu0 %1056
    %1058 = vrot.lane.b32.xlu0 %v1024, 66
    %v1059 = vpop.permute.xlu0 %1058
    %1060 = vrot.lane.b32.xlu0 %v1025, 66
    %v1061 = vpop.permute.xlu0 %1060
    %1062 = vrot.lane.b32.xlu0 %v1026, 66
    %v1063 = vpop.permute.xlu0 %1062
    %1064 = vrot.lane.b32.xlu0 %v1027, 66
    %v1065 = vpop.permute.xlu0 %1064
    %1066 = vrot.lane.b32.xlu0 %v1028, 66
    %v1067 = vpop.permute.xlu0 %1066
    %1068 = vrot.lane.b32.xlu0 %v1029, 66
    %v1069 = vpop.permute.xlu0 %1068
    %1070 = vrot.lane.b32.xlu0 %v1030, 66
    %v1071 = vpop.permute.xlu0 %1070
    %1072 = vrot.lane.b32.xlu0 %v1031, 66
    %v1073 = vpop.permute.xlu0 %1072
    %1074 = vrot.lane.b32.xlu0 %v1032, 66
    %v1075 = vpop.permute.xlu0 %1074
    %1076 = vrot.lane.b32.xlu0 %v1033, 66
    %v1077 = vpop.permute.xlu0 %1076
    %1078 = vrot.lane.b32.xlu0 %v1034, 66
    %v1079 = vpop.permute.xlu0 %1078
    %vm1080 = vcmask 539648
    %v1081 = vsel %vm1080, %v1051, %v1053
    %v1082 = vsel %vm1080, %v1053, %v1055
    %v1083 = vsel %vm1080, %v1055, %v1057
    %v1084 = vsel %vm1080, %v1057, %v1059
    %v1085 = vsel %vm1080, %v1059, %v1061
    %v1086 = vsel %vm1080, %v1061, %v1063
    %v1087 = vsel %vm1080, %v1063, %v1065
    %v1088 = vsel %vm1080, %v1065, %v1067
    %v1089 = vsel %vm1080, %v1067, %v1069
    %v1090 = vsel %vm1080, %v1069, %v1071
    %v1091 = vsel %vm1080, %v1071, %v1073
    %v1092 = vsel %vm1080, %v1073, %v1075
    %v1093 = vsel %vm1080, %v1075, %v1077
    %v1094 = vsel %vm1080, %v1077, %v1079
    %v1110 = vadd.f32 %v1000, %v1051
    %v1111 = vadd.f32 %v1001, %v1081
    %v1112 = vadd.f32 %v1002, %v1082
    %v1113 = vadd.f32 %v1003, %v1083
    %v1114 = vadd.f32 %v1004, %v1084
    %v1115 = vadd.f32 %v1005, %v1085
    %v1116 = vadd.f32 %v1006, %v1086
    %v1117 = vadd.f32 %v1007, %v1087
    %v1118 = vadd.f32 %v1008, %v1088
    %v1119 = vadd.f32 %v1009, %v1089
    %v1120 = vadd.f32 %v1010, %v1090
    %v1121 = vadd.f32 %v1011, %v1091
    %v1122 = vadd.f32 %v1012, %v1092
    %v1123 = vadd.f32 %v1013, %v1093
    %v1124 = vadd.f32 %v1014, %v1094
    %1126 = vset.pattern.permute.xlu0 0
    %1127 = vperm.xlu0 %1126, %v169
    %v1128 = vpop.permute.xlu0 %1127
    %v1130 = vadd.f32 %v1110, %v1128
    %v1131 = vadd.f32 %v1111, %v1128
    %v1132 = vadd.f32 %v1112, %v1128
    %v1133 = vadd.f32 %v1113, %v1128
    %v1134 = vadd.f32 %v1114, %v1128
    %v1135 = vadd.f32 %v1115, %v1128
    %v1136 = vadd.f32 %v1116, %v1128
    %v1137 = vadd.f32 %v1117, %v1128
    %v1138 = vadd.f32 %v1118, %v1128
    %v1139 = vadd.f32 %v1119, %v1128
    %v1140 = vadd.f32 %v1120, %v1128
    %v1141 = vadd.f32 %v1121, %v1128
    %v1142 = vadd.f32 %v1122, %v1128
    %v1143 = vadd.f32 %v1123, %v1128
    %v1144 = vadd.f32 %v1124, %v1128
    %v1145 = vld [vmem:[#allocation2] sm:$0xff]
    %v1146 = vld [vmem:[#allocation2 + $0x8] sm:$0xff]
    %v1147 = vld [vmem:[#allocation2 + $0x10] sm:$0xff]
    %v1148 = vld [vmem:[#allocation2 + $0x18] sm:$0xff]
    %v1149 = vld [vmem:[#allocation2 + $0x20] sm:$0xff]
    %v1150 = vld [vmem:[#allocation2 + $0x28] sm:$0xff]
    %v1151 = vld [vmem:[#allocation2 + $0x30] sm:$0xff]
    %v1152 = vld [vmem:[#allocation2 + $0x38] sm:$0xff]
    %v1153 = vld [vmem:[#allocation2 + $0x40] sm:$0xff]
    %v1154 = vld [vmem:[#allocation2 + $0x48] sm:$0xff]
    %v1155 = vld [vmem:[#allocation2 + $0x50] sm:$0xff]
    %v1156 = vld [vmem:[#allocation2 + $0x58] sm:$0xff]
    %v1157 = vld [vmem:[#allocation2 + $0x60] sm:$0xff]
    %v1158 = vld [vmem:[#allocation2 + $0x68] sm:$0xff]
    %v1159 = vld [vmem:[#allocation2 + $0x70] sm:$0xff]
    %v1160 = vld [vmem:[#allocation2 + $0x78] sm:$0xff]
    %v1161 = vld [vmem:[#allocation2 + $0x80] sm:$0xff]
    %v1162 = vld [vmem:[#allocation2 + $0x88] sm:$0xff]
    %v1163 = vld [vmem:[#allocation2 + $0x90] sm:$0xff]
    %v1164 = vld [vmem:[#allocation2 + $0x98] sm:$0xff]
    %v1165 = vld [vmem:[#allocation2 + $0xa0] sm:$0xff]
    %v1166 = vld [vmem:[#allocation2 + $0xa8] sm:$0xff]
    %v1167 = vld [vmem:[#allocation2 + $0xb0] sm:$0xff]
    %v1168 = vld [vmem:[#allocation2 + $0xb8] sm:$0xff]
    %v1169 = vld [vmem:[#allocation2 + $0xc0] sm:$0xff]
    %v1170 = vld [vmem:[#allocation2 + $0xc8] sm:$0xff]
    %v1171 = vld [vmem:[#allocation2 + $0xd0] sm:$0xff]
    %v1172 = vld [vmem:[#allocation2 + $0xd8] sm:$0xff]
    %v1173 = vld [vmem:[#allocation2 + $0xe0] sm:$0xff]
    %v1174 = vld [vmem:[#allocation2 + $0xe8] sm:$0xff]
    %v1175 = vld [vmem:[#allocation2 + $0xf0] sm:$0xff]
    %v1176 = vld [vmem:[#allocation2 + $0xf8] sm:$0xff]
    %v1177 = vld [vmem:[#allocation2 + $0x100] sm:$0xff]
    %v1178 = vld [vmem:[#allocation2 + $0x108] sm:$0xff]
    %v1179 = vld [vmem:[#allocation2 + $0x110] sm:$0xff]
    %v1180 = vld [vmem:[#allocation2 + $0x118] sm:$0xff]
    %v1181 = vld [vmem:[#allocation2 + $0x120] sm:$0xff]
    %v1182 = vld [vmem:[#allocation2 + $0x128] sm:$0xff]
    %v1183 = vld [vmem:[#allocation2 + $0x130] sm:$0xff]
    %v1184 = vld [vmem:[#allocation2 + $0x138] sm:$0xff]
    %v1185 = vld [vmem:[#allocation2 + $0x140] sm:$0xff]
    %v1186 = vld [vmem:[#allocation2 + $0x148] sm:$0xff]
    %v1187 = vld [vmem:[#allocation2 + $0x150] sm:$0xff]
    %v1188 = vld [vmem:[#allocation2 + $0x158] sm:$0xff]
    %v1189 = vld [vmem:[#allocation2 + $0x160] sm:$0xff]
    %v1190 = vld [vmem:[#allocation2 + $0x168] sm:$0xff]
    %v1191 = vld [vmem:[#allocation2 + $0x170] sm:$0xff]
    %v1192 = vld [vmem:[#allocation2 + $0x178] sm:$0xff]
    %v1193 = vld [vmem:[#allocation2 + $0x180] sm:$0xff]
    %v1194 = vld [vmem:[#allocation2 + $0x188] sm:$0xff]
    %v1195 = vld [vmem:[#allocation2 + $0x190] sm:$0xff]
    %v1196 = vld [vmem:[#allocation2 + $0x198] sm:$0xff]
    %v1197 = vld [vmem:[#allocation2 + $0x1a0] sm:$0xff]
    %v1198 = vld [vmem:[#allocation2 + $0x1a8] sm:$0xff]
    %v1199 = vld [vmem:[#allocation2 + $0x1b0] sm:$0xff]
    %v1200 = vld [vmem:[#allocation2 + $0x1b8] sm:$0xff]
    %v1201 = vld [vmem:[#allocation2 + $0x1c0] sm:$0xff]
    %v1202 = vld [vmem:[#allocation2 + $0x1c8] sm:$0xff]
    %v1203 = vld [vmem:[#allocation2 + $0x1d0] sm:$0xff]
    %v1204 = vld [vmem:[#allocation2 + $0x1d8] sm:$0xff]
    %v1205 = vld [vmem:[#allocation2 + $0x1e0] sm:$0xff]
    %v1206 = vld [vmem:[#allocation2 + $0x1e8] sm:$0xff]
    %v1207 = vld [vmem:[#allocation2 + $0x1f0] sm:$0xff]
    %v1208 = vld [vmem:[#allocation2 + $0x1f8] sm:$0xff]
    %v1209 = vld [vmem:[#allocation2 + $0x200] sm:$0xff]
    %v1210 = vld [vmem:[#allocation2 + $0x208] sm:$0xff]
    %v1211 = vld [vmem:[#allocation2 + $0x210] sm:$0xff]
    %v1212 = vld [vmem:[#allocation2 + $0x218] sm:$0xff]
    %v1213 = vld [vmem:[#allocation2 + $0x220] sm:$0xff]
    %v1214 = vld [vmem:[#allocation2 + $0x228] sm:$0xff]
    %v1215 = vld [vmem:[#allocation2 + $0x230] sm:$0xff]
    %v1216 = vld [vmem:[#allocation2 + $0x238] sm:$0xff]
    %v1217 = vld [vmem:[#allocation2 + $0x240] sm:$0xff]
    %v1218 = vld [vmem:[#allocation2 + $0x248] sm:$0xff]
    %v1219 = vld [vmem:[#allocation2 + $0x250] sm:$0xff]
    %v1220 = vld [vmem:[#allocation2 + $0x258] sm:$0xff]
    %v1221 = vld [vmem:[#allocation2 + $0x260] sm:$0xff]
    %v1222 = vld [vmem:[#allocation2 + $0x268] sm:$0xff]
    %v1223 = vld [vmem:[#allocation2 + $0x270] sm:$0xff]
    %v1224 = vld [vmem:[#allocation2 + $0x278] sm:$0xff]
    %v1225 = vld [vmem:[#allocation2 + $0x280] sm:$0xff]
    %v1226 = vld [vmem:[#allocation2 + $0x288] sm:$0xff]
    %v1227 = vld [vmem:[#allocation2 + $0x290] sm:$0xff]
    %v1228 = vld [vmem:[#allocation2 + $0x298] sm:$0xff]
    %v1229 = vld [vmem:[#allocation2 + $0x2a0] sm:$0xff]
    %v1230 = vld [vmem:[#allocation2 + $0x2a8] sm:$0xff]
    %v1231 = vld [vmem:[#allocation2 + $0x2b0] sm:$0xff]
    %v1232 = vld [vmem:[#allocation2 + $0x2b8] sm:$0xff]
    %v1233 = vld [vmem:[#allocation2 + $0x2c0] sm:$0xff]
    %v1234 = vld [vmem:[#allocation2 + $0x2c8] sm:$0xff]
    %v1235 = vld [vmem:[#allocation2 + $0x2d0] sm:$0xff]
    %v1236 = vld [vmem:[#allocation2 + $0x2d8] sm:$0xff]
    %v1237 = vld [vmem:[#allocation2 + $0x2e0] sm:$0xff]
    %v1238 = vld [vmem:[#allocation2 + $0x2e8] sm:$0xff]
    %v1239 = vld [vmem:[#allocation2 + $0x2f0] sm:$0xff]
    %v1240 = vld [vmem:[#allocation2 + $0x2f8] sm:$0xff]
    %v1241 = vld [vmem:[#allocation2 + $0x300] sm:$0xff]
    %v1242 = vld [vmem:[#allocation2 + $0x308] sm:$0xff]
    %v1243 = vld [vmem:[#allocation2 + $0x310] sm:$0xff]
    %v1244 = vld [vmem:[#allocation2 + $0x318] sm:$0xff]
    %v1245 = vld [vmem:[#allocation2 + $0x320] sm:$0xff]
    %v1246 = vld [vmem:[#allocation2 + $0x328] sm:$0xff]
    %v1247 = vld [vmem:[#allocation2 + $0x330] sm:$0xff]
    %v1248 = vld [vmem:[#allocation2 + $0x338] sm:$0xff]
    %v1249 = vld [vmem:[#allocation2 + $0x340] sm:$0xff]
    %v1250 = vld [vmem:[#allocation2 + $0x348] sm:$0xff]
    %v1251 = vld [vmem:[#allocation2 + $0x350] sm:$0xff]
    %v1252 = vld [vmem:[#allocation2 + $0x358] sm:$0xff]
    %v1253 = vld [vmem:[#allocation2 + $0x360] sm:$0xff]
    %v1254 = vld [vmem:[#allocation2 + $0x368] sm:$0xff]
    %v1255 = vld [vmem:[#allocation2 + $0x370] sm:$0xff]
    %v1256 = vld [vmem:[#allocation2 + $0x378] sm:$0xff]
    %v1257 = vld [vmem:[#allocation2 + $0x380] sm:$0xff]
    %v1258 = vld [vmem:[#allocation2 + $0x388] sm:$0xff]
    %v1259 = vld [vmem:[#allocation2 + $0x390] sm:$0xff]
    %v1260 = vld [vmem:[#allocation2 + $0x398] sm:$0xff]
    %v1261 = vld [vmem:[#allocation2 + $0x3a0] sm:$0xff]
    %v1262 = vld [vmem:[#allocation2 + $0x3a8] sm:$0xff]
    %v1263 = vld [vmem:[#allocation2 + $0x3b0] sm:$0xff]
    %v1264 = vld [vmem:[#allocation2 + $0x3b8] sm:$0xff]
    %v1265 = vld [vmem:[#allocation2 + $0x3c0] sm:$0xff]
    %v1266 = vld [vmem:[#allocation2 + $0x3c8] sm:$0xff]
    %v1267 = vld [vmem:[#allocation2 + $0x3d0] sm:$0xff]
    %v1268 = vld [vmem:[#allocation2 + $0x3d8] sm:$0xff]
    %v1269 = vld [vmem:[#allocation2 + $0x3e0] sm:$0xff]
    %v1270 = vld [vmem:[#allocation2 + $0x3e8] sm:$0xff]
    %v1271 = vld [vmem:[#allocation2 + $0x3f0] sm:$0xff]
    %v1272 = vld [vmem:[#allocation2 + $0x3f8] sm:$0xff]
    %v1273 = vld [vmem:[#allocation2 + $0x400] sm:$0xff]
    %v1274 = vld [vmem:[#allocation2 + $0x408] sm:$0xff]
    %v1275 = vld [vmem:[#allocation2 + $0x410] sm:$0xff]
    %v1276 = vld [vmem:[#allocation2 + $0x418] sm:$0xff]
    %v1277 = vld [vmem:[#allocation2 + $0x420] sm:$0xff]
    %v1278 = vld [vmem:[#allocation2 + $0x428] sm:$0xff]
    %v1279 = vld [vmem:[#allocation2 + $0x430] sm:$0xff]
    %v1280 = vld [vmem:[#allocation2 + $0x438] sm:$0xff]
    %v1281 = vld [vmem:[#allocation2 + $0x440] sm:$0xff]
    %v1282 = vld [vmem:[#allocation2 + $0x448] sm:$0xff]
    %v1283 = vld [vmem:[#allocation2 + $0x450] sm:$0xff]
    %v1284 = vld [vmem:[#allocation2 + $0x458] sm:$0xff]
    %v1285 = vld [vmem:[#allocation2 + $0x460] sm:$0xff]
    %v1286 = vld [vmem:[#allocation2 + $0x468] sm:$0xff]
    %v1287 = vld [vmem:[#allocation2 + $0x470] sm:$0xff]
    %v1288 = vld [vmem:[#allocation2 + $0x478] sm:$0xff]
    %v1289 = vld [vmem:[#allocation2 + $0x480] sm:$0xff]
    %v1290 = vld [vmem:[#allocation2 + $0x488] sm:$0xff]
    %v1291 = vld [vmem:[#allocation2 + $0x490] sm:$0xff]
    %v1292 = vld [vmem:[#allocation2 + $0x498] sm:$0xff]
    %v1293 = vld [vmem:[#allocation2 + $0x4a0] sm:$0xff]
    %v1294 = vld [vmem:[#allocation2 + $0x4a8] sm:$0xff]
    %v1295 = vld [vmem:[#allocation2 + $0x4b0] sm:$0xff]
    %v1296 = vld [vmem:[#allocation2 + $0x4b8] sm:$0xff]
    %v1297 = vld [vmem:[#allocation2 + $0x4c0] sm:$0xff]
    %v1298 = vld [vmem:[#allocation2 + $0x4c8] sm:$0xff]
    %v1299 = vld [vmem:[#allocation2 + $0x4d0] sm:$0xff]
    %v1300 = vld [vmem:[#allocation2 + $0x4d8] sm:$0xff]
    %v1301 = vld [vmem:[#allocation2 + $0x4e0] sm:$0xff]
    %v1302 = vld [vmem:[#allocation2 + $0x4e8] sm:$0xff]
    %v1303 = vld [vmem:[#allocation2 + $0x4f0] sm:$0xff]
    %v1304 = vld [vmem:[#allocation2 + $0x4f8] sm:$0xff]
    %v1305 = vld [vmem:[#allocation2 + $0x500] sm:$0xff]
    %v1306 = vld [vmem:[#allocation2 + $0x508] sm:$0xff]
    %v1307 = vld [vmem:[#allocation2 + $0x510] sm:$0xff]
    %v1308 = vld [vmem:[#allocation2 + $0x518] sm:$0xff]
    %v1309 = vld [vmem:[#allocation2 + $0x520] sm:$0xff]
    %v1310 = vld [vmem:[#allocation2 + $0x528] sm:$0xff]
    %v1311 = vld [vmem:[#allocation2 + $0x530] sm:$0xff]
    %v1312 = vld [vmem:[#allocation2 + $0x538] sm:$0xff]
    %v1313 = vld [vmem:[#allocation2 + $0x540] sm:$0xff]
    %v1314 = vld [vmem:[#allocation2 + $0x548] sm:$0xff]
    %v1315 = vld [vmem:[#allocation2 + $0x550] sm:$0xff]
    %v1316 = vld [vmem:[#allocation2 + $0x558] sm:$0xff]
    %v1317 = vld [vmem:[#allocation2 + $0x560] sm:$0xff]
    %v1318 = vld [vmem:[#allocation2 + $0x568] sm:$0xff]
    %v1319 = vld [vmem:[#allocation2 + $0x570] sm:$0xff]
    %v1320 = vld [vmem:[#allocation2 + $0x578] sm:$0xff]
    %v1321 = vld [vmem:[#allocation2 + $0x580] sm:$0xff]
    %v1322 = vld [vmem:[#allocation2 + $0x588] sm:$0xff]
    %v1323 = vld [vmem:[#allocation2 + $0x590] sm:$0xff]
    %v1324 = vld [vmem:[#allocation2 + $0x598] sm:$0xff]
    %v1325 = vld [vmem:[#allocation2 + $0x5a0] sm:$0xff]
    %v1326 = vld [vmem:[#allocation2 + $0x5a8] sm:$0xff]
    %v1327 = vld [vmem:[#allocation2 + $0x5b0] sm:$0xff]
    %v1328 = vld [vmem:[#allocation2 + $0x5b8] sm:$0xff]
    %v1329 = vld [vmem:[#allocation2 + $0x5c0] sm:$0xff]
    %v1330 = vld [vmem:[#allocation2 + $0x5c8] sm:$0xff]
    %v1331 = vld [vmem:[#allocation2 + $0x5d0] sm:$0xff]
    %v1332 = vld [vmem:[#allocation2 + $0x5d8] sm:$0xff]
    %v1333 = vld [vmem:[#allocation2 + $0x5e0] sm:$0xff]
    %v1334 = vld [vmem:[#allocation2 + $0x5e8] sm:$0xff]
    %v1335 = vld [vmem:[#allocation2 + $0x5f0] sm:$0xff]
    %v1336 = vld [vmem:[#allocation2 + $0x5f8] sm:$0xff]
    %v1337 = vld [vmem:[#allocation2 + $0x600] sm:$0xff]
    %v1338 = vld [vmem:[#allocation2 + $0x608] sm:$0xff]
    %v1339 = vld [vmem:[#allocation2 + $0x610] sm:$0xff]
    %v1340 = vld [vmem:[#allocation2 + $0x618] sm:$0xff]
    %v1341 = vld [vmem:[#allocation2 + $0x620] sm:$0xff]
    %v1342 = vld [vmem:[#allocation2 + $0x628] sm:$0xff]
    %v1343 = vld [vmem:[#allocation2 + $0x630] sm:$0xff]
    %v1344 = vld [vmem:[#allocation2 + $0x638] sm:$0xff]
    %v1345 = vld [vmem:[#allocation2 + $0x640] sm:$0xff]
    %v1346 = vld [vmem:[#allocation2 + $0x648] sm:$0xff]
    %v1347 = vld [vmem:[#allocation2 + $0x650] sm:$0xff]
    %v1348 = vld [vmem:[#allocation2 + $0x658] sm:$0xff]
    %v1349 = vld [vmem:[#allocation2 + $0x660] sm:$0xff]
    %v1350 = vld [vmem:[#allocation2 + $0x668] sm:$0xff]
    %v1351 = vld [vmem:[#allocation2 + $0x670] sm:$0xff]
    %v1352 = vld [vmem:[#allocation2 + $0x678] sm:$0xff]
    %v1353 = vld [vmem:[#allocation2 + $0x680] sm:$0xff]
    %v1354 = vld [vmem:[#allocation2 + $0x688] sm:$0xff]
    %v1355 = vld [vmem:[#allocation2 + $0x690] sm:$0xff]
    %v1356 = vld [vmem:[#allocation2 + $0x698] sm:$0xff]
    %v1357 = vld [vmem:[#allocation2 + $0x6a0] sm:$0xff]
    %v1358 = vld [vmem:[#allocation2 + $0x6a8] sm:$0xff]
    %v1359 = vld [vmem:[#allocation2 + $0x6b0] sm:$0xff]
    %v1360 = vld [vmem:[#allocation2 + $0x6b8] sm:$0xff]
    %v1361 = vld [vmem:[#allocation2 + $0x6c0] sm:$0xff]
    %v1362 = vld [vmem:[#allocation2 + $0x6c8] sm:$0xff]
    %v1363 = vld [vmem:[#allocation2 + $0x6d0] sm:$0xff]
    %v1364 = vld [vmem:[#allocation2 + $0x6d8] sm:$0xff]
    %v1365 = vld [vmem:[#allocation2 + $0x6e0] sm:$0xff]
    %v1366 = vld [vmem:[#allocation2 + $0x6e8] sm:$0xff]
    %v1367 = vld [vmem:[#allocation2 + $0x6f0] sm:$0xff]
    %v1368 = vld [vmem:[#allocation2 + $0x6f8] sm:$0xff]
    %v1369 = vld [vmem:[#allocation2 + $0x700] sm:$0xff]
    %v1370 = vld [vmem:[#allocation2 + $0x708] sm:$0xff]
    %v1371 = vld [vmem:[#allocation2 + $0x710] sm:$0xff]
    %v1372 = vld [vmem:[#allocation2 + $0x718] sm:$0xff]
    %v1373 = vld [vmem:[#allocation2 + $0x720] sm:$0xff]
    %v1374 = vld [vmem:[#allocation2 + $0x728] sm:$0xff]
    %v1375 = vld [vmem:[#allocation2 + $0x730] sm:$0xff]
    %v1376 = vld [vmem:[#allocation2 + $0x738] sm:$0xff]
    %v1377 = vld [vmem:[#allocation2 + $0x740] sm:$0xff]
    %v1378 = vld [vmem:[#allocation2 + $0x748] sm:$0xff]
    %v1379 = vld [vmem:[#allocation2 + $0x750] sm:$0xff]
    %v1380 = vld [vmem:[#allocation2 + $0x758] sm:$0xff]
    %v1381 = vld [vmem:[#allocation2 + $0x760] sm:$0xff]
    %v1382 = vld [vmem:[#allocation2 + $0x768] sm:$0xff]
    %v1383 = vld [vmem:[#allocation2 + $0x770] sm:$0xff]
    %v1384 = vld [vmem:[#allocation2 + $0x778] sm:$0xff]
    %v1385 = vld [vmem:[#allocation2 + $0x780] sm:$0xff]
    %v1386 = vld [vmem:[#allocation2 + $0x788] sm:$0xff]
    %v1387 = vld [vmem:[#allocation2 + $0x790] sm:$0xff]
    %v1388 = vld [vmem:[#allocation2 + $0x798] sm:$0xff]
    %v1389 = vld [vmem:[#allocation2 + $0x7a0] sm:$0xff]
    %v1390 = vld [vmem:[#allocation2 + $0x7a8] sm:$0xff]
    %v1391 = vld [vmem:[#allocation2 + $0x7b0] sm:$0xff]
    %v1392 = vld [vmem:[#allocation2 + $0x7b8] sm:$0xff]
    %v1393 = vld [vmem:[#allocation2 + $0x7c0] sm:$0xff]
    %v1394 = vld [vmem:[#allocation2 + $0x7c8] sm:$0xff]
    %v1395 = vld [vmem:[#allocation2 + $0x7d0] sm:$0xff]
    %v1396 = vld [vmem:[#allocation2 + $0x7d8] sm:$0xff]
    %v1397 = vld [vmem:[#allocation2 + $0x7e0] sm:$0xff]
    %v1398 = vld [vmem:[#allocation2 + $0x7e8] sm:$0xff]
    %v1399 = vld [vmem:[#allocation2 + $0x7f0] sm:$0xff]
    %v1400 = vld [vmem:[#allocation2 + $0x7f8] sm:$0xff]
    %v1401 = vld [vmem:[#allocation2 + $0x800] sm:$0xff]
    %v1402 = vld [vmem:[#allocation2 + $0x808] sm:$0xff]
    %v1403 = vld [vmem:[#allocation2 + $0x810] sm:$0xff]
    %v1404 = vld [vmem:[#allocation2 + $0x818] sm:$0xff]
    %v1405 = vld [vmem:[#allocation2 + $0x820] sm:$0xff]
    %v1406 = vld [vmem:[#allocation2 + $0x828] sm:$0xff]
    %v1407 = vld [vmem:[#allocation2 + $0x830] sm:$0xff]
    %v1408 = vld [vmem:[#allocation2 + $0x838] sm:$0xff]
    %v1409 = vld [vmem:[#allocation2 + $0x840] sm:$0xff]
    %v1410 = vld [vmem:[#allocation2 + $0x848] sm:$0xff]
    %v1411 = vld [vmem:[#allocation2 + $0x850] sm:$0xff]
    %v1412 = vld [vmem:[#allocation2 + $0x858] sm:$0xff]
    %v1413 = vld [vmem:[#allocation2 + $0x860] sm:$0xff]
    %v1414 = vld [vmem:[#allocation2 + $0x868] sm:$0xff]
    %v1415 = vld [vmem:[#allocation2 + $0x870] sm:$0xff]
    %v1416 = vld [vmem:[#allocation2 + $0x878] sm:$0xff]
    %v1417 = vld [vmem:[#allocation2 + $0x880] sm:$0xff]
    %v1418 = vld [vmem:[#allocation2 + $0x888] sm:$0xff]
    %v1419 = vld [vmem:[#allocation2 + $0x890] sm:$0xff]
    %v1420 = vld [vmem:[#allocation2 + $0x898] sm:$0xff]
    %v1421 = vld [vmem:[#allocation2 + $0x8a0] sm:$0xff]
    %v1422 = vld [vmem:[#allocation2 + $0x8a8] sm:$0xff]
    %v1423 = vld [vmem:[#allocation2 + $0x8b0] sm:$0xff]
    %v1424 = vld [vmem:[#allocation2 + $0x8b8] sm:$0xff]
    %v1425 = vld [vmem:[#allocation2 + $0x8c0] sm:$0xff]
    %v1426 = vld [vmem:[#allocation2 + $0x8c8] sm:$0xff]
    %v1427 = vld [vmem:[#allocation2 + $0x8d0] sm:$0xff]
    %v1428 = vld [vmem:[#allocation2 + $0x8d8] sm:$0xff]
    %v1429 = vld [vmem:[#allocation2 + $0x8e0] sm:$0xff]
    %v1430 = vld [vmem:[#allocation2 + $0x8e8] sm:$0xff]
    %v1431 = vld [vmem:[#allocation2 + $0x8f0] sm:$0xff]
    %v1432 = vld [vmem:[#allocation2 + $0x8f8] sm:$0xff]
    %v1433 = vld [vmem:[#allocation2 + $0x900] sm:$0xff]
    %v1434 = vld [vmem:[#allocation2 + $0x908] sm:$0xff]
    %v1435 = vld [vmem:[#allocation2 + $0x910] sm:$0xff]
    %v1436 = vld [vmem:[#allocation2 + $0x918] sm:$0xff]
    %v1437 = vld [vmem:[#allocation2 + $0x920] sm:$0xff]
    %v1438 = vld [vmem:[#allocation2 + $0x928] sm:$0xff]
    %v1439 = vld [vmem:[#allocation2 + $0x930] sm:$0xff]
    %v1440 = vld [vmem:[#allocation2 + $0x938] sm:$0xff]
    %v1441 = vld [vmem:[#allocation2 + $0x940] sm:$0xff]
    %v1442 = vld [vmem:[#allocation2 + $0x948] sm:$0xff]
    %v1443 = vld [vmem:[#allocation2 + $0x950] sm:$0xff]
    %v1444 = vld [vmem:[#allocation2 + $0x958] sm:$0xff]
    %v1445 = vld [vmem:[#allocation2 + $0x960] sm:$0xff]
    %v1446 = vld [vmem:[#allocation2 + $0x968] sm:$0xff]
    %v1447 = vld [vmem:[#allocation2 + $0x970] sm:$0xff]
    %v1448 = vld [vmem:[#allocation2 + $0x978] sm:$0xff]
    %v1449 = vld [vmem:[#allocation2 + $0x980] sm:$0xff]
    %v1450 = vld [vmem:[#allocation2 + $0x988] sm:$0xff]
    %v1451 = vld [vmem:[#allocation2 + $0x990] sm:$0xff]
    %v1452 = vld [vmem:[#allocation2 + $0x998] sm:$0xff]
    %v1453 = vld [vmem:[#allocation2 + $0x9a0] sm:$0xff]
    %v1454 = vld [vmem:[#allocation2 + $0x9a8] sm:$0xff]
    %v1455 = vld [vmem:[#allocation2 + $0x9b0] sm:$0xff]
    %v1456 = vld [vmem:[#allocation2 + $0x9b8] sm:$0xff]
    %v1457 = vld [vmem:[#allocation2 + $0x9c0] sm:$0xff]
    %v1458 = vld [vmem:[#allocation2 + $0x9c8] sm:$0xff]
    %v1459 = vld [vmem:[#allocation2 + $0x9d0] sm:$0xff]
    %v1460 = vld [vmem:[#allocation2 + $0x9d8] sm:$0xff]
    %v1461 = vld [vmem:[#allocation2 + $0x9e0] sm:$0xff]
    %v1462 = vld [vmem:[#allocation2 + $0x9e8] sm:$0xff]
    %v1463 = vld [vmem:[#allocation2 + $0x9f0] sm:$0xff]
    %v1464 = vld [vmem:[#allocation2 + $0x9f8] sm:$0xff]
    %v1465 = vld [vmem:[#allocation2 + $0xa00] sm:$0xff]
    %v1466 = vld [vmem:[#allocation2 + $0xa08] sm:$0xff]
    %v1467 = vld [vmem:[#allocation2 + $0xa10] sm:$0xff]
    %v1468 = vld [vmem:[#allocation2 + $0xa18] sm:$0xff]
    %v1469 = vld [vmem:[#allocation2 + $0xa20] sm:$0xff]
    %v1470 = vld [vmem:[#allocation2 + $0xa28] sm:$0xff]
    %v1471 = vld [vmem:[#allocation2 + $0xa30] sm:$0xff]
    %v1472 = vld [vmem:[#allocation2 + $0xa38] sm:$0xff]
    %v1473 = vld [vmem:[#allocation2 + $0xa40] sm:$0xff]
    %v1474 = vld [vmem:[#allocation2 + $0xa48] sm:$0xff]
    %v1475 = vld [vmem:[#allocation2 + $0xa50] sm:$0xff]
    %v1476 = vld [vmem:[#allocation2 + $0xa58] sm:$0xff]
    %v1477 = vld [vmem:[#allocation2 + $0xa60] sm:$0xff]
    %v1478 = vld [vmem:[#allocation2 + $0xa68] sm:$0xff]
    %v1479 = vld [vmem:[#allocation2 + $0xa70] sm:$0xff]
    %v1480 = vld [vmem:[#allocation2 + $0xa78] sm:$0xff]
    %v1481 = vld [vmem:[#allocation2 + $0xa80] sm:$0xff]
    %v1482 = vld [vmem:[#allocation2 + $0xa88] sm:$0xff]
    %v1483 = vld [vmem:[#allocation2 + $0xa90] sm:$0xff]
    %v1484 = vld [vmem:[#allocation2 + $0xa98] sm:$0xff]
    %v1485 = vld [vmem:[#allocation2 + $0xaa0] sm:$0xff]
    %v1486 = vld [vmem:[#allocation2 + $0xaa8] sm:$0xff]
    %v1487 = vld [vmem:[#allocation2 + $0xab0] sm:$0xff]
    %v1488 = vld [vmem:[#allocation2 + $0xab8] sm:$0xff]
    %v1489 = vld [vmem:[#allocation2 + $0xac0] sm:$0xff]
    %v1490 = vld [vmem:[#allocation2 + $0xac8] sm:$0xff]
    %v1491 = vld [vmem:[#allocation2 + $0xad0] sm:$0xff]
    %v1492 = vld [vmem:[#allocation2 + $0xad8] sm:$0xff]
    %v1493 = vld [vmem:[#allocation2 + $0xae0] sm:$0xff]
    %v1494 = vld [vmem:[#allocation2 + $0xae8] sm:$0xff]
    %v1495 = vld [vmem:[#allocation2 + $0xaf0] sm:$0xff]
    %v1496 = vld [vmem:[#allocation2 + $0xaf8] sm:$0xff]
    %v1497 = vld [vmem:[#allocation2 + $0xb00] sm:$0xff]
    %v1498 = vld [vmem:[#allocation2 + $0xb08] sm:$0xff]
    %v1499 = vld [vmem:[#allocation2 + $0xb10] sm:$0xff]
    %v1500 = vld [vmem:[#allocation2 + $0xb18] sm:$0xff]
    %v1501 = vld [vmem:[#allocation2 + $0xb20] sm:$0xff]
    %v1502 = vld [vmem:[#allocation2 + $0xb28] sm:$0xff]
    %v1503 = vld [vmem:[#allocation2 + $0xb30] sm:$0xff]
    %v1504 = vld [vmem:[#allocation2 + $0xb38] sm:$0xff]
    %v1505 = vld [vmem:[#allocation2 + $0xb40] sm:$0xff]
    %v1506 = vld [vmem:[#allocation2 + $0xb48] sm:$0xff]
    %v1507 = vld [vmem:[#allocation2 + $0xb50] sm:$0xff]
    %v1508 = vld [vmem:[#allocation2 + $0xb58] sm:$0xff]
    %v1509 = vld [vmem:[#allocation2 + $0xb60] sm:$0xff]
    %v1510 = vld [vmem:[#allocation2 + $0xb68] sm:$0xff]
    %v1511 = vld [vmem:[#allocation2 + $0xb70] sm:$0xff]
    %v1512 = vld [vmem:[#allocation2 + $0xb78] sm:$0xff]
    %v1513 = vld [vmem:[#allocation2 + $0xb80] sm:$0xff]
    %v1514 = vld [vmem:[#allocation2 + $0xb88] sm:$0xff]
    %v1515 = vld [vmem:[#allocation2 + $0xb90] sm:$0xff]
    %v1516 = vld [vmem:[#allocation2 + $0xb98] sm:$0xff]
    %v1517 = vld [vmem:[#allocation2 + $0xba0] sm:$0xff]
    %v1518 = vld [vmem:[#allocation2 + $0xba8] sm:$0xff]
    %v1519 = vld [vmem:[#allocation2 + $0xbb0] sm:$0xff]
    %v1520 = vld [vmem:[#allocation2 + $0xbb8] sm:$0xff]
    %v1521 = vld [vmem:[#allocation2 + $0xbc0] sm:$0xff]
    %v1522 = vld [vmem:[#allocation2 + $0xbc8] sm:$0xff]
    %v1523 = vld [vmem:[#allocation2 + $0xbd0] sm:$0xff]
    %v1524 = vld [vmem:[#allocation2 + $0xbd8] sm:$0xff]
    %v1525 = vld [vmem:[#allocation2 + $0xbe0] sm:$0xff]
    %v1526 = vld [vmem:[#allocation2 + $0xbe8] sm:$0xff]
    %v1527 = vld [vmem:[#allocation2 + $0xbf0] sm:$0xff]
    %v1528 = vld [vmem:[#allocation2 + $0xbf8] sm:$0xff]
    %v1529 = vld [vmem:[#allocation2 + $0xc00] sm:$0xff]
    %v1530 = vld [vmem:[#allocation2 + $0xc08] sm:$0xff]
    %v1531 = vld [vmem:[#allocation2 + $0xc10] sm:$0xff]
    %v1532 = vld [vmem:[#allocation2 + $0xc18] sm:$0xff]
    %v1533 = vld [vmem:[#allocation2 + $0xc20] sm:$0xff]
    %v1534 = vld [vmem:[#allocation2 + $0xc28] sm:$0xff]
    %v1535 = vld [vmem:[#allocation2 + $0xc30] sm:$0xff]
    %v1536 = vld [vmem:[#allocation2 + $0xc38] sm:$0xff]
    %v1537 = vld [vmem:[#allocation2 + $0xc40] sm:$0xff]
    %v1538 = vld [vmem:[#allocation2 + $0xc48] sm:$0xff]
    %v1539 = vld [vmem:[#allocation2 + $0xc50] sm:$0xff]
    %v1540 = vld [vmem:[#allocation2 + $0xc58] sm:$0xff]
    %v1541 = vld [vmem:[#allocation2 + $0xc60] sm:$0xff]
    %v1542 = vld [vmem:[#allocation2 + $0xc68] sm:$0xff]
    %v1543 = vld [vmem:[#allocation2 + $0xc70] sm:$0xff]
    %v1544 = vld [vmem:[#allocation2 + $0xc78] sm:$0xff]
    %v1545 = vld [vmem:[#allocation2 + $0xc80] sm:$0xff]
    %v1546 = vld [vmem:[#allocation2 + $0xc88] sm:$0xff]
    %v1547 = vld [vmem:[#allocation2 + $0xc90] sm:$0xff]
    %v1548 = vld [vmem:[#allocation2 + $0xc98] sm:$0xff]
    %v1549 = vld [vmem:[#allocation2 + $0xca0] sm:$0xff]
    %v1550 = vld [vmem:[#allocation2 + $0xca8] sm:$0xff]
    %v1551 = vld [vmem:[#allocation2 + $0xcb0] sm:$0xff]
    %v1552 = vld [vmem:[#allocation2 + $0xcb8] sm:$0xff]
    %v1553 = vld [vmem:[#allocation2 + $0xcc0] sm:$0xff]
    %v1554 = vld [vmem:[#allocation2 + $0xcc8] sm:$0xff]
    %v1555 = vld [vmem:[#allocation2 + $0xcd0] sm:$0xff]
    %v1556 = vld [vmem:[#allocation2 + $0xcd8] sm:$0xff]
    %v1557 = vld [vmem:[#allocation2 + $0xce0] sm:$0xff]
    %v1558 = vld [vmem:[#allocation2 + $0xce8] sm:$0xff]
    %v1559 = vld [vmem:[#allocation2 + $0xcf0] sm:$0xff]
    %v1560 = vld [vmem:[#allocation2 + $0xcf8] sm:$0xff]
    %v1561 = vld [vmem:[#allocation2 + $0xd00] sm:$0xff]
    %v1562 = vld [vmem:[#allocation2 + $0xd08] sm:$0xff]
    %v1563 = vld [vmem:[#allocation2 + $0xd10] sm:$0xff]
    %v1564 = vld [vmem:[#allocation2 + $0xd18] sm:$0xff]
    %v1565 = vld [vmem:[#allocation2 + $0xd20] sm:$0xff]
    %v1566 = vld [vmem:[#allocation2 + $0xd28] sm:$0xff]
    %v1567 = vld [vmem:[#allocation2 + $0xd30] sm:$0xff]
    %v1568 = vld [vmem:[#allocation2 + $0xd38] sm:$0xff]
    %v1569 = vld [vmem:[#allocation2 + $0xd40] sm:$0xff]
    %v1570 = vld [vmem:[#allocation2 + $0xd48] sm:$0xff]
    %v1571 = vld [vmem:[#allocation2 + $0xd50] sm:$0xff]
    %v1572 = vld [vmem:[#allocation2 + $0xd58] sm:$0xff]
    %v1573 = vld [vmem:[#allocation2 + $0xd60] sm:$0xff]
    %v1574 = vld [vmem:[#allocation2 + $0xd68] sm:$0xff]
    %v1575 = vld [vmem:[#allocation2 + $0xd70] sm:$0xff]
    %v1576 = vld [vmem:[#allocation2 + $0xd78] sm:$0xff]
    %v1577 = vld [vmem:[#allocation2 + $0xd80] sm:$0xff]
    %v1578 = vld [vmem:[#allocation2 + $0xd88] sm:$0xff]
    %v1579 = vld [vmem:[#allocation2 + $0xd90] sm:$0xff]
    %v1580 = vld [vmem:[#allocation2 + $0xd98] sm:$0xff]
    %v1581 = vld [vmem:[#allocation2 + $0xda0] sm:$0xff]
    %v1582 = vld [vmem:[#allocation2 + $0xda8] sm:$0xff]
    %v1583 = vld [vmem:[#allocation2 + $0xdb0] sm:$0xff]
    %v1584 = vld [vmem:[#allocation2 + $0xdb8] sm:$0xff]
    %v1585 = vld [vmem:[#allocation2 + $0xdc0] sm:$0xff]
    %v1586 = vld [vmem:[#allocation2 + $0xdc8] sm:$0xff]
    %v1587 = vld [vmem:[#allocation2 + $0xdd0] sm:$0xff]
    %v1588 = vld [vmem:[#allocation2 + $0xdd8] sm:$0xff]
    %v1589 = vld [vmem:[#allocation2 + $0xde0] sm:$0xff]
    %v1590 = vld [vmem:[#allocation2 + $0xde8] sm:$0xff]
    %v1591 = vld [vmem:[#allocation2 + $0xdf0] sm:$0xff]
    %v1592 = vld [vmem:[#allocation2 + $0xdf8] sm:$0xff]
    %v1593 = vld [vmem:[#allocation2 + $0xe00] sm:$0xff]
    %v1594 = vld [vmem:[#allocation2 + $0xe08] sm:$0xff]
    %v1595 = vld [vmem:[#allocation2 + $0xe10] sm:$0xff]
    %v1596 = vld [vmem:[#allocation2 + $0xe18] sm:$0xff]
    %v1597 = vld [vmem:[#allocation2 + $0xe20] sm:$0xff]
    %v1598 = vld [vmem:[#allocation2 + $0xe28] sm:$0xff]
    %v1599 = vld [vmem:[#allocation2 + $0xe30] sm:$0xff]
    %v1600 = vld [vmem:[#allocation2 + $0xe38] sm:$0xff]
    %v1601 = vld [vmem:[#allocation2 + $0xe40] sm:$0xff]
    %v1602 = vld [vmem:[#allocation2 + $0xe48] sm:$0xff]
    %v1603 = vld [vmem:[#allocation2 + $0xe50] sm:$0xff]
    %v1604 = vld [vmem:[#allocation2 + $0xe58] sm:$0xff]
    %v1605 = vld [vmem:[#allocation2 + $0xe60] sm:$0xff]
    %v1606 = vld [vmem:[#allocation2 + $0xe68] sm:$0xff]
    %v1607 = vld [vmem:[#allocation2 + $0xe70] sm:$0xff]
    %v1608 = vld [vmem:[#allocation2 + $0xe78] sm:$0xff]
    %v1609 = vld [vmem:[#allocation2 + $0xe80] sm:$0xff]
    %v1610 = vld [vmem:[#allocation2 + $0xe88] sm:$0xff]
    %v1611 = vld [vmem:[#allocation2 + $0xe90] sm:$0xff]
    %v1612 = vld [vmem:[#allocation2 + $0xe98] sm:$0xff]
    %v1613 = vld [vmem:[#allocation2 + $0xea0] sm:$0xff]
    %v1614 = vld [vmem:[#allocation2 + $0xea8] sm:$0xff]
    %v1615 = vld [vmem:[#allocation2 + $0xeb0] sm:$0xff]
    %v1616 = vld [vmem:[#allocation2 + $0xeb8] sm:$0xff]
    %v1617 = vld [vmem:[#allocation2 + $0xec0] sm:$0xff]
    %v1618 = vld [vmem:[#allocation2 + $0xec8] sm:$0xff]
    %v1619 = vld [vmem:[#allocation2 + $0xed0] sm:$0xff]
    %v1620 = vld [vmem:[#allocation2 + $0xed8] sm:$0xff]
    %v1621 = vld [vmem:[#allocation2 + $0xee0] sm:$0xff]
    %v1622 = vld [vmem:[#allocation2 + $0xee8] sm:$0xff]
    %v1623 = vld [vmem:[#allocation2 + $0xef0] sm:$0xff]
    %v1624 = vld [vmem:[#allocation2 + $0xef8] sm:$0xff]
    %v1625 = vld [vmem:[#allocation2 + $0xf00] sm:$0xff]
    %v1626 = vld [vmem:[#allocation2 + $0xf08] sm:$0xff]
    %v1627 = vld [vmem:[#allocation2 + $0xf10] sm:$0xff]
    %v1628 = vld [vmem:[#allocation2 + $0xf18] sm:$0xff]
    %v1629 = vld [vmem:[#allocation2 + $0xf20] sm:$0xff]
    %v1630 = vld [vmem:[#allocation2 + $0xf28] sm:$0xff]
    %v1631 = vld [vmem:[#allocation2 + $0xf30] sm:$0xff]
    %v1632 = vld [vmem:[#allocation2 + $0xf38] sm:$0xff]
    %v1633 = vld [vmem:[#allocation2 + $0xf40] sm:$0xff]
    %v1634 = vld [vmem:[#allocation2 + $0xf48] sm:$0xff]
    %v1635 = vld [vmem:[#allocation2 + $0xf50] sm:$0xff]
    %v1636 = vld [vmem:[#allocation2 + $0xf58] sm:$0xff]
    %v1637 = vld [vmem:[#allocation2 + $0xf60] sm:$0xff]
    %v1638 = vld [vmem:[#allocation2 + $0xf68] sm:$0xff]
    %v1639 = vld [vmem:[#allocation2 + $0xf70] sm:$0xff]
    %v1640 = vld [vmem:[#allocation2 + $0xf78] sm:$0xff]
    %v1641 = vld [vmem:[#allocation2 + $0xf80] sm:$0xff]
    %v1642 = vld [vmem:[#allocation2 + $0xf88] sm:$0xff]
    %v1643 = vld [vmem:[#allocation2 + $0xf90] sm:$0xff]
    %v1644 = vld [vmem:[#allocation2 + $0xf98] sm:$0xff]
    %v1645 = vld [vmem:[#allocation2 + $0xfa0] sm:$0xff]
    %v1646 = vld [vmem:[#allocation2 + $0xfa8] sm:$0xff]
    %v1647 = vld [vmem:[#allocation2 + $0xfb0] sm:$0xff]
    %v1648 = vld [vmem:[#allocation2 + $0xfb8] sm:$0xff]
    %v1649 = vld [vmem:[#allocation2 + $0xfc0] sm:$0xff]
    %v1650 = vld [vmem:[#allocation2 + $0xfc8] sm:$0xff]
    %v1651 = vld [vmem:[#allocation2 + $0xfd0] sm:$0xff]
    %v1652 = vld [vmem:[#allocation2 + $0xfd8] sm:$0xff]
    %v1653 = vld [vmem:[#allocation2 + $0xfe0] sm:$0xff]
    %v1654 = vld [vmem:[#allocation2 + $0xfe8] sm:$0xff]
    %v1655 = vld [vmem:[#allocation2 + $0xff0] sm:$0xff]
    %v1656 = vld [vmem:[#allocation2 + $0xff8] sm:$0xff]
    %v1657 = vld [vmem:[#allocation2 + $0x1000] sm:$0xff]
    %v1658 = vld [vmem:[#allocation2 + $0x1008] sm:$0xff]
    %v1659 = vld [vmem:[#allocation2 + $0x1010] sm:$0xff]
    %v1660 = vld [vmem:[#allocation2 + $0x1018] sm:$0xff]
    %v1661 = vld [vmem:[#allocation2 + $0x1020] sm:$0xff]
    %v1662 = vld [vmem:[#allocation2 + $0x1028] sm:$0xff]
    %v1663 = vld [vmem:[#allocation2 + $0x1030] sm:$0xff]
    %v1664 = vld [vmem:[#allocation2 + $0x1038] sm:$0xff]
    %v1665 = vld [vmem:[#allocation2 + $0x1040] sm:$0xff]
    %v1666 = vld [vmem:[#allocation2 + $0x1048] sm:$0xff]
    %v1667 = vld [vmem:[#allocation2 + $0x1050] sm:$0xff]
    %v1668 = vld [vmem:[#allocation2 + $0x1058] sm:$0xff]
    %v1669 = vld [vmem:[#allocation2 + $0x1060] sm:$0xff]
    %v1670 = vld [vmem:[#allocation2 + $0x1068] sm:$0xff]
    %v1671 = vld [vmem:[#allocation2 + $0x1070] sm:$0xff]
    %v1672 = vld [vmem:[#allocation2 + $0x1078] sm:$0xff]
    %v1673 = vld [vmem:[#allocation2 + $0x1080] sm:$0xff]
    %v1674 = vld [vmem:[#allocation2 + $0x1088] sm:$0xff]
    %v1675 = vld [vmem:[#allocation2 + $0x1090] sm:$0xff]
    %v1676 = vld [vmem:[#allocation2 + $0x1098] sm:$0xff]
    %v1677 = vld [vmem:[#allocation2 + $0x10a0] sm:$0xff]
    %v1678 = vld [vmem:[#allocation2 + $0x10a8] sm:$0xff]
    %v1679 = vld [vmem:[#allocation2 + $0x10b0] sm:$0xff]
    %v1680 = vld [vmem:[#allocation2 + $0x10b8] sm:$0xff]
    %v1681 = vld [vmem:[#allocation2 + $0x10c0] sm:$0xff]
    %v1682 = vld [vmem:[#allocation2 + $0x10c8] sm:$0xff]
    %v1683 = vld [vmem:[#allocation2 + $0x10d0] sm:$0xff]
    %v1684 = vld [vmem:[#allocation2 + $0x10d8] sm:$0xff]
    %v1685 = vld [vmem:[#allocation2 + $0x10e0] sm:$0xff]
    %v1686 = vld [vmem:[#allocation2 + $0x10e8] sm:$0xff]
    %v1687 = vld [vmem:[#allocation2 + $0x10f0] sm:$0xff]
    %v1688 = vld [vmem:[#allocation2 + $0x10f8] sm:$0xff]
    %v1689 = vld [vmem:[#allocation2 + $0x1100] sm:$0xff]
    %v1690 = vld [vmem:[#allocation2 + $0x1108] sm:$0xff]
    %v1691 = vld [vmem:[#allocation2 + $0x1110] sm:$0xff]
    %v1692 = vld [vmem:[#allocation2 + $0x1118] sm:$0xff]
    %v1693 = vld [vmem:[#allocation2 + $0x1120] sm:$0xff]
    %v1694 = vld [vmem:[#allocation2 + $0x1128] sm:$0xff]
    %v1695 = vld [vmem:[#allocation2 + $0x1130] sm:$0xff]
    %v1696 = vld [vmem:[#allocation2 + $0x1138] sm:$0xff]
    %v1697 = vld [vmem:[#allocation2 + $0x1140] sm:$0xff]
    %v1698 = vld [vmem:[#allocation2 + $0x1148] sm:$0xff]
    %v1699 = vld [vmem:[#allocation2 + $0x1150] sm:$0xff]
    %v1700 = vld [vmem:[#allocation2 + $0x1158] sm:$0xff]
    %v1701 = vld [vmem:[#allocation2 + $0x1160] sm:$0xff]
    %v1702 = vld [vmem:[#allocation2 + $0x1168] sm:$0xff]
    %v1703 = vld [vmem:[#allocation2 + $0x1170] sm:$0xff]
    %v1704 = vld [vmem:[#allocation2 + $0x1178] sm:$0xff]
    %v1705 = vld [vmem:[#allocation2 + $0x1180] sm:$0xff]
    %v1706 = vld [vmem:[#allocation2 + $0x1188] sm:$0xff]
    %v1707 = vld [vmem:[#allocation2 + $0x1190] sm:$0xff]
    %v1708 = vld [vmem:[#allocation2 + $0x1198] sm:$0xff]
    %v1709 = vld [vmem:[#allocation2 + $0x11a0] sm:$0xff]
    %v1710 = vld [vmem:[#allocation2 + $0x11a8] sm:$0xff]
    %v1711 = vld [vmem:[#allocation2 + $0x11b0] sm:$0xff]
    %v1712 = vld [vmem:[#allocation2 + $0x11b8] sm:$0xff]
    %v1713 = vld [vmem:[#allocation2 + $0x11c0] sm:$0xff]
    %v1714 = vld [vmem:[#allocation2 + $0x11c8] sm:$0xff]
    %v1715 = vld [vmem:[#allocation2 + $0x11d0] sm:$0xff]
    %v1716 = vld [vmem:[#allocation2 + $0x11d8] sm:$0xff]
    %v1717 = vld [vmem:[#allocation2 + $0x11e0] sm:$0xff]
    %v1718 = vld [vmem:[#allocation2 + $0x11e8] sm:$0xff]
    %v1719 = vld [vmem:[#allocation2 + $0x11f0] sm:$0xff]
    %v1720 = vld [vmem:[#allocation2 + $0x11f8] sm:$0xff]
    %v1721 = vld [vmem:[#allocation2 + $0x1200] sm:$0xff]
    %v1722 = vld [vmem:[#allocation2 + $0x1208] sm:$0xff]
    %v1723 = vld [vmem:[#allocation2 + $0x1210] sm:$0xff]
    %v1724 = vld [vmem:[#allocation2 + $0x1218] sm:$0xff]
    %v1725 = vld [vmem:[#allocation2 + $0x1220] sm:$0xff]
    %v1726 = vld [vmem:[#allocation2 + $0x1228] sm:$0xff]
    %v1727 = vld [vmem:[#allocation2 + $0x1230] sm:$0xff]
    %v1728 = vld [vmem:[#allocation2 + $0x1238] sm:$0xff]
    %v1729 = vld [vmem:[#allocation2 + $0x1240] sm:$0xff]
    %v1730 = vld [vmem:[#allocation2 + $0x1248] sm:$0xff]
    %v1731 = vld [vmem:[#allocation2 + $0x1250] sm:$0xff]
    %v1732 = vld [vmem:[#allocation2 + $0x1258] sm:$0xff]
    %v1733 = vld [vmem:[#allocation2 + $0x1260] sm:$0xff]
    %v1734 = vld [vmem:[#allocation2 + $0x1268] sm:$0xff]
    %v1735 = vld [vmem:[#allocation2 + $0x1270] sm:$0xff]
    %v1736 = vld [vmem:[#allocation2 + $0x1278] sm:$0xff]
    %v1737 = vld [vmem:[#allocation2 + $0x1280] sm:$0xff]
    %v1738 = vld [vmem:[#allocation2 + $0x1288] sm:$0xff]
    %v1739 = vld [vmem:[#allocation2 + $0x1290] sm:$0xff]
    %v1740 = vld [vmem:[#allocation2 + $0x1298] sm:$0xff]
    %v1741 = vld [vmem:[#allocation2 + $0x12a0] sm:$0xff]
    %v1742 = vld [vmem:[#allocation2 + $0x12a8] sm:$0xff]
    %v1743 = vld [vmem:[#allocation2 + $0x12b0] sm:$0xff]
    %v1744 = vld [vmem:[#allocation2 + $0x12b8] sm:$0xff]
    %v1745 = vld [vmem:[#allocation2 + $0x12c0] sm:$0xff]
    %v1746 = vld [vmem:[#allocation2 + $0x12c8] sm:$0xff]
    %v1747 = vld [vmem:[#allocation2 + $0x12d0] sm:$0xff]
    %v1748 = vld [vmem:[#allocation2 + $0x12d8] sm:$0xff]
    %v1749 = vld [vmem:[#allocation2 + $0x12e0] sm:$0xff]
    %v1750 = vld [vmem:[#allocation2 + $0x12e8] sm:$0xff]
    %v1751 = vld [vmem:[#allocation2 + $0x12f0] sm:$0xff]
    %v1752 = vld [vmem:[#allocation2 + $0x12f8] sm:$0xff]
    %v1753 = vld [vmem:[#allocation2 + $0x1300] sm:$0xff]
    %v1754 = vld [vmem:[#allocation2 + $0x1308] sm:$0xff]
    %v1755 = vld [vmem:[#allocation2 + $0x1310] sm:$0xff]
    %v1756 = vld [vmem:[#allocation2 + $0x1318] sm:$0xff]
    %v1757 = vld [vmem:[#allocation2 + $0x1320] sm:$0xff]
    %v1758 = vld [vmem:[#allocation2 + $0x1328] sm:$0xff]
    %v1759 = vld [vmem:[#allocation2 + $0x1330] sm:$0xff]
    %v1760 = vld [vmem:[#allocation2 + $0x1338] sm:$0xff]
    %v1761 = vld [vmem:[#allocation2 + $0x1340] sm:$0xff]
    %v1762 = vld [vmem:[#allocation2 + $0x1348] sm:$0xff]
    %v1763 = vld [vmem:[#allocation2 + $0x1350] sm:$0xff]
    %v1764 = vld [vmem:[#allocation2 + $0x1358] sm:$0xff]
    %v1765 = vld [vmem:[#allocation2 + $0x1360] sm:$0xff]
    %v1766 = vld [vmem:[#allocation2 + $0x1368] sm:$0xff]
    %v1767 = vld [vmem:[#allocation2 + $0x1370] sm:$0xff]
    %v1768 = vld [vmem:[#allocation2 + $0x1378] sm:$0xff]
    %v1769 = vld [vmem:[#allocation2 + $0x1380] sm:$0xff]
    %v1770 = vld [vmem:[#allocation2 + $0x1388] sm:$0xff]
    %v1771 = vld [vmem:[#allocation2 + $0x1390] sm:$0xff]
    %v1772 = vld [vmem:[#allocation2 + $0x1398] sm:$0xff]
    %v1773 = vld [vmem:[#allocation2 + $0x13a0] sm:$0xff]
    %v1774 = vld [vmem:[#allocation2 + $0x13a8] sm:$0xff]
    %v1775 = vld [vmem:[#allocation2 + $0x13b0] sm:$0xff]
    %v1776 = vld [vmem:[#allocation2 + $0x13b8] sm:$0xff]
    %v1777 = vld [vmem:[#allocation2 + $0x13c0] sm:$0xff]
    %v1778 = vld [vmem:[#allocation2 + $0x13c8] sm:$0xff]
    %v1779 = vld [vmem:[#allocation2 + $0x13d0] sm:$0xff]
    %v1780 = vld [vmem:[#allocation2 + $0x13d8] sm:$0xff]
    %v1781 = vld [vmem:[#allocation2 + $0x13e0] sm:$0xff]
    %v1782 = vld [vmem:[#allocation2 + $0x13e8] sm:$0xff]
    %v1783 = vld [vmem:[#allocation2 + $0x13f0] sm:$0xff]
    %v1784 = vld [vmem:[#allocation2 + $0x13f8] sm:$0xff]
    %v1785 = vld [vmem:[#allocation2 + $0x1400] sm:$0xff]
    %v1786 = vld [vmem:[#allocation2 + $0x1408] sm:$0xff]
    %v1787 = vld [vmem:[#allocation2 + $0x1410] sm:$0xff]
    %v1788 = vld [vmem:[#allocation2 + $0x1418] sm:$0xff]
    %v1789 = vld [vmem:[#allocation2 + $0x1420] sm:$0xff]
    %v1790 = vld [vmem:[#allocation2 + $0x1428] sm:$0xff]
    %v1791 = vld [vmem:[#allocation2 + $0x1430] sm:$0xff]
    %v1792 = vld [vmem:[#allocation2 + $0x1438] sm:$0xff]
    %v1793 = vld [vmem:[#allocation2 + $0x1440] sm:$0xff]
    %v1794 = vld [vmem:[#allocation2 + $0x1448] sm:$0xff]
    %v1795 = vld [vmem:[#allocation2 + $0x1450] sm:$0xff]
    %v1796 = vld [vmem:[#allocation2 + $0x1458] sm:$0xff]
    %v1797 = vld [vmem:[#allocation2 + $0x1460] sm:$0xff]
    %v1798 = vld [vmem:[#allocation2 + $0x1468] sm:$0xff]
    %v1799 = vld [vmem:[#allocation2 + $0x1470] sm:$0xff]
    %v1800 = vld [vmem:[#allocation2 + $0x1478] sm:$0xff]
    %v1801 = vld [vmem:[#allocation2 + $0x1480] sm:$0xff]
    %v1802 = vld [vmem:[#allocation2 + $0x1488] sm:$0xff]
    %v1803 = vld [vmem:[#allocation2 + $0x1490] sm:$0xff]
    %v1804 = vld [vmem:[#allocation2 + $0x1498] sm:$0xff]
    %v1805 = vld [vmem:[#allocation2 + $0x14a0] sm:$0xff]
    %v1806 = vld [vmem:[#allocation2 + $0x14a8] sm:$0xff]
    %v1807 = vld [vmem:[#allocation2 + $0x14b0] sm:$0xff]
    %v1808 = vld [vmem:[#allocation2 + $0x14b8] sm:$0xff]
    %v1809 = vld [vmem:[#allocation2 + $0x14c0] sm:$0xff]
    %v1810 = vld [vmem:[#allocation2 + $0x14c8] sm:$0xff]
    %v1811 = vld [vmem:[#allocation2 + $0x14d0] sm:$0xff]
    %v1812 = vld [vmem:[#allocation2 + $0x14d8] sm:$0xff]
    %v1813 = vld [vmem:[#allocation2 + $0x14e0] sm:$0xff]
    %v1814 = vld [vmem:[#allocation2 + $0x14e8] sm:$0xff]
    %v1815 = vld [vmem:[#allocation2 + $0x14f0] sm:$0xff]
    %v1816 = vld [vmem:[#allocation2 + $0x14f8] sm:$0xff]
    %v1817 = vld [vmem:[#allocation2 + $0x1500] sm:$0xff]
    %v1818 = vld [vmem:[#allocation2 + $0x1508] sm:$0xff]
    %v1819 = vld [vmem:[#allocation2 + $0x1510] sm:$0xff]
    %v1820 = vld [vmem:[#allocation2 + $0x1518] sm:$0xff]
    %v1821 = vld [vmem:[#allocation2 + $0x1520] sm:$0xff]
    %v1822 = vld [vmem:[#allocation2 + $0x1528] sm:$0xff]
    %v1823 = vld [vmem:[#allocation2 + $0x1530] sm:$0xff]
    %v1824 = vld [vmem:[#allocation2 + $0x1538] sm:$0xff]
    %v1825 = vld [vmem:[#allocation2 + $0x1540] sm:$0xff]
    %v1826 = vld [vmem:[#allocation2 + $0x1548] sm:$0xff]
    %v1827 = vld [vmem:[#allocation2 + $0x1550] sm:$0xff]
    %v1828 = vld [vmem:[#allocation2 + $0x1558] sm:$0xff]
    %v1829 = vld [vmem:[#allocation2 + $0x1560] sm:$0xff]
    %v1830 = vld [vmem:[#allocation2 + $0x1568] sm:$0xff]
    %v1831 = vld [vmem:[#allocation2 + $0x1570] sm:$0xff]
    %v1832 = vld [vmem:[#allocation2 + $0x1578] sm:$0xff]
    %v1833 = vld [vmem:[#allocation2 + $0x1580] sm:$0xff]
    %v1834 = vld [vmem:[#allocation2 + $0x1588] sm:$0xff]
    %v1835 = vld [vmem:[#allocation2 + $0x1590] sm:$0xff]
    %v1836 = vld [vmem:[#allocation2 + $0x1598] sm:$0xff]
    %v1837 = vld [vmem:[#allocation2 + $0x15a0] sm:$0xff]
    %v1838 = vld [vmem:[#allocation2 + $0x15a8] sm:$0xff]
    %v1839 = vld [vmem:[#allocation2 + $0x15b0] sm:$0xff]
    %v1840 = vld [vmem:[#allocation2 + $0x15b8] sm:$0xff]
    %v1841 = vld [vmem:[#allocation2 + $0x15c0] sm:$0xff]
    %v1842 = vld [vmem:[#allocation2 + $0x15c8] sm:$0xff]
    %v1843 = vld [vmem:[#allocation2 + $0x15d0] sm:$0xff]
    %v1844 = vld [vmem:[#allocation2 + $0x15d8] sm:$0xff]
    %v1845 = vld [vmem:[#allocation2 + $0x15e0] sm:$0xff]
    %v1846 = vld [vmem:[#allocation2 + $0x15e8] sm:$0xff]
    %v1847 = vld [vmem:[#allocation2 + $0x15f0] sm:$0xff]
    %v1848 = vld [vmem:[#allocation2 + $0x15f8] sm:$0xff]
    %v1849 = vld [vmem:[#allocation2 + $0x1600] sm:$0xff]
    %v1850 = vld [vmem:[#allocation2 + $0x1608] sm:$0xff]
    %v1851 = vld [vmem:[#allocation2 + $0x1610] sm:$0xff]
    %v1852 = vld [vmem:[#allocation2 + $0x1618] sm:$0xff]
    %v1853 = vld [vmem:[#allocation2 + $0x1620] sm:$0xff]
    %v1854 = vld [vmem:[#allocation2 + $0x1628] sm:$0xff]
    %v1855 = vld [vmem:[#allocation2 + $0x1630] sm:$0xff]
    %v1856 = vld [vmem:[#allocation2 + $0x1638] sm:$0xff]
    %v1857 = vld [vmem:[#allocation2 + $0x1640] sm:$0xff]
    %v1858 = vld [vmem:[#allocation2 + $0x1648] sm:$0xff]
    %v1859 = vld [vmem:[#allocation2 + $0x1650] sm:$0xff]
    %v1860 = vld [vmem:[#allocation2 + $0x1658] sm:$0xff]
    %v1861 = vld [vmem:[#allocation2 + $0x1660] sm:$0xff]
    %v1862 = vld [vmem:[#allocation2 + $0x1668] sm:$0xff]
    %v1863 = vld [vmem:[#allocation2 + $0x1670] sm:$0xff]
    %v1864 = vld [vmem:[#allocation2 + $0x1678] sm:$0xff]
    %v1865 = vld [vmem:[#allocation2 + $0x1680] sm:$0xff]
    %v1866 = vld [vmem:[#allocation2 + $0x1688] sm:$0xff]
    %v1867 = vld [vmem:[#allocation2 + $0x1690] sm:$0xff]
    %v1868 = vld [vmem:[#allocation2 + $0x1698] sm:$0xff]
    %v1869 = vld [vmem:[#allocation2 + $0x16a0] sm:$0xff]
    %v1870 = vld [vmem:[#allocation2 + $0x16a8] sm:$0xff]
    %v1871 = vld [vmem:[#allocation2 + $0x16b0] sm:$0xff]
    %v1872 = vld [vmem:[#allocation2 + $0x16b8] sm:$0xff]
    %v1873 = vld [vmem:[#allocation2 + $0x16c0] sm:$0xff]
    %v1874 = vld [vmem:[#allocation2 + $0x16c8] sm:$0xff]
    %v1875 = vld [vmem:[#allocation2 + $0x16d0] sm:$0xff]
    %v1876 = vld [vmem:[#allocation2 + $0x16d8] sm:$0xff]
    %v1877 = vld [vmem:[#allocation2 + $0x16e0] sm:$0xff]
    %v1878 = vld [vmem:[#allocation2 + $0x16e8] sm:$0xff]
    %v1879 = vld [vmem:[#allocation2 + $0x16f0] sm:$0xff]
    %v1880 = vld [vmem:[#allocation2 + $0x16f8] sm:$0xff]
    %v1881 = vld [vmem:[#allocation2 + $0x1700] sm:$0xff]
    %v1882 = vld [vmem:[#allocation2 + $0x1708] sm:$0xff]
    %v1883 = vld [vmem:[#allocation2 + $0x1710] sm:$0xff]
    %v1884 = vld [vmem:[#allocation2 + $0x1718] sm:$0xff]
    %v1885 = vld [vmem:[#allocation2 + $0x1720] sm:$0xff]
    %v1886 = vld [vmem:[#allocation2 + $0x1728] sm:$0xff]
    %v1887 = vld [vmem:[#allocation2 + $0x1730] sm:$0xff]
    %v1888 = vld [vmem:[#allocation2 + $0x1738] sm:$0xff]
    %v1889 = vld [vmem:[#allocation2 + $0x1740] sm:$0xff]
    %v1890 = vld [vmem:[#allocation2 + $0x1748] sm:$0xff]
    %v1891 = vld [vmem:[#allocation2 + $0x1750] sm:$0xff]
    %v1892 = vld [vmem:[#allocation2 + $0x1758] sm:$0xff]
    %v1893 = vld [vmem:[#allocation2 + $0x1760] sm:$0xff]
    %v1894 = vld [vmem:[#allocation2 + $0x1768] sm:$0xff]
    %v1895 = vld [vmem:[#allocation2 + $0x1770] sm:$0xff]
    %v1896 = vld [vmem:[#allocation2 + $0x1778] sm:$0xff]
    %v1897 = vld [vmem:[#allocation2 + $0x1780] sm:$0xff]
    %v1898 = vld [vmem:[#allocation2 + $0x1788] sm:$0xff]
    %v1899 = vld [vmem:[#allocation2 + $0x1790] sm:$0xff]
    %v1900 = vld [vmem:[#allocation2 + $0x1798] sm:$0xff]
    %v1901 = vld [vmem:[#allocation2 + $0x17a0] sm:$0xff]
    %v1902 = vld [vmem:[#allocation2 + $0x17a8] sm:$0xff]
    %v1903 = vld [vmem:[#allocation2 + $0x17b0] sm:$0xff]
    %v1904 = vld [vmem:[#allocation2 + $0x17b8] sm:$0xff]
    %v1905 = vld [vmem:[#allocation2 + $0x17c0] sm:$0xff]
    %v1906 = vld [vmem:[#allocation2 + $0x17c8] sm:$0xff]
    %v1907 = vld [vmem:[#allocation2 + $0x17d0] sm:$0xff]
    %v1908 = vld [vmem:[#allocation2 + $0x17d8] sm:$0xff]
    %v1909 = vld [vmem:[#allocation2 + $0x17e0] sm:$0xff]
    %v1910 = vld [vmem:[#allocation2 + $0x17e8] sm:$0xff]
    %v1911 = vld [vmem:[#allocation2 + $0x17f0] sm:$0xff]
    %v1912 = vld [vmem:[#allocation2 + $0x17f8] sm:$0xff]
    %v1913 = vld [vmem:[#allocation2 + $0x1800] sm:$0xff]
    %v1914 = vld [vmem:[#allocation2 + $0x1808] sm:$0xff]
    %v1915 = vld [vmem:[#allocation2 + $0x1810] sm:$0xff]
    %v1916 = vld [vmem:[#allocation2 + $0x1818] sm:$0xff]
    %v1917 = vld [vmem:[#allocation2 + $0x1820] sm:$0xff]
    %v1918 = vld [vmem:[#allocation2 + $0x1828] sm:$0xff]
    %v1919 = vld [vmem:[#allocation2 + $0x1830] sm:$0xff]
    %v1920 = vld [vmem:[#allocation2 + $0x1838] sm:$0xff]
    %v1921 = vld [vmem:[#allocation2 + $0x1840] sm:$0xff]
    %v1922 = vld [vmem:[#allocation2 + $0x1848] sm:$0xff]
    %v1923 = vld [vmem:[#allocation2 + $0x1850] sm:$0xff]
    %v1924 = vld [vmem:[#allocation2 + $0x1858] sm:$0xff]
    %v1925 = vld [vmem:[#allocation2 + $0x1860] sm:$0xff]
    %v1926 = vld [vmem:[#allocation2 + $0x1868] sm:$0xff]
    %v1927 = vld [vmem:[#allocation2 + $0x1870] sm:$0xff]
    %v1928 = vld [vmem:[#allocation2 + $0x1878] sm:$0xff]
    %v1929 = vld [vmem:[#allocation2 + $0x1880] sm:$0xff]
    %v1930 = vld [vmem:[#allocation2 + $0x1888] sm:$0xff]
    %v1931 = vld [vmem:[#allocation2 + $0x1890] sm:$0xff]
    %v1932 = vld [vmem:[#allocation2 + $0x1898] sm:$0xff]
    %v1933 = vld [vmem:[#allocation2 + $0x18a0] sm:$0xff]
    %v1934 = vld [vmem:[#allocation2 + $0x18a8] sm:$0xff]
    %v1935 = vld [vmem:[#allocation2 + $0x18b0] sm:$0xff]
    %v1936 = vld [vmem:[#allocation2 + $0x18b8] sm:$0xff]
    %v1937 = vld [vmem:[#allocation2 + $0x18c0] sm:$0xff]
    %v1938 = vld [vmem:[#allocation2 + $0x18c8] sm:$0xff]
    %v1939 = vld [vmem:[#allocation2 + $0x18d0] sm:$0xff]
    %v1940 = vld [vmem:[#allocation2 + $0x18d8] sm:$0xff]
    %v1941 = vld [vmem:[#allocation2 + $0x18e0] sm:$0xff]
    %v1942 = vld [vmem:[#allocation2 + $0x18e8] sm:$0xff]
    %v1943 = vld [vmem:[#allocation2 + $0x18f0] sm:$0xff]
    %v1944 = vld [vmem:[#allocation2 + $0x18f8] sm:$0xff]
    %v1945 = vld [vmem:[#allocation2 + $0x1900] sm:$0xff]
    %v1946 = vld [vmem:[#allocation2 + $0x1908] sm:$0xff]
    %v1947 = vld [vmem:[#allocation2 + $0x1910] sm:$0xff]
    %v1948 = vld [vmem:[#allocation2 + $0x1918] sm:$0xff]
    %v1949 = vld [vmem:[#allocation2 + $0x1920] sm:$0xff]
    %v1950 = vld [vmem:[#allocation2 + $0x1928] sm:$0xff]
    %v1951 = vld [vmem:[#allocation2 + $0x1930] sm:$0xff]
    %v1952 = vld [vmem:[#allocation2 + $0x1938] sm:$0xff]
    %v1953 = vld [vmem:[#allocation2 + $0x1940] sm:$0xff]
    %v1954 = vld [vmem:[#allocation2 + $0x1948] sm:$0xff]
    %v1955 = vld [vmem:[#allocation2 + $0x1950] sm:$0xff]
    %v1956 = vld [vmem:[#allocation2 + $0x1958] sm:$0xff]
    %v1957 = vld [vmem:[#allocation2 + $0x1960] sm:$0xff]
    %v1958 = vld [vmem:[#allocation2 + $0x1968] sm:$0xff]
    %v1959 = vld [vmem:[#allocation2 + $0x1970] sm:$0xff]
    %v1960 = vld [vmem:[#allocation2 + $0x1978] sm:$0xff]
    %v1961 = vld [vmem:[#allocation2 + $0x1980] sm:$0xff]
    %v1962 = vld [vmem:[#allocation2 + $0x1988] sm:$0xff]
    %v1963 = vld [vmem:[#allocation2 + $0x1990] sm:$0xff]
    %v1964 = vld [vmem:[#allocation2 + $0x1998] sm:$0xff]
    %v1965 = vld [vmem:[#allocation2 + $0x19a0] sm:$0xff]
    %v1966 = vld [vmem:[#allocation2 + $0x19a8] sm:$0xff]
    %v1967 = vld [vmem:[#allocation2 + $0x19b0] sm:$0xff]
    %v1968 = vld [vmem:[#allocation2 + $0x19b8] sm:$0xff]
    %v1969 = vld [vmem:[#allocation2 + $0x19c0] sm:$0xff]
    %v1970 = vld [vmem:[#allocation2 + $0x19c8] sm:$0xff]
    %v1971 = vld [vmem:[#allocation2 + $0x19d0] sm:$0xff]
    %v1972 = vld [vmem:[#allocation2 + $0x19d8] sm:$0xff]
    %v1973 = vld [vmem:[#allocation2 + $0x19e0] sm:$0xff]
    %v1974 = vld [vmem:[#allocation2 + $0x19e8] sm:$0xff]
    %v1975 = vld [vmem:[#allocation2 + $0x19f0] sm:$0xff]
    %v1976 = vld [vmem:[#allocation2 + $0x19f8] sm:$0xff]
    %v1977 = vld [vmem:[#allocation2 + $0x1a00] sm:$0xff]
    %v1978 = vld [vmem:[#allocation2 + $0x1a08] sm:$0xff]
    %v1979 = vld [vmem:[#allocation2 + $0x1a10] sm:$0xff]
    %v1980 = vld [vmem:[#allocation2 + $0x1a18] sm:$0xff]
    %v1981 = vld [vmem:[#allocation2 + $0x1a20] sm:$0xff]
    %v1982 = vld [vmem:[#allocation2 + $0x1a28] sm:$0xff]
    %v1983 = vld [vmem:[#allocation2 + $0x1a30] sm:$0xff]
    %v1984 = vld [vmem:[#allocation2 + $0x1a38] sm:$0xff]
    %v1985 = vld [vmem:[#allocation2 + $0x1a40] sm:$0xff]
    %v1986 = vld [vmem:[#allocation2 + $0x1a48] sm:$0xff]
    %v1987 = vld [vmem:[#allocation2 + $0x1a50] sm:$0xff]
    %v1988 = vld [vmem:[#allocation2 + $0x1a58] sm:$0xff]
    %v1989 = vld [vmem:[#allocation2 + $0x1a60] sm:$0xff]
    %v1990 = vld [vmem:[#allocation2 + $0x1a68] sm:$0xff]
    %v1991 = vld [vmem:[#allocation2 + $0x1a70] sm:$0xff]
    %v1992 = vld [vmem:[#allocation2 + $0x1a78] sm:$0xff]
    %v1993 = vld [vmem:[#allocation2 + $0x1a80] sm:$0xff]
    %v1994 = vld [vmem:[#allocation2 + $0x1a88] sm:$0xff]
    %v1995 = vld [vmem:[#allocation2 + $0x1a90] sm:$0xff]
    %v1996 = vld [vmem:[#allocation2 + $0x1a98] sm:$0xff]
    %v1997 = vld [vmem:[#allocation2 + $0x1aa0] sm:$0xff]
    %v1998 = vld [vmem:[#allocation2 + $0x1aa8] sm:$0xff]
    %v1999 = vld [vmem:[#allocation2 + $0x1ab0] sm:$0xff]
    %v2000 = vld [vmem:[#allocation2 + $0x1ab8] sm:$0xff]
    %v2001 = vld [vmem:[#allocation2 + $0x1ac0] sm:$0xff]
    %v2002 = vld [vmem:[#allocation2 + $0x1ac8] sm:$0xff]
    %v2003 = vld [vmem:[#allocation2 + $0x1ad0] sm:$0xff]
    %v2004 = vld [vmem:[#allocation2 + $0x1ad8] sm:$0xff]
    %v2005 = vld [vmem:[#allocation2 + $0x1ae0] sm:$0xff]
    %v2006 = vld [vmem:[#allocation2 + $0x1ae8] sm:$0xff]
    %v2007 = vld [vmem:[#allocation2 + $0x1af0] sm:$0xff]
    %v2008 = vld [vmem:[#allocation2 + $0x1af8] sm:$0xff]
    %v2009 = vld [vmem:[#allocation2 + $0x1b00] sm:$0xff]
    %v2010 = vld [vmem:[#allocation2 + $0x1b08] sm:$0xff]
    %v2011 = vld [vmem:[#allocation2 + $0x1b10] sm:$0xff]
    %v2012 = vld [vmem:[#allocation2 + $0x1b18] sm:$0xff]
    %v2013 = vld [vmem:[#allocation2 + $0x1b20] sm:$0xff]
    %v2014 = vld [vmem:[#allocation2 + $0x1b28] sm:$0xff]
    %v2015 = vld [vmem:[#allocation2 + $0x1b30] sm:$0xff]
    %v2016 = vld [vmem:[#allocation2 + $0x1b38] sm:$0xff]
    %v2017 = vld [vmem:[#allocation2 + $0x1b40] sm:$0xff]
    %v2018 = vld [vmem:[#allocation2 + $0x1b48] sm:$0xff]
    %v2019 = vld [vmem:[#allocation2 + $0x1b50] sm:$0xff]
    %v2020 = vld [vmem:[#allocation2 + $0x1b58] sm:$0xff]
    %v2021 = vld [vmem:[#allocation2 + $0x1b60] sm:$0xff]
    %v2022 = vld [vmem:[#allocation2 + $0x1b68] sm:$0xff]
    %v2023 = vld [vmem:[#allocation2 + $0x1b70] sm:$0xff]
    %v2024 = vld [vmem:[#allocation2 + $0x1b78] sm:$0xff]
    %v2025 = vld [vmem:[#allocation2 + $0x1b80] sm:$0xff]
    %v2026 = vld [vmem:[#allocation2 + $0x1b88] sm:$0xff]
    %v2027 = vld [vmem:[#allocation2 + $0x1b90] sm:$0xff]
    %v2028 = vld [vmem:[#allocation2 + $0x1b98] sm:$0xff]
    %v2029 = vld [vmem:[#allocation2 + $0x1ba0] sm:$0x1]
    %v2030 = vld [vmem:[#allocation2 + $0x1ba8] sm:$0x1]
    %v2031 = vld [vmem:[#allocation2 + $0x1bb0] sm:$0x1]
    %v2032 = vld [vmem:[#allocation2 + $0x1bb8] sm:$0x1]
    %v2033 = vld [vmem:[%s3] sm:$0xf]
    %v2034 = vld [vmem:[%s4] sm:$0xf]
    %v2035 = vld [vmem:[#allocation4] sm:$0xf]
    %2051 = vrot.lane.b32.xlu0 %v1130, 127
    %v2052 = vpop.permute.xlu0 %2051
    %2053 = vrot.lane.b32.xlu0 %v1131, 127
    %v2054 = vpop.permute.xlu0 %2053
    %2055 = vrot.lane.b32.xlu0 %v1132, 127
    %v2056 = vpop.permute.xlu0 %2055
    %2057 = vrot.lane.b32.xlu0 %v1133, 127
    %v2058 = vpop.permute.xlu0 %2057
    %2059 = vrot.lane.b32.xlu0 %v1134, 127
    %v2060 = vpop.permute.xlu0 %2059
    %2061 = vrot.lane.b32.xlu0 %v1135, 127
    %v2062 = vpop.permute.xlu0 %2061
    %2063 = vrot.lane.b32.xlu0 %v1136, 127
    %v2064 = vpop.permute.xlu0 %2063
    %2065 = vrot.lane.b32.xlu0 %v1137, 127
    %v2066 = vpop.permute.xlu0 %2065
    %2067 = vrot.lane.b32.xlu0 %v1138, 127
    %v2068 = vpop.permute.xlu0 %2067
    %2069 = vrot.lane.b32.xlu0 %v1139, 127
    %v2070 = vpop.permute.xlu0 %2069
    %2071 = vrot.lane.b32.xlu0 %v1140, 127
    %v2072 = vpop.permute.xlu0 %2071
    %2073 = vrot.lane.b32.xlu0 %v1141, 127
    %v2074 = vpop.permute.xlu0 %2073
    %2075 = vrot.lane.b32.xlu0 %v1142, 127
    %v2076 = vpop.permute.xlu0 %2075
    %2077 = vrot.lane.b32.xlu0 %v1143, 127
    %v2078 = vpop.permute.xlu0 %2077
    %2079 = vrot.lane.b32.xlu0 %v1144, 127
    %v2080 = vpop.permute.xlu0 %2079
    %v2081 = vsel %vm304, %v2052, %v2054
    %v2082 = vsel %vm304, %v2054, %v2056
    %v2083 = vsel %vm304, %v2056, %v2058
    %v2084 = vsel %vm304, %v2058, %v2060
    %v2085 = vsel %vm304, %v2060, %v2062
    %v2086 = vsel %vm304, %v2062, %v2064
    %v2087 = vsel %vm304, %v2064, %v2066
    %v2088 = vsel %vm304, %v2066, %v2068
    %v2089 = vsel %vm304, %v2068, %v2070
    %v2090 = vsel %vm304, %v2070, %v2072
    %v2091 = vsel %vm304, %v2072, %v2074
    %v2092 = vsel %vm304, %v2074, %v2076
    %v2093 = vsel %vm304, %v2076, %v2078
    %v2094 = vsel %vm304, %v2078, %v2080
    %v2110 = vmax.f32 %v1130, %v2081
    %v2111 = vmax.f32 %v1131, %v2082
    %v2112 = vmax.f32 %v1132, %v2083
    %v2113 = vmax.f32 %v1133, %v2084
    %v2114 = vmax.f32 %v1134, %v2085
    %v2115 = vmax.f32 %v1135, %v2086
    %v2116 = vmax.f32 %v1136, %v2087
    %v2117 = vmax.f32 %v1137, %v2088
    %v2118 = vmax.f32 %v1138, %v2089
    %v2119 = vmax.f32 %v1139, %v2090
    %v2120 = vmax.f32 %v1140, %v2091
    %v2121 = vmax.f32 %v1141, %v2092
    %v2122 = vmax.f32 %v1142, %v2093
    %v2123 = vmax.f32 %v1143, %v2094
    %v2124 = vmax.f32 %v1144, %v2080
    %v2126 = vmax.f32 %v1130, %v2054
    %2142 = vrot.lane.b32.xlu0 %v2126, 98
    %v2143 = vpop.permute.xlu0 %2142
    %2144 = vrot.lane.b32.xlu0 %v2111, 98
    %v2145 = vpop.permute.xlu0 %2144
    %2146 = vrot.lane.b32.xlu0 %v2112, 98
    %v2147 = vpop.permute.xlu0 %2146
    %2148 = vrot.lane.b32.xlu0 %v2113, 98
    %v2149 = vpop.permute.xlu0 %2148
    %2150 = vrot.lane.b32.xlu0 %v2114, 98
    %v2151 = vpop.permute.xlu0 %2150
    %2152 = vrot.lane.b32.xlu0 %v2115, 98
    %v2153 = vpop.permute.xlu0 %2152
    %2154 = vrot.lane.b32.xlu0 %v2116, 98
    %v2155 = vpop.permute.xlu0 %2154
    %2156 = vrot.lane.b32.xlu0 %v2117, 98
    %v2157 = vpop.permute.xlu0 %2156
    %2158 = vrot.lane.b32.xlu0 %v2118, 98
    %v2159 = vpop.permute.xlu0 %2158
    %2160 = vrot.lane.b32.xlu0 %v2119, 98
    %v2161 = vpop.permute.xlu0 %2160
    %2162 = vrot.lane.b32.xlu0 %v2120, 98
    %v2163 = vpop.permute.xlu0 %2162
    %2164 = vrot.lane.b32.xlu0 %v2121, 98
    %v2165 = vpop.permute.xlu0 %2164
    %2166 = vrot.lane.b32.xlu0 %v2122, 98
    %v2167 = vpop.permute.xlu0 %2166
    %2168 = vrot.lane.b32.xlu0 %v2123, 98
    %v2169 = vpop.permute.xlu0 %2168
    %2170 = vrot.lane.b32.xlu0 %v2124, 98
    %v2171 = vpop.permute.xlu0 %2170
    %v2172 = vsel %vm529, %v2143, %v2145
    %v2173 = vsel %vm529, %v2145, %v2147
    %v2174 = vsel %vm529, %v2147, %v2149
    %v2175 = vsel %vm529, %v2149, %v2151
    %v2176 = vsel %vm529, %v2151, %v2153
    %v2177 = vsel %vm529, %v2153, %v2155
    %v2178 = vsel %vm529, %v2155, %v2157
    %v2179 = vsel %vm529, %v2157, %v2159
    %v2180 = vsel %vm529, %v2159, %v2161
    %v2181 = vsel %vm529, %v2161, %v2163
    %v2182 = vsel %vm529, %v2163, %v2165
    %v2183 = vsel %vm529, %v2165, %v2167
    %v2184 = vsel %vm529, %v2167, %v2169
    %v2185 = vsel %vm529, %v2169, %v2171
    %v2201 = vmax.f32 %v2110, %v2172
    %v2202 = vmax.f32 %v2111, %v2173
    %v2203 = vmax.f32 %v2112, %v2174
    %v2204 = vmax.f32 %v2113, %v2175
    %v2205 = vmax.f32 %v2114, %v2176
    %v2206 = vmax.f32 %v2115, %v2177
    %v2207 = vmax.f32 %v2116, %v2178
    %v2208 = vmax.f32 %v2117, %v2179
    %v2209 = vmax.f32 %v2118, %v2180
    %v2210 = vmax.f32 %v2119, %v2181
    %v2211 = vmax.f32 %v2120, %v2182
    %v2212 = vmax.f32 %v2121, %v2183
    %v2213 = vmax.f32 %v2122, %v2184
    %v2214 = vmax.f32 %v2123, %v2185
    %v2215 = vmax.f32 %v2124, %v2171
    %2231 = vrot.lane.b32.xlu0 %v2201, 31
    %v2232 = vpop.permute.xlu0 %2231
    %2233 = vrot.lane.b32.xlu0 %v2202, 31
    %v2234 = vpop.permute.xlu0 %2233
    %2235 = vrot.lane.b32.xlu0 %v2203, 31
    %v2236 = vpop.permute.xlu0 %2235
    %2237 = vrot.lane.b32.xlu0 %v2204, 31
    %v2238 = vpop.permute.xlu0 %2237
    %2239 = vrot.lane.b32.xlu0 %v2205, 31
    %v2240 = vpop.permute.xlu0 %2239
    %2241 = vrot.lane.b32.xlu0 %v2206, 31
    %v2242 = vpop.permute.xlu0 %2241
    %2243 = vrot.lane.b32.xlu0 %v2207, 31
    %v2244 = vpop.permute.xlu0 %2243
    %2245 = vrot.lane.b32.xlu0 %v2208, 31
    %v2246 = vpop.permute.xlu0 %2245
    %2247 = vrot.lane.b32.xlu0 %v2209, 31
    %v2248 = vpop.permute.xlu0 %2247
    %2249 = vrot.lane.b32.xlu0 %v2210, 31
    %v2250 = vpop.permute.xlu0 %2249
    %2251 = vrot.lane.b32.xlu0 %v2211, 31
    %v2252 = vpop.permute.xlu0 %2251
    %2253 = vrot.lane.b32.xlu0 %v2212, 31
    %v2254 = vpop.permute.xlu0 %2253
    %2255 = vrot.lane.b32.xlu0 %v2213, 31
    %v2256 = vpop.permute.xlu0 %2255
    %2257 = vrot.lane.b32.xlu0 %v2214, 31
    %v2258 = vpop.permute.xlu0 %2257
    %2259 = vrot.lane.b32.xlu0 %v2215, 31
    %v2260 = vpop.permute.xlu0 %2259
    %vm2261 = vcmask 252928
    %v2262 = vsel %vm2261, %v2232, %v2234
    %v2263 = vsel %vm2261, %v2234, %v2236
    %v2264 = vsel %vm2261, %v2236, %v2238
    %v2265 = vsel %vm2261, %v2238, %v2240
    %v2266 = vsel %vm2261, %v2240, %v2242
    %v2267 = vsel %vm2261, %v2242, %v2244
    %v2268 = vsel %vm2261, %v2244, %v2246
    %v2269 = vsel %vm2261, %v2246, %v2248
    %v2270 = vsel %vm2261, %v2248, %v2250
    %v2271 = vsel %vm2261, %v2250, %v2252
    %v2272 = vsel %vm2261, %v2252, %v2254
    %v2273 = vsel %vm2261, %v2254, %v2256
    %v2274 = vsel %vm2261, %v2256, %v2258
    %v2275 = vsel %vm2261, %v2258, %v2260
    %vm2289 = vcmask 859136
    %v2290 = vsel %vm2289, %v2275, 0
    %vm2292 = vcmask 1040384
    %v2294 = vsel %vm2292, %v2029, 0
    %v2297 = vsel %vm2292, %v2030, 0
    %v2300 = vsel %vm2292, %v2031, 0
    %v2303 = vsel %vm2292, %v2032, 0
    %2305 = vmatpush.msra.mxu0 %v1205
    %2306 = vmatpush.msra.mxu0 %v1201
    %2307 = vmatpush.msra.mxu0 %v1197
    %2308 = vmatpush.msra.mxu0 %v1193
    %2309 = vmatpush.msra.mxu0 %v1189
    %2310 = vmatpush.msra.mxu0 %v1185
    %2311 = vmatpush.msra.mxu0 %v1181
    %2312 = vmatpush.msra.mxu0 %v1177
    %2313 = vmatpush.msra.mxu0 %v1173
    %2314 = vmatpush.msra.mxu0 %v1169
    %2315 = vmatpush.msra.mxu0 %v1165
    %2316 = vmatpush.msra.mxu0 %v1161
    %2317 = vmatpush.msra.mxu0 %v1157
    %2318 = vmatpush.msra.mxu0 %v1153
    %2319 = vmatpush.msra.mxu0 %v1149
    %2320 = vmatpush.msra.mxu0 %v1145
    %2321 = vmatmul.f32.gmra.mxu0 %v2262
    %v2322 = vpop.f32.mrf.mxu0
    %v2323 = vadd.f32 0.0, %v2322
    %2324 = vdwg.mxu0
    %2325 = vmatpush.msra.mxu0 %v1269
    %2326 = vmatpush.msra.mxu0 %v1265
    %2327 = vmatpush.msra.mxu0 %v1261
    %2328 = vmatpush.msra.mxu0 %v1257
    %2329 = vmatpush.msra.mxu0 %v1253
    %2330 = vmatpush.msra.mxu0 %v1249
    %2331 = vmatpush.msra.mxu0 %v1245
    %2332 = vmatpush.msra.mxu0 %v1241
    %2333 = vmatpush.msra.mxu0 %v1237
    %2334 = vmatpush.msra.mxu0 %v1233
    %2335 = vmatpush.msra.mxu0 %v1229
    %2336 = vmatpush.msra.mxu0 %v1225
    %2337 = vmatpush.msra.mxu0 %v1221
    %2338 = vmatpush.msra.mxu0 %v1217
    %2339 = vmatpush.msra.mxu0 %v1213
    %2340 = vmatpush.msra.mxu0 %v1209
    %2341 = vmatmul.f32.gmra.mxu0 %v2263
    %v2342 = vpop.f32.mrf.mxu0
    %v2343 = vadd.f32 %v2323, %v2342
    %2344 = vdwg.mxu0
    %2345 = vmatpush.msra.mxu0 %v1333
    %2346 = vmatpush.msra.mxu0 %v1329
    %2347 = vmatpush.msra.mxu0 %v1325
    %2348 = vmatpush.msra.mxu0 %v1321
    %2349 = vmatpush.msra.mxu0 %v1317
    %2350 = vmatpush.msra.mxu0 %v1313
    %2351 = vmatpush.msra.mxu0 %v1309
    %2352 = vmatpush.msra.mxu0 %v1305
    %2353 = vmatpush.msra.mxu0 %v1301
    %2354 = vmatpush.msra.mxu0 %v1297
    %2355 = vmatpush.msra.mxu0 %v1293
    %2356 = vmatpush.msra.mxu0 %v1289
    %2357 = vmatpush.msra.mxu0 %v1285
    %2358 = vmatpush.msra.mxu0 %v1281
    %2359 = vmatpush.msra.mxu0 %v1277
    %2360 = vmatpush.msra.mxu0 %v1273
    %2361 = vmatmul.f32.gmra.mxu0 %v2264
    %v2362 = vpop.f32.mrf.mxu0
    %v2363 = vadd.f32 %v2343, %v2362
    %2364 = vdwg.mxu0
    %2365 = vmatpush.msra.mxu0 %v1397
    %2366 = vmatpush.msra.mxu0 %v1393
    %2367 = vmatpush.msra.mxu0 %v1389
    %2368 = vmatpush.msra.mxu0 %v1385
    %2369 = vmatpush.msra.mxu0 %v1381
    %2370 = vmatpush.msra.mxu0 %v1377
    %2371 = vmatpush.msra.mxu0 %v1373
    %2372 = vmatpush.msra.mxu0 %v1369
    %2373 = vmatpush.msra.mxu0 %v1365
    %2374 = vmatpush.msra.mxu0 %v1361
    %2375 = vmatpush.msra.mxu0 %v1357
    %2376 = vmatpush.msra.mxu0 %v1353
    %2377 = vmatpush.msra.mxu0 %v1349
    %2378 = vmatpush.msra.mxu0 %v1345
    %2379 = vmatpush.msra.mxu0 %v1341
    %2380 = vmatpush.msra.mxu0 %v1337
    %2381 = vmatmul.f32.gmra.mxu0 %v2265
    %v2382 = vpop.f32.mrf.mxu0
    %v2383 = vadd.f32 %v2363, %v2382
    %2384 = vdwg.mxu0
    %2385 = vmatpush.msra.mxu0 %v1461
    %2386 = vmatpush.msra.mxu0 %v1457
    %2387 = vmatpush.msra.mxu0 %v1453
    %2388 = vmatpush.msra.mxu0 %v1449
    %2389 = vmatpush.msra.mxu0 %v1445
    %2390 = vmatpush.msra.mxu0 %v1441
    %2391 = vmatpush.msra.mxu0 %v1437
    %2392 = vmatpush.msra.mxu0 %v1433
    %2393 = vmatpush.msra.mxu0 %v1429
    %2394 = vmatpush.msra.mxu0 %v1425
    %2395 = vmatpush.msra.mxu0 %v1421
    %2396 = vmatpush.msra.mxu0 %v1417
    %2397 = vmatpush.msra.mxu0 %v1413
    %2398 = vmatpush.msra.mxu0 %v1409
    %2399 = vmatpush.msra.mxu0 %v1405
    %2400 = vmatpush.msra.mxu0 %v1401
    %2401 = vmatmul.f32.gmra.mxu0 %v2266
    %v2402 = vpop.f32.mrf.mxu0
    %v2403 = vadd.f32 %v2383, %v2402
    %2404 = vdwg.mxu0
    %2405 = vmatpush.msra.mxu0 %v1525
    %2406 = vmatpush.msra.mxu0 %v1521
    %2407 = vmatpush.msra.mxu0 %v1517
    %2408 = vmatpush.msra.mxu0 %v1513
    %2409 = vmatpush.msra.mxu0 %v1509
    %2410 = vmatpush.msra.mxu0 %v1505
    %2411 = vmatpush.msra.mxu0 %v1501
    %2412 = vmatpush.msra.mxu0 %v1497
    %2413 = vmatpush.msra.mxu0 %v1493
    %2414 = vmatpush.msra.mxu0 %v1489
    %2415 = vmatpush.msra.mxu0 %v1485
    %2416 = vmatpush.msra.mxu0 %v1481
    %2417 = vmatpush.msra.mxu0 %v1477
    %2418 = vmatpush.msra.mxu0 %v1473
    %2419 = vmatpush.msra.mxu0 %v1469
    %2420 = vmatpush.msra.mxu0 %v1465
    %2421 = vmatmul.f32.gmra.mxu0 %v2267
    %v2422 = vpop.f32.mrf.mxu0
    %v2423 = vadd.f32 %v2403, %v2422
    %2424 = vdwg.mxu0
    %2425 = vmatpush.msra.mxu0 %v1589
    %2426 = vmatpush.msra.mxu0 %v1585
    %2427 = vmatpush.msra.mxu0 %v1581
    %2428 = vmatpush.msra.mxu0 %v1577
    %2429 = vmatpush.msra.mxu0 %v1573
    %2430 = vmatpush.msra.mxu0 %v1569
    %2431 = vmatpush.msra.mxu0 %v1565
    %2432 = vmatpush.msra.mxu0 %v1561
    %2433 = vmatpush.msra.mxu0 %v1557
    %2434 = vmatpush.msra.mxu0 %v1553
    %2435 = vmatpush.msra.mxu0 %v1549
    %2436 = vmatpush.msra.mxu0 %v1545
    %2437 = vmatpush.msra.mxu0 %v1541
    %2438 = vmatpush.msra.mxu0 %v1537
    %2439 = vmatpush.msra.mxu0 %v1533
    %2440 = vmatpush.msra.mxu0 %v1529
    %2441 = vmatmul.f32.gmra.mxu0 %v2268
    %v2442 = vpop.f32.mrf.mxu0
    %v2443 = vadd.f32 %v2423, %v2442
    %2444 = vdwg.mxu0
    %2445 = vmatpush.msra.mxu0 %v1653
    %2446 = vmatpush.msra.mxu0 %v1649
    %2447 = vmatpush.msra.mxu0 %v1645
    %2448 = vmatpush.msra.mxu0 %v1641
    %2449 = vmatpush.msra.mxu0 %v1637
    %2450 = vmatpush.msra.mxu0 %v1633
    %2451 = vmatpush.msra.mxu0 %v1629
    %2452 = vmatpush.msra.mxu0 %v1625
    %2453 = vmatpush.msra.mxu0 %v1621
    %2454 = vmatpush.msra.mxu0 %v1617
    %2455 = vmatpush.msra.mxu0 %v1613
    %2456 = vmatpush.msra.mxu0 %v1609
    %2457 = vmatpush.msra.mxu0 %v1605
    %2458 = vmatpush.msra.mxu0 %v1601
    %2459 = vmatpush.msra.mxu0 %v1597
    %2460 = vmatpush.msra.mxu0 %v1593
    %2461 = vmatmul.f32.gmra.mxu0 %v2269
    %v2462 = vpop.f32.mrf.mxu0
    %v2463 = vadd.f32 %v2443, %v2462
    %2464 = vdwg.mxu0
    %2465 = vmatpush.msra.mxu0 %v1717
    %2466 = vmatpush.msra.mxu0 %v1713
    %2467 = vmatpush.msra.mxu0 %v1709
    %2468 = vmatpush.msra.mxu0 %v1705
    %2469 = vmatpush.msra.mxu0 %v1701
    %2470 = vmatpush.msra.mxu0 %v1697
    %2471 = vmatpush.msra.mxu0 %v1693
    %2472 = vmatpush.msra.mxu0 %v1689
    %2473 = vmatpush.msra.mxu0 %v1685
    %2474 = vmatpush.msra.mxu0 %v1681
    %2475 = vmatpush.msra.mxu0 %v1677
    %2476 = vmatpush.msra.mxu0 %v1673
    %2477 = vmatpush.msra.mxu0 %v1669
    %2478 = vmatpush.msra.mxu0 %v1665
    %2479 = vmatpush.msra.mxu0 %v1661
    %2480 = vmatpush.msra.mxu0 %v1657
    %2481 = vmatmul.f32.gmra.mxu0 %v2270
    %v2482 = vpop.f32.mrf.mxu0
    %v2483 = vadd.f32 %v2463, %v2482
    %2484 = vdwg.mxu0
    %2485 = vmatpush.msra.mxu0 %v1781
    %2486 = vmatpush.msra.mxu0 %v1777
    %2487 = vmatpush.msra.mxu0 %v1773
    %2488 = vmatpush.msra.mxu0 %v1769
    %2489 = vmatpush.msra.mxu0 %v1765
    %2490 = vmatpush.msra.mxu0 %v1761
    %2491 = vmatpush.msra.mxu0 %v1757
    %2492 = vmatpush.msra.mxu0 %v1753
    %2493 = vmatpush.msra.mxu0 %v1749
    %2494 = vmatpush.msra.mxu0 %v1745
    %2495 = vmatpush.msra.mxu0 %v1741
    %2496 = vmatpush.msra.mxu0 %v1737
    %2497 = vmatpush.msra.mxu0 %v1733
    %2498 = vmatpush.msra.mxu0 %v1729
    %2499 = vmatpush.msra.mxu0 %v1725
    %2500 = vmatpush.msra.mxu0 %v1721
    %2501 = vmatmul.f32.gmra.mxu0 %v2271
    %v2502 = vpop.f32.mrf.mxu0
    %v2503 = vadd.f32 %v2483, %v2502
    %2504 = vdwg.mxu0
    %2505 = vmatpush.msra.mxu0 %v1845
    %2506 = vmatpush.msra.mxu0 %v1841
    %2507 = vmatpush.msra.mxu0 %v1837
    %2508 = vmatpush.msra.mxu0 %v1833
    %2509 = vmatpush.msra.mxu0 %v1829
    %2510 = vmatpush.msra.mxu0 %v1825
    %2511 = vmatpush.msra.mxu0 %v1821
    %2512 = vmatpush.msra.mxu0 %v1817
    %2513 = vmatpush.msra.mxu0 %v1813
    %2514 = vmatpush.msra.mxu0 %v1809
    %2515 = vmatpush.msra.mxu0 %v1805
    %2516 = vmatpush.msra.mxu0 %v1801
    %2517 = vmatpush.msra.mxu0 %v1797
    %2518 = vmatpush.msra.mxu0 %v1793
    %2519 = vmatpush.msra.mxu0 %v1789
    %2520 = vmatpush.msra.mxu0 %v1785
    %2521 = vmatmul.f32.gmra.mxu0 %v2272
    %v2522 = vpop.f32.mrf.mxu0
    %v2523 = vadd.f32 %v2503, %v2522
    %2524 = vdwg.mxu0
    %2525 = vmatpush.msra.mxu0 %v1909
    %2526 = vmatpush.msra.mxu0 %v1905
    %2527 = vmatpush.msra.mxu0 %v1901
    %2528 = vmatpush.msra.mxu0 %v1897
    %2529 = vmatpush.msra.mxu0 %v1893
    %2530 = vmatpush.msra.mxu0 %v1889
    %2531 = vmatpush.msra.mxu0 %v1885
    %2532 = vmatpush.msra.mxu0 %v1881
    %2533 = vmatpush.msra.mxu0 %v1877
    %2534 = vmatpush.msra.mxu0 %v1873
    %2535 = vmatpush.msra.mxu0 %v1869
    %2536 = vmatpush.msra.mxu0 %v1865
    %2537 = vmatpush.msra.mxu0 %v1861
    %2538 = vmatpush.msra.mxu0 %v1857
    %2539 = vmatpush.msra.mxu0 %v1853
    %2540 = vmatpush.msra.mxu0 %v1849
    %2541 = vmatmul.f32.gmra.mxu0 %v2273
    %v2542 = vpop.f32.mrf.mxu0
    %v2543 = vadd.f32 %v2523, %v2542
    %2544 = vdwg.mxu0
    %2545 = vmatpush.msra.mxu0 %v1973
    %2546 = vmatpush.msra.mxu0 %v1969
    %2547 = vmatpush.msra.mxu0 %v1965
    %2548 = vmatpush.msra.mxu0 %v1961
    %2549 = vmatpush.msra.mxu0 %v1957
    %2550 = vmatpush.msra.mxu0 %v1953
    %2551 = vmatpush.msra.mxu0 %v1949
    %2552 = vmatpush.msra.mxu0 %v1945
    %2553 = vmatpush.msra.mxu0 %v1941
    %2554 = vmatpush.msra.mxu0 %v1937
    %2555 = vmatpush.msra.mxu0 %v1933
    %2556 = vmatpush.msra.mxu0 %v1929
    %2557 = vmatpush.msra.mxu0 %v1925
    %2558 = vmatpush.msra.mxu0 %v1921
    %2559 = vmatpush.msra.mxu0 %v1917
    %2560 = vmatpush.msra.mxu0 %v1913
    %2561 = vmatmul.f32.gmra.mxu0 %v2274
    %v2562 = vpop.f32.mrf.mxu0
    %v2563 = vadd.f32 %v2543, %v2562
    %2564 = vdwg.mxu0
    %2565 = vmatpush.msra.mxu0 0.0
    %2566 = vmatpush.msra.mxu0 0.0
    %2567 = vmatpush.msra.mxu0 %v2294
    %2568 = vmatpush.msra.mxu0 %v2025
    %2569 = vmatpush.msra.mxu0 %v2021
    %2570 = vmatpush.msra.mxu0 %v2017
    %2571 = vmatpush.msra.mxu0 %v2013
    %2572 = vmatpush.msra.mxu0 %v2009
    %2573 = vmatpush.msra.mxu0 %v2005
    %2574 = vmatpush.msra.mxu0 %v2001
    %2575 = vmatpush.msra.mxu0 %v1997
    %2576 = vmatpush.msra.mxu0 %v1993
    %2577 = vmatpush.msra.mxu0 %v1989
    %2578 = vmatpush.msra.mxu0 %v1985
    %2579 = vmatpush.msra.mxu0 %v1981
    %2580 = vmatpush.msra.mxu0 %v1977
    %2581 = vmatmul.f32.gmra.mxu0 %v2290
    %v2582 = vpop.f32.mrf.mxu0
    %v2583 = vadd.f32 %v2563, %v2582
    %2584 = vdwg.mxu0
    %2585 = vmatpush.msra.mxu0 %v1206
    %2586 = vmatpush.msra.mxu0 %v1202
    %2587 = vmatpush.msra.mxu0 %v1198
    %2588 = vmatpush.msra.mxu0 %v1194
    %2589 = vmatpush.msra.mxu0 %v1190
    %2590 = vmatpush.msra.mxu0 %v1186
    %2591 = vmatpush.msra.mxu0 %v1182
    %2592 = vmatpush.msra.mxu0 %v1178
    %2593 = vmatpush.msra.mxu0 %v1174
    %2594 = vmatpush.msra.mxu0 %v1170
    %2595 = vmatpush.msra.mxu0 %v1166
    %2596 = vmatpush.msra.mxu0 %v1162
    %2597 = vmatpush.msra.mxu0 %v1158
    %2598 = vmatpush.msra.mxu0 %v1154
    %2599 = vmatpush.msra.mxu0 %v1150
    %2600 = vmatpush.msra.mxu0 %v1146
    %2601 = vmatmul.f32.gmra.mxu0 %v2262
    %v2602 = vpop.f32.mrf.mxu0
    %v2603 = vadd.f32 0.0, %v2602
    %2604 = vdwg.mxu0
    %2605 = vmatpush.msra.mxu0 %v1270
    %2606 = vmatpush.msra.mxu0 %v1266
    %2607 = vmatpush.msra.mxu0 %v1262
    %2608 = vmatpush.msra.mxu0 %v1258
    %2609 = vmatpush.msra.mxu0 %v1254
    %2610 = vmatpush.msra.mxu0 %v1250
    %2611 = vmatpush.msra.mxu0 %v1246
    %2612 = vmatpush.msra.mxu0 %v1242
    %2613 = vmatpush.msra.mxu0 %v1238
    %2614 = vmatpush.msra.mxu0 %v1234
    %2615 = vmatpush.msra.mxu0 %v1230
    %2616 = vmatpush.msra.mxu0 %v1226
    %2617 = vmatpush.msra.mxu0 %v1222
    %2618 = vmatpush.msra.mxu0 %v1218
    %2619 = vmatpush.msra.mxu0 %v1214
    %2620 = vmatpush.msra.mxu0 %v1210
    %2621 = vmatmul.f32.gmra.mxu0 %v2263
    %v2622 = vpop.f32.mrf.mxu0
    %v2623 = vadd.f32 %v2603, %v2622
    %2624 = vdwg.mxu0
    %2625 = vmatpush.msra.mxu0 %v1334
    %2626 = vmatpush.msra.mxu0 %v1330
    %2627 = vmatpush.msra.mxu0 %v1326
    %2628 = vmatpush.msra.mxu0 %v1322
    %2629 = vmatpush.msra.mxu0 %v1318
    %2630 = vmatpush.msra.mxu0 %v1314
    %2631 = vmatpush.msra.mxu0 %v1310
    %2632 = vmatpush.msra.mxu0 %v1306
    %2633 = vmatpush.msra.mxu0 %v1302
    %2634 = vmatpush.msra.mxu0 %v1298
    %2635 = vmatpush.msra.mxu0 %v1294
    %2636 = vmatpush.msra.mxu0 %v1290
    %2637 = vmatpush.msra.mxu0 %v1286
    %2638 = vmatpush.msra.mxu0 %v1282
    %2639 = vmatpush.msra.mxu0 %v1278
    %2640 = vmatpush.msra.mxu0 %v1274
    %2641 = vmatmul.f32.gmra.mxu0 %v2264
    %v2642 = vpop.f32.mrf.mxu0
    %v2643 = vadd.f32 %v2623, %v2642
    %2644 = vdwg.mxu0
    %2645 = vmatpush.msra.mxu0 %v1398
    %2646 = vmatpush.msra.mxu0 %v1394
    %2647 = vmatpush.msra.mxu0 %v1390
    %2648 = vmatpush.msra.mxu0 %v1386
    %2649 = vmatpush.msra.mxu0 %v1382
    %2650 = vmatpush.msra.mxu0 %v1378
    %2651 = vmatpush.msra.mxu0 %v1374
    %2652 = vmatpush.msra.mxu0 %v1370
    %2653 = vmatpush.msra.mxu0 %v1366
    %2654 = vmatpush.msra.mxu0 %v1362
    %2655 = vmatpush.msra.mxu0 %v1358
    %2656 = vmatpush.msra.mxu0 %v1354
    %2657 = vmatpush.msra.mxu0 %v1350
    %2658 = vmatpush.msra.mxu0 %v1346
    %2659 = vmatpush.msra.mxu0 %v1342
    %2660 = vmatpush.msra.mxu0 %v1338
    %2661 = vmatmul.f32.gmra.mxu0 %v2265
    %v2662 = vpop.f32.mrf.mxu0
    %v2663 = vadd.f32 %v2643, %v2662
    %2664 = vdwg.mxu0
    %2665 = vmatpush.msra.mxu0 %v1462
    %2666 = vmatpush.msra.mxu0 %v1458
    %2667 = vmatpush.msra.mxu0 %v1454
    %2668 = vmatpush.msra.mxu0 %v1450
    %2669 = vmatpush.msra.mxu0 %v1446
    %2670 = vmatpush.msra.mxu0 %v1442
    %2671 = vmatpush.msra.mxu0 %v1438
    %2672 = vmatpush.msra.mxu0 %v1434
    %2673 = vmatpush.msra.mxu0 %v1430
    %2674 = vmatpush.msra.mxu0 %v1426
    %2675 = vmatpush.msra.mxu0 %v1422
    %2676 = vmatpush.msra.mxu0 %v1418
    %2677 = vmatpush.msra.mxu0 %v1414
    %2678 = vmatpush.msra.mxu0 %v1410
    %2679 = vmatpush.msra.mxu0 %v1406
    %2680 = vmatpush.msra.mxu0 %v1402
    %2681 = vmatmul.f32.gmra.mxu0 %v2266
    %v2682 = vpop.f32.mrf.mxu0
    %v2683 = vadd.f32 %v2663, %v2682
    %2684 = vdwg.mxu0
    %2685 = vmatpush.msra.mxu0 %v1526
    %2686 = vmatpush.msra.mxu0 %v1522
    %2687 = vmatpush.msra.mxu0 %v1518
    %2688 = vmatpush.msra.mxu0 %v1514
    %2689 = vmatpush.msra.mxu0 %v1510
    %2690 = vmatpush.msra.mxu0 %v1506
    %2691 = vmatpush.msra.mxu0 %v1502
    %2692 = vmatpush.msra.mxu0 %v1498
    %2693 = vmatpush.msra.mxu0 %v1494
    %2694 = vmatpush.msra.mxu0 %v1490
    %2695 = vmatpush.msra.mxu0 %v1486
    %2696 = vmatpush.msra.mxu0 %v1482
    %2697 = vmatpush.msra.mxu0 %v1478
    %2698 = vmatpush.msra.mxu0 %v1474
    %2699 = vmatpush.msra.mxu0 %v1470
    %2700 = vmatpush.msra.mxu0 %v1466
    %2701 = vmatmul.f32.gmra.mxu0 %v2267
    %v2702 = vpop.f32.mrf.mxu0
    %v2703 = vadd.f32 %v2683, %v2702
    %2704 = vdwg.mxu0
    %2705 = vmatpush.msra.mxu0 %v1590
    %2706 = vmatpush.msra.mxu0 %v1586
    %2707 = vmatpush.msra.mxu0 %v1582
    %2708 = vmatpush.msra.mxu0 %v1578
    %2709 = vmatpush.msra.mxu0 %v1574
    %2710 = vmatpush.msra.mxu0 %v1570
    %2711 = vmatpush.msra.mxu0 %v1566
    %2712 = vmatpush.msra.mxu0 %v1562
    %2713 = vmatpush.msra.mxu0 %v1558
    %2714 = vmatpush.msra.mxu0 %v1554
    %2715 = vmatpush.msra.mxu0 %v1550
    %2716 = vmatpush.msra.mxu0 %v1546
    %2717 = vmatpush.msra.mxu0 %v1542
    %2718 = vmatpush.msra.mxu0 %v1538
    %2719 = vmatpush.msra.mxu0 %v1534
    %2720 = vmatpush.msra.mxu0 %v1530
    %2721 = vmatmul.f32.gmra.mxu0 %v2268
    %v2722 = vpop.f32.mrf.mxu0
    %v2723 = vadd.f32 %v2703, %v2722
    %2724 = vdwg.mxu0
    %2725 = vmatpush.msra.mxu0 %v1654
    %2726 = vmatpush.msra.mxu0 %v1650
    %2727 = vmatpush.msra.mxu0 %v1646
    %2728 = vmatpush.msra.mxu0 %v1642
    %2729 = vmatpush.msra.mxu0 %v1638
    %2730 = vmatpush.msra.mxu0 %v1634
    %2731 = vmatpush.msra.mxu0 %v1630
    %2732 = vmatpush.msra.mxu0 %v1626
    %2733 = vmatpush.msra.mxu0 %v1622
    %2734 = vmatpush.msra.mxu0 %v1618
    %2735 = vmatpush.msra.mxu0 %v1614
    %2736 = vmatpush.msra.mxu0 %v1610
    %2737 = vmatpush.msra.mxu0 %v1606
    %2738 = vmatpush.msra.mxu0 %v1602
    %2739 = vmatpush.msra.mxu0 %v1598
    %2740 = vmatpush.msra.mxu0 %v1594
    %2741 = vmatmul.f32.gmra.mxu0 %v2269
    %v2742 = vpop.f32.mrf.mxu0
    %v2743 = vadd.f32 %v2723, %v2742
    %2744 = vdwg.mxu0
    %2745 = vmatpush.msra.mxu0 %v1718
    %2746 = vmatpush.msra.mxu0 %v1714
    %2747 = vmatpush.msra.mxu0 %v1710
    %2748 = vmatpush.msra.mxu0 %v1706
    %2749 = vmatpush.msra.mxu0 %v1702
    %2750 = vmatpush.msra.mxu0 %v1698
    %2751 = vmatpush.msra.mxu0 %v1694
    %2752 = vmatpush.msra.mxu0 %v1690
    %2753 = vmatpush.msra.mxu0 %v1686
    %2754 = vmatpush.msra.mxu0 %v1682
    %2755 = vmatpush.msra.mxu0 %v1678
    %2756 = vmatpush.msra.mxu0 %v1674
    %2757 = vmatpush.msra.mxu0 %v1670
    %2758 = vmatpush.msra.mxu0 %v1666
    %2759 = vmatpush.msra.mxu0 %v1662
    %2760 = vmatpush.msra.mxu0 %v1658
    %2761 = vmatmul.f32.gmra.mxu0 %v2270
    %v2762 = vpop.f32.mrf.mxu0
    %v2763 = vadd.f32 %v2743, %v2762
    %2764 = vdwg.mxu0
    %2765 = vmatpush.msra.mxu0 %v1782
    %2766 = vmatpush.msra.mxu0 %v1778
    %2767 = vmatpush.msra.mxu0 %v1774
    %2768 = vmatpush.msra.mxu0 %v1770
    %2769 = vmatpush.msra.mxu0 %v1766
    %2770 = vmatpush.msra.mxu0 %v1762
    %2771 = vmatpush.msra.mxu0 %v1758
    %2772 = vmatpush.msra.mxu0 %v1754
    %2773 = vmatpush.msra.mxu0 %v1750
    %2774 = vmatpush.msra.mxu0 %v1746
    %2775 = vmatpush.msra.mxu0 %v1742
    %2776 = vmatpush.msra.mxu0 %v1738
    %2777 = vmatpush.msra.mxu0 %v1734
    %2778 = vmatpush.msra.mxu0 %v1730
    %2779 = vmatpush.msra.mxu0 %v1726
    %2780 = vmatpush.msra.mxu0 %v1722
    %2781 = vmatmul.f32.gmra.mxu0 %v2271
    %v2782 = vpop.f32.mrf.mxu0
    %v2783 = vadd.f32 %v2763, %v2782
    %2784 = vdwg.mxu0
    %2785 = vmatpush.msra.mxu0 %v1846
    %2786 = vmatpush.msra.mxu0 %v1842
    %2787 = vmatpush.msra.mxu0 %v1838
    %2788 = vmatpush.msra.mxu0 %v1834
    %2789 = vmatpush.msra.mxu0 %v1830
    %2790 = vmatpush.msra.mxu0 %v1826
    %2791 = vmatpush.msra.mxu0 %v1822
    %2792 = vmatpush.msra.mxu0 %v1818
    %2793 = vmatpush.msra.mxu0 %v1814
    %2794 = vmatpush.msra.mxu0 %v1810
    %2795 = vmatpush.msra.mxu0 %v1806
    %2796 = vmatpush.msra.mxu0 %v1802
    %2797 = vmatpush.msra.mxu0 %v1798
    %2798 = vmatpush.msra.mxu0 %v1794
    %2799 = vmatpush.msra.mxu0 %v1790
    %2800 = vmatpush.msra.mxu0 %v1786
    %2801 = vmatmul.f32.gmra.mxu0 %v2272
    %v2802 = vpop.f32.mrf.mxu0
    %v2803 = vadd.f32 %v2783, %v2802
    %2804 = vdwg.mxu0
    %2805 = vmatpush.msra.mxu0 %v1910
    %2806 = vmatpush.msra.mxu0 %v1906
    %2807 = vmatpush.msra.mxu0 %v1902
    %2808 = vmatpush.msra.mxu0 %v1898
    %2809 = vmatpush.msra.mxu0 %v1894
    %2810 = vmatpush.msra.mxu0 %v1890
    %2811 = vmatpush.msra.mxu0 %v1886
    %2812 = vmatpush.msra.mxu0 %v1882
    %2813 = vmatpush.msra.mxu0 %v1878
    %2814 = vmatpush.msra.mxu0 %v1874
    %2815 = vmatpush.msra.mxu0 %v1870
    %2816 = vmatpush.msra.mxu0 %v1866
    %2817 = vmatpush.msra.mxu0 %v1862
    %2818 = vmatpush.msra.mxu0 %v1858
    %2819 = vmatpush.msra.mxu0 %v1854
    %2820 = vmatpush.msra.mxu0 %v1850
    %2821 = vmatmul.f32.gmra.mxu0 %v2273
    %v2822 = vpop.f32.mrf.mxu0
    %v2823 = vadd.f32 %v2803, %v2822
    %2824 = vdwg.mxu0
    %2825 = vmatpush.msra.mxu0 %v1974
    %2826 = vmatpush.msra.mxu0 %v1970
    %2827 = vmatpush.msra.mxu0 %v1966
    %2828 = vmatpush.msra.mxu0 %v1962
    %2829 = vmatpush.msra.mxu0 %v1958
    %2830 = vmatpush.msra.mxu0 %v1954
    %2831 = vmatpush.msra.mxu0 %v1950
    %2832 = vmatpush.msra.mxu0 %v1946
    %2833 = vmatpush.msra.mxu0 %v1942
    %2834 = vmatpush.msra.mxu0 %v1938
    %2835 = vmatpush.msra.mxu0 %v1934
    %2836 = vmatpush.msra.mxu0 %v1930
    %2837 = vmatpush.msra.mxu0 %v1926
    %2838 = vmatpush.msra.mxu0 %v1922
    %2839 = vmatpush.msra.mxu0 %v1918
    %2840 = vmatpush.msra.mxu0 %v1914
    %2841 = vmatmul.f32.gmra.mxu0 %v2274
    %v2842 = vpop.f32.mrf.mxu0
    %v2843 = vadd.f32 %v2823, %v2842
    %2844 = vdwg.mxu0
    %2845 = vmatpush.msra.mxu0 0.0
    %2846 = vmatpush.msra.mxu0 0.0
    %2847 = vmatpush.msra.mxu0 %v2297
    %2848 = vmatpush.msra.mxu0 %v2026
    %2849 = vmatpush.msra.mxu0 %v2022
    %2850 = vmatpush.msra.mxu0 %v2018
    %2851 = vmatpush.msra.mxu0 %v2014
    %2852 = vmatpush.msra.mxu0 %v2010
    %2853 = vmatpush.msra.mxu0 %v2006
    %2854 = vmatpush.msra.mxu0 %v2002
    %2855 = vmatpush.msra.mxu0 %v1998
    %2856 = vmatpush.msra.mxu0 %v1994
    %2857 = vmatpush.msra.mxu0 %v1990
    %2858 = vmatpush.msra.mxu0 %v1986
    %2859 = vmatpush.msra.mxu0 %v1982
    %2860 = vmatpush.msra.mxu0 %v1978
    %2861 = vmatmul.f32.gmra.mxu0 %v2290
    %v2862 = vpop.f32.mrf.mxu0
    %v2863 = vadd.f32 %v2843, %v2862
    %2864 = vdwg.mxu0
    %2865 = vmatpush.msra.mxu0 %v1207
    %2866 = vmatpush.msra.mxu0 %v1203
    %2867 = vmatpush.msra.mxu0 %v1199
    %2868 = vmatpush.msra.mxu0 %v1195
    %2869 = vmatpush.msra.mxu0 %v1191
    %2870 = vmatpush.msra.mxu0 %v1187
    %2871 = vmatpush.msra.mxu0 %v1183
    %2872 = vmatpush.msra.mxu0 %v1179
    %2873 = vmatpush.msra.mxu0 %v1175
    %2874 = vmatpush.msra.mxu0 %v1171
    %2875 = vmatpush.msra.mxu0 %v1167
    %2876 = vmatpush.msra.mxu0 %v1163
    %2877 = vmatpush.msra.mxu0 %v1159
    %2878 = vmatpush.msra.mxu0 %v1155
    %2879 = vmatpush.msra.mxu0 %v1151
    %2880 = vmatpush.msra.mxu0 %v1147
    %2881 = vmatmul.f32.gmra.mxu0 %v2262
    %v2882 = vpop.f32.mrf.mxu0
    %v2883 = vadd.f32 0.0, %v2882
    %2884 = vdwg.mxu0
    %2885 = vmatpush.msra.mxu0 %v1271
    %2886 = vmatpush.msra.mxu0 %v1267
    %2887 = vmatpush.msra.mxu0 %v1263
    %2888 = vmatpush.msra.mxu0 %v1259
    %2889 = vmatpush.msra.mxu0 %v1255
    %2890 = vmatpush.msra.mxu0 %v1251
    %2891 = vmatpush.msra.mxu0 %v1247
    %2892 = vmatpush.msra.mxu0 %v1243
    %2893 = vmatpush.msra.mxu0 %v1239
    %2894 = vmatpush.msra.mxu0 %v1235
    %2895 = vmatpush.msra.mxu0 %v1231
    %2896 = vmatpush.msra.mxu0 %v1227
    %2897 = vmatpush.msra.mxu0 %v1223
    %2898 = vmatpush.msra.mxu0 %v1219
    %2899 = vmatpush.msra.mxu0 %v1215
    %2900 = vmatpush.msra.mxu0 %v1211
    %2901 = vmatmul.f32.gmra.mxu0 %v2263
    %v2902 = vpop.f32.mrf.mxu0
    %v2903 = vadd.f32 %v2883, %v2902
    %2904 = vdwg.mxu0
    %2905 = vmatpush.msra.mxu0 %v1335
    %2906 = vmatpush.msra.mxu0 %v1331
    %2907 = vmatpush.msra.mxu0 %v1327
    %2908 = vmatpush.msra.mxu0 %v1323
    %2909 = vmatpush.msra.mxu0 %v1319
    %2910 = vmatpush.msra.mxu0 %v1315
    %2911 = vmatpush.msra.mxu0 %v1311
    %2912 = vmatpush.msra.mxu0 %v1307
    %2913 = vmatpush.msra.mxu0 %v1303
    %2914 = vmatpush.msra.mxu0 %v1299
    %2915 = vmatpush.msra.mxu0 %v1295
    %2916 = vmatpush.msra.mxu0 %v1291
    %2917 = vmatpush.msra.mxu0 %v1287
    %2918 = vmatpush.msra.mxu0 %v1283
    %2919 = vmatpush.msra.mxu0 %v1279
    %2920 = vmatpush.msra.mxu0 %v1275
    %2921 = vmatmul.f32.gmra.mxu0 %v2264
    %v2922 = vpop.f32.mrf.mxu0
    %v2923 = vadd.f32 %v2903, %v2922
    %2924 = vdwg.mxu0
    %2925 = vmatpush.msra.mxu0 %v1399
    %2926 = vmatpush.msra.mxu0 %v1395
    %2927 = vmatpush.msra.mxu0 %v1391
    %2928 = vmatpush.msra.mxu0 %v1387
    %2929 = vmatpush.msra.mxu0 %v1383
    %2930 = vmatpush.msra.mxu0 %v1379
    %2931 = vmatpush.msra.mxu0 %v1375
    %2932 = vmatpush.msra.mxu0 %v1371
    %2933 = vmatpush.msra.mxu0 %v1367
    %2934 = vmatpush.msra.mxu0 %v1363
    %2935 = vmatpush.msra.mxu0 %v1359
    %2936 = vmatpush.msra.mxu0 %v1355
    %2937 = vmatpush.msra.mxu0 %v1351
    %2938 = vmatpush.msra.mxu0 %v1347
    %2939 = vmatpush.msra.mxu0 %v1343
    %2940 = vmatpush.msra.mxu0 %v1339
    %2941 = vmatmul.f32.gmra.mxu0 %v2265
    %v2942 = vpop.f32.mrf.mxu0
    %v2943 = vadd.f32 %v2923, %v2942
    %2944 = vdwg.mxu0
    %2945 = vmatpush.msra.mxu0 %v1463
    %2946 = vmatpush.msra.mxu0 %v1459
    %2947 = vmatpush.msra.mxu0 %v1455
    %2948 = vmatpush.msra.mxu0 %v1451
    %2949 = vmatpush.msra.mxu0 %v1447
    %2950 = vmatpush.msra.mxu0 %v1443
    %2951 = vmatpush.msra.mxu0 %v1439
    %2952 = vmatpush.msra.mxu0 %v1435
    %2953 = vmatpush.msra.mxu0 %v1431
    %2954 = vmatpush.msra.mxu0 %v1427
    %2955 = vmatpush.msra.mxu0 %v1423
    %2956 = vmatpush.msra.mxu0 %v1419
    %2957 = vmatpush.msra.mxu0 %v1415
    %2958 = vmatpush.msra.mxu0 %v1411
    %2959 = vmatpush.msra.mxu0 %v1407
    %2960 = vmatpush.msra.mxu0 %v1403
    %2961 = vmatmul.f32.gmra.mxu0 %v2266
    %v2962 = vpop.f32.mrf.mxu0
    %v2963 = vadd.f32 %v2943, %v2962
    %2964 = vdwg.mxu0
    %2965 = vmatpush.msra.mxu0 %v1527
    %2966 = vmatpush.msra.mxu0 %v1523
    %2967 = vmatpush.msra.mxu0 %v1519
    %2968 = vmatpush.msra.mxu0 %v1515
    %2969 = vmatpush.msra.mxu0 %v1511
    %2970 = vmatpush.msra.mxu0 %v1507
    %2971 = vmatpush.msra.mxu0 %v1503
    %2972 = vmatpush.msra.mxu0 %v1499
    %2973 = vmatpush.msra.mxu0 %v1495
    %2974 = vmatpush.msra.mxu0 %v1491
    %2975 = vmatpush.msra.mxu0 %v1487
    %2976 = vmatpush.msra.mxu0 %v1483
    %2977 = vmatpush.msra.mxu0 %v1479
    %2978 = vmatpush.msra.mxu0 %v1475
    %2979 = vmatpush.msra.mxu0 %v1471
    %2980 = vmatpush.msra.mxu0 %v1467
    %2981 = vmatmul.f32.gmra.mxu0 %v2267
    %v2982 = vpop.f32.mrf.mxu0
    %v2983 = vadd.f32 %v2963, %v2982
    %2984 = vdwg.mxu0
    %2985 = vmatpush.msra.mxu0 %v1591
    %2986 = vmatpush.msra.mxu0 %v1587
    %2987 = vmatpush.msra.mxu0 %v1583
    %2988 = vmatpush.msra.mxu0 %v1579
    %2989 = vmatpush.msra.mxu0 %v1575
    %2990 = vmatpush.msra.mxu0 %v1571
    %2991 = vmatpush.msra.mxu0 %v1567
    %2992 = vmatpush.msra.mxu0 %v1563
    %2993 = vmatpush.msra.mxu0 %v1559
    %2994 = vmatpush.msra.mxu0 %v1555
    %2995 = vmatpush.msra.mxu0 %v1551
    %2996 = vmatpush.msra.mxu0 %v1547
    %2997 = vmatpush.msra.mxu0 %v1543
    %2998 = vmatpush.msra.mxu0 %v1539
    %2999 = vmatpush.msra.mxu0 %v1535
    %3000 = vmatpush.msra.mxu0 %v1531
    %3001 = vmatmul.f32.gmra.mxu0 %v2268
    %v3002 = vpop.f32.mrf.mxu0
    %v3003 = vadd.f32 %v2983, %v3002
    %3004 = vdwg.mxu0
    %3005 = vmatpush.msra.mxu0 %v1655
    %3006 = vmatpush.msra.mxu0 %v1651
    %3007 = vmatpush.msra.mxu0 %v1647
    %3008 = vmatpush.msra.mxu0 %v1643
    %3009 = vmatpush.msra.mxu0 %v1639
    %3010 = vmatpush.msra.mxu0 %v1635
    %3011 = vmatpush.msra.mxu0 %v1631
    %3012 = vmatpush.msra.mxu0 %v1627
    %3013 = vmatpush.msra.mxu0 %v1623
    %3014 = vmatpush.msra.mxu0 %v1619
    %3015 = vmatpush.msra.mxu0 %v1615
    %3016 = vmatpush.msra.mxu0 %v1611
    %3017 = vmatpush.msra.mxu0 %v1607
    %3018 = vmatpush.msra.mxu0 %v1603
    %3019 = vmatpush.msra.mxu0 %v1599
    %3020 = vmatpush.msra.mxu0 %v1595
    %3021 = vmatmul.f32.gmra.mxu0 %v2269
    %v3022 = vpop.f32.mrf.mxu0
    %v3023 = vadd.f32 %v3003, %v3022
    %3024 = vdwg.mxu0
    %3025 = vmatpush.msra.mxu0 %v1719
    %3026 = vmatpush.msra.mxu0 %v1715
    %3027 = vmatpush.msra.mxu0 %v1711
    %3028 = vmatpush.msra.mxu0 %v1707
    %3029 = vmatpush.msra.mxu0 %v1703
    %3030 = vmatpush.msra.mxu0 %v1699
    %3031 = vmatpush.msra.mxu0 %v1695
    %3032 = vmatpush.msra.mxu0 %v1691
    %3033 = vmatpush.msra.mxu0 %v1687
    %3034 = vmatpush.msra.mxu0 %v1683
    %3035 = vmatpush.msra.mxu0 %v1679
    %3036 = vmatpush.msra.mxu0 %v1675
    %3037 = vmatpush.msra.mxu0 %v1671
    %3038 = vmatpush.msra.mxu0 %v1667
    %3039 = vmatpush.msra.mxu0 %v1663
    %3040 = vmatpush.msra.mxu0 %v1659
    %3041 = vmatmul.f32.gmra.mxu0 %v2270
    %v3042 = vpop.f32.mrf.mxu0
    %v3043 = vadd.f32 %v3023, %v3042
    %3044 = vdwg.mxu0
    %3045 = vmatpush.msra.mxu0 %v1783
    %3046 = vmatpush.msra.mxu0 %v1779
    %3047 = vmatpush.msra.mxu0 %v1775
    %3048 = vmatpush.msra.mxu0 %v1771
    %3049 = vmatpush.msra.mxu0 %v1767
    %3050 = vmatpush.msra.mxu0 %v1763
    %3051 = vmatpush.msra.mxu0 %v1759
    %3052 = vmatpush.msra.mxu0 %v1755
    %3053 = vmatpush.msra.mxu0 %v1751
    %3054 = vmatpush.msra.mxu0 %v1747
    %3055 = vmatpush.msra.mxu0 %v1743
    %3056 = vmatpush.msra.mxu0 %v1739
    %3057 = vmatpush.msra.mxu0 %v1735
    %3058 = vmatpush.msra.mxu0 %v1731
    %3059 = vmatpush.msra.mxu0 %v1727
    %3060 = vmatpush.msra.mxu0 %v1723
    %3061 = vmatmul.f32.gmra.mxu0 %v2271
    %v3062 = vpop.f32.mrf.mxu0
    %v3063 = vadd.f32 %v3043, %v3062
    %3064 = vdwg.mxu0
    %3065 = vmatpush.msra.mxu0 %v1847
    %3066 = vmatpush.msra.mxu0 %v1843
    %3067 = vmatpush.msra.mxu0 %v1839
    %3068 = vmatpush.msra.mxu0 %v1835
    %3069 = vmatpush.msra.mxu0 %v1831
    %3070 = vmatpush.msra.mxu0 %v1827
    %3071 = vmatpush.msra.mxu0 %v1823
    %3072 = vmatpush.msra.mxu0 %v1819
    %3073 = vmatpush.msra.mxu0 %v1815
    %3074 = vmatpush.msra.mxu0 %v1811
    %3075 = vmatpush.msra.mxu0 %v1807
    %3076 = vmatpush.msra.mxu0 %v1803
    %3077 = vmatpush.msra.mxu0 %v1799
    %3078 = vmatpush.msra.mxu0 %v1795
    %3079 = vmatpush.msra.mxu0 %v1791
    %3080 = vmatpush.msra.mxu0 %v1787
    %3081 = vmatmul.f32.gmra.mxu0 %v2272
    %v3082 = vpop.f32.mrf.mxu0
    %v3083 = vadd.f32 %v3063, %v3082
    %3084 = vdwg.mxu0
    %3085 = vmatpush.msra.mxu0 %v1911
    %3086 = vmatpush.msra.mxu0 %v1907
    %3087 = vmatpush.msra.mxu0 %v1903
    %3088 = vmatpush.msra.mxu0 %v1899
    %3089 = vmatpush.msra.mxu0 %v1895
    %3090 = vmatpush.msra.mxu0 %v1891
    %3091 = vmatpush.msra.mxu0 %v1887
    %3092 = vmatpush.msra.mxu0 %v1883
    %3093 = vmatpush.msra.mxu0 %v1879
    %3094 = vmatpush.msra.mxu0 %v1875
    %3095 = vmatpush.msra.mxu0 %v1871
    %3096 = vmatpush.msra.mxu0 %v1867
    %3097 = vmatpush.msra.mxu0 %v1863
    %3098 = vmatpush.msra.mxu0 %v1859
    %3099 = vmatpush.msra.mxu0 %v1855
    %3100 = vmatpush.msra.mxu0 %v1851
    %3101 = vmatmul.f32.gmra.mxu0 %v2273
    %v3102 = vpop.f32.mrf.mxu0
    %v3103 = vadd.f32 %v3083, %v3102
    %3104 = vdwg.mxu0
    %3105 = vmatpush.msra.mxu0 %v1975
    %3106 = vmatpush.msra.mxu0 %v1971
    %3107 = vmatpush.msra.mxu0 %v1967
    %3108 = vmatpush.msra.mxu0 %v1963
    %3109 = vmatpush.msra.mxu0 %v1959
    %3110 = vmatpush.msra.mxu0 %v1955
    %3111 = vmatpush.msra.mxu0 %v1951
    %3112 = vmatpush.msra.mxu0 %v1947
    %3113 = vmatpush.msra.mxu0 %v1943
    %3114 = vmatpush.msra.mxu0 %v1939
    %3115 = vmatpush.msra.mxu0 %v1935
    %3116 = vmatpush.msra.mxu0 %v1931
    %3117 = vmatpush.msra.mxu0 %v1927
    %3118 = vmatpush.msra.mxu0 %v1923
    %3119 = vmatpush.msra.mxu0 %v1919
    %3120 = vmatpush.msra.mxu0 %v1915
    %3121 = vmatmul.f32.gmra.mxu0 %v2274
    %v3122 = vpop.f32.mrf.mxu0
    %v3123 = vadd.f32 %v3103, %v3122
    %3124 = vdwg.mxu0
    %3125 = vmatpush.msra.mxu0 0.0
    %3126 = vmatpush.msra.mxu0 0.0
    %3127 = vmatpush.msra.mxu0 %v2300
    %3128 = vmatpush.msra.mxu0 %v2027
    %3129 = vmatpush.msra.mxu0 %v2023
    %3130 = vmatpush.msra.mxu0 %v2019
    %3131 = vmatpush.msra.mxu0 %v2015
    %3132 = vmatpush.msra.mxu0 %v2011
    %3133 = vmatpush.msra.mxu0 %v2007
    %3134 = vmatpush.msra.mxu0 %v2003
    %3135 = vmatpush.msra.mxu0 %v1999
    %3136 = vmatpush.msra.mxu0 %v1995
    %3137 = vmatpush.msra.mxu0 %v1991
    %3138 = vmatpush.msra.mxu0 %v1987
    %3139 = vmatpush.msra.mxu0 %v1983
    %3140 = vmatpush.msra.mxu0 %v1979
    %3141 = vmatmul.f32.gmra.mxu0 %v2290
    %v3142 = vpop.f32.mrf.mxu0
    %v3143 = vadd.f32 %v3123, %v3142
    %3144 = vdwg.mxu0
    %3145 = vmatpush.msra.mxu0 %v1208
    %3146 = vmatpush.msra.mxu0 %v1204
    %3147 = vmatpush.msra.mxu0 %v1200
    %3148 = vmatpush.msra.mxu0 %v1196
    %3149 = vmatpush.msra.mxu0 %v1192
    %3150 = vmatpush.msra.mxu0 %v1188
    %3151 = vmatpush.msra.mxu0 %v1184
    %3152 = vmatpush.msra.mxu0 %v1180
    %3153 = vmatpush.msra.mxu0 %v1176
    %3154 = vmatpush.msra.mxu0 %v1172
    %3155 = vmatpush.msra.mxu0 %v1168
    %3156 = vmatpush.msra.mxu0 %v1164
    %3157 = vmatpush.msra.mxu0 %v1160
    %3158 = vmatpush.msra.mxu0 %v1156
    %3159 = vmatpush.msra.mxu0 %v1152
    %3160 = vmatpush.msra.mxu0 %v1148
    %3161 = vmatmul.f32.gmra.mxu0 %v2262
    %v3162 = vpop.f32.mrf.mxu0
    %v3163 = vadd.f32 0.0, %v3162
    %3164 = vdwg.mxu0
    %3165 = vmatpush.msra.mxu0 %v1272
    %3166 = vmatpush.msra.mxu0 %v1268
    %3167 = vmatpush.msra.mxu0 %v1264
    %3168 = vmatpush.msra.mxu0 %v1260
    %3169 = vmatpush.msra.mxu0 %v1256
    %3170 = vmatpush.msra.mxu0 %v1252
    %3171 = vmatpush.msra.mxu0 %v1248
    %3172 = vmatpush.msra.mxu0 %v1244
    %3173 = vmatpush.msra.mxu0 %v1240
    %3174 = vmatpush.msra.mxu0 %v1236
    %3175 = vmatpush.msra.mxu0 %v1232
    %3176 = vmatpush.msra.mxu0 %v1228
    %3177 = vmatpush.msra.mxu0 %v1224
    %3178 = vmatpush.msra.mxu0 %v1220
    %3179 = vmatpush.msra.mxu0 %v1216
    %3180 = vmatpush.msra.mxu0 %v1212
    %3181 = vmatmul.f32.gmra.mxu0 %v2263
    %v3182 = vpop.f32.mrf.mxu0
    %v3183 = vadd.f32 %v3163, %v3182
    %3184 = vdwg.mxu0
    %3185 = vmatpush.msra.mxu0 %v1336
    %3186 = vmatpush.msra.mxu0 %v1332
    %3187 = vmatpush.msra.mxu0 %v1328
    %3188 = vmatpush.msra.mxu0 %v1324
    %3189 = vmatpush.msra.mxu0 %v1320
    %3190 = vmatpush.msra.mxu0 %v1316
    %3191 = vmatpush.msra.mxu0 %v1312
    %3192 = vmatpush.msra.mxu0 %v1308
    %3193 = vmatpush.msra.mxu0 %v1304
    %3194 = vmatpush.msra.mxu0 %v1300
    %3195 = vmatpush.msra.mxu0 %v1296
    %3196 = vmatpush.msra.mxu0 %v1292
    %3197 = vmatpush.msra.mxu0 %v1288
    %3198 = vmatpush.msra.mxu0 %v1284
    %3199 = vmatpush.msra.mxu0 %v1280
    %3200 = vmatpush.msra.mxu0 %v1276
    %3201 = vmatmul.f32.gmra.mxu0 %v2264
    %v3202 = vpop.f32.mrf.mxu0
    %v3203 = vadd.f32 %v3183, %v3202
    %3204 = vdwg.mxu0
    %3205 = vmatpush.msra.mxu0 %v1400
    %3206 = vmatpush.msra.mxu0 %v1396
    %3207 = vmatpush.msra.mxu0 %v1392
    %3208 = vmatpush.msra.mxu0 %v1388
    %3209 = vmatpush.msra.mxu0 %v1384
    %3210 = vmatpush.msra.mxu0 %v1380
    %3211 = vmatpush.msra.mxu0 %v1376
    %3212 = vmatpush.msra.mxu0 %v1372
    %3213 = vmatpush.msra.mxu0 %v1368
    %3214 = vmatpush.msra.mxu0 %v1364
    %3215 = vmatpush.msra.mxu0 %v1360
    %3216 = vmatpush.msra.mxu0 %v1356
    %3217 = vmatpush.msra.mxu0 %v1352
    %3218 = vmatpush.msra.mxu0 %v1348
    %3219 = vmatpush.msra.mxu0 %v1344
    %3220 = vmatpush.msra.mxu0 %v1340
    %3221 = vmatmul.f32.gmra.mxu0 %v2265
    %v3222 = vpop.f32.mrf.mxu0
    %v3223 = vadd.f32 %v3203, %v3222
    %3224 = vdwg.mxu0
    %3225 = vmatpush.msra.mxu0 %v1464
    %3226 = vmatpush.msra.mxu0 %v1460
    %3227 = vmatpush.msra.mxu0 %v1456
    %3228 = vmatpush.msra.mxu0 %v1452
    %3229 = vmatpush.msra.mxu0 %v1448
    %3230 = vmatpush.msra.mxu0 %v1444
    %3231 = vmatpush.msra.mxu0 %v1440
    %3232 = vmatpush.msra.mxu0 %v1436
    %3233 = vmatpush.msra.mxu0 %v1432
    %3234 = vmatpush.msra.mxu0 %v1428
    %3235 = vmatpush.msra.mxu0 %v1424
    %3236 = vmatpush.msra.mxu0 %v1420
    %3237 = vmatpush.msra.mxu0 %v1416
    %3238 = vmatpush.msra.mxu0 %v1412
    %3239 = vmatpush.msra.mxu0 %v1408
    %3240 = vmatpush.msra.mxu0 %v1404
    %3241 = vmatmul.f32.gmra.mxu0 %v2266
    %v3242 = vpop.f32.mrf.mxu0
    %v3243 = vadd.f32 %v3223, %v3242
    %3244 = vdwg.mxu0
    %3245 = vmatpush.msra.mxu0 %v1528
    %3246 = vmatpush.msra.mxu0 %v1524
    %3247 = vmatpush.msra.mxu0 %v1520
    %3248 = vmatpush.msra.mxu0 %v1516
    %3249 = vmatpush.msra.mxu0 %v1512
    %3250 = vmatpush.msra.mxu0 %v1508
    %3251 = vmatpush.msra.mxu0 %v1504
    %3252 = vmatpush.msra.mxu0 %v1500
    %3253 = vmatpush.msra.mxu0 %v1496
    %3254 = vmatpush.msra.mxu0 %v1492
    %3255 = vmatpush.msra.mxu0 %v1488
    %3256 = vmatpush.msra.mxu0 %v1484
    %3257 = vmatpush.msra.mxu0 %v1480
    %3258 = vmatpush.msra.mxu0 %v1476
    %3259 = vmatpush.msra.mxu0 %v1472
    %3260 = vmatpush.msra.mxu0 %v1468
    %3261 = vmatmul.f32.gmra.mxu0 %v2267
    %v3262 = vpop.f32.mrf.mxu0
    %v3263 = vadd.f32 %v3243, %v3262
    %3264 = vdwg.mxu0
    %3265 = vmatpush.msra.mxu0 %v1592
    %3266 = vmatpush.msra.mxu0 %v1588
    %3267 = vmatpush.msra.mxu0 %v1584
    %3268 = vmatpush.msra.mxu0 %v1580
    %3269 = vmatpush.msra.mxu0 %v1576
    %3270 = vmatpush.msra.mxu0 %v1572
    %3271 = vmatpush.msra.mxu0 %v1568
    %3272 = vmatpush.msra.mxu0 %v1564
    %3273 = vmatpush.msra.mxu0 %v1560
    %3274 = vmatpush.msra.mxu0 %v1556
    %3275 = vmatpush.msra.mxu0 %v1552
    %3276 = vmatpush.msra.mxu0 %v1548
    %3277 = vmatpush.msra.mxu0 %v1544
    %3278 = vmatpush.msra.mxu0 %v1540
    %3279 = vmatpush.msra.mxu0 %v1536
    %3280 = vmatpush.msra.mxu0 %v1532
    %3281 = vmatmul.f32.gmra.mxu0 %v2268
    %v3282 = vpop.f32.mrf.mxu0
    %v3283 = vadd.f32 %v3263, %v3282
    %3284 = vdwg.mxu0
    %3285 = vmatpush.msra.mxu0 %v1656
    %3286 = vmatpush.msra.mxu0 %v1652
    %3287 = vmatpush.msra.mxu0 %v1648
    %3288 = vmatpush.msra.mxu0 %v1644
    %3289 = vmatpush.msra.mxu0 %v1640
    %3290 = vmatpush.msra.mxu0 %v1636
    %3291 = vmatpush.msra.mxu0 %v1632
    %3292 = vmatpush.msra.mxu0 %v1628
    %3293 = vmatpush.msra.mxu0 %v1624
    %3294 = vmatpush.msra.mxu0 %v1620
    %3295 = vmatpush.msra.mxu0 %v1616
    %3296 = vmatpush.msra.mxu0 %v1612
    %3297 = vmatpush.msra.mxu0 %v1608
    %3298 = vmatpush.msra.mxu0 %v1604
    %3299 = vmatpush.msra.mxu0 %v1600
    %3300 = vmatpush.msra.mxu0 %v1596
    %3301 = vmatmul.f32.gmra.mxu0 %v2269
    %v3302 = vpop.f32.mrf.mxu0
    %v3303 = vadd.f32 %v3283, %v3302
    %3304 = vdwg.mxu0
    %3305 = vmatpush.msra.mxu0 %v1720
    %3306 = vmatpush.msra.mxu0 %v1716
    %3307 = vmatpush.msra.mxu0 %v1712
    %3308 = vmatpush.msra.mxu0 %v1708
    %3309 = vmatpush.msra.mxu0 %v1704
    %3310 = vmatpush.msra.mxu0 %v1700
    %3311 = vmatpush.msra.mxu0 %v1696
    %3312 = vmatpush.msra.mxu0 %v1692
    %3313 = vmatpush.msra.mxu0 %v1688
    %3314 = vmatpush.msra.mxu0 %v1684
    %3315 = vmatpush.msra.mxu0 %v1680
    %3316 = vmatpush.msra.mxu0 %v1676
    %3317 = vmatpush.msra.mxu0 %v1672
    %3318 = vmatpush.msra.mxu0 %v1668
    %3319 = vmatpush.msra.mxu0 %v1664
    %3320 = vmatpush.msra.mxu0 %v1660
    %3321 = vmatmul.f32.gmra.mxu0 %v2270
    %v3322 = vpop.f32.mrf.mxu0
    %v3323 = vadd.f32 %v3303, %v3322
    %3324 = vdwg.mxu0
    %3325 = vmatpush.msra.mxu0 %v1784
    %3326 = vmatpush.msra.mxu0 %v1780
    %3327 = vmatpush.msra.mxu0 %v1776
    %3328 = vmatpush.msra.mxu0 %v1772
    %3329 = vmatpush.msra.mxu0 %v1768
    %3330 = vmatpush.msra.mxu0 %v1764
    %3331 = vmatpush.msra.mxu0 %v1760
    %3332 = vmatpush.msra.mxu0 %v1756
    %3333 = vmatpush.msra.mxu0 %v1752
    %3334 = vmatpush.msra.mxu0 %v1748
    %3335 = vmatpush.msra.mxu0 %v1744
    %3336 = vmatpush.msra.mxu0 %v1740
    %3337 = vmatpush.msra.mxu0 %v1736
    %3338 = vmatpush.msra.mxu0 %v1732
    %3339 = vmatpush.msra.mxu0 %v1728
    %3340 = vmatpush.msra.mxu0 %v1724
    %3341 = vmatmul.f32.gmra.mxu0 %v2271
    %v3342 = vpop.f32.mrf.mxu0
    %v3343 = vadd.f32 %v3323, %v3342
    %3344 = vdwg.mxu0
    %3345 = vmatpush.msra.mxu0 %v1848
    %3346 = vmatpush.msra.mxu0 %v1844
    %3347 = vmatpush.msra.mxu0 %v1840
    %3348 = vmatpush.msra.mxu0 %v1836
    %3349 = vmatpush.msra.mxu0 %v1832
    %3350 = vmatpush.msra.mxu0 %v1828
    %3351 = vmatpush.msra.mxu0 %v1824
    %3352 = vmatpush.msra.mxu0 %v1820
    %3353 = vmatpush.msra.mxu0 %v1816
    %3354 = vmatpush.msra.mxu0 %v1812
    %3355 = vmatpush.msra.mxu0 %v1808
    %3356 = vmatpush.msra.mxu0 %v1804
    %3357 = vmatpush.msra.mxu0 %v1800
    %3358 = vmatpush.msra.mxu0 %v1796
    %3359 = vmatpush.msra.mxu0 %v1792
    %3360 = vmatpush.msra.mxu0 %v1788
    %3361 = vmatmul.f32.gmra.mxu0 %v2272
    %v3362 = vpop.f32.mrf.mxu0
    %v3363 = vadd.f32 %v3343, %v3362
    %3364 = vdwg.mxu0
    %3365 = vmatpush.msra.mxu0 %v1912
    %3366 = vmatpush.msra.mxu0 %v1908
    %3367 = vmatpush.msra.mxu0 %v1904
    %3368 = vmatpush.msra.mxu0 %v1900
    %3369 = vmatpush.msra.mxu0 %v1896
    %3370 = vmatpush.msra.mxu0 %v1892
    %3371 = vmatpush.msra.mxu0 %v1888
    %3372 = vmatpush.msra.mxu0 %v1884
    %3373 = vmatpush.msra.mxu0 %v1880
    %3374 = vmatpush.msra.mxu0 %v1876
    %3375 = vmatpush.msra.mxu0 %v1872
    %3376 = vmatpush.msra.mxu0 %v1868
    %3377 = vmatpush.msra.mxu0 %v1864
    %3378 = vmatpush.msra.mxu0 %v1860
    %3379 = vmatpush.msra.mxu0 %v1856
    %3380 = vmatpush.msra.mxu0 %v1852
    %3381 = vmatmul.f32.gmra.mxu0 %v2273
    %v3382 = vpop.f32.mrf.mxu0
    %v3383 = vadd.f32 %v3363, %v3382
    %3384 = vdwg.mxu0
    %3385 = vmatpush.msra.mxu0 %v1976
    %3386 = vmatpush.msra.mxu0 %v1972
    %3387 = vmatpush.msra.mxu0 %v1968
    %3388 = vmatpush.msra.mxu0 %v1964
    %3389 = vmatpush.msra.mxu0 %v1960
    %3390 = vmatpush.msra.mxu0 %v1956
    %3391 = vmatpush.msra.mxu0 %v1952
    %3392 = vmatpush.msra.mxu0 %v1948
    %3393 = vmatpush.msra.mxu0 %v1944
    %3394 = vmatpush.msra.mxu0 %v1940
    %3395 = vmatpush.msra.mxu0 %v1936
    %3396 = vmatpush.msra.mxu0 %v1932
    %3397 = vmatpush.msra.mxu0 %v1928
    %3398 = vmatpush.msra.mxu0 %v1924
    %3399 = vmatpush.msra.mxu0 %v1920
    %3400 = vmatpush.msra.mxu0 %v1916
    %3401 = vmatmul.f32.gmra.mxu0 %v2274
    %v3402 = vpop.f32.mrf.mxu0
    %v3403 = vadd.f32 %v3383, %v3402
    %3404 = vdwg.mxu0
    %3405 = vmatpush.msra.mxu0 0.0
    %3406 = vmatpush.msra.mxu0 0.0
    %3407 = vmatpush.msra.mxu0 %v2303
    %3408 = vmatpush.msra.mxu0 %v2028
    %3409 = vmatpush.msra.mxu0 %v2024
    %3410 = vmatpush.msra.mxu0 %v2020
    %3411 = vmatpush.msra.mxu0 %v2016
    %3412 = vmatpush.msra.mxu0 %v2012
    %3413 = vmatpush.msra.mxu0 %v2008
    %3414 = vmatpush.msra.mxu0 %v2004
    %3415 = vmatpush.msra.mxu0 %v2000
    %3416 = vmatpush.msra.mxu0 %v1996
    %3417 = vmatpush.msra.mxu0 %v1992
    %3418 = vmatpush.msra.mxu0 %v1988
    %3419 = vmatpush.msra.mxu0 %v1984
    %3420 = vmatpush.msra.mxu0 %v1980
    %3421 = vmatmul.f32.gmra.mxu0 %v2290
    %v3422 = vpop.f32.mrf.mxu0
    %v3423 = vadd.f32 %v3403, %v3422
    %3424 = vdwg.mxu0
    %vm3425 = vcmask 1043456
    %v3426 = vsel %vm3425, %v2583, 0.0
    %v3427 = vsel %vm3425, %v2863, 0.0
    %v3428 = vadd.f32 %v3426, %v3427
    %v3429 = vsel %vm3425, %v3143, 0.0
    %v3430 = vadd.f32 %v3428, %v3429
    %v3431 = vsel %vm3425, %v3423, 0.0
    %v3432 = vadd.f32 %v3430, %v3431
    %3433 = vadd.xlane.f32.xlu0 %v3432
    %v3434 = vpop.xlane.xlu0 %3433
    %v3435 = vmul.f32 %v3434, 0.0025510204
    %v3436 = vmul.f32 %v2583, %v2583
    %v3437 = vmul.f32 %v2863, %v2863
    %v3438 = vmul.f32 %v3143, %v3143
    %v3439 = vmul.f32 %v3423, %v3423
    %v3440 = vsel %vm3425, %v3436, 0.0
    %v3441 = vsel %vm3425, %v3437, 0.0
    %v3442 = vadd.f32 %v3440, %v3441
    %v3443 = vsel %vm3425, %v3438, 0.0
    %v3444 = vadd.f32 %v3442, %v3443
    %v3445 = vsel %vm3425, %v3439, 0.0
    %v3446 = vadd.f32 %v3444, %v3445
    %3447 = vadd.xlane.f32.xlu0 %v3446
    %v3448 = vpop.xlane.xlu0 %3447
    %v3449 = vmul.f32 %v3448, 0.0025510204
    %v3450 = vmul.f32 %v3435, %v3435
    %v3451 = vsub.f32 %v3449, %v3450
    %v3452 = vmax.f32 %v3451, 0.0
    %v3453 = vadd.f32 %v3452, 1e-05
    %v3454 = vrsqrt.pop %v3453
    %v3455 = vmul.f32 %v3454, %v3453
    %v3456 = vmul.f32 %v3455, %v3454
    %v3457 = vmul.f32 0.5, %v3456
    %v3458 = vsub.f32 1.5, %v3457
    %v3459 = vmul.f32 %v3454, %v3458
    %vm3460 = vweird.f32 %v3453
    %vm3461 = vweird.f32 %v3454
    %vm3462 = vmor %vm3460, %vm3461
    %v3463 = vsel %vm3462, %v3454, %v3459
    %v3464 = vsub.f32 %v2583, %v3435
    %v3465 = vsub.f32 %v2863, %v3435
    %v3466 = vsub.f32 %v3143, %v3435
    %v3467 = vsub.f32 %v3423, %v3435
    %v3468 = vmul.f32 %v3464, %v3463
    %v3469 = vmul.f32 %v3465, %v3463
    %v3470 = vmul.f32 %v3466, %v3463
    %v3471 = vmul.f32 %v3467, %v3463
    %3473 = vset.pattern.permute.xlu0 0
    %3474 = vperm.xlu0 %3473, %v2033
    %v3475 = vpop.permute.xlu0 %3474
    %v3477 = vmul.f32 %v3468, %v3475
    %v3478 = vmul.f32 %v3469, %v3475
    %v3479 = vmul.f32 %v3470, %v3475
    %v3480 = vmul.f32 %v3471, %v3475
    %3482 = vset.pattern.permute.xlu0 0
    %3483 = vperm.xlu0 %3482, %v2034
    %v3484 = vpop.permute.xlu0 %3483
    %v3486 = vadd.f32 %v3477, %v3484
    %v3487 = vadd.f32 %v3478, %v3484
    %v3488 = vadd.f32 %v3479, %v3484
    %v3489 = vadd.f32 %v3480, %v3484
    %v3490 = vmax.f32 %v3486, 0.0
    %v3491 = vmax.f32 %v3487, 0.0
    %v3492 = vmax.f32 %v3488, 0.0
    %v3493 = vmax.f32 %v3489, 0.0
    %v3495 = vperm.slane %v2035, 0
    %v3496 = vperm.slane %v2035, 1
    %v3497 = vperm.slane %v2035, 2
    %v3498 = vperm.slane %v2035, 3
    %v3503 = vmul.f32 %v3490, %v3495
    %v3504 = vmul.f32 %v3491, %v3496
    %v3505 = vmul.f32 %v3492, %v3497
    %v3506 = vmul.f32 %v3493, %v3498
    %v3507 = vld [vmem:[%s7] sm:$0xff]
    %v3508 = vld [vmem:[%s7 + $0x8] sm:$0xff]
    %v3509 = vld [vmem:[%s7 + $0x10] sm:$0xff]
    %v3510 = vld [vmem:[%s7 + $0x18] sm:$0xff]
    %v3511 = vld [vmem:[%s7 + $0x20] sm:$0xff]
    %v3512 = vld [vmem:[%s7 + $0x28] sm:$0xff]
    %v3513 = vld [vmem:[%s7 + $0x30] sm:$0xff]
    %v3514 = vld [vmem:[%s7 + $0x38] sm:$0xff]
    %v3515 = vld [vmem:[%s7 + $0x40] sm:$0xff]
    %v3516 = vld [vmem:[%s8] sm:$0xff]
    %3522 = vrot.lane.b32.xlu0 0.0, 16
    %v3523 = vpop.permute.xlu0 %3522
    %3524 = vrot.lane.b32.xlu0 %v3503, 16
    %v3525 = vpop.permute.xlu0 %3524
    %3526 = vrot.lane.b32.xlu0 %v3504, 16
    %v3527 = vpop.permute.xlu0 %3526
    %3528 = vrot.lane.b32.xlu0 %v3505, 16
    %v3529 = vpop.permute.xlu0 %3528
    %3530 = vrot.lane.b32.xlu0 %v3506, 16
    %v3531 = vpop.permute.xlu0 %3530
    %vm3532 = vcmask 130048
    %v3533 = vsel %vm3532, %v3523, %v3525
    %v3534 = vsel %vm3532, %v3525, %v3527
    %v3535 = vsel %vm3532, %v3527, %v3529
    %v3536 = vsel %vm3532, %v3529, %v3531
    %vm3537 = vcmask 31744
    %v3539 = vsel %vm3537, %v3508, 0
    %v3541 = vsel %vm3425, %v3533, 0
    %v3543 = vsel %vm3425, %v3534, 0
    %v3545 = vsel %vm3425, %v3535, 0
    %v3547 = vsel %vm3425, %v3536, 0
    %3549 = vmatpush.msra.mxu0 0.0
    %3550 = vmatpush.msra.mxu0 0.0
    %3551 = vmatpush.msra.mxu0 0.0
    %3552 = vmatpush.msra.mxu0 0.0
    %3553 = vmatpush.msra.mxu0 0.0
    %3554 = vmatpush.msra.mxu0 0.0
    %3555 = vmatpush.msra.mxu0 0.0
    %3556 = vmatpush.msra.mxu0 0.0
    %3557 = vmatpush.msra.mxu0 0.0
    %3558 = vmatpush.msra.mxu0 0.0
    %3559 = vmatpush.msra.mxu0 0.0
    %3560 = vmatpush.msra.mxu0 0.0
    %3561 = vmatpush.msra.mxu0 0.0
    %3562 = vmatpush.msra.mxu0 0.0
    %3563 = vmatpush.msra.mxu0 0.0
    %3564 = vmatpush.msra.mxu0 %v3541
    %3565 = vmatmul.f32.gmra.mxu0 %v3539
    %v3566 = vpop.f32.mrf.mxu0
    %v3567 = vadd.f32 0.0, %v3566
    %3568 = vdwg.mxu0
    %3569 = vmatpush.msra.mxu0 0.0
    %3570 = vmatpush.msra.mxu0 0.0
    %3571 = vmatpush.msra.mxu0 0.0
    %3572 = vmatpush.msra.mxu0 0.0
    %3573 = vmatpush.msra.mxu0 0.0
    %3574 = vmatpush.msra.mxu0 0.0
    %3575 = vmatpush.msra.mxu0 0.0
    %3576 = vmatpush.msra.mxu0 0.0
    %3577 = vmatpush.msra.mxu0 0.0
    %3578 = vmatpush.msra.mxu0 0.0
    %3579 = vmatpush.msra.mxu0 0.0
    %3580 = vmatpush.msra.mxu0 0.0
    %3581 = vmatpush.msra.mxu0 0.0
    %3582 = vmatpush.msra.mxu0 0.0
    %3583 = vmatpush.msra.mxu0 0.0
    %3584 = vmatpush.msra.mxu0 %v3543
    %3585 = vmatmul.f32.gmra.mxu0 %v3539
    %v3586 = vpop.f32.mrf.mxu0
    %v3587 = vadd.f32 0.0, %v3586
    %3588 = vdwg.mxu0
    %3589 = vmatpush.msra.mxu0 0.0
    %3590 = vmatpush.msra.mxu0 0.0
    %3591 = vmatpush.msra.mxu0 0.0
    %3592 = vmatpush.msra.mxu0 0.0
    %3593 = vmatpush.msra.mxu0 0.0
    %3594 = vmatpush.msra.mxu0 0.0
    %3595 = vmatpush.msra.mxu0 0.0
    %3596 = vmatpush.msra.mxu0 0.0
    %3597 = vmatpush.msra.mxu0 0.0
    %3598 = vmatpush.msra.mxu0 0.0
    %3599 = vmatpush.msra.mxu0 0.0
    %3600 = vmatpush.msra.mxu0 0.0
    %3601 = vmatpush.msra.mxu0 0.0
    %3602 = vmatpush.msra.mxu0 0.0
    %3603 = vmatpush.msra.mxu0 0.0
    %3604 = vmatpush.msra.mxu0 %v3545
    %3605 = vmatmul.f32.gmra.mxu0 %v3539
    %v3606 = vpop.f32.mrf.mxu0
    %v3607 = vadd.f32 0.0, %v3606
    %3608 = vdwg.mxu0
    %3609 = vmatpush.msra.mxu0 0.0
    %3610 = vmatpush.msra.mxu0 0.0
    %3611 = vmatpush.msra.mxu0 0.0
    %3612 = vmatpush.msra.mxu0 0.0
    %3613 = vmatpush.msra.mxu0 0.0
    %3614 = vmatpush.msra.mxu0 0.0
    %3615 = vmatpush.msra.mxu0 0.0
    %3616 = vmatpush.msra.mxu0 0.0
    %3617 = vmatpush.msra.mxu0 0.0
    %3618 = vmatpush.msra.mxu0 0.0
    %3619 = vmatpush.msra.mxu0 0.0
    %3620 = vmatpush.msra.mxu0 0.0
    %3621 = vmatpush.msra.mxu0 0.0
    %3622 = vmatpush.msra.mxu0 0.0
    %3623 = vmatpush.msra.mxu0 0.0
    %3624 = vmatpush.msra.mxu0 %v3547
    %3625 = vmatmul.f32.gmra.mxu0 %v3539
    %v3626 = vpop.f32.mrf.mxu0
    %v3627 = vadd.f32 0.0, %v3626
    %3628 = vdwg.mxu0
    %3629 = vrot.lane.b32.xlu0 0.0, 17
    %v3630 = vpop.permute.xlu0 %3629
    %3631 = vrot.lane.b32.xlu0 %v3503, 17
    %v3632 = vpop.permute.xlu0 %3631
    %3633 = vrot.lane.b32.xlu0 %v3504, 17
    %v3634 = vpop.permute.xlu0 %3633
    %3635 = vrot.lane.b32.xlu0 %v3505, 17
    %v3636 = vpop.permute.xlu0 %3635
    %3637 = vrot.lane.b32.xlu0 %v3506, 17
    %v3638 = vpop.permute.xlu0 %3637
    %vm3639 = vcmask 138240
    %v3640 = vsel %vm3639, %v3630, %v3632
    %v3641 = vsel %vm3639, %v3632, %v3634
    %v3642 = vsel %vm3639, %v3634, %v3636
    %v3643 = vsel %vm3639, %v3636, %v3638
    %v3645 = vsel %vm3537, %v3507, 0
    %v3647 = vsel %vm3425, %v3640, 0
    %v3649 = vsel %vm3425, %v3641, 0
    %v3651 = vsel %vm3425, %v3642, 0
    %v3653 = vsel %vm3425, %v3643, 0
    %3655 = vmatpush.msra.mxu0 0.0
    %3656 = vmatpush.msra.mxu0 0.0
    %3657 = vmatpush.msra.mxu0 0.0
    %3658 = vmatpush.msra.mxu0 0.0
    %3659 = vmatpush.msra.mxu0 0.0
    %3660 = vmatpush.msra.mxu0 0.0
    %3661 = vmatpush.msra.mxu0 0.0
    %3662 = vmatpush.msra.mxu0 0.0
    %3663 = vmatpush.msra.mxu0 0.0
    %3664 = vmatpush.msra.mxu0 0.0
    %3665 = vmatpush.msra.mxu0 0.0
    %3666 = vmatpush.msra.mxu0 0.0
    %3667 = vmatpush.msra.mxu0 0.0
    %3668 = vmatpush.msra.mxu0 0.0
    %3669 = vmatpush.msra.mxu0 0.0
    %3670 = vmatpush.msra.mxu0 %v3647
    %3671 = vmatmul.f32.gmra.mxu0 %v3645
    %v3672 = vpop.f32.mrf.mxu0
    %v3673 = vadd.f32 %v3567, %v3672
    %3674 = vdwg.mxu0
    %3675 = vmatpush.msra.mxu0 0.0
    %3676 = vmatpush.msra.mxu0 0.0
    %3677 = vmatpush.msra.mxu0 0.0
    %3678 = vmatpush.msra.mxu0 0.0
    %3679 = vmatpush.msra.mxu0 0.0
    %3680 = vmatpush.msra.mxu0 0.0
    %3681 = vmatpush.msra.mxu0 0.0
    %3682 = vmatpush.msra.mxu0 0.0
    %3683 = vmatpush.msra.mxu0 0.0
    %3684 = vmatpush.msra.mxu0 0.0
    %3685 = vmatpush.msra.mxu0 0.0
    %3686 = vmatpush.msra.mxu0 0.0
    %3687 = vmatpush.msra.mxu0 0.0
    %3688 = vmatpush.msra.mxu0 0.0
    %3689 = vmatpush.msra.mxu0 0.0
    %3690 = vmatpush.msra.mxu0 %v3649
    %3691 = vmatmul.f32.gmra.mxu0 %v3645
    %v3692 = vpop.f32.mrf.mxu0
    %v3693 = vadd.f32 %v3587, %v3692
    %3694 = vdwg.mxu0
    %3695 = vmatpush.msra.mxu0 0.0
    %3696 = vmatpush.msra.mxu0 0.0
    %3697 = vmatpush.msra.mxu0 0.0
    %3698 = vmatpush.msra.mxu0 0.0
    %3699 = vmatpush.msra.mxu0 0.0
    %3700 = vmatpush.msra.mxu0 0.0
    %3701 = vmatpush.msra.mxu0 0.0
    %3702 = vmatpush.msra.mxu0 0.0
    %3703 = vmatpush.msra.mxu0 0.0
    %3704 = vmatpush.msra.mxu0 0.0
    %3705 = vmatpush.msra.mxu0 0.0
    %3706 = vmatpush.msra.mxu0 0.0
    %3707 = vmatpush.msra.mxu0 0.0
    %3708 = vmatpush.msra.mxu0 0.0
    %3709 = vmatpush.msra.mxu0 0.0
    %3710 = vmatpush.msra.mxu0 %v3651
    %3711 = vmatmul.f32.gmra.mxu0 %v3645
    %v3712 = vpop.f32.mrf.mxu0
    %v3713 = vadd.f32 %v3607, %v3712
    %3714 = vdwg.mxu0
    %3715 = vmatpush.msra.mxu0 0.0
    %3716 = vmatpush.msra.mxu0 0.0
    %3717 = vmatpush.msra.mxu0 0.0
    %3718 = vmatpush.msra.mxu0 0.0
    %3719 = vmatpush.msra.mxu0 0.0
    %3720 = vmatpush.msra.mxu0 0.0
    %3721 = vmatpush.msra.mxu0 0.0
    %3722 = vmatpush.msra.mxu0 0.0
    %3723 = vmatpush.msra.mxu0 0.0
    %3724 = vmatpush.msra.mxu0 0.0
    %3725 = vmatpush.msra.mxu0 0.0
    %3726 = vmatpush.msra.mxu0 0.0
    %3727 = vmatpush.msra.mxu0 0.0
    %3728 = vmatpush.msra.mxu0 0.0
    %3729 = vmatpush.msra.mxu0 0.0
    %3730 = vmatpush.msra.mxu0 %v3653
    %3731 = vmatmul.f32.gmra.mxu0 %v3645
    %v3732 = vpop.f32.mrf.mxu0
    %v3733 = vadd.f32 %v3627, %v3732
    %3734 = vdwg.mxu0
    %3735 = vrot.lane.b32.xlu0 0.0, 15
    %v3736 = vpop.permute.xlu0 %3735
    %3737 = vrot.lane.b32.xlu0 %v3503, 15
    %v3738 = vpop.permute.xlu0 %3737
    %3739 = vrot.lane.b32.xlu0 %v3504, 15
    %v3740 = vpop.permute.xlu0 %3739
    %3741 = vrot.lane.b32.xlu0 %v3505, 15
    %v3742 = vpop.permute.xlu0 %3741
    %3743 = vrot.lane.b32.xlu0 %v3506, 15
    %v3744 = vpop.permute.xlu0 %3743
    %vm3745 = vcmask 121856
    %v3746 = vsel %vm3745, %v3736, %v3738
    %v3747 = vsel %vm3745, %v3738, %v3740
    %v3748 = vsel %vm3745, %v3740, %v3742
    %v3749 = vsel %vm3745, %v3742, %v3744
    %v3751 = vsel %vm3537, %v3509, 0
    %v3753 = vsel %vm3425, %v3746, 0
    %v3755 = vsel %vm3425, %v3747, 0
    %v3757 = vsel %vm3425, %v3748, 0
    %v3759 = vsel %vm3425, %v3749, 0
    %3761 = vmatpush.msra.mxu0 0.0
    %3762 = vmatpush.msra.mxu0 0.0
    %3763 = vmatpush.msra.mxu0 0.0
    %3764 = vmatpush.msra.mxu0 0.0
    %3765 = vmatpush.msra.mxu0 0.0
    %3766 = vmatpush.msra.mxu0 0.0
    %3767 = vmatpush.msra.mxu0 0.0
    %3768 = vmatpush.msra.mxu0 0.0
    %3769 = vmatpush.msra.mxu0 0.0
    %3770 = vmatpush.msra.mxu0 0.0
    %3771 = vmatpush.msra.mxu0 0.0
    %3772 = vmatpush.msra.mxu0 0.0
    %3773 = vmatpush.msra.mxu0 0.0
    %3774 = vmatpush.msra.mxu0 0.0
    %3775 = vmatpush.msra.mxu0 0.0
    %3776 = vmatpush.msra.mxu0 %v3753
    %3777 = vmatmul.f32.gmra.mxu0 %v3751
    %v3778 = vpop.f32.mrf.mxu0
    %v3779 = vadd.f32 0.0, %v3778
    %3780 = vdwg.mxu0
    %3781 = vmatpush.msra.mxu0 0.0
    %3782 = vmatpush.msra.mxu0 0.0
    %3783 = vmatpush.msra.mxu0 0.0
    %3784 = vmatpush.msra.mxu0 0.0
    %3785 = vmatpush.msra.mxu0 0.0
    %3786 = vmatpush.msra.mxu0 0.0
    %3787 = vmatpush.msra.mxu0 0.0
    %3788 = vmatpush.msra.mxu0 0.0
    %3789 = vmatpush.msra.mxu0 0.0
    %3790 = vmatpush.msra.mxu0 0.0
    %3791 = vmatpush.msra.mxu0 0.0
    %3792 = vmatpush.msra.mxu0 0.0
    %3793 = vmatpush.msra.mxu0 0.0
    %3794 = vmatpush.msra.mxu0 0.0
    %3795 = vmatpush.msra.mxu0 0.0
    %3796 = vmatpush.msra.mxu0 %v3755
    %3797 = vmatmul.f32.gmra.mxu0 %v3751
    %v3798 = vpop.f32.mrf.mxu0
    %v3799 = vadd.f32 0.0, %v3798
    %3800 = vdwg.mxu0
    %3801 = vmatpush.msra.mxu0 0.0
    %3802 = vmatpush.msra.mxu0 0.0
    %3803 = vmatpush.msra.mxu0 0.0
    %3804 = vmatpush.msra.mxu0 0.0
    %3805 = vmatpush.msra.mxu0 0.0
    %3806 = vmatpush.msra.mxu0 0.0
    %3807 = vmatpush.msra.mxu0 0.0
    %3808 = vmatpush.msra.mxu0 0.0
    %3809 = vmatpush.msra.mxu0 0.0
    %3810 = vmatpush.msra.mxu0 0.0
    %3811 = vmatpush.msra.mxu0 0.0
    %3812 = vmatpush.msra.mxu0 0.0
    %3813 = vmatpush.msra.mxu0 0.0
    %3814 = vmatpush.msra.mxu0 0.0
    %3815 = vmatpush.msra.mxu0 0.0
    %3816 = vmatpush.msra.mxu0 %v3757
    %3817 = vmatmul.f32.gmra.mxu0 %v3751
    %v3818 = vpop.f32.mrf.mxu0
    %v3819 = vadd.f32 0.0, %v3818
    %3820 = vdwg.mxu0
    %3821 = vmatpush.msra.mxu0 0.0
    %3822 = vmatpush.msra.mxu0 0.0
    %3823 = vmatpush.msra.mxu0 0.0
    %3824 = vmatpush.msra.mxu0 0.0
    %3825 = vmatpush.msra.mxu0 0.0
    %3826 = vmatpush.msra.mxu0 0.0
    %3827 = vmatpush.msra.mxu0 0.0
    %3828 = vmatpush.msra.mxu0 0.0
    %3829 = vmatpush.msra.mxu0 0.0
    %3830 = vmatpush.msra.mxu0 0.0
    %3831 = vmatpush.msra.mxu0 0.0
    %3832 = vmatpush.msra.mxu0 0.0
    %3833 = vmatpush.msra.mxu0 0.0
    %3834 = vmatpush.msra.mxu0 0.0
    %3835 = vmatpush.msra.mxu0 0.0
    %3836 = vmatpush.msra.mxu0 %v3759
    %3837 = vmatmul.f32.gmra.mxu0 %v3751
    %v3838 = vpop.f32.mrf.mxu0
    %v3839 = vadd.f32 0.0, %v3838
    %3840 = vdwg.mxu0
    %v3841 = vadd.f32 %v3673, %v3779
    %v3842 = vadd.f32 %v3693, %v3799
    %v3843 = vadd.f32 %v3713, %v3819
    %v3844 = vadd.f32 %v3733, %v3839
    %3845 = vrot.lane.b32.xlu0 0.0, 1
    %v3846 = vpop.permute.xlu0 %3845
    %3847 = vrot.lane.b32.xlu0 %v3503, 1
    %v3848 = vpop.permute.xlu0 %3847
    %3849 = vrot.lane.b32.xlu0 %v3504, 1
    %v3850 = vpop.permute.xlu0 %3849
    %3851 = vrot.lane.b32.xlu0 %v3505, 1
    %v3852 = vpop.permute.xlu0 %3851
    %3853 = vrot.lane.b32.xlu0 %v3506, 1
    %v3854 = vpop.permute.xlu0 %3853
    %vm3855 = vcmask 7168
    %v3856 = vsel %vm3855, %v3846, %v3848
    %v3857 = vsel %vm3855, %v3848, %v3850
    %v3858 = vsel %vm3855, %v3850, %v3852
    %v3859 = vsel %vm3855, %v3852, %v3854
    %v3861 = vsel %vm3537, %v3510, 0
    %v3863 = vsel %vm3425, %v3856, 0
    %v3865 = vsel %vm3425, %v3857, 0
    %v3867 = vsel %vm3425, %v3858, 0
    %v3869 = vsel %vm3425, %v3859, 0
    %3871 = vmatpush.msra.mxu0 0.0
    %3872 = vmatpush.msra.mxu0 0.0
    %3873 = vmatpush.msra.mxu0 0.0
    %3874 = vmatpush.msra.mxu0 0.0
    %3875 = vmatpush.msra.mxu0 0.0
    %3876 = vmatpush.msra.mxu0 0.0
    %3877 = vmatpush.msra.mxu0 0.0
    %3878 = vmatpush.msra.mxu0 0.0
    %3879 = vmatpush.msra.mxu0 0.0
    %3880 = vmatpush.msra.mxu0 0.0
    %3881 = vmatpush.msra.mxu0 0.0
    %3882 = vmatpush.msra.mxu0 0.0
    %3883 = vmatpush.msra.mxu0 0.0
    %3884 = vmatpush.msra.mxu0 0.0
    %3885 = vmatpush.msra.mxu0 0.0
    %3886 = vmatpush.msra.mxu0 %v3863
    %3887 = vmatmul.f32.gmra.mxu0 %v3861
    %v3888 = vpop.f32.mrf.mxu0
    %v3889 = vadd.f32 0.0, %v3888
    %3890 = vdwg.mxu0
    %3891 = vmatpush.msra.mxu0 0.0
    %3892 = vmatpush.msra.mxu0 0.0
    %3893 = vmatpush.msra.mxu0 0.0
    %3894 = vmatpush.msra.mxu0 0.0
    %3895 = vmatpush.msra.mxu0 0.0
    %3896 = vmatpush.msra.mxu0 0.0
    %3897 = vmatpush.msra.mxu0 0.0
    %3898 = vmatpush.msra.mxu0 0.0
    %3899 = vmatpush.msra.mxu0 0.0
    %3900 = vmatpush.msra.mxu0 0.0
    %3901 = vmatpush.msra.mxu0 0.0
    %3902 = vmatpush.msra.mxu0 0.0
    %3903 = vmatpush.msra.mxu0 0.0
    %3904 = vmatpush.msra.mxu0 0.0
    %3905 = vmatpush.msra.mxu0 0.0
    %3906 = vmatpush.msra.mxu0 %v3865
    %3907 = vmatmul.f32.gmra.mxu0 %v3861
    %v3908 = vpop.f32.mrf.mxu0
    %v3909 = vadd.f32 0.0, %v3908
    %3910 = vdwg.mxu0
    %3911 = vmatpush.msra.mxu0 0.0
    %3912 = vmatpush.msra.mxu0 0.0
    %3913 = vmatpush.msra.mxu0 0.0
    %3914 = vmatpush.msra.mxu0 0.0
    %3915 = vmatpush.msra.mxu0 0.0
    %3916 = vmatpush.msra.mxu0 0.0
    %3917 = vmatpush.msra.mxu0 0.0
    %3918 = vmatpush.msra.mxu0 0.0
    %3919 = vmatpush.msra.mxu0 0.0
    %3920 = vmatpush.msra.mxu0 0.0
    %3921 = vmatpush.msra.mxu0 0.0
    %3922 = vmatpush.msra.mxu0 0.0
    %3923 = vmatpush.msra.mxu0 0.0
    %3924 = vmatpush.msra.mxu0 0.0
    %3925 = vmatpush.msra.mxu0 0.0
    %3926 = vmatpush.msra.mxu0 %v3867
    %3927 = vmatmul.f32.gmra.mxu0 %v3861
    %v3928 = vpop.f32.mrf.mxu0
    %v3929 = vadd.f32 0.0, %v3928
    %3930 = vdwg.mxu0
    %3931 = vmatpush.msra.mxu0 0.0
    %3932 = vmatpush.msra.mxu0 0.0
    %3933 = vmatpush.msra.mxu0 0.0
    %3934 = vmatpush.msra.mxu0 0.0
    %3935 = vmatpush.msra.mxu0 0.0
    %3936 = vmatpush.msra.mxu0 0.0
    %3937 = vmatpush.msra.mxu0 0.0
    %3938 = vmatpush.msra.mxu0 0.0
    %3939 = vmatpush.msra.mxu0 0.0
    %3940 = vmatpush.msra.mxu0 0.0
    %3941 = vmatpush.msra.mxu0 0.0
    %3942 = vmatpush.msra.mxu0 0.0
    %3943 = vmatpush.msra.mxu0 0.0
    %3944 = vmatpush.msra.mxu0 0.0
    %3945 = vmatpush.msra.mxu0 0.0
    %3946 = vmatpush.msra.mxu0 %v3869
    %3947 = vmatmul.f32.gmra.mxu0 %v3861
    %v3948 = vpop.f32.mrf.mxu0
    %v3949 = vadd.f32 0.0, %v3948
    %3950 = vdwg.mxu0
    %v3951 = vadd.f32 %v3841, %v3889
    %v3952 = vadd.f32 %v3842, %v3909
    %v3953 = vadd.f32 %v3843, %v3929
    %v3954 = vadd.f32 %v3844, %v3949
    %v3956 = vsel %vm3537, %v3511, 0
    %v3958 = vsel %vm3425, %v3503, 0
    %v3960 = vsel %vm3425, %v3504, 0
    %v3962 = vsel %vm3425, %v3505, 0
    %v3964 = vsel %vm3425, %v3506, 0
    %3966 = vmatpush.msra.mxu0 0.0
    %3967 = vmatpush.msra.mxu0 0.0
    %3968 = vmatpush.msra.mxu0 0.0
    %3969 = vmatpush.msra.mxu0 0.0
    %3970 = vmatpush.msra.mxu0 0.0
    %3971 = vmatpush.msra.mxu0 0.0
    %3972 = vmatpush.msra.mxu0 0.0
    %3973 = vmatpush.msra.mxu0 0.0
    %3974 = vmatpush.msra.mxu0 0.0
    %3975 = vmatpush.msra.mxu0 0.0
    %3976 = vmatpush.msra.mxu0 0.0
    %3977 = vmatpush.msra.mxu0 0.0
    %3978 = vmatpush.msra.mxu0 0.0
    %3979 = vmatpush.msra.mxu0 0.0
    %3980 = vmatpush.msra.mxu0 0.0
    %3981 = vmatpush.msra.mxu0 %v3958
    %3982 = vmatmul.f32.gmra.mxu0 %v3956
    %v3983 = vpop.f32.mrf.mxu0
    %v3984 = vadd.f32 0.0, %v3983
    %3985 = vdwg.mxu0
    %3986 = vmatpush.msra.mxu0 0.0
    %3987 = vmatpush.msra.mxu0 0.0
    %3988 = vmatpush.msra.mxu0 0.0
    %3989 = vmatpush.msra.mxu0 0.0
    %3990 = vmatpush.msra.mxu0 0.0
    %3991 = vmatpush.msra.mxu0 0.0
    %3992 = vmatpush.msra.mxu0 0.0
    %3993 = vmatpush.msra.mxu0 0.0
    %3994 = vmatpush.msra.mxu0 0.0
    %3995 = vmatpush.msra.mxu0 0.0
    %3996 = vmatpush.msra.mxu0 0.0
    %3997 = vmatpush.msra.mxu0 0.0
    %3998 = vmatpush.msra.mxu0 0.0
    %3999 = vmatpush.msra.mxu0 0.0
    %4000 = vmatpush.msra.mxu0 0.0
    %4001 = vmatpush.msra.mxu0 %v3960
    %4002 = vmatmul.f32.gmra.mxu0 %v3956
    %v4003 = vpop.f32.mrf.mxu0
    %v4004 = vadd.f32 0.0, %v4003
    %4005 = vdwg.mxu0
    %4006 = vmatpush.msra.mxu0 0.0
    %4007 = vmatpush.msra.mxu0 0.0
    %4008 = vmatpush.msra.mxu0 0.0
    %4009 = vmatpush.msra.mxu0 0.0
    %4010 = vmatpush.msra.mxu0 0.0
    %4011 = vmatpush.msra.mxu0 0.0
    %4012 = vmatpush.msra.mxu0 0.0
    %4013 = vmatpush.msra.mxu0 0.0
    %4014 = vmatpush.msra.mxu0 0.0
    %4015 = vmatpush.msra.mxu0 0.0
    %4016 = vmatpush.msra.mxu0 0.0
    %4017 = vmatpush.msra.mxu0 0.0
    %4018 = vmatpush.msra.mxu0 0.0
    %4019 = vmatpush.msra.mxu0 0.0
    %4020 = vmatpush.msra.mxu0 0.0
    %4021 = vmatpush.msra.mxu0 %v3962
    %4022 = vmatmul.f32.gmra.mxu0 %v3956
    %v4023 = vpop.f32.mrf.mxu0
    %v4024 = vadd.f32 0.0, %v4023
    %4025 = vdwg.mxu0
    %4026 = vmatpush.msra.mxu0 0.0
    %4027 = vmatpush.msra.mxu0 0.0
    %4028 = vmatpush.msra.mxu0 0.0
    %4029 = vmatpush.msra.mxu0 0.0
    %4030 = vmatpush.msra.mxu0 0.0
    %4031 = vmatpush.msra.mxu0 0.0
    %4032 = vmatpush.msra.mxu0 0.0
    %4033 = vmatpush.msra.mxu0 0.0
    %4034 = vmatpush.msra.mxu0 0.0
    %4035 = vmatpush.msra.mxu0 0.0
    %4036 = vmatpush.msra.mxu0 0.0
    %4037 = vmatpush.msra.mxu0 0.0
    %4038 = vmatpush.msra.mxu0 0.0
    %4039 = vmatpush.msra.mxu0 0.0
    %4040 = vmatpush.msra.mxu0 0.0
    %4041 = vmatpush.msra.mxu0 %v3964
    %4042 = vmatmul.f32.gmra.mxu0 %v3956
    %v4043 = vpop.f32.mrf.mxu0
    %v4044 = vadd.f32 0.0, %v4043
    %4045 = vdwg.mxu0
    %v4046 = vadd.f32 %v3951, %v3984
    %v4047 = vadd.f32 %v3952, %v4004
    %v4048 = vadd.f32 %v3953, %v4024
    %v4049 = vadd.f32 %v3954, %v4044
    %4050 = vrot.lane.b32.xlu0 %v3503, 127
    %v4051 = vpop.permute.xlu0 %4050
    %4052 = vrot.lane.b32.xlu0 %v3504, 127
    %v4053 = vpop.permute.xlu0 %4052
    %4054 = vrot.lane.b32.xlu0 %v3505, 127
    %v4055 = vpop.permute.xlu0 %4054
    %4056 = vrot.lane.b32.xlu0 %v3506, 127
    %v4057 = vpop.permute.xlu0 %4056
    %4058 = vrot.lane.b32.xlu0 0.0, 127
    %v4059 = vpop.permute.xlu0 %4058
    %v4060 = vsel %vm304, %v4051, %v4053
    %v4061 = vsel %vm304, %v4053, %v4055
    %v4062 = vsel %vm304, %v4055, %v4057
    %v4063 = vsel %vm304, %v4057, %v4059
    %v4065 = vsel %vm3537, %v3512, 0
    %v4067 = vsel %vm3425, %v4060, 0
    %v4069 = vsel %vm3425, %v4061, 0
    %v4071 = vsel %vm3425, %v4062, 0
    %v4073 = vsel %vm3425, %v4063, 0
    %4075 = vmatpush.msra.mxu0 0.0
    %4076 = vmatpush.msra.mxu0 0.0
    %4077 = vmatpush.msra.mxu0 0.0
    %4078 = vmatpush.msra.mxu0 0.0
    %4079 = vmatpush.msra.mxu0 0.0
    %4080 = vmatpush.msra.mxu0 0.0
    %4081 = vmatpush.msra.mxu0 0.0
    %4082 = vmatpush.msra.mxu0 0.0
    %4083 = vmatpush.msra.mxu0 0.0
    %4084 = vmatpush.msra.mxu0 0.0
    %4085 = vmatpush.msra.mxu0 0.0
    %4086 = vmatpush.msra.mxu0 0.0
    %4087 = vmatpush.msra.mxu0 0.0
    %4088 = vmatpush.msra.mxu0 0.0
    %4089 = vmatpush.msra.mxu0 0.0
    %4090 = vmatpush.msra.mxu0 %v4067
    %4091 = vmatmul.f32.gmra.mxu0 %v4065
    %v4092 = vpop.f32.mrf.mxu0
    %v4093 = vadd.f32 0.0, %v4092
    %4094 = vdwg.mxu0
    %4095 = vmatpush.msra.mxu0 0.0
    %4096 = vmatpush.msra.mxu0 0.0
    %4097 = vmatpush.msra.mxu0 0.0
    %4098 = vmatpush.msra.mxu0 0.0
    %4099 = vmatpush.msra.mxu0 0.0
    %4100 = vmatpush.msra.mxu0 0.0
    %4101 = vmatpush.msra.mxu0 0.0
    %4102 = vmatpush.msra.mxu0 0.0
    %4103 = vmatpush.msra.mxu0 0.0
    %4104 = vmatpush.msra.mxu0 0.0
    %4105 = vmatpush.msra.mxu0 0.0
    %4106 = vmatpush.msra.mxu0 0.0
    %4107 = vmatpush.msra.mxu0 0.0
    %4108 = vmatpush.msra.mxu0 0.0
    %4109 = vmatpush.msra.mxu0 0.0
    %4110 = vmatpush.msra.mxu0 %v4069
    %4111 = vmatmul.f32.gmra.mxu0 %v4065
    %v4112 = vpop.f32.mrf.mxu0
    %v4113 = vadd.f32 0.0, %v4112
    %4114 = vdwg.mxu0
    %4115 = vmatpush.msra.mxu0 0.0
    %4116 = vmatpush.msra.mxu0 0.0
    %4117 = vmatpush.msra.mxu0 0.0
    %4118 = vmatpush.msra.mxu0 0.0
    %4119 = vmatpush.msra.mxu0 0.0
    %4120 = vmatpush.msra.mxu0 0.0
    %4121 = vmatpush.msra.mxu0 0.0
    %4122 = vmatpush.msra.mxu0 0.0
    %4123 = vmatpush.msra.mxu0 0.0
    %4124 = vmatpush.msra.mxu0 0.0
    %4125 = vmatpush.msra.mxu0 0.0
    %4126 = vmatpush.msra.mxu0 0.0
    %4127 = vmatpush.msra.mxu0 0.0
    %4128 = vmatpush.msra.mxu0 0.0
    %4129 = vmatpush.msra.mxu0 0.0
    %4130 = vmatpush.msra.mxu0 %v4071
    %4131 = vmatmul.f32.gmra.mxu0 %v4065
    %v4132 = vpop.f32.mrf.mxu0
    %v4133 = vadd.f32 0.0, %v4132
    %4134 = vdwg.mxu0
    %4135 = vmatpush.msra.mxu0 0.0
    %4136 = vmatpush.msra.mxu0 0.0
    %4137 = vmatpush.msra.mxu0 0.0
    %4138 = vmatpush.msra.mxu0 0.0
    %4139 = vmatpush.msra.mxu0 0.0
    %4140 = vmatpush.msra.mxu0 0.0
    %4141 = vmatpush.msra.mxu0 0.0
    %4142 = vmatpush.msra.mxu0 0.0
    %4143 = vmatpush.msra.mxu0 0.0
    %4144 = vmatpush.msra.mxu0 0.0
    %4145 = vmatpush.msra.mxu0 0.0
    %4146 = vmatpush.msra.mxu0 0.0
    %4147 = vmatpush.msra.mxu0 0.0
    %4148 = vmatpush.msra.mxu0 0.0
    %4149 = vmatpush.msra.mxu0 0.0
    %4150 = vmatpush.msra.mxu0 %v4073
    %4151 = vmatmul.f32.gmra.mxu0 %v4065
    %v4152 = vpop.f32.mrf.mxu0
    %v4153 = vadd.f32 0.0, %v4152
    %4154 = vdwg.mxu0
    %v4155 = vadd.f32 %v4046, %v4093
    %v4156 = vadd.f32 %v4047, %v4113
    %v4157 = vadd.f32 %v4048, %v4133
    %v4158 = vadd.f32 %v4049, %v4153
    %4159 = vrot.lane.b32.xlu0 %v3503, 113
    %v4160 = vpop.permute.xlu0 %4159
    %4161 = vrot.lane.b32.xlu0 %v3504, 113
    %v4162 = vpop.permute.xlu0 %4161
    %4163 = vrot.lane.b32.xlu0 %v3505, 113
    %v4164 = vpop.permute.xlu0 %4163
    %4165 = vrot.lane.b32.xlu0 %v3506, 113
    %v4166 = vpop.permute.xlu0 %4165
    %4167 = vrot.lane.b32.xlu0 0.0, 113
    %v4168 = vpop.permute.xlu0 %4167
    %vm4169 = vcmask 924672
    %v4170 = vsel %vm4169, %v4160, %v4162
    %v4171 = vsel %vm4169, %v4162, %v4164
    %v4172 = vsel %vm4169, %v4164, %v4166
    %v4173 = vsel %vm4169, %v4166, %v4168
    %v4175 = vsel %vm3537, %v3513, 0
    %v4177 = vsel %vm3425, %v4170, 0
    %v4179 = vsel %vm3425, %v4171, 0
    %v4181 = vsel %vm3425, %v4172, 0
    %v4183 = vsel %vm3425, %v4173, 0
    %4185 = vmatpush.msra.mxu0 0.0
    %4186 = vmatpush.msra.mxu0 0.0
    %4187 = vmatpush.msra.mxu0 0.0
    %4188 = vmatpush.msra.mxu0 0.0
    %4189 = vmatpush.msra.mxu0 0.0
    %4190 = vmatpush.msra.mxu0 0.0
    %4191 = vmatpush.msra.mxu0 0.0
    %4192 = vmatpush.msra.mxu0 0.0
    %4193 = vmatpush.msra.mxu0 0.0
    %4194 = vmatpush.msra.mxu0 0.0
    %4195 = vmatpush.msra.mxu0 0.0
    %4196 = vmatpush.msra.mxu0 0.0
    %4197 = vmatpush.msra.mxu0 0.0
    %4198 = vmatpush.msra.mxu0 0.0
    %4199 = vmatpush.msra.mxu0 0.0
    %4200 = vmatpush.msra.mxu0 %v4177
    %4201 = vmatmul.f32.gmra.mxu0 %v4175
    %v4202 = vpop.f32.mrf.mxu0
    %v4203 = vadd.f32 0.0, %v4202
    %4204 = vdwg.mxu0
    %4205 = vmatpush.msra.mxu0 0.0
    %4206 = vmatpush.msra.mxu0 0.0
    %4207 = vmatpush.msra.mxu0 0.0
    %4208 = vmatpush.msra.mxu0 0.0
    %4209 = vmatpush.msra.mxu0 0.0
    %4210 = vmatpush.msra.mxu0 0.0
    %4211 = vmatpush.msra.mxu0 0.0
    %4212 = vmatpush.msra.mxu0 0.0
    %4213 = vmatpush.msra.mxu0 0.0
    %4214 = vmatpush.msra.mxu0 0.0
    %4215 = vmatpush.msra.mxu0 0.0
    %4216 = vmatpush.msra.mxu0 0.0
    %4217 = vmatpush.msra.mxu0 0.0
    %4218 = vmatpush.msra.mxu0 0.0
    %4219 = vmatpush.msra.mxu0 0.0
    %4220 = vmatpush.msra.mxu0 %v4179
    %4221 = vmatmul.f32.gmra.mxu0 %v4175
    %v4222 = vpop.f32.mrf.mxu0
    %v4223 = vadd.f32 0.0, %v4222
    %4224 = vdwg.mxu0
    %4225 = vmatpush.msra.mxu0 0.0
    %4226 = vmatpush.msra.mxu0 0.0
    %4227 = vmatpush.msra.mxu0 0.0
    %4228 = vmatpush.msra.mxu0 0.0
    %4229 = vmatpush.msra.mxu0 0.0
    %4230 = vmatpush.msra.mxu0 0.0
    %4231 = vmatpush.msra.mxu0 0.0
    %4232 = vmatpush.msra.mxu0 0.0
    %4233 = vmatpush.msra.mxu0 0.0
    %4234 = vmatpush.msra.mxu0 0.0
    %4235 = vmatpush.msra.mxu0 0.0
    %4236 = vmatpush.msra.mxu0 0.0
    %4237 = vmatpush.msra.mxu0 0.0
    %4238 = vmatpush.msra.mxu0 0.0
    %4239 = vmatpush.msra.mxu0 0.0
    %4240 = vmatpush.msra.mxu0 %v4181
    %4241 = vmatmul.f32.gmra.mxu0 %v4175
    %v4242 = vpop.f32.mrf.mxu0
    %v4243 = vadd.f32 0.0, %v4242
    %4244 = vdwg.mxu0
    %4245 = vmatpush.msra.mxu0 0.0
    %4246 = vmatpush.msra.mxu0 0.0
    %4247 = vmatpush.msra.mxu0 0.0
    %4248 = vmatpush.msra.mxu0 0.0
    %4249 = vmatpush.msra.mxu0 0.0
    %4250 = vmatpush.msra.mxu0 0.0
    %4251 = vmatpush.msra.mxu0 0.0
    %4252 = vmatpush.msra.mxu0 0.0
    %4253 = vmatpush.msra.mxu0 0.0
    %4254 = vmatpush.msra.mxu0 0.0
    %4255 = vmatpush.msra.mxu0 0.0
    %4256 = vmatpush.msra.mxu0 0.0
    %4257 = vmatpush.msra.mxu0 0.0
    %4258 = vmatpush.msra.mxu0 0.0
    %4259 = vmatpush.msra.mxu0 0.0
    %4260 = vmatpush.msra.mxu0 %v4183
    %4261 = vmatmul.f32.gmra.mxu0 %v4175
    %v4262 = vpop.f32.mrf.mxu0
    %v4263 = vadd.f32 0.0, %v4262
    %4264 = vdwg.mxu0
    %v4265 = vadd.f32 %v4155, %v4203
    %v4266 = vadd.f32 %v4156, %v4223
    %v4267 = vadd.f32 %v4157, %v4243
    %v4268 = vadd.f32 %v4158, %v4263
    %4269 = vrot.lane.b32.xlu0 %v3503, 112
    %v4270 = vpop.permute.xlu0 %4269
    %4271 = vrot.lane.b32.xlu0 %v3504, 112
    %v4272 = vpop.permute.xlu0 %4271
    %4273 = vrot.lane.b32.xlu0 %v3505, 112
    %v4274 = vpop.permute.xlu0 %4273
    %4275 = vrot.lane.b32.xlu0 %v3506, 112
    %v4276 = vpop.permute.xlu0 %4275
    %4277 = vrot.lane.b32.xlu0 0.0, 112
    %v4278 = vpop.permute.xlu0 %4277
    %vm4279 = vcmask 916480
    %v4280 = vsel %vm4279, %v4270, %v4272
    %v4281 = vsel %vm4279, %v4272, %v4274
    %v4282 = vsel %vm4279, %v4274, %v4276
    %v4283 = vsel %vm4279, %v4276, %v4278
    %v4285 = vsel %vm3537, %v3514, 0
    %v4287 = vsel %vm3425, %v4280, 0
    %v4289 = vsel %vm3425, %v4281, 0
    %v4291 = vsel %vm3425, %v4282, 0
    %v4293 = vsel %vm3425, %v4283, 0
    %4295 = vmatpush.msra.mxu0 0.0
    %4296 = vmatpush.msra.mxu0 0.0
    %4297 = vmatpush.msra.mxu0 0.0
    %4298 = vmatpush.msra.mxu0 0.0
    %4299 = vmatpush.msra.mxu0 0.0
    %4300 = vmatpush.msra.mxu0 0.0
    %4301 = vmatpush.msra.mxu0 0.0
    %4302 = vmatpush.msra.mxu0 0.0
    %4303 = vmatpush.msra.mxu0 0.0
    %4304 = vmatpush.msra.mxu0 0.0
    %4305 = vmatpush.msra.mxu0 0.0
    %4306 = vmatpush.msra.mxu0 0.0
    %4307 = vmatpush.msra.mxu0 0.0
    %4308 = vmatpush.msra.mxu0 0.0
    %4309 = vmatpush.msra.mxu0 0.0
    %4310 = vmatpush.msra.mxu0 %v4287
    %4311 = vmatmul.f32.gmra.mxu0 %v4285
    %v4312 = vpop.f32.mrf.mxu0
    %v4313 = vadd.f32 0.0, %v4312
    %4314 = vdwg.mxu0
    %4315 = vmatpush.msra.mxu0 0.0
    %4316 = vmatpush.msra.mxu0 0.0
    %4317 = vmatpush.msra.mxu0 0.0
    %4318 = vmatpush.msra.mxu0 0.0
    %4319 = vmatpush.msra.mxu0 0.0
    %4320 = vmatpush.msra.mxu0 0.0
    %4321 = vmatpush.msra.mxu0 0.0
    %4322 = vmatpush.msra.mxu0 0.0
    %4323 = vmatpush.msra.mxu0 0.0
    %4324 = vmatpush.msra.mxu0 0.0
    %4325 = vmatpush.msra.mxu0 0.0
    %4326 = vmatpush.msra.mxu0 0.0
    %4327 = vmatpush.msra.mxu0 0.0
    %4328 = vmatpush.msra.mxu0 0.0
    %4329 = vmatpush.msra.mxu0 0.0
    %4330 = vmatpush.msra.mxu0 %v4289
    %4331 = vmatmul.f32.gmra.mxu0 %v4285
    %v4332 = vpop.f32.mrf.mxu0
    %v4333 = vadd.f32 0.0, %v4332
    %4334 = vdwg.mxu0
    %4335 = vmatpush.msra.mxu0 0.0
    %4336 = vmatpush.msra.mxu0 0.0
    %4337 = vmatpush.msra.mxu0 0.0
    %4338 = vmatpush.msra.mxu0 0.0
    %4339 = vmatpush.msra.mxu0 0.0
    %4340 = vmatpush.msra.mxu0 0.0
    %4341 = vmatpush.msra.mxu0 0.0
    %4342 = vmatpush.msra.mxu0 0.0
    %4343 = vmatpush.msra.mxu0 0.0
    %4344 = vmatpush.msra.mxu0 0.0
    %4345 = vmatpush.msra.mxu0 0.0
    %4346 = vmatpush.msra.mxu0 0.0
    %4347 = vmatpush.msra.mxu0 0.0
    %4348 = vmatpush.msra.mxu0 0.0
    %4349 = vmatpush.msra.mxu0 0.0
    %4350 = vmatpush.msra.mxu0 %v4291
    %4351 = vmatmul.f32.gmra.mxu0 %v4285
    %v4352 = vpop.f32.mrf.mxu0
    %v4353 = vadd.f32 0.0, %v4352
    %4354 = vdwg.mxu0
    %4355 = vmatpush.msra.mxu0 0.0
    %4356 = vmatpush.msra.mxu0 0.0
    %4357 = vmatpush.msra.mxu0 0.0
    %4358 = vmatpush.msra.mxu0 0.0
    %4359 = vmatpush.msra.mxu0 0.0
    %4360 = vmatpush.msra.mxu0 0.0
    %4361 = vmatpush.msra.mxu0 0.0
    %4362 = vmatpush.msra.mxu0 0.0
    %4363 = vmatpush.msra.mxu0 0.0
    %4364 = vmatpush.msra.mxu0 0.0
    %4365 = vmatpush.msra.mxu0 0.0
    %4366 = vmatpush.msra.mxu0 0.0
    %4367 = vmatpush.msra.mxu0 0.0
    %4368 = vmatpush.msra.mxu0 0.0
    %4369 = vmatpush.msra.mxu0 0.0
    %4370 = vmatpush.msra.mxu0 %v4293
    %4371 = vmatmul.f32.gmra.mxu0 %v4285
    %v4372 = vpop.f32.mrf.mxu0
    %v4373 = vadd.f32 0.0, %v4372
    %4374 = vdwg.mxu0
    %v4375 = vadd.f32 %v4265, %v4313
    %v4376 = vadd.f32 %v4266, %v4333
    %v4377 = vadd.f32 %v4267, %v4353
    %v4378 = vadd.f32 %v4268, %v4373
    %4379 = vrot.lane.b32.xlu0 %v3503, 111
    %v4380 = vpop.permute.xlu0 %4379
    %4381 = vrot.lane.b32.xlu0 %v3504, 111
    %v4382 = vpop.permute.xlu0 %4381
    %4383 = vrot.lane.b32.xlu0 %v3505, 111
    %v4384 = vpop.permute.xlu0 %4383
    %4385 = vrot.lane.b32.xlu0 %v3506, 111
    %v4386 = vpop.permute.xlu0 %4385
    %4387 = vrot.lane.b32.xlu0 0.0, 111
    %v4388 = vpop.permute.xlu0 %4387
    %vm4389 = vcmask 908288
    %v4390 = vsel %vm4389, %v4380, %v4382
    %v4391 = vsel %vm4389, %v4382, %v4384
    %v4392 = vsel %vm4389, %v4384, %v4386
    %v4393 = vsel %vm4389, %v4386, %v4388
    %v4395 = vsel %vm3537, %v3515, 0
    %v4397 = vsel %vm3425, %v4390, 0
    %v4399 = vsel %vm3425, %v4391, 0
    %v4401 = vsel %vm3425, %v4392, 0
    %v4403 = vsel %vm3425, %v4393, 0
    %4405 = vmatpush.msra.mxu0 0.0
    %4406 = vmatpush.msra.mxu0 0.0
    %4407 = vmatpush.msra.mxu0 0.0
    %4408 = vmatpush.msra.mxu0 0.0
    %4409 = vmatpush.msra.mxu0 0.0
    %4410 = vmatpush.msra.mxu0 0.0
    %4411 = vmatpush.msra.mxu0 0.0
    %4412 = vmatpush.msra.mxu0 0.0
    %4413 = vmatpush.msra.mxu0 0.0
    %4414 = vmatpush.msra.mxu0 0.0
    %4415 = vmatpush.msra.mxu0 0.0
    %4416 = vmatpush.msra.mxu0 0.0
    %4417 = vmatpush.msra.mxu0 0.0
    %4418 = vmatpush.msra.mxu0 0.0
    %4419 = vmatpush.msra.mxu0 0.0
    %4420 = vmatpush.msra.mxu0 %v4397
    %4421 = vmatmul.f32.gmra.mxu0 %v4395
    %v4422 = vpop.f32.mrf.mxu0
    %v4423 = vadd.f32 0.0, %v4422
    %4424 = vdwg.mxu0
    %4425 = vmatpush.msra.mxu0 0.0
    %4426 = vmatpush.msra.mxu0 0.0
    %4427 = vmatpush.msra.mxu0 0.0
    %4428 = vmatpush.msra.mxu0 0.0
    %4429 = vmatpush.msra.mxu0 0.0
    %4430 = vmatpush.msra.mxu0 0.0
    %4431 = vmatpush.msra.mxu0 0.0
    %4432 = vmatpush.msra.mxu0 0.0
    %4433 = vmatpush.msra.mxu0 0.0
    %4434 = vmatpush.msra.mxu0 0.0
    %4435 = vmatpush.msra.mxu0 0.0
    %4436 = vmatpush.msra.mxu0 0.0
    %4437 = vmatpush.msra.mxu0 0.0
    %4438 = vmatpush.msra.mxu0 0.0
    %4439 = vmatpush.msra.mxu0 0.0
    %4440 = vmatpush.msra.mxu0 %v4399
    %4441 = vmatmul.f32.gmra.mxu0 %v4395
    %v4442 = vpop.f32.mrf.mxu0
    %v4443 = vadd.f32 0.0, %v4442
    %4444 = vdwg.mxu0
    %4445 = vmatpush.msra.mxu0 0.0
    %4446 = vmatpush.msra.mxu0 0.0
    %4447 = vmatpush.msra.mxu0 0.0
    %4448 = vmatpush.msra.mxu0 0.0
    %4449 = vmatpush.msra.mxu0 0.0
    %4450 = vmatpush.msra.mxu0 0.0
    %4451 = vmatpush.msra.mxu0 0.0
    %4452 = vmatpush.msra.mxu0 0.0
    %4453 = vmatpush.msra.mxu0 0.0
    %4454 = vmatpush.msra.mxu0 0.0
    %4455 = vmatpush.msra.mxu0 0.0
    %4456 = vmatpush.msra.mxu0 0.0
    %4457 = vmatpush.msra.mxu0 0.0
    %4458 = vmatpush.msra.mxu0 0.0
    %4459 = vmatpush.msra.mxu0 0.0
    %4460 = vmatpush.msra.mxu0 %v4401
    %4461 = vmatmul.f32.gmra.mxu0 %v4395
    %v4462 = vpop.f32.mrf.mxu0
    %v4463 = vadd.f32 0.0, %v4462
    %4464 = vdwg.mxu0
    %4465 = vmatpush.msra.mxu0 0.0
    %4466 = vmatpush.msra.mxu0 0.0
    %4467 = vmatpush.msra.mxu0 0.0
    %4468 = vmatpush.msra.mxu0 0.0
    %4469 = vmatpush.msra.mxu0 0.0
    %4470 = vmatpush.msra.mxu0 0.0
    %4471 = vmatpush.msra.mxu0 0.0
    %4472 = vmatpush.msra.mxu0 0.0
    %4473 = vmatpush.msra.mxu0 0.0
    %4474 = vmatpush.msra.mxu0 0.0
    %4475 = vmatpush.msra.mxu0 0.0
    %4476 = vmatpush.msra.mxu0 0.0
    %4477 = vmatpush.msra.mxu0 0.0
    %4478 = vmatpush.msra.mxu0 0.0
    %4479 = vmatpush.msra.mxu0 0.0
    %4480 = vmatpush.msra.mxu0 %v4403
    %4481 = vmatmul.f32.gmra.mxu0 %v4395
    %v4482 = vpop.f32.mrf.mxu0
    %v4483 = vadd.f32 0.0, %v4482
    %4484 = vdwg.mxu0
    %v4485 = vadd.f32 %v4375, %v4423
    %v4486 = vadd.f32 %v4376, %v4443
    %v4487 = vadd.f32 %v4377, %v4463
    %v4488 = vadd.f32 %v4378, %v4483
    %4490 = vset.pattern.permute.xlu0 0
    %4491 = vperm.xlu0 %4490, %v3516
    %v4492 = vpop.permute.xlu0 %4491
    %v4494 = vadd.f32 %v4485, %v4492
    %v4495 = vadd.f32 %v4486, %v4492
    %v4496 = vadd.f32 %v4487, %v4492
    %v4497 = vadd.f32 %v4488, %v4492
    %v4498 = vld [vmem:[#allocation6] sm:$0xff]
    %v4499 = vld [vmem:[#allocation6 + $0x8] sm:$0xff]
    %v4500 = vld [vmem:[#allocation6 + $0x10] sm:$0xff]
    %v4501 = vld [vmem:[#allocation6 + $0x18] sm:$0xff]
    %v4502 = vld [vmem:[#allocation6 + $0x20] sm:$0xff]
    %v4503 = vld [vmem:[#allocation6 + $0x28] sm:$0xff]
    %v4504 = vld [vmem:[#allocation6 + $0x30] sm:$0xff]
    %v4505 = vld [vmem:[#allocation6 + $0x38] sm:$0xff]
    %v4506 = vld [vmem:[#allocation6 + $0x40] sm:$0xff]
    %v4507 = vld [vmem:[#allocation6 + $0x48] sm:$0xff]
    %v4508 = vld [vmem:[#allocation6 + $0x50] sm:$0xff]
    %v4509 = vld [vmem:[#allocation6 + $0x58] sm:$0xff]
    %v4510 = vld [vmem:[#allocation6 + $0x60] sm:$0xff]
    %v4511 = vld [vmem:[#allocation6 + $0x68] sm:$0xff]
    %v4512 = vld [vmem:[#allocation6 + $0x70] sm:$0xff]
    %v4513 = vld [vmem:[#allocation6 + $0x78] sm:$0xff]
    %v4514 = vld [vmem:[#allocation6 + $0x80] sm:$0xff]
    %v4515 = vld [vmem:[#allocation6 + $0x88] sm:$0xff]
    %v4516 = vld [vmem:[#allocation6 + $0x90] sm:$0xff]
    %v4517 = vld [vmem:[#allocation6 + $0x98] sm:$0xff]
    %v4518 = vld [vmem:[#allocation6 + $0xa0] sm:$0xff]
    %v4519 = vld [vmem:[#allocation6 + $0xa8] sm:$0xff]
    %v4520 = vld [vmem:[#allocation6 + $0xb0] sm:$0xff]
    %v4521 = vld [vmem:[#allocation6 + $0xb8] sm:$0xff]
    %v4522 = vld [vmem:[#allocation6 + $0xc0] sm:$0xff]
    %v4523 = vld [vmem:[#allocation6 + $0xc8] sm:$0xff]
    %v4524 = vld [vmem:[#allocation6 + $0xd0] sm:$0xff]
    %v4525 = vld [vmem:[#allocation6 + $0xd8] sm:$0xff]
    %v4526 = vld [vmem:[#allocation6 + $0xe0] sm:$0xff]
    %v4527 = vld [vmem:[#allocation6 + $0xe8] sm:$0xff]
    %v4528 = vld [vmem:[#allocation6 + $0xf0] sm:$0xff]
    %v4529 = vld [vmem:[#allocation6 + $0xf8] sm:$0xff]
    %v4530 = vld [vmem:[#allocation6 + $0x100] sm:$0xff]
    %v4531 = vld [vmem:[#allocation6 + $0x108] sm:$0xff]
    %v4532 = vld [vmem:[#allocation6 + $0x110] sm:$0xff]
    %v4533 = vld [vmem:[#allocation6 + $0x118] sm:$0xff]
    %v4534 = vld [vmem:[#allocation6 + $0x120] sm:$0xff]
    %v4535 = vld [vmem:[#allocation6 + $0x128] sm:$0xff]
    %v4536 = vld [vmem:[#allocation6 + $0x130] sm:$0xff]
    %v4537 = vld [vmem:[#allocation6 + $0x138] sm:$0xff]
    %v4538 = vld [vmem:[#allocation6 + $0x140] sm:$0xff]
    %v4539 = vld [vmem:[#allocation6 + $0x148] sm:$0xff]
    %v4540 = vld [vmem:[#allocation6 + $0x150] sm:$0xff]
    %v4541 = vld [vmem:[#allocation6 + $0x158] sm:$0xff]
    %v4542 = vld [vmem:[#allocation6 + $0x160] sm:$0xff]
    %v4543 = vld [vmem:[#allocation6 + $0x168] sm:$0xff]
    %v4544 = vld [vmem:[#allocation6 + $0x170] sm:$0xff]
    %v4545 = vld [vmem:[#allocation6 + $0x178] sm:$0xff]
    %v4546 = vld [vmem:[#allocation6 + $0x180] sm:$0xff]
    %v4547 = vld [vmem:[#allocation6 + $0x188] sm:$0xff]
    %v4548 = vld [vmem:[#allocation6 + $0x190] sm:$0xff]
    %v4549 = vld [vmem:[#allocation6 + $0x198] sm:$0xff]
    %v4550 = vld [vmem:[#allocation6 + $0x1a0] sm:$0xff]
    %v4551 = vld [vmem:[#allocation6 + $0x1a8] sm:$0xff]
    %v4552 = vld [vmem:[#allocation6 + $0x1b0] sm:$0xff]
    %v4553 = vld [vmem:[#allocation6 + $0x1b8] sm:$0xff]
    %v4554 = vld [vmem:[#allocation6 + $0x1c0] sm:$0xff]
    %v4555 = vld [vmem:[#allocation6 + $0x1c8] sm:$0xff]
    %v4556 = vld [vmem:[#allocation6 + $0x1d0] sm:$0xff]
    %v4557 = vld [vmem:[#allocation6 + $0x1d8] sm:$0xff]
    %v4558 = vld [vmem:[#allocation6 + $0x1e0] sm:$0xff]
    %v4559 = vld [vmem:[#allocation6 + $0x1e8] sm:$0xff]
    %v4560 = vld [vmem:[#allocation6 + $0x1f0] sm:$0xff]
    %v4561 = vld [vmem:[#allocation6 + $0x1f8] sm:$0xff]
    %v4562 = vld [vmem:[#allocation6 + $0x200] sm:$0xff]
    %v4563 = vld [vmem:[#allocation6 + $0x208] sm:$0xff]
    %v4564 = vld [vmem:[#allocation6 + $0x210] sm:$0xff]
    %v4565 = vld [vmem:[#allocation6 + $0x218] sm:$0xff]
    %v4566 = vld [vmem:[#allocation6 + $0x220] sm:$0xff]
    %v4567 = vld [vmem:[#allocation6 + $0x228] sm:$0xff]
    %v4568 = vld [vmem:[#allocation6 + $0x230] sm:$0xff]
    %v4569 = vld [vmem:[#allocation6 + $0x238] sm:$0xff]
    %v4570 = vld [vmem:[#allocation6 + $0x240] sm:$0xff]
    %v4571 = vld [vmem:[#allocation6 + $0x248] sm:$0xff]
    %v4572 = vld [vmem:[#allocation6 + $0x250] sm:$0xff]
    %v4573 = vld [vmem:[#allocation6 + $0x258] sm:$0xff]
    %v4574 = vld [vmem:[#allocation6 + $0x260] sm:$0xff]
    %v4575 = vld [vmem:[#allocation6 + $0x268] sm:$0xff]
    %v4576 = vld [vmem:[#allocation6 + $0x270] sm:$0xff]
    %v4577 = vld [vmem:[#allocation6 + $0x278] sm:$0xff]
    %v4578 = vld [vmem:[#allocation6 + $0x280] sm:$0xff]
    %v4579 = vld [vmem:[#allocation6 + $0x288] sm:$0xff]
    %v4580 = vld [vmem:[#allocation6 + $0x290] sm:$0xff]
    %v4581 = vld [vmem:[#allocation6 + $0x298] sm:$0xff]
    %v4582 = vld [vmem:[#allocation6 + $0x2a0] sm:$0xff]
    %v4583 = vld [vmem:[#allocation6 + $0x2a8] sm:$0xff]
    %v4584 = vld [vmem:[#allocation6 + $0x2b0] sm:$0xff]
    %v4585 = vld [vmem:[#allocation6 + $0x2b8] sm:$0xff]
    %v4586 = vld [vmem:[#allocation6 + $0x2c0] sm:$0xff]
    %v4587 = vld [vmem:[#allocation6 + $0x2c8] sm:$0xff]
    %v4588 = vld [vmem:[#allocation6 + $0x2d0] sm:$0xff]
    %v4589 = vld [vmem:[#allocation6 + $0x2d8] sm:$0xff]
    %v4590 = vld [vmem:[#allocation6 + $0x2e0] sm:$0xff]
    %v4591 = vld [vmem:[#allocation6 + $0x2e8] sm:$0xff]
    %v4592 = vld [vmem:[#allocation6 + $0x2f0] sm:$0xff]
    %v4593 = vld [vmem:[#allocation6 + $0x2f8] sm:$0xff]
    %v4594 = vld [vmem:[#allocation6 + $0x300] sm:$0xff]
    %v4595 = vld [vmem:[#allocation6 + $0x308] sm:$0xff]
    %v4596 = vld [vmem:[#allocation6 + $0x310] sm:$0xff]
    %v4597 = vld [vmem:[#allocation6 + $0x318] sm:$0xff]
    %v4598 = vld [vmem:[#allocation6 + $0x320] sm:$0xff]
    %v4599 = vld [vmem:[#allocation6 + $0x328] sm:$0xff]
    %v4600 = vld [vmem:[#allocation6 + $0x330] sm:$0xff]
    %v4601 = vld [vmem:[#allocation6 + $0x338] sm:$0xff]
    %v4602 = vld [vmem:[#allocation6 + $0x340] sm:$0xff]
    %v4603 = vld [vmem:[#allocation6 + $0x348] sm:$0xff]
    %v4604 = vld [vmem:[#allocation6 + $0x350] sm:$0xff]
    %v4605 = vld [vmem:[#allocation6 + $0x358] sm:$0xff]
    %v4606 = vld [vmem:[#allocation6 + $0x360] sm:$0xff]
    %v4607 = vld [vmem:[#allocation6 + $0x368] sm:$0xff]
    %v4608 = vld [vmem:[#allocation6 + $0x370] sm:$0xff]
    %v4609 = vld [vmem:[#allocation6 + $0x378] sm:$0xff]
    %v4610 = vld [vmem:[#allocation6 + $0x380] sm:$0xff]
    %v4611 = vld [vmem:[#allocation6 + $0x388] sm:$0xff]
    %v4612 = vld [vmem:[#allocation6 + $0x390] sm:$0xff]
    %v4613 = vld [vmem:[#allocation6 + $0x398] sm:$0xff]
    %v4614 = vld [vmem:[#allocation6 + $0x3a0] sm:$0xff]
    %v4615 = vld [vmem:[#allocation6 + $0x3a8] sm:$0xff]
    %v4616 = vld [vmem:[#allocation6 + $0x3b0] sm:$0xff]
    %v4617 = vld [vmem:[#allocation6 + $0x3b8] sm:$0xff]
    %v4618 = vld [vmem:[#allocation6 + $0x3c0] sm:$0xff]
    %v4619 = vld [vmem:[#allocation6 + $0x3c8] sm:$0xff]
    %v4620 = vld [vmem:[#allocation6 + $0x3d0] sm:$0x7f]
    %v4621 = vld [vmem:[#allocation6 + $0x3d8] sm:$0x7f]
    %v4622 = vld [vmem:[%s9] sm:$0xff]
    %v4623 = vld [vmem:[%s10] sm:$0xff]
    %v4624 = vld [vmem:[#allocation7] sm:$0x3]
    %4629 = vrot.lane.b32.xlu0 %v4494, 127
    %v4630 = vpop.permute.xlu0 %4629
    %4631 = vrot.lane.b32.xlu0 %v4495, 127
    %v4632 = vpop.permute.xlu0 %4631
    %4633 = vrot.lane.b32.xlu0 %v4496, 127
    %v4634 = vpop.permute.xlu0 %4633
    %4635 = vrot.lane.b32.xlu0 %v4497, 127
    %v4636 = vpop.permute.xlu0 %4635
    %v4637 = vsel %vm304, %v4630, %v4632
    %v4638 = vsel %vm304, %v4632, %v4634
    %v4639 = vsel %vm304, %v4634, %v4636
    %v4644 = vmax.f32 %v4494, %v4637
    %v4645 = vmax.f32 %v4495, %v4638
    %v4646 = vmax.f32 %v4496, %v4639
    %v4647 = vmax.f32 %v4497, %v4636
    %4652 = vrot.lane.b32.xlu0 %v4644, 112
    %v4653 = vpop.permute.xlu0 %4652
    %4654 = vrot.lane.b32.xlu0 %v4645, 112
    %v4655 = vpop.permute.xlu0 %4654
    %4656 = vrot.lane.b32.xlu0 %v4646, 112
    %v4657 = vpop.permute.xlu0 %4656
    %4658 = vrot.lane.b32.xlu0 %v4647, 112
    %v4659 = vpop.permute.xlu0 %4658
    %v4660 = vsel %vm4279, %v4653, %v4655
    %v4661 = vsel %vm4279, %v4655, %v4657
    %v4662 = vsel %vm4279, %v4657, %v4659
    %v4667 = vmax.f32 %v4644, %v4660
    %v4668 = vmax.f32 %v4645, %v4661
    %v4669 = vmax.f32 %v4646, %v4662
    %v4670 = vmax.f32 %v4647, %v4659
    %v4672 = vsel %vm4389, %v4670, 0
    %vm4674 = vcmask 1046528
    %v4676 = vsel %vm4674, %v4620, 0
    %v4679 = vsel %vm4674, %v4621, 0
    %4681 = vmatpush.msra.mxu0 %v4528
    %4682 = vmatpush.msra.mxu0 %v4526
    %4683 = vmatpush.msra.mxu0 %v4524
    %4684 = vmatpush.msra.mxu0 %v4522
    %4685 = vmatpush.msra.mxu0 %v4520
    %4686 = vmatpush.msra.mxu0 %v4518
    %4687 = vmatpush.msra.mxu0 %v4516
    %4688 = vmatpush.msra.mxu0 %v4514
    %4689 = vmatpush.msra.mxu0 %v4512
    %4690 = vmatpush.msra.mxu0 %v4510
    %4691 = vmatpush.msra.mxu0 %v4508
    %4692 = vmatpush.msra.mxu0 %v4506
    %4693 = vmatpush.msra.mxu0 %v4504
    %4694 = vmatpush.msra.mxu0 %v4502
    %4695 = vmatpush.msra.mxu0 %v4500
    %4696 = vmatpush.msra.mxu0 %v4498
    %4697 = vmatmul.f32.gmra.mxu0 %v4667
    %v4698 = vpop.f32.mrf.mxu0
    %v4699 = vadd.f32 0.0, %v4698
    %4700 = vdwg.mxu0
    %4701 = vmatpush.msra.mxu0 %v4560
    %4702 = vmatpush.msra.mxu0 %v4558
    %4703 = vmatpush.msra.mxu0 %v4556
    %4704 = vmatpush.msra.mxu0 %v4554
    %4705 = vmatpush.msra.mxu0 %v4552
    %4706 = vmatpush.msra.mxu0 %v4550
    %4707 = vmatpush.msra.mxu0 %v4548
    %4708 = vmatpush.msra.mxu0 %v4546
    %4709 = vmatpush.msra.mxu0 %v4544
    %4710 = vmatpush.msra.mxu0 %v4542
    %4711 = vmatpush.msra.mxu0 %v4540
    %4712 = vmatpush.msra.mxu0 %v4538
    %4713 = vmatpush.msra.mxu0 %v4536
    %4714 = vmatpush.msra.mxu0 %v4534
    %4715 = vmatpush.msra.mxu0 %v4532
    %4716 = vmatpush.msra.mxu0 %v4530
    %4717 = vmatmul.f32.gmra.mxu0 %v4668
    %v4718 = vpop.f32.mrf.mxu0
    %v4719 = vadd.f32 %v4699, %v4718
    %4720 = vdwg.mxu0
    %4721 = vmatpush.msra.mxu0 %v4592
    %4722 = vmatpush.msra.mxu0 %v4590
    %4723 = vmatpush.msra.mxu0 %v4588
    %4724 = vmatpush.msra.mxu0 %v4586
    %4725 = vmatpush.msra.mxu0 %v4584
    %4726 = vmatpush.msra.mxu0 %v4582
    %4727 = vmatpush.msra.mxu0 %v4580
    %4728 = vmatpush.msra.mxu0 %v4578
    %4729 = vmatpush.msra.mxu0 %v4576
    %4730 = vmatpush.msra.mxu0 %v4574
    %4731 = vmatpush.msra.mxu0 %v4572
    %4732 = vmatpush.msra.mxu0 %v4570
    %4733 = vmatpush.msra.mxu0 %v4568
    %4734 = vmatpush.msra.mxu0 %v4566
    %4735 = vmatpush.msra.mxu0 %v4564
    %4736 = vmatpush.msra.mxu0 %v4562
    %4737 = vmatmul.f32.gmra.mxu0 %v4669
    %v4738 = vpop.f32.mrf.mxu0
    %v4739 = vadd.f32 %v4719, %v4738
    %4740 = vdwg.mxu0
    %4741 = vmatpush.msra.mxu0 0.0
    %4742 = vmatpush.msra.mxu0 0.0
    %4743 = vmatpush.msra.mxu0 %v4676
    %4744 = vmatpush.msra.mxu0 %v4618
    %4745 = vmatpush.msra.mxu0 %v4616
    %4746 = vmatpush.msra.mxu0 %v4614
    %4747 = vmatpush.msra.mxu0 %v4612
    %4748 = vmatpush.msra.mxu0 %v4610
    %4749 = vmatpush.msra.mxu0 %v4608
    %4750 = vmatpush.msra.mxu0 %v4606
    %4751 = vmatpush.msra.mxu0 %v4604
    %4752 = vmatpush.msra.mxu0 %v4602
    %4753 = vmatpush.msra.mxu0 %v4600
    %4754 = vmatpush.msra.mxu0 %v4598
    %4755 = vmatpush.msra.mxu0 %v4596
    %4756 = vmatpush.msra.mxu0 %v4594
    %4757 = vmatmul.f32.gmra.mxu0 %v4672
    %v4758 = vpop.f32.mrf.mxu0
    %v4759 = vadd.f32 %v4739, %v4758
    %4760 = vdwg.mxu0
    %4761 = vmatpush.msra.mxu0 %v4529
    %4762 = vmatpush.msra.mxu0 %v4527
    %4763 = vmatpush.msra.mxu0 %v4525
    %4764 = vmatpush.msra.mxu0 %v4523
    %4765 = vmatpush.msra.mxu0 %v4521
    %4766 = vmatpush.msra.mxu0 %v4519
    %4767 = vmatpush.msra.mxu0 %v4517
    %4768 = vmatpush.msra.mxu0 %v4515
    %4769 = vmatpush.msra.mxu0 %v4513
    %4770 = vmatpush.msra.mxu0 %v4511
    %4771 = vmatpush.msra.mxu0 %v4509
    %4772 = vmatpush.msra.mxu0 %v4507
    %4773 = vmatpush.msra.mxu0 %v4505
    %4774 = vmatpush.msra.mxu0 %v4503
    %4775 = vmatpush.msra.mxu0 %v4501
    %4776 = vmatpush.msra.mxu0 %v4499
    %4777 = vmatmul.f32.gmra.mxu0 %v4667
    %v4778 = vpop.f32.mrf.mxu0
    %v4779 = vadd.f32 0.0, %v4778
    %4780 = vdwg.mxu0
    %4781 = vmatpush.msra.mxu0 %v4561
    %4782 = vmatpush.msra.mxu0 %v4559
    %4783 = vmatpush.msra.mxu0 %v4557
    %4784 = vmatpush.msra.mxu0 %v4555
    %4785 = vmatpush.msra.mxu0 %v4553
    %4786 = vmatpush.msra.mxu0 %v4551
    %4787 = vmatpush.msra.mxu0 %v4549
    %4788 = vmatpush.msra.mxu0 %v4547
    %4789 = vmatpush.msra.mxu0 %v4545
    %4790 = vmatpush.msra.mxu0 %v4543
    %4791 = vmatpush.msra.mxu0 %v4541
    %4792 = vmatpush.msra.mxu0 %v4539
    %4793 = vmatpush.msra.mxu0 %v4537
    %4794 = vmatpush.msra.mxu0 %v4535
    %4795 = vmatpush.msra.mxu0 %v4533
    %4796 = vmatpush.msra.mxu0 %v4531
    %4797 = vmatmul.f32.gmra.mxu0 %v4668
    %v4798 = vpop.f32.mrf.mxu0
    %v4799 = vadd.f32 %v4779, %v4798
    %4800 = vdwg.mxu0
    %4801 = vmatpush.msra.mxu0 %v4593
    %4802 = vmatpush.msra.mxu0 %v4591
    %4803 = vmatpush.msra.mxu0 %v4589
    %4804 = vmatpush.msra.mxu0 %v4587
    %4805 = vmatpush.msra.mxu0 %v4585
    %4806 = vmatpush.msra.mxu0 %v4583
    %4807 = vmatpush.msra.mxu0 %v4581
    %4808 = vmatpush.msra.mxu0 %v4579
    %4809 = vmatpush.msra.mxu0 %v4577
    %4810 = vmatpush.msra.mxu0 %v4575
    %4811 = vmatpush.msra.mxu0 %v4573
    %4812 = vmatpush.msra.mxu0 %v4571
    %4813 = vmatpush.msra.mxu0 %v4569
    %4814 = vmatpush.msra.mxu0 %v4567
    %4815 = vmatpush.msra.mxu0 %v4565
    %4816 = vmatpush.msra.mxu0 %v4563
    %4817 = vmatmul.f32.gmra.mxu0 %v4669
    %v4818 = vpop.f32.mrf.mxu0
    %v4819 = vadd.f32 %v4799, %v4818
    %4820 = vdwg.mxu0
    %4821 = vmatpush.msra.mxu0 0.0
    %4822 = vmatpush.msra.mxu0 0.0
    %4823 = vmatpush.msra.mxu0 %v4679
    %4824 = vmatpush.msra.mxu0 %v4619
    %4825 = vmatpush.msra.mxu0 %v4617
    %4826 = vmatpush.msra.mxu0 %v4615
    %4827 = vmatpush.msra.mxu0 %v4613
    %4828 = vmatpush.msra.mxu0 %v4611
    %4829 = vmatpush.msra.mxu0 %v4609
    %4830 = vmatpush.msra.mxu0 %v4607
    %4831 = vmatpush.msra.mxu0 %v4605
    %4832 = vmatpush.msra.mxu0 %v4603
    %4833 = vmatpush.msra.mxu0 %v4601
    %4834 = vmatpush.msra.mxu0 %v4599
    %4835 = vmatpush.msra.mxu0 %v4597
    %4836 = vmatpush.msra.mxu0 %v4595
    %4837 = vmatmul.f32.gmra.mxu0 %v4672
    %v4838 = vpop.f32.mrf.mxu0
    %v4839 = vadd.f32 %v4819, %v4838
    %4840 = vdwg.mxu0
    %vm4841 = vcmask 277504
    %v4842 = vsel %vm4841, %v4839, 0.0
    %v4843 = vadd.f32 %v4759, %v4842
    %4844 = vadd.xlane.f32.xlu0 %v4843
    %v4845 = vpop.xlane.xlu0 %4844
    %v4846 = vmul.f32 %v4845, 0.010204081
    %v4847 = vmul.f32 %v4759, %v4759
    %v4848 = vmul.f32 %v4839, %v4839
    %v4849 = vsel %vm4841, %v4848, 0.0
    %v4850 = vadd.f32 %v4847, %v4849
    %4851 = vadd.xlane.f32.xlu0 %v4850
    %v4852 = vpop.xlane.xlu0 %4851
    %v4853 = vmul.f32 %v4852, 0.010204081
    %v4854 = vmul.f32 %v4846, %v4846
    %v4855 = vsub.f32 %v4853, %v4854
    %v4856 = vmax.f32 %v4855, 0.0
    %v4857 = vadd.f32 %v4856, 1e-05
    %v4858 = vrsqrt.pop %v4857
    %v4859 = vmul.f32 %v4858, %v4857
    %v4860 = vmul.f32 %v4859, %v4858
    %v4861 = vmul.f32 0.5, %v4860
    %v4862 = vsub.f32 1.5, %v4861
    %v4863 = vmul.f32 %v4858, %v4862
    %vm4864 = vweird.f32 %v4857
    %vm4865 = vweird.f32 %v4858
    %vm4866 = vmor %vm4864, %vm4865
    %v4867 = vsel %vm4866, %v4858, %v4863
    %v4868 = vsub.f32 %v4759, %v4846
    %v4869 = vsub.f32 %v4839, %v4846
    %v4870 = vmul.f32 %v4868, %v4867
    %v4871 = vmul.f32 %v4869, %v4867
    %4873 = vset.pattern.permute.xlu0 0
    %4874 = vperm.xlu0 %4873, %v4622
    %v4875 = vpop.permute.xlu0 %4874
    %v4877 = vmul.f32 %v4870, %v4875
    %v4878 = vmul.f32 %v4871, %v4875
    %4880 = vset.pattern.permute.xlu0 0
    %4881 = vperm.xlu0 %4880, %v4623
    %v4882 = vpop.permute.xlu0 %4881
    %v4884 = vadd.f32 %v4877, %v4882
    %v4885 = vadd.f32 %v4878, %v4882
    %v4886 = vmax.f32 %v4884, 0.0
    %v4887 = vmax.f32 %v4885, 0.0
    %v4889 = vperm.slane %v4624, 0
    %v4890 = vperm.slane %v4624, 1
    %v4893 = vmul.f32 %v4886, %v4889
    %v4894 = vmul.f32 %v4887, %v4890
    %v4895 = vld [vmem:[%s13] sm:$0xff]
    %v4896 = vld [vmem:[%s13 + $0x8] sm:$0xff]
    %v4897 = vld [vmem:[%s13 + $0x10] sm:$0xff]
    %v4898 = vld [vmem:[%s13 + $0x18] sm:$0xff]
    %v4899 = vld [vmem:[%s13 + $0x20] sm:$0xff]
    %v4900 = vld [vmem:[%s13 + $0x28] sm:$0xff]
    %v4901 = vld [vmem:[%s13 + $0x30] sm:$0xff]
    %v4902 = vld [vmem:[%s13 + $0x38] sm:$0xff]
    %v4903 = vld [vmem:[%s13 + $0x40] sm:$0xff]
    %v4904 = vld [vmem:[%s13 + $0x48] sm:$0xff]
    %v4905 = vld [vmem:[%s13 + $0x50] sm:$0xff]
    %v4906 = vld [vmem:[%s13 + $0x58] sm:$0xff]
    %v4907 = vld [vmem:[%s13 + $0x60] sm:$0xff]
    %v4908 = vld [vmem:[%s13 + $0x68] sm:$0xff]
    %v4909 = vld [vmem:[%s13 + $0x70] sm:$0xff]
    %v4910 = vld [vmem:[%s13 + $0x78] sm:$0xff]
    %v4911 = vld [vmem:[%s13 + $0x80] sm:$0xff]
    %v4912 = vld [vmem:[%s13 + $0x88] sm:$0xff]
    %v4913 = vld [vmem:[%s14] sm:$0xff]
    %v4914 = vld [vmem:[%s14 + $0x8] sm:$0xff]
    %v4915 = vsel %vm4841, %v4894, 0.0
    %4918 = vrot.lane.b32.xlu0 0.0, 9
    %v4919 = vpop.permute.xlu0 %4918
    %4920 = vrot.lane.b32.xlu0 %v4893, 9
    %v4921 = vpop.permute.xlu0 %4920
    %4922 = vrot.lane.b32.xlu0 %v4915, 9
    %v4923 = vpop.permute.xlu0 %4922
    %vm4924 = vcmask 72704
    %v4925 = vsel %vm4924, %v4919, %v4921
    %v4926 = vsel %vm4924, %v4921, %v4923
    %v4930 = vsel %vm202, %v4897, 0
    %v4933 = vsel %vm202, %v4898, 0
    %4935 = vmatpush.msra.mxu0 0.0
    %4936 = vmatpush.msra.mxu0 0.0
    %4937 = vmatpush.msra.mxu0 0.0
    %4938 = vmatpush.msra.mxu0 0.0
    %4939 = vmatpush.msra.mxu0 0.0
    %4940 = vmatpush.msra.mxu0 0.0
    %4941 = vmatpush.msra.mxu0 0.0
    %4942 = vmatpush.msra.mxu0 0.0
    %4943 = vmatpush.msra.mxu0 0.0
    %4944 = vmatpush.msra.mxu0 0.0
    %4945 = vmatpush.msra.mxu0 0.0
    %4946 = vmatpush.msra.mxu0 0.0
    %4947 = vmatpush.msra.mxu0 0.0
    %4948 = vmatpush.msra.mxu0 0.0
    %4949 = vmatpush.msra.mxu0 0.0
    %4950 = vmatpush.msra.mxu0 %v4925
    %4951 = vmatmul.f32.gmra.mxu0 %v4930
    %v4952 = vpop.f32.mrf.mxu0
    %v4953 = vadd.f32 0.0, %v4952
    %4954 = vmatmul.f32.gmra.mxu0 %v4933
    %v4955 = vpop.f32.mrf.mxu0
    %v4956 = vadd.f32 0.0, %v4955
    %4957 = vdwg.mxu0
    %4958 = vmatpush.msra.mxu0 0.0
    %4959 = vmatpush.msra.mxu0 0.0
    %4960 = vmatpush.msra.mxu0 0.0
    %4961 = vmatpush.msra.mxu0 0.0
    %4962 = vmatpush.msra.mxu0 0.0
    %4963 = vmatpush.msra.mxu0 0.0
    %4964 = vmatpush.msra.mxu0 0.0
    %4965 = vmatpush.msra.mxu0 0.0
    %4966 = vmatpush.msra.mxu0 0.0
    %4967 = vmatpush.msra.mxu0 0.0
    %4968 = vmatpush.msra.mxu0 0.0
    %4969 = vmatpush.msra.mxu0 0.0
    %4970 = vmatpush.msra.mxu0 0.0
    %4971 = vmatpush.msra.mxu0 0.0
    %4972 = vmatpush.msra.mxu0 0.0
    %4973 = vmatpush.msra.mxu0 %v4926
    %4974 = vmatmul.f32.gmra.mxu0 %v4930
    %v4975 = vpop.f32.mrf.mxu0
    %v4976 = vadd.f32 0.0, %v4975
    %4977 = vmatmul.f32.gmra.mxu0 %v4933
    %v4978 = vpop.f32.mrf.mxu0
    %v4979 = vadd.f32 0.0, %v4978
    %4980 = vdwg.mxu0
    %4981 = vrot.lane.b32.xlu0 0.0, 10
    %v4982 = vpop.permute.xlu0 %4981
    %4983 = vrot.lane.b32.xlu0 %v4893, 10
    %v4984 = vpop.permute.xlu0 %4983
    %4985 = vrot.lane.b32.xlu0 %v4915, 10
    %v4986 = vpop.permute.xlu0 %4985
    %vm4987 = vcmask 80896
    %v4988 = vsel %vm4987, %v4982, %v4984
    %v4989 = vsel %vm4987, %v4984, %v4986
    %v4993 = vsel %vm202, %v4895, 0
    %v4996 = vsel %vm202, %v4896, 0
    %4998 = vmatpush.msra.mxu0 0.0
    %4999 = vmatpush.msra.mxu0 0.0
    %5000 = vmatpush.msra.mxu0 0.0
    %5001 = vmatpush.msra.mxu0 0.0
    %5002 = vmatpush.msra.mxu0 0.0
    %5003 = vmatpush.msra.mxu0 0.0
    %5004 = vmatpush.msra.mxu0 0.0
    %5005 = vmatpush.msra.mxu0 0.0
    %5006 = vmatpush.msra.mxu0 0.0
    %5007 = vmatpush.msra.mxu0 0.0
    %5008 = vmatpush.msra.mxu0 0.0
    %5009 = vmatpush.msra.mxu0 0.0
    %5010 = vmatpush.msra.mxu0 0.0
    %5011 = vmatpush.msra.mxu0 0.0
    %5012 = vmatpush.msra.mxu0 0.0
    %5013 = vmatpush.msra.mxu0 %v4988
    %5014 = vmatmul.f32.gmra.mxu0 %v4993
    %v5015 = vpop.f32.mrf.mxu0
    %v5016 = vadd.f32 %v4953, %v5015
    %5017 = vmatmul.f32.gmra.mxu0 %v4996
    %v5018 = vpop.f32.mrf.mxu0
    %v5019 = vadd.f32 %v4956, %v5018
    %5020 = vdwg.mxu0
    %5021 = vmatpush.msra.mxu0 0.0
    %5022 = vmatpush.msra.mxu0 0.0
    %5023 = vmatpush.msra.mxu0 0.0
    %5024 = vmatpush.msra.mxu0 0.0
    %5025 = vmatpush.msra.mxu0 0.0
    %5026 = vmatpush.msra.mxu0 0.0
    %5027 = vmatpush.msra.mxu0 0.0
    %5028 = vmatpush.msra.mxu0 0.0
    %5029 = vmatpush.msra.mxu0 0.0
    %5030 = vmatpush.msra.mxu0 0.0
    %5031 = vmatpush.msra.mxu0 0.0
    %5032 = vmatpush.msra.mxu0 0.0
    %5033 = vmatpush.msra.mxu0 0.0
    %5034 = vmatpush.msra.mxu0 0.0
    %5035 = vmatpush.msra.mxu0 0.0
    %5036 = vmatpush.msra.mxu0 %v4989
    %5037 = vmatmul.f32.gmra.mxu0 %v4993
    %v5038 = vpop.f32.mrf.mxu0
    %v5039 = vadd.f32 %v4976, %v5038
    %5040 = vmatmul.f32.gmra.mxu0 %v4996
    %v5041 = vpop.f32.mrf.mxu0
    %v5042 = vadd.f32 %v4979, %v5041
    %5043 = vdwg.mxu0
    %5044 = vrot.lane.b32.xlu0 0.0, 8
    %v5045 = vpop.permute.xlu0 %5044
    %5046 = vrot.lane.b32.xlu0 %v4893, 8
    %v5047 = vpop.permute.xlu0 %5046
    %5048 = vrot.lane.b32.xlu0 %v4915, 8
    %v5049 = vpop.permute.xlu0 %5048
    %v5050 = vsel %vm202, %v5045, %v5047
    %v5051 = vsel %vm202, %v5047, %v5049
    %v5055 = vsel %vm202, %v4899, 0
    %v5058 = vsel %vm202, %v4900, 0
    %5060 = vmatpush.msra.mxu0 0.0
    %5061 = vmatpush.msra.mxu0 0.0
    %5062 = vmatpush.msra.mxu0 0.0
    %5063 = vmatpush.msra.mxu0 0.0
    %5064 = vmatpush.msra.mxu0 0.0
    %5065 = vmatpush.msra.mxu0 0.0
    %5066 = vmatpush.msra.mxu0 0.0
    %5067 = vmatpush.msra.mxu0 0.0
    %5068 = vmatpush.msra.mxu0 0.0
    %5069 = vmatpush.msra.mxu0 0.0
    %5070 = vmatpush.msra.mxu0 0.0
    %5071 = vmatpush.msra.mxu0 0.0
    %5072 = vmatpush.msra.mxu0 0.0
    %5073 = vmatpush.msra.mxu0 0.0
    %5074 = vmatpush.msra.mxu0 0.0
    %5075 = vmatpush.msra.mxu0 %v5050
    %5076 = vmatmul.f32.gmra.mxu0 %v5055
    %v5077 = vpop.f32.mrf.mxu0
    %v5078 = vadd.f32 0.0, %v5077
    %5079 = vmatmul.f32.gmra.mxu0 %v5058
    %v5080 = vpop.f32.mrf.mxu0
    %v5081 = vadd.f32 0.0, %v5080
    %5082 = vdwg.mxu0
    %5083 = vmatpush.msra.mxu0 0.0
    %5084 = vmatpush.msra.mxu0 0.0
    %5085 = vmatpush.msra.mxu0 0.0
    %5086 = vmatpush.msra.mxu0 0.0
    %5087 = vmatpush.msra.mxu0 0.0
    %5088 = vmatpush.msra.mxu0 0.0
    %5089 = vmatpush.msra.mxu0 0.0
    %5090 = vmatpush.msra.mxu0 0.0
    %5091 = vmatpush.msra.mxu0 0.0
    %5092 = vmatpush.msra.mxu0 0.0
    %5093 = vmatpush.msra.mxu0 0.0
    %5094 = vmatpush.msra.mxu0 0.0
    %5095 = vmatpush.msra.mxu0 0.0
    %5096 = vmatpush.msra.mxu0 0.0
    %5097 = vmatpush.msra.mxu0 0.0
    %5098 = vmatpush.msra.mxu0 %v5051
    %5099 = vmatmul.f32.gmra.mxu0 %v5055
    %v5100 = vpop.f32.mrf.mxu0
    %v5101 = vadd.f32 0.0, %v5100
    %5102 = vmatmul.f32.gmra.mxu0 %v5058
    %v5103 = vpop.f32.mrf.mxu0
    %v5104 = vadd.f32 0.0, %v5103
    %5105 = vdwg.mxu0
    %v5106 = vadd.f32 %v5016, %v5078
    %v5107 = vadd.f32 %v5039, %v5101
    %v5108 = vadd.f32 %v5019, %v5081
    %v5109 = vadd.f32 %v5042, %v5104
    %5110 = vrot.lane.b32.xlu0 %v4893, 1
    %v5111 = vpop.permute.xlu0 %5110
    %5112 = vrot.lane.b32.xlu0 %v4915, 1
    %v5113 = vpop.permute.xlu0 %5112
    %v5114 = vsel %vm3855, %v3846, %v5111
    %v5115 = vsel %vm3855, %v5111, %v5113
    %v5119 = vsel %vm202, %v4901, 0
    %v5122 = vsel %vm202, %v4902, 0
    %5124 = vmatpush.msra.mxu0 0.0
    %5125 = vmatpush.msra.mxu0 0.0
    %5126 = vmatpush.msra.mxu0 0.0
    %5127 = vmatpush.msra.mxu0 0.0
    %5128 = vmatpush.msra.mxu0 0.0
    %5129 = vmatpush.msra.mxu0 0.0
    %5130 = vmatpush.msra.mxu0 0.0
    %5131 = vmatpush.msra.mxu0 0.0
    %5132 = vmatpush.msra.mxu0 0.0
    %5133 = vmatpush.msra.mxu0 0.0
    %5134 = vmatpush.msra.mxu0 0.0
    %5135 = vmatpush.msra.mxu0 0.0
    %5136 = vmatpush.msra.mxu0 0.0
    %5137 = vmatpush.msra.mxu0 0.0
    %5138 = vmatpush.msra.mxu0 0.0
    %5139 = vmatpush.msra.mxu0 %v5114
    %5140 = vmatmul.f32.gmra.mxu0 %v5119
    %v5141 = vpop.f32.mrf.mxu0
    %v5142 = vadd.f32 0.0, %v5141
    %5143 = vmatmul.f32.gmra.mxu0 %v5122
    %v5144 = vpop.f32.mrf.mxu0
    %v5145 = vadd.f32 0.0, %v5144
    %5146 = vdwg.mxu0
    %5147 = vmatpush.msra.mxu0 0.0
    %5148 = vmatpush.msra.mxu0 0.0
    %5149 = vmatpush.msra.mxu0 0.0
    %5150 = vmatpush.msra.mxu0 0.0
    %5151 = vmatpush.msra.mxu0 0.0
    %5152 = vmatpush.msra.mxu0 0.0
    %5153 = vmatpush.msra.mxu0 0.0
    %5154 = vmatpush.msra.mxu0 0.0
    %5155 = vmatpush.msra.mxu0 0.0
    %5156 = vmatpush.msra.mxu0 0.0
    %5157 = vmatpush.msra.mxu0 0.0
    %5158 = vmatpush.msra.mxu0 0.0
    %5159 = vmatpush.msra.mxu0 0.0
    %5160 = vmatpush.msra.mxu0 0.0
    %5161 = vmatpush.msra.mxu0 0.0
    %5162 = vmatpush.msra.mxu0 %v5115
    %5163 = vmatmul.f32.gmra.mxu0 %v5119
    %v5164 = vpop.f32.mrf.mxu0
    %v5165 = vadd.f32 0.0, %v5164
    %5166 = vmatmul.f32.gmra.mxu0 %v5122
    %v5167 = vpop.f32.mrf.mxu0
    %v5168 = vadd.f32 0.0, %v5167
    %5169 = vdwg.mxu0
    %v5170 = vadd.f32 %v5106, %v5142
    %v5171 = vadd.f32 %v5107, %v5165
    %v5172 = vadd.f32 %v5108, %v5145
    %v5173 = vadd.f32 %v5109, %v5168
    %v5175 = vsel %vm202, %v4903, 0
    %v5178 = vsel %vm202, %v4904, 0
    %5180 = vmatpush.msra.mxu0 0.0
    %5181 = vmatpush.msra.mxu0 0.0
    %5182 = vmatpush.msra.mxu0 0.0
    %5183 = vmatpush.msra.mxu0 0.0
    %5184 = vmatpush.msra.mxu0 0.0
    %5185 = vmatpush.msra.mxu0 0.0
    %5186 = vmatpush.msra.mxu0 0.0
    %5187 = vmatpush.msra.mxu0 0.0
    %5188 = vmatpush.msra.mxu0 0.0
    %5189 = vmatpush.msra.mxu0 0.0
    %5190 = vmatpush.msra.mxu0 0.0
    %5191 = vmatpush.msra.mxu0 0.0
    %5192 = vmatpush.msra.mxu0 0.0
    %5193 = vmatpush.msra.mxu0 0.0
    %5194 = vmatpush.msra.mxu0 0.0
    %5195 = vmatpush.msra.mxu0 %v4893
    %5196 = vmatmul.f32.gmra.mxu0 %v5175
    %v5197 = vpop.f32.mrf.mxu0
    %v5198 = vadd.f32 0.0, %v5197
    %5199 = vmatmul.f32.gmra.mxu0 %v5178
    %v5200 = vpop.f32.mrf.mxu0
    %v5201 = vadd.f32 0.0, %v5200
    %5202 = vdwg.mxu0
    %5203 = vmatpush.msra.mxu0 0.0
    %5204 = vmatpush.msra.mxu0 0.0
    %5205 = vmatpush.msra.mxu0 0.0
    %5206 = vmatpush.msra.mxu0 0.0
    %5207 = vmatpush.msra.mxu0 0.0
    %5208 = vmatpush.msra.mxu0 0.0
    %5209 = vmatpush.msra.mxu0 0.0
    %5210 = vmatpush.msra.mxu0 0.0
    %5211 = vmatpush.msra.mxu0 0.0
    %5212 = vmatpush.msra.mxu0 0.0
    %5213 = vmatpush.msra.mxu0 0.0
    %5214 = vmatpush.msra.mxu0 0.0
    %5215 = vmatpush.msra.mxu0 0.0
    %5216 = vmatpush.msra.mxu0 0.0
    %5217 = vmatpush.msra.mxu0 0.0
    %5218 = vmatpush.msra.mxu0 %v4915
    %5219 = vmatmul.f32.gmra.mxu0 %v5175
    %v5220 = vpop.f32.mrf.mxu0
    %v5221 = vadd.f32 0.0, %v5220
    %5222 = vmatmul.f32.gmra.mxu0 %v5178
    %v5223 = vpop.f32.mrf.mxu0
    %v5224 = vadd.f32 0.0, %v5223
    %5225 = vdwg.mxu0
    %v5226 = vadd.f32 %v5170, %v5198
    %v5227 = vadd.f32 %v5171, %v5221
    %v5228 = vadd.f32 %v5172, %v5201
    %v5229 = vadd.f32 %v5173, %v5224
    %5230 = vrot.lane.b32.xlu0 %v4893, 127
    %v5231 = vpop.permute.xlu0 %5230
    %5232 = vrot.lane.b32.xlu0 %v4915, 127
    %v5233 = vpop.permute.xlu0 %5232
    %v5234 = vsel %vm304, %v5231, %v5233
    %v5238 = vsel %vm202, %v4905, 0
    %v5241 = vsel %vm202, %v4906, 0
    %5243 = vmatpush.msra.mxu0 0.0
    %5244 = vmatpush.msra.mxu0 0.0
    %5245 = vmatpush.msra.mxu0 0.0
    %5246 = vmatpush.msra.mxu0 0.0
    %5247 = vmatpush.msra.mxu0 0.0
    %5248 = vmatpush.msra.mxu0 0.0
    %5249 = vmatpush.msra.mxu0 0.0
    %5250 = vmatpush.msra.mxu0 0.0
    %5251 = vmatpush.msra.mxu0 0.0
    %5252 = vmatpush.msra.mxu0 0.0
    %5253 = vmatpush.msra.mxu0 0.0
    %5254 = vmatpush.msra.mxu0 0.0
    %5255 = vmatpush.msra.mxu0 0.0
    %5256 = vmatpush.msra.mxu0 0.0
    %5257 = vmatpush.msra.mxu0 0.0
    %5258 = vmatpush.msra.mxu0 %v5234
    %5259 = vmatmul.f32.gmra.mxu0 %v5238
    %v5260 = vpop.f32.mrf.mxu0
    %v5261 = vadd.f32 0.0, %v5260
    %5262 = vmatmul.f32.gmra.mxu0 %v5241
    %v5263 = vpop.f32.mrf.mxu0
    %v5264 = vadd.f32 0.0, %v5263
    %5265 = vdwg.mxu0
    %5266 = vmatpush.msra.mxu0 0.0
    %5267 = vmatpush.msra.mxu0 0.0
    %5268 = vmatpush.msra.mxu0 0.0
    %5269 = vmatpush.msra.mxu0 0.0
    %5270 = vmatpush.msra.mxu0 0.0
    %5271 = vmatpush.msra.mxu0 0.0
    %5272 = vmatpush.msra.mxu0 0.0
    %5273 = vmatpush.msra.mxu0 0.0
    %5274 = vmatpush.msra.mxu0 0.0
    %5275 = vmatpush.msra.mxu0 0.0
    %5276 = vmatpush.msra.mxu0 0.0
    %5277 = vmatpush.msra.mxu0 0.0
    %5278 = vmatpush.msra.mxu0 0.0
    %5279 = vmatpush.msra.mxu0 0.0
    %5280 = vmatpush.msra.mxu0 0.0
    %5281 = vmatpush.msra.mxu0 %v5233
    %5282 = vmatmul.f32.gmra.mxu0 %v5238
    %v5283 = vpop.f32.mrf.mxu0
    %v5284 = vadd.f32 0.0, %v5283
    %5285 = vmatmul.f32.gmra.mxu0 %v5241
    %v5286 = vpop.f32.mrf.mxu0
    %v5287 = vadd.f32 0.0, %v5286
    %5288 = vdwg.mxu0
    %v5289 = vadd.f32 %v5226, %v5261
    %v5290 = vadd.f32 %v5227, %v5284
    %v5291 = vadd.f32 %v5228, %v5264
    %v5292 = vadd.f32 %v5229, %v5287
    %5293 = vrot.lane.b32.xlu0 %v4893, 120
    %v5294 = vpop.permute.xlu0 %5293
    %5295 = vrot.lane.b32.xlu0 %v4915, 120
    %v5296 = vpop.permute.xlu0 %5295
    %vm5297 = vcmask 982016
    %v5298 = vsel %vm5297, %v5294, %v5296
    %v5302 = vsel %vm202, %v4907, 0
    %v5305 = vsel %vm202, %v4908, 0
    %5307 = vmatpush.msra.mxu0 0.0
    %5308 = vmatpush.msra.mxu0 0.0
    %5309 = vmatpush.msra.mxu0 0.0
    %5310 = vmatpush.msra.mxu0 0.0
    %5311 = vmatpush.msra.mxu0 0.0
    %5312 = vmatpush.msra.mxu0 0.0
    %5313 = vmatpush.msra.mxu0 0.0
    %5314 = vmatpush.msra.mxu0 0.0
    %5315 = vmatpush.msra.mxu0 0.0
    %5316 = vmatpush.msra.mxu0 0.0
    %5317 = vmatpush.msra.mxu0 0.0
    %5318 = vmatpush.msra.mxu0 0.0
    %5319 = vmatpush.msra.mxu0 0.0
    %5320 = vmatpush.msra.mxu0 0.0
    %5321 = vmatpush.msra.mxu0 0.0
    %5322 = vmatpush.msra.mxu0 %v5298
    %5323 = vmatmul.f32.gmra.mxu0 %v5302
    %v5324 = vpop.f32.mrf.mxu0
    %v5325 = vadd.f32 0.0, %v5324
    %5326 = vmatmul.f32.gmra.mxu0 %v5305
    %v5327 = vpop.f32.mrf.mxu0
    %v5328 = vadd.f32 0.0, %v5327
    %5329 = vdwg.mxu0
    %5330 = vmatpush.msra.mxu0 0.0
    %5331 = vmatpush.msra.mxu0 0.0
    %5332 = vmatpush.msra.mxu0 0.0
    %5333 = vmatpush.msra.mxu0 0.0
    %5334 = vmatpush.msra.mxu0 0.0
    %5335 = vmatpush.msra.mxu0 0.0
    %5336 = vmatpush.msra.mxu0 0.0
    %5337 = vmatpush.msra.mxu0 0.0
    %5338 = vmatpush.msra.mxu0 0.0
    %5339 = vmatpush.msra.mxu0 0.0
    %5340 = vmatpush.msra.mxu0 0.0
    %5341 = vmatpush.msra.mxu0 0.0
    %5342 = vmatpush.msra.mxu0 0.0
    %5343 = vmatpush.msra.mxu0 0.0
    %5344 = vmatpush.msra.mxu0 0.0
    %5345 = vmatpush.msra.mxu0 %v5296
    %5346 = vmatmul.f32.gmra.mxu0 %v5302
    %v5347 = vpop.f32.mrf.mxu0
    %v5348 = vadd.f32 0.0, %v5347
    %5349 = vmatmul.f32.gmra.mxu0 %v5305
    %v5350 = vpop.f32.mrf.mxu0
    %v5351 = vadd.f32 0.0, %v5350
    %5352 = vdwg.mxu0
    %v5353 = vadd.f32 %v5289, %v5325
    %v5354 = vadd.f32 %v5290, %v5348
    %v5355 = vadd.f32 %v5291, %v5328
    %v5356 = vadd.f32 %v5292, %v5351
    %5357 = vrot.lane.b32.xlu0 %v4893, 119
    %v5358 = vpop.permute.xlu0 %5357
    %5359 = vrot.lane.b32.xlu0 %v4915, 119
    %v5360 = vpop.permute.xlu0 %5359
    %vm5361 = vcmask 973824
    %v5362 = vsel %vm5361, %v5358, %v5360
    %v5366 = vsel %vm202, %v4909, 0
    %v5369 = vsel %vm202, %v4910, 0
    %5371 = vmatpush.msra.mxu0 0.0
    %5372 = vmatpush.msra.mxu0 0.0
    %5373 = vmatpush.msra.mxu0 0.0
    %5374 = vmatpush.msra.mxu0 0.0
    %5375 = vmatpush.msra.mxu0 0.0
    %5376 = vmatpush.msra.mxu0 0.0
    %5377 = vmatpush.msra.mxu0 0.0
    %5378 = vmatpush.msra.mxu0 0.0
    %5379 = vmatpush.msra.mxu0 0.0
    %5380 = vmatpush.msra.mxu0 0.0
    %5381 = vmatpush.msra.mxu0 0.0
    %5382 = vmatpush.msra.mxu0 0.0
    %5383 = vmatpush.msra.mxu0 0.0
    %5384 = vmatpush.msra.mxu0 0.0
    %5385 = vmatpush.msra.mxu0 0.0
    %5386 = vmatpush.msra.mxu0 %v5362
    %5387 = vmatmul.f32.gmra.mxu0 %v5366
    %v5388 = vpop.f32.mrf.mxu0
    %v5389 = vadd.f32 0.0, %v5388
    %5390 = vmatmul.f32.gmra.mxu0 %v5369
    %v5391 = vpop.f32.mrf.mxu0
    %v5392 = vadd.f32 0.0, %v5391
    %5393 = vdwg.mxu0
    %5394 = vmatpush.msra.mxu0 0.0
    %5395 = vmatpush.msra.mxu0 0.0
    %5396 = vmatpush.msra.mxu0 0.0
    %5397 = vmatpush.msra.mxu0 0.0
    %5398 = vmatpush.msra.mxu0 0.0
    %5399 = vmatpush.msra.mxu0 0.0
    %5400 = vmatpush.msra.mxu0 0.0
    %5401 = vmatpush.msra.mxu0 0.0
    %5402 = vmatpush.msra.mxu0 0.0
    %5403 = vmatpush.msra.mxu0 0.0
    %5404 = vmatpush.msra.mxu0 0.0
    %5405 = vmatpush.msra.mxu0 0.0
    %5406 = vmatpush.msra.mxu0 0.0
    %5407 = vmatpush.msra.mxu0 0.0
    %5408 = vmatpush.msra.mxu0 0.0
    %5409 = vmatpush.msra.mxu0 %v5360
    %5410 = vmatmul.f32.gmra.mxu0 %v5366
    %v5411 = vpop.f32.mrf.mxu0
    %v5412 = vadd.f32 0.0, %v5411
    %5413 = vmatmul.f32.gmra.mxu0 %v5369
    %v5414 = vpop.f32.mrf.mxu0
    %v5415 = vadd.f32 0.0, %v5414
    %5416 = vdwg.mxu0
    %v5417 = vadd.f32 %v5353, %v5389
    %v5418 = vadd.f32 %v5354, %v5412
    %v5419 = vadd.f32 %v5355, %v5392
    %v5420 = vadd.f32 %v5356, %v5415
    %5421 = vrot.lane.b32.xlu0 %v4893, 118
    %v5422 = vpop.permute.xlu0 %5421
    %5423 = vrot.lane.b32.xlu0 %v4915, 118
    %v5424 = vpop.permute.xlu0 %5423
    %vm5425 = vcmask 965632
    %v5426 = vsel %vm5425, %v5422, %v5424
    %v5430 = vsel %vm202, %v4911, 0
    %v5433 = vsel %vm202, %v4912, 0
    %5435 = vmatpush.msra.mxu0 0.0
    %5436 = vmatpush.msra.mxu0 0.0
    %5437 = vmatpush.msra.mxu0 0.0
    %5438 = vmatpush.msra.mxu0 0.0
    %5439 = vmatpush.msra.mxu0 0.0
    %5440 = vmatpush.msra.mxu0 0.0
    %5441 = vmatpush.msra.mxu0 0.0
    %5442 = vmatpush.msra.mxu0 0.0
    %5443 = vmatpush.msra.mxu0 0.0
    %5444 = vmatpush.msra.mxu0 0.0
    %5445 = vmatpush.msra.mxu0 0.0
    %5446 = vmatpush.msra.mxu0 0.0
    %5447 = vmatpush.msra.mxu0 0.0
    %5448 = vmatpush.msra.mxu0 0.0
    %5449 = vmatpush.msra.mxu0 0.0
    %5450 = vmatpush.msra.mxu0 %v5426
    %5451 = vmatmul.f32.gmra.mxu0 %v5430
    %v5452 = vpop.f32.mrf.mxu0
    %v5453 = vadd.f32 0.0, %v5452
    %5454 = vmatmul.f32.gmra.mxu0 %v5433
    %v5455 = vpop.f32.mrf.mxu0
    %v5456 = vadd.f32 0.0, %v5455
    %5457 = vdwg.mxu0
    %5458 = vmatpush.msra.mxu0 0.0
    %5459 = vmatpush.msra.mxu0 0.0
    %5460 = vmatpush.msra.mxu0 0.0
    %5461 = vmatpush.msra.mxu0 0.0
    %5462 = vmatpush.msra.mxu0 0.0
    %5463 = vmatpush.msra.mxu0 0.0
    %5464 = vmatpush.msra.mxu0 0.0
    %5465 = vmatpush.msra.mxu0 0.0
    %5466 = vmatpush.msra.mxu0 0.0
    %5467 = vmatpush.msra.mxu0 0.0
    %5468 = vmatpush.msra.mxu0 0.0
    %5469 = vmatpush.msra.mxu0 0.0
    %5470 = vmatpush.msra.mxu0 0.0
    %5471 = vmatpush.msra.mxu0 0.0
    %5472 = vmatpush.msra.mxu0 0.0
    %5473 = vmatpush.msra.mxu0 %v5424
    %5474 = vmatmul.f32.gmra.mxu0 %v5430
    %v5475 = vpop.f32.mrf.mxu0
    %v5476 = vadd.f32 0.0, %v5475
    %5477 = vmatmul.f32.gmra.mxu0 %v5433
    %v5478 = vpop.f32.mrf.mxu0
    %v5479 = vadd.f32 0.0, %v5478
    %5480 = vdwg.mxu0
    %v5481 = vadd.f32 %v5417, %v5453
    %v5482 = vadd.f32 %v5418, %v5476
    %v5483 = vadd.f32 %v5419, %v5456
    %v5484 = vadd.f32 %v5420, %v5479
    %5486 = vset.pattern.permute.xlu0 0
    %5487 = vperm.xlu0 %5486, %v4913
    %v5488 = vpop.permute.xlu0 %5487
    %5491 = vset.pattern.permute.xlu0 0
    %5492 = vperm.xlu0 %5491, %v4914
    %v5493 = vpop.permute.xlu0 %5492
    %v5495 = vadd.f32 %v5481, %v5488
    %v5496 = vadd.f32 %v5482, %v5488
    %v5497 = vadd.f32 %v5483, %v5493
    %v5498 = vadd.f32 %v5484, %v5493
    %v5499 = vld [vmem:[#allocation9] sm:$0xff]
    %v5500 = vld [vmem:[#allocation9 + $0x8] sm:$0xff]
    %v5501 = vld [vmem:[#allocation9 + $0x10] sm:$0xff]
    %v5502 = vld [vmem:[#allocation9 + $0x18] sm:$0xff]
    %v5503 = vld [vmem:[#allocation9 + $0x20] sm:$0xff]
    %v5504 = vld [vmem:[#allocation9 + $0x28] sm:$0xff]
    %v5505 = vld [vmem:[#allocation9 + $0x30] sm:$0xff]
    %v5506 = vld [vmem:[#allocation9 + $0x38] sm:$0xff]
    %v5507 = vld [vmem:[#allocation9 + $0x40] sm:$0xff]
    %v5508 = vld [vmem:[#allocation9 + $0x48] sm:$0xff]
    %v5509 = vld [vmem:[#allocation9 + $0x50] sm:$0xff]
    %v5510 = vld [vmem:[#allocation9 + $0x58] sm:$0xff]
    %v5511 = vld [vmem:[#allocation9 + $0x60] sm:$0xff]
    %v5512 = vld [vmem:[#allocation9 + $0x68] sm:$0xff]
    %v5513 = vld [vmem:[#allocation9 + $0x70] sm:$0xff]
    %v5514 = vld [vmem:[#allocation9 + $0x78] sm:$0xff]
    %v5515 = vld [vmem:[#allocation9 + $0x80] sm:$0xff]
    %v5516 = vld [vmem:[#allocation9 + $0x88] sm:$0xff]
    %v5517 = vld [vmem:[#allocation9 + $0x90] sm:$0xff]
    %v5518 = vld [vmem:[%s15] sm:$0xff]
    %v5519 = vld [vmem:[%s15 + $0x8] sm:$0xff]
    %v5520 = vld [vmem:[%s16] sm:$0xff]
    %v5521 = vld [vmem:[%s16 + $0x8] sm:$0xff]
    %5526 = vrot.lane.b32.xlu0 %v5495, 127
    %v5527 = vpop.permute.xlu0 %5526
    %5528 = vrot.lane.b32.xlu0 %v5496, 127
    %v5529 = vpop.permute.xlu0 %5528
    %5530 = vrot.lane.b32.xlu0 %v5497, 127
    %v5531 = vpop.permute.xlu0 %5530
    %5532 = vrot.lane.b32.xlu0 %v5498, 127
    %v5533 = vpop.permute.xlu0 %5532
    %v5534 = vsel %vm304, %v5527, %v5529
    %v5535 = vsel %vm304, %v5531, %v5533
    %v5540 = vmax.f32 %v5495, %v5534
    %v5541 = vmax.f32 %v5496, %v5529
    %v5542 = vmax.f32 %v5497, %v5535
    %v5543 = vmax.f32 %v5498, %v5533
    %5548 = vrot.lane.b32.xlu0 %v5540, 119
    %v5549 = vpop.permute.xlu0 %5548
    %5550 = vrot.lane.b32.xlu0 %v5541, 119
    %v5551 = vpop.permute.xlu0 %5550
    %5552 = vrot.lane.b32.xlu0 %v5542, 119
    %v5553 = vpop.permute.xlu0 %5552
    %5554 = vrot.lane.b32.xlu0 %v5543, 119
    %v5555 = vpop.permute.xlu0 %5554
    %v5556 = vsel %vm5361, %v5549, %v5551
    %v5557 = vsel %vm5361, %v5553, %v5555
    %v5562 = vmax.f32 %v5540, %v5556
    %v5563 = vmax.f32 %v5541, %v5551
    %v5564 = vmax.f32 %v5542, %v5557
    %v5565 = vmax.f32 %v5543, %v5555
    %vm5566 = vcmask 195584
    %v5568 = vsel %vm5566, %v5563, 0
    %v5571 = vsel %vm5566, %v5565, 0
    %5573 = vmatpush.msra.mxu0 %v5514
    %5574 = vmatpush.msra.mxu0 %v5513
    %5575 = vmatpush.msra.mxu0 %v5512
    %5576 = vmatpush.msra.mxu0 %v5511
    %5577 = vmatpush.msra.mxu0 %v5510
    %5578 = vmatpush.msra.mxu0 %v5509
    %5579 = vmatpush.msra.mxu0 %v5508
    %5580 = vmatpush.msra.mxu0 %v5507
    %5581 = vmatpush.msra.mxu0 %v5506
    %5582 = vmatpush.msra.mxu0 %v5505
    %5583 = vmatpush.msra.mxu0 %v5504
    %5584 = vmatpush.msra.mxu0 %v5503
    %5585 = vmatpush.msra.mxu0 %v5502
    %5586 = vmatpush.msra.mxu0 %v5501
    %5587 = vmatpush.msra.mxu0 %v5500
    %5588 = vmatpush.msra.mxu0 %v5499
    %5589 = vmatmul.f32.gmra.mxu0 %v5562
    %v5590 = vpop.f32.mrf.mxu0
    %v5591 = vadd.f32 0.0, %v5590
    %5592 = vmatmul.f32.gmra.mxu0 %v5564
    %v5593 = vpop.f32.mrf.mxu0
    %v5594 = vadd.f32 0.0, %v5593
    %5595 = vdwg.mxu0
    %5596 = vmatpush.msra.mxu0 0.0
    %5597 = vmatpush.msra.mxu0 0.0
    %5598 = vmatpush.msra.mxu0 0.0
    %5599 = vmatpush.msra.mxu0 0.0
    %5600 = vmatpush.msra.mxu0 0.0
    %5601 = vmatpush.msra.mxu0 0.0
    %5602 = vmatpush.msra.mxu0 0.0
    %5603 = vmatpush.msra.mxu0 0.0
    %5604 = vmatpush.msra.mxu0 0.0
    %5605 = vmatpush.msra.mxu0 0.0
    %5606 = vmatpush.msra.mxu0 0.0
    %5607 = vmatpush.msra.mxu0 0.0
    %5608 = vmatpush.msra.mxu0 0.0
    %5609 = vmatpush.msra.mxu0 %v5517
    %5610 = vmatpush.msra.mxu0 %v5516
    %5611 = vmatpush.msra.mxu0 %v5515
    %5612 = vmatmul.f32.gmra.mxu0 %v5568
    %v5613 = vpop.f32.mrf.mxu0
    %v5614 = vadd.f32 %v5591, %v5613
    %5615 = vmatmul.f32.gmra.mxu0 %v5571
    %v5616 = vpop.f32.mrf.mxu0
    %v5617 = vadd.f32 %v5594, %v5616
    %5618 = vdwg.mxu0
    %vm5619 = vcmask 408576
    %v5620 = vsel %vm5619, %v5614, 0.0
    %5621 = vadd.xlane.f32.xlu0 %v5620
    %v5622 = vpop.xlane.xlu0 %5621
    %v5623 = vsel %vm5619, %v5617, 0.0
    %5624 = vadd.xlane.f32.xlu0 %v5623
    %v5625 = vpop.xlane.xlu0 %5624
    %v5626 = vmul.f32 %v5622, 0.055555556
    %v5627 = vmul.f32 %v5625, 0.055555556
    %v5628 = vmul.f32 %v5614, %v5614
    %v5629 = vmul.f32 %v5617, %v5617
    %v5630 = vsel %vm5619, %v5628, 0.0
    %5631 = vadd.xlane.f32.xlu0 %v5630
    %v5632 = vpop.xlane.xlu0 %5631
    %v5633 = vsel %vm5619, %v5629, 0.0
    %5634 = vadd.xlane.f32.xlu0 %v5633
    %v5635 = vpop.xlane.xlu0 %5634
    %v5636 = vmul.f32 %v5632, 0.055555556
    %v5637 = vmul.f32 %v5635, 0.055555556
    %v5638 = vmul.f32 %v5626, %v5626
    %v5639 = vmul.f32 %v5627, %v5627
    %v5640 = vsub.f32 %v5636, %v5638
    %v5641 = vsub.f32 %v5637, %v5639
    %v5642 = vmax.f32 %v5640, 0.0
    %v5643 = vmax.f32 %v5641, 0.0
    %v5644 = vadd.f32 %v5642, 1e-05
    %v5645 = vadd.f32 %v5643, 1e-05
    %v5646 = vrsqrt.pop %v5644
    %v5647 = vmul.f32 %v5646, %v5644
    %v5648 = vmul.f32 %v5647, %v5646
    %v5649 = vmul.f32 0.5, %v5648
    %v5650 = vsub.f32 1.5, %v5649
    %v5651 = vmul.f32 %v5646, %v5650
    %vm5652 = vweird.f32 %v5644
    %vm5653 = vweird.f32 %v5646
    %vm5654 = vmor %vm5652, %vm5653
    %v5655 = vsel %vm5654, %v5646, %v5651
    %v5656 = vrsqrt.pop %v5645
    %v5657 = vmul.f32 %v5656, %v5645
    %v5658 = vmul.f32 %v5657, %v5656
    %v5659 = vmul.f32 0.5, %v5658
    %v5660 = vsub.f32 1.5, %v5659
    %v5661 = vmul.f32 %v5656, %v5660
    %vm5662 = vweird.f32 %v5645
    %vm5663 = vweird.f32 %v5656
    %vm5664 = vmor %vm5662, %vm5663
    %v5665 = vsel %vm5664, %v5656, %v5661
    %v5666 = vsub.f32 %v5614, %v5626
    %v5667 = vsub.f32 %v5617, %v5627
    %v5668 = vmul.f32 %v5666, %v5655
    %v5669 = vmul.f32 %v5667, %v5665
    %5671 = vset.pattern.permute.xlu0 0
    %5672 = vperm.xlu0 %5671, %v5518
    %v5673 = vpop.permute.xlu0 %5672
    %5676 = vset.pattern.permute.xlu0 0
    %5677 = vperm.xlu0 %5676, %v5519
    %v5678 = vpop.permute.xlu0 %5677
    %v5680 = vmul.f32 %v5668, %v5673
    %v5681 = vmul.f32 %v5669, %v5678
    %5683 = vset.pattern.permute.xlu0 0
    %5684 = vperm.xlu0 %5683, %v5520
    %v5685 = vpop.permute.xlu0 %5684
    %5688 = vset.pattern.permute.xlu0 0
    %5689 = vperm.xlu0 %5688, %v5521
    %v5690 = vpop.permute.xlu0 %5689
    %v5692 = vadd.f32 %v5680, %v5685
    %v5693 = vadd.f32 %v5681, %v5690
    %v5694 = vmax.f32 %v5692, 0.0
    %v5695 = vmax.f32 %v5693, 0.0
    %v5696 = vld [vmem:[%s18] sm:$0xff]
    %v5697 = vld [vmem:[%s18 + $0x8] sm:$0x3]
    %v5698 = vld [vmem:[%s18 + $0x10] sm:$0xff]
    %v5699 = vld [vmem:[%s18 + $0x18] sm:$0x3]
    %v5700 = vld [vmem:[%s18 + $0x20] sm:$0xff]
    %v5701 = vld [vmem:[%s18 + $0x28] sm:$0x3]
    %v5702 = vld [vmem:[%s18 + $0x30] sm:$0xff]
    %v5703 = vld [vmem:[%s18 + $0x38] sm:$0x3]
    %v5704 = vld [vmem:[%s18 + $0x40] sm:$0xff]
    %v5705 = vld [vmem:[%s18 + $0x48] sm:$0x3]
    %v5706 = vld [vmem:[%s18 + $0x50] sm:$0xff]
    %v5707 = vld [vmem:[%s18 + $0x58] sm:$0x3]
    %v5708 = vld [vmem:[%s18 + $0x60] sm:$0xff]
    %v5709 = vld [vmem:[%s18 + $0x68] sm:$0x3]
    %v5710 = vld [vmem:[%s18 + $0x70] sm:$0xff]
    %v5711 = vld [vmem:[%s18 + $0x78] sm:$0x3]
    %v5712 = vld [vmem:[%s18 + $0x80] sm:$0xff]
    %v5713 = vld [vmem:[%s18 + $0x88] sm:$0x3]
    %v5714 = vld [vmem:[%s19] sm:$0xff]
    %v5715 = vld [vmem:[%s19 + $0x8] sm:$0x3]
    %v5716 = vsel %vm5619, %v5694, 0.0
    %v5717 = vsel %vm5619, %v5695, 0.0
    %5720 = vrot.lane.b32.xlu0 0.0, 5
    %v5721 = vpop.permute.xlu0 %5720
    %5722 = vrot.lane.b32.xlu0 %v5716, 5
    %v5723 = vpop.permute.xlu0 %5722
    %5724 = vrot.lane.b32.xlu0 %v5717, 5
    %v5725 = vpop.permute.xlu0 %5724
    %vm5726 = vcmask 39936
    %v5727 = vsel %vm5726, %v5721, %v5723
    %v5728 = vsel %vm5726, %v5721, %v5725
    %v5732 = vsel %vm3532, %v5698, 0
    %v5735 = vsel %vm3532, %v5699, 0
    %5737 = vmatpush.msra.mxu0 0.0
    %5738 = vmatpush.msra.mxu0 0.0
    %5739 = vmatpush.msra.mxu0 0.0
    %5740 = vmatpush.msra.mxu0 0.0
    %5741 = vmatpush.msra.mxu0 0.0
    %5742 = vmatpush.msra.mxu0 0.0
    %5743 = vmatpush.msra.mxu0 0.0
    %5744 = vmatpush.msra.mxu0 0.0
    %5745 = vmatpush.msra.mxu0 0.0
    %5746 = vmatpush.msra.mxu0 0.0
    %5747 = vmatpush.msra.mxu0 0.0
    %5748 = vmatpush.msra.mxu0 0.0
    %5749 = vmatpush.msra.mxu0 0.0
    %5750 = vmatpush.msra.mxu0 0.0
    %5751 = vmatpush.msra.mxu0 %v5728
    %5752 = vmatpush.msra.mxu0 %v5727
    %5753 = vmatmul.f32.gmra.mxu0 %v5732
    %v5754 = vpop.f32.mrf.mxu0
    %v5755 = vadd.f32 0.0, %v5754
    %5756 = vmatmul.f32.gmra.mxu0 %v5735
    %v5757 = vpop.f32.mrf.mxu0
    %v5758 = vadd.f32 0.0, %v5757
    %5759 = vdwg.mxu0
    %5760 = vrot.lane.b32.xlu0 0.0, 6
    %v5761 = vpop.permute.xlu0 %5760
    %5762 = vrot.lane.b32.xlu0 %v5716, 6
    %v5763 = vpop.permute.xlu0 %5762
    %5764 = vrot.lane.b32.xlu0 %v5717, 6
    %v5765 = vpop.permute.xlu0 %5764
    %vm5766 = vcmask 48128
    %v5767 = vsel %vm5766, %v5761, %v5763
    %v5768 = vsel %vm5766, %v5761, %v5765
    %v5772 = vsel %vm3532, %v5696, 0
    %v5775 = vsel %vm3532, %v5697, 0
    %5777 = vmatpush.msra.mxu0 0.0
    %5778 = vmatpush.msra.mxu0 0.0
    %5779 = vmatpush.msra.mxu0 0.0
    %5780 = vmatpush.msra.mxu0 0.0
    %5781 = vmatpush.msra.mxu0 0.0
    %5782 = vmatpush.msra.mxu0 0.0
    %5783 = vmatpush.msra.mxu0 0.0
    %5784 = vmatpush.msra.mxu0 0.0
    %5785 = vmatpush.msra.mxu0 0.0
    %5786 = vmatpush.msra.mxu0 0.0
    %5787 = vmatpush.msra.mxu0 0.0
    %5788 = vmatpush.msra.mxu0 0.0
    %5789 = vmatpush.msra.mxu0 0.0
    %5790 = vmatpush.msra.mxu0 0.0
    %5791 = vmatpush.msra.mxu0 %v5768
    %5792 = vmatpush.msra.mxu0 %v5767
    %5793 = vmatmul.f32.gmra.mxu0 %v5772
    %v5794 = vpop.f32.mrf.mxu0
    %v5795 = vadd.f32 %v5755, %v5794
    %5796 = vmatmul.f32.gmra.mxu0 %v5775
    %v5797 = vpop.f32.mrf.mxu0
    %v5798 = vadd.f32 %v5758, %v5797
    %5799 = vdwg.mxu0
    %5800 = vrot.lane.b32.xlu0 0.0, 4
    %v5801 = vpop.permute.xlu0 %5800
    %5802 = vrot.lane.b32.xlu0 %v5716, 4
    %v5803 = vpop.permute.xlu0 %5802
    %5804 = vrot.lane.b32.xlu0 %v5717, 4
    %v5805 = vpop.permute.xlu0 %5804
    %v5806 = vsel %vm3537, %v5801, %v5803
    %v5807 = vsel %vm3537, %v5801, %v5805
    %v5811 = vsel %vm3532, %v5700, 0
    %v5814 = vsel %vm3532, %v5701, 0
    %5816 = vmatpush.msra.mxu0 0.0
    %5817 = vmatpush.msra.mxu0 0.0
    %5818 = vmatpush.msra.mxu0 0.0
    %5819 = vmatpush.msra.mxu0 0.0
    %5820 = vmatpush.msra.mxu0 0.0
    %5821 = vmatpush.msra.mxu0 0.0
    %5822 = vmatpush.msra.mxu0 0.0
    %5823 = vmatpush.msra.mxu0 0.0
    %5824 = vmatpush.msra.mxu0 0.0
    %5825 = vmatpush.msra.mxu0 0.0
    %5826 = vmatpush.msra.mxu0 0.0
    %5827 = vmatpush.msra.mxu0 0.0
    %5828 = vmatpush.msra.mxu0 0.0
    %5829 = vmatpush.msra.mxu0 0.0
    %5830 = vmatpush.msra.mxu0 %v5807
    %5831 = vmatpush.msra.mxu0 %v5806
    %5832 = vmatmul.f32.gmra.mxu0 %v5811
    %v5833 = vpop.f32.mrf.mxu0
    %v5834 = vadd.f32 0.0, %v5833
    %5835 = vmatmul.f32.gmra.mxu0 %v5814
    %v5836 = vpop.f32.mrf.mxu0
    %v5837 = vadd.f32 0.0, %v5836
    %5838 = vdwg.mxu0
    %v5839 = vadd.f32 %v5795, %v5834
    %v5840 = vadd.f32 %v5798, %v5837
    %5841 = vrot.lane.b32.xlu0 %v5716, 1
    %v5842 = vpop.permute.xlu0 %5841
    %5843 = vrot.lane.b32.xlu0 %v5717, 1
    %v5844 = vpop.permute.xlu0 %5843
    %v5845 = vsel %vm3855, %v3846, %v5842
    %v5846 = vsel %vm3855, %v3846, %v5844
    %v5850 = vsel %vm3532, %v5702, 0
    %v5853 = vsel %vm3532, %v5703, 0
    %5855 = vmatpush.msra.mxu0 0.0
    %5856 = vmatpush.msra.mxu0 0.0
    %5857 = vmatpush.msra.mxu0 0.0
    %5858 = vmatpush.msra.mxu0 0.0
    %5859 = vmatpush.msra.mxu0 0.0
    %5860 = vmatpush.msra.mxu0 0.0
    %5861 = vmatpush.msra.mxu0 0.0
    %5862 = vmatpush.msra.mxu0 0.0
    %5863 = vmatpush.msra.mxu0 0.0
    %5864 = vmatpush.msra.mxu0 0.0
    %5865 = vmatpush.msra.mxu0 0.0
    %5866 = vmatpush.msra.mxu0 0.0
    %5867 = vmatpush.msra.mxu0 0.0
    %5868 = vmatpush.msra.mxu0 0.0
    %5869 = vmatpush.msra.mxu0 %v5846
    %5870 = vmatpush.msra.mxu0 %v5845
    %5871 = vmatmul.f32.gmra.mxu0 %v5850
    %v5872 = vpop.f32.mrf.mxu0
    %v5873 = vadd.f32 0.0, %v5872
    %5874 = vmatmul.f32.gmra.mxu0 %v5853
    %v5875 = vpop.f32.mrf.mxu0
    %v5876 = vadd.f32 0.0, %v5875
    %5877 = vdwg.mxu0
    %v5878 = vadd.f32 %v5839, %v5873
    %v5879 = vadd.f32 %v5840, %v5876
    %v5881 = vsel %vm3532, %v5704, 0
    %v5884 = vsel %vm3532, %v5705, 0
    %5886 = vmatpush.msra.mxu0 0.0
    %5887 = vmatpush.msra.mxu0 0.0
    %5888 = vmatpush.msra.mxu0 0.0
    %5889 = vmatpush.msra.mxu0 0.0
    %5890 = vmatpush.msra.mxu0 0.0
    %5891 = vmatpush.msra.mxu0 0.0
    %5892 = vmatpush.msra.mxu0 0.0
    %5893 = vmatpush.msra.mxu0 0.0
    %5894 = vmatpush.msra.mxu0 0.0
    %5895 = vmatpush.msra.mxu0 0.0
    %5896 = vmatpush.msra.mxu0 0.0
    %5897 = vmatpush.msra.mxu0 0.0
    %5898 = vmatpush.msra.mxu0 0.0
    %5899 = vmatpush.msra.mxu0 0.0
    %5900 = vmatpush.msra.mxu0 %v5717
    %5901 = vmatpush.msra.mxu0 %v5716
    %5902 = vmatmul.f32.gmra.mxu0 %v5881
    %v5903 = vpop.f32.mrf.mxu0
    %v5904 = vadd.f32 0.0, %v5903
    %5905 = vmatmul.f32.gmra.mxu0 %v5884
    %v5906 = vpop.f32.mrf.mxu0
    %v5907 = vadd.f32 0.0, %v5906
    %5908 = vdwg.mxu0
    %v5909 = vadd.f32 %v5878, %v5904
    %v5910 = vadd.f32 %v5879, %v5907
    %5911 = vrot.lane.b32.xlu0 %v5716, 127
    %v5912 = vpop.permute.xlu0 %5911
    %5913 = vrot.lane.b32.xlu0 %v5717, 127
    %v5914 = vpop.permute.xlu0 %5913
    %v5918 = vsel %vm3532, %v5706, 0
    %v5921 = vsel %vm3532, %v5707, 0
    %5923 = vmatpush.msra.mxu0 0.0
    %5924 = vmatpush.msra.mxu0 0.0
    %5925 = vmatpush.msra.mxu0 0.0
    %5926 = vmatpush.msra.mxu0 0.0
    %5927 = vmatpush.msra.mxu0 0.0
    %5928 = vmatpush.msra.mxu0 0.0
    %5929 = vmatpush.msra.mxu0 0.0
    %5930 = vmatpush.msra.mxu0 0.0
    %5931 = vmatpush.msra.mxu0 0.0
    %5932 = vmatpush.msra.mxu0 0.0
    %5933 = vmatpush.msra.mxu0 0.0
    %5934 = vmatpush.msra.mxu0 0.0
    %5935 = vmatpush.msra.mxu0 0.0
    %5936 = vmatpush.msra.mxu0 0.0
    %5937 = vmatpush.msra.mxu0 %v5914
    %5938 = vmatpush.msra.mxu0 %v5912
    %5939 = vmatmul.f32.gmra.mxu0 %v5918
    %v5940 = vpop.f32.mrf.mxu0
    %v5941 = vadd.f32 0.0, %v5940
    %5942 = vmatmul.f32.gmra.mxu0 %v5921
    %v5943 = vpop.f32.mrf.mxu0
    %v5944 = vadd.f32 0.0, %v5943
    %5945 = vdwg.mxu0
    %v5946 = vadd.f32 %v5909, %v5941
    %v5947 = vadd.f32 %v5910, %v5944
    %5948 = vrot.lane.b32.xlu0 %v5716, 124
    %v5949 = vpop.permute.xlu0 %5948
    %5950 = vrot.lane.b32.xlu0 %v5717, 124
    %v5951 = vpop.permute.xlu0 %5950
    %v5955 = vsel %vm3532, %v5708, 0
    %v5958 = vsel %vm3532, %v5709, 0
    %5960 = vmatpush.msra.mxu0 0.0
    %5961 = vmatpush.msra.mxu0 0.0
    %5962 = vmatpush.msra.mxu0 0.0
    %5963 = vmatpush.msra.mxu0 0.0
    %5964 = vmatpush.msra.mxu0 0.0
    %5965 = vmatpush.msra.mxu0 0.0
    %5966 = vmatpush.msra.mxu0 0.0
    %5967 = vmatpush.msra.mxu0 0.0
    %5968 = vmatpush.msra.mxu0 0.0
    %5969 = vmatpush.msra.mxu0 0.0
    %5970 = vmatpush.msra.mxu0 0.0
    %5971 = vmatpush.msra.mxu0 0.0
    %5972 = vmatpush.msra.mxu0 0.0
    %5973 = vmatpush.msra.mxu0 0.0
    %5974 = vmatpush.msra.mxu0 %v5951
    %5975 = vmatpush.msra.mxu0 %v5949
    %5976 = vmatmul.f32.gmra.mxu0 %v5955
    %v5977 = vpop.f32.mrf.mxu0
    %v5978 = vadd.f32 0.0, %v5977
    %5979 = vmatmul.f32.gmra.mxu0 %v5958
    %v5980 = vpop.f32.mrf.mxu0
    %v5981 = vadd.f32 0.0, %v5980
    %5982 = vdwg.mxu0
    %v5983 = vadd.f32 %v5946, %v5978
    %v5984 = vadd.f32 %v5947, %v5981
    %5985 = vrot.lane.b32.xlu0 %v5716, 123
    %v5986 = vpop.permute.xlu0 %5985
    %5987 = vrot.lane.b32.xlu0 %v5717, 123
    %v5988 = vpop.permute.xlu0 %5987
    %v5992 = vsel %vm3532, %v5710, 0
    %v5995 = vsel %vm3532, %v5711, 0
    %5997 = vmatpush.msra.mxu0 0.0
    %5998 = vmatpush.msra.mxu0 0.0
    %5999 = vmatpush.msra.mxu0 0.0
    %6000 = vmatpush.msra.mxu0 0.0
    %6001 = vmatpush.msra.mxu0 0.0
    %6002 = vmatpush.msra.mxu0 0.0
    %6003 = vmatpush.msra.mxu0 0.0
    %6004 = vmatpush.msra.mxu0 0.0
    %6005 = vmatpush.msra.mxu0 0.0
    %6006 = vmatpush.msra.mxu0 0.0
    %6007 = vmatpush.msra.mxu0 0.0
    %6008 = vmatpush.msra.mxu0 0.0
    %6009 = vmatpush.msra.mxu0 0.0
    %6010 = vmatpush.msra.mxu0 0.0
    %6011 = vmatpush.msra.mxu0 %v5988
    %6012 = vmatpush.msra.mxu0 %v5986
    %6013 = vmatmul.f32.gmra.mxu0 %v5992
    %v6014 = vpop.f32.mrf.mxu0
    %v6015 = vadd.f32 0.0, %v6014
    %6016 = vmatmul.f32.gmra.mxu0 %v5995
    %v6017 = vpop.f32.mrf.mxu0
    %v6018 = vadd.f32 0.0, %v6017
    %6019 = vdwg.mxu0
    %v6020 = vadd.f32 %v5983, %v6015
    %v6021 = vadd.f32 %v5984, %v6018
    %6022 = vrot.lane.b32.xlu0 %v5716, 122
    %v6023 = vpop.permute.xlu0 %6022
    %6024 = vrot.lane.b32.xlu0 %v5717, 122
    %v6025 = vpop.permute.xlu0 %6024
    %v6029 = vsel %vm3532, %v5712, 0
    %v6032 = vsel %vm3532, %v5713, 0
    %6034 = vmatpush.msra.mxu0 0.0
    %6035 = vmatpush.msra.mxu0 0.0
    %6036 = vmatpush.msra.mxu0 0.0
    %6037 = vmatpush.msra.mxu0 0.0
    %6038 = vmatpush.msra.mxu0 0.0
    %6039 = vmatpush.msra.mxu0 0.0
    %6040 = vmatpush.msra.mxu0 0.0
    %6041 = vmatpush.msra.mxu0 0.0
    %6042 = vmatpush.msra.mxu0 0.0
    %6043 = vmatpush.msra.mxu0 0.0
    %6044 = vmatpush.msra.mxu0 0.0
    %6045 = vmatpush.msra.mxu0 0.0
    %6046 = vmatpush.msra.mxu0 0.0
    %6047 = vmatpush.msra.mxu0 0.0
    %6048 = vmatpush.msra.mxu0 %v6025
    %6049 = vmatpush.msra.mxu0 %v6023
    %6050 = vmatmul.f32.gmra.mxu0 %v6029
    %v6051 = vpop.f32.mrf.mxu0
    %v6052 = vadd.f32 0.0, %v6051
    %6053 = vmatmul.f32.gmra.mxu0 %v6032
    %v6054 = vpop.f32.mrf.mxu0
    %v6055 = vadd.f32 0.0, %v6054
    %6056 = vdwg.mxu0
    %v6057 = vadd.f32 %v6020, %v6052
    %v6058 = vadd.f32 %v6021, %v6055
    %6060 = vset.pattern.permute.xlu0 0
    %6061 = vperm.xlu0 %6060, %v5714
    %v6062 = vpop.permute.xlu0 %6061
    %6065 = vset.pattern.permute.xlu0 0
    %6066 = vperm.xlu0 %6065, %v5715
    %v6067 = vpop.permute.xlu0 %6066
    %v6069 = vadd.f32 %v6057, %v6062
    %v6070 = vadd.f32 %v6058, %v6067
    %v6071 = vld [vmem:[#allocation10] sm:$0xff]
    %v6072 = vld [vmem:[#allocation10 + $0x8] sm:$0xff]
    %v6073 = vld [vmem:[#allocation10 + $0x10] sm:$0xff]
    %v6074 = vld [vmem:[#allocation10 + $0x18] sm:$0xff]
    %v6075 = vld [vmem:[#allocation10 + $0x20] sm:$0xff]
    %v6076 = vld [vmem:[#allocation10 + $0x28] sm:$0xff]
    %v6077 = vld [vmem:[#allocation10 + $0x30] sm:$0x3]
    %v6079 = vsel %vm5619, %v6069, 0
    %v6082 = vsel %vm5619, %v6070, 0
    %vm6084 = vcmask 1041408
    %v6086 = vsel %vm6084, %v6077, 0
    %6088 = vmatpush.msra.mxu0 0.0
    %6089 = vmatpush.msra.mxu0 0.0
    %6090 = vmatpush.msra.mxu0 0.0
    %6091 = vmatpush.msra.mxu0 0.0
    %6092 = vmatpush.msra.mxu0 0.0
    %6093 = vmatpush.msra.mxu0 0.0
    %6094 = vmatpush.msra.mxu0 0.0
    %6095 = vmatpush.msra.mxu0 0.0
    %6096 = vmatpush.msra.mxu0 0.0
    %6097 = vmatpush.msra.mxu0 %v6086
    %6098 = vmatpush.msra.mxu0 %v6076
    %6099 = vmatpush.msra.mxu0 %v6075
    %6100 = vmatpush.msra.mxu0 %v6074
    %6101 = vmatpush.msra.mxu0 %v6073
    %6102 = vmatpush.msra.mxu0 %v6072
    %6103 = vmatpush.msra.mxu0 %v6071
    %6104 = vmatmul.f32.gmra.mxu0 %v6079
    %v6105 = vpop.f32.mrf.mxu0
    %v6106 = vadd.f32 0.0, %v6105
    %6107 = vmatmul.f32.gmra.mxu0 %v6082
    %v6108 = vpop.f32.mrf.mxu0
    %v6109 = vadd.f32 0.0, %v6108
    %6110 = vdwg.mxu0
    %vm6111 = vcmask 15360
    %6112 = vst.msk [vmem:[%s21] sm:$0xff] %vm6111, %v6106
    %vm6113 = vcmask 9216
    %6114 = vst.msk [vmem:[%s21 + $0x8] sm:$0x3] %vm6113, %v6109
    // Predicated region
    $region110: #{net_forward.1} parent=1 // pred_check
      _
    $region111: #{net_forward.1} parent=1 // pred_check_branch
      %6116 = sbr.rel (0) target = $region113
    $region112: #{net_forward.1} parent=1 // pred_region
      _
    $region113: #{net_forward.1} parent=1 // pred_fallthru
      _
    // Predicated region
    $region114: #{net_forward.1} parent=1 // pred_check
      _
    $region115: #{net_forward.1} parent=1 // pred_check_branch
      %6118 = sbr.rel (0) target = $region117
    $region116: #{net_forward.1} parent=1 // pred_region
      _
    $region117: #{net_forward.1} parent=1 // pred_fallthru
      _
    %6119 = vsyncpa [#allocation3], 1
    %6120 = vsyncpa [#allocation5], 1
    %6121 = vsyncpa [#allocation8], 1
    %6122 = vsyncpa [#allocation11], 1

</llo_original>
